<compile_context>
chip_gen: v6e
topology: v6e:2x2x1
jax: 0.10.0
libtpu: 0.0.40
codegen_flags: <defaults>
</compile_context>

<pallas_src>
import jax
import jax.numpy as jnp
from jax.experimental import pallas as pl
from jax.experimental.pallas import tpu as pltpu


def _cdiv(a, b):
    return -(-a // b)


def _round_up(a, b):
    return _cdiv(a, b) * b


def conv_reduce_3d(x, params, kernel_sizes, paddings, strides=None, dilations=None,
                   *, compute_dtype=jnp.bfloat16, lane_tile_target=1024):
    """ConvReduce3D forward (reduction_method='sum') as one Pallas kernel.

    x       : (N, Cin, D, H, W) f32
    params  : list of (weight (Cout, Cin, kd, kh, kw), bias (Cout,) or None)
    returns : (N, Cout, Do, Ho, Wo) f32
    """
    N, Cin, D, H, W = x.shape
    Cout = params[0][0].shape[0]
    nb = len(params)
    strides = strides if strides is not None else ((1, 1, 1),) * nb
    dilations = dilations if dilations is not None else ((1, 1, 1),) * nb

    # ---- correctness guards: the tap-table fold below assumes these.
    for (w, _), ks, pad, st, dl in zip(params, kernel_sizes, paddings, strides, dilations):
        assert tuple(st) == (1, 1, 1), "only stride=1 is supported"
        assert tuple(dl) == (1, 1, 1), "only dilation=1 is supported"
        assert w.shape[1] == Cin, "grouped conv not supported"
        assert all(pad[d] <= ks[d] - 1 for d in range(3)), "padding must be <= k-1"
    # TODO(synk): reduction_method='cat', stride/dilation != 1 and non-'zeros'
    # padding modes are not implemented (the instantiated module needs none).

    out_dims = [tuple(s + 2 * p - k + 1 for s, p, k in zip((D, H, W), pad, ks))
                for ks, pad in zip(kernel_sizes, paddings)]
    assert all(od == out_dims[0] for od in out_dims), "branch output shapes must match"
    Do, Ho, Wo = out_dims[0]

    # ---- shared padded grid: one zero-pad large enough for every branch.
    hp = tuple(max(max(pad[d], ks[d] - 1 - pad[d])
                   for ks, pad in zip(kernel_sizes, paddings)) for d in range(3))
    Dp, Hp, Wp = D + 2 * hp[0], H + 2 * hp[1], W + 2 * hp[2]
    Q = Hp * Wp
    P = Dp * Q

    # ---- fold every branch into one tap table {flat lane offset: (Cout, Cin) W}.
    # On the shared padded grid each branch tap is a pure lane shift of
    # (a - pad_d)*Q + (b - pad_h)*Wp + (c - pad_w); coincident taps are summed
    # (this is exactly the old 1x1x1-into-centre fold, but fully general).
    taps = {}
    bias = jnp.zeros((Cout,), jnp.float32)
    for (w, b), ks, pad in zip(params, kernel_sizes, paddings):
        wf = w.astype(jnp.float32)
        for a in range(ks[0]):
            for bb in range(ks[1]):
                for c in range(ks[2]):
                    off = (a - pad[0]) * Q + (bb - pad[1]) * Wp + (c - pad[2])
                    wt = wf[:, :, a, bb, c]
                    taps[off] = wt if off not in taps else taps[off] + wt
        if b is not None:
            bias = bias + b.astype(jnp.float32)
    off_list = tuple(sorted(taps.keys()))
    T = len(off_list)

    COUT_PAD = _round_up(Cout, 8)
    CIN_PAD = _round_up(Cin, 8)
    w_taps = jnp.stack([taps[o] for o in off_list], axis=0)            # (T, Cout, Cin) f32
    w_taps = jnp.pad(w_taps, ((0, 0), (0, COUT_PAD - Cout), (0, CIN_PAD - Cin)))
    w_taps = w_taps.astype(compute_dtype)                              # (T, COUT_PAD, CIN_PAD)
    bias_col = jnp.pad(bias, (0, COUT_PAD - Cout)).reshape(COUT_PAD, 1)  # (COUT_PAD, 1) f32

    # ---- padded input, batch folded into the lane axis (~1x HBM traffic; no im2col).
    xq = x.astype(compute_dtype)
    xp = jnp.pad(xq, ((0, 0), (0, 0),
                      (hp[0], hp[0]), (hp[1], hp[1]), (hp[2], hp[2])))
    z = jnp.transpose(xp, (1, 0, 2, 3, 4)).reshape(Cin, N * P)         # (Cin, N*P)
    if CIN_PAD > Cin:
        z = jnp.pad(z, ((0, CIN_PAD - Cin), (0, 0)))
    L = N * P

    # ---- lane tiling: multiple of 128, >=512 lanes/step, even step count (v7x 2 TCs).
    HALO = _round_up(hp[0] * Q + hp[1] * Wp + hp[2], 128)   # max |tap offset|, 128-aligned
    num_tiles = max(2, _cdiv(L, lane_tile_target))
    num_tiles += num_tiles % 2
    TL = _round_up(_cdiv(L, num_tiles), 128)
    num_tiles = _cdiv(L, TL)
    num_tiles += num_tiles % 2
    L_pad = num_tiles * TL
    BLK = TL + 2 * HALO

    # Left/right zero halos so every per-tile DMA slice is in bounds; wrapped /
    # cross-batch reads only ever land on padded-border output positions, which
    # are cropped after the kernel, so the result is exact.
    z_ext = jnp.pad(z, ((0, 0), (HALO, HALO + (L_pad - L))))           # (CIN_PAD, L_pad+2*HALO)

    def kernel(z_hbm, w_ref, b_ref, o_ref, xbuf, sem):
        t = pl.program_id(0)
        start = pl.multiple_of(t * TL, 128)
        cp = pltpu.make_async_copy(z_hbm.at[:, pl.ds(start, BLK)], xbuf, sem.at[0])
        cp.start()
        cp.wait()
        # Bias folded into the accumulator init -> epilogue is a pure store.
        acc = jnp.broadcast_to(b_ref[...], (COUT_PAD, TL))
        for i, off in enumerate(off_list):
            xs = xbuf[:, HALO + off:HALO + off + TL]      # (CIN_PAD, TL) bf16, static slice
            acc = acc + jnp.dot(w_ref[i], xs, preferred_element_type=jnp.float32)
        o_ref[...] = acc

    # VMEM budget: haloed input scratch + double-buffered output block +
    # resident tap weights / bias (tile-padded), with 2x headroom.
    vmem_need = (CIN_PAD * BLK * 2
                 + 2 * COUT_PAD * TL * 4
                 + 2 * T * 16 * 128 * 2
                 + 2 * 8 * 128 * 4)
    vmem_limit = int(min(max(2 * vmem_need, 4 << 20), 64 << 20))

    cost = pl.CostEstimate(
        flops=2 * T * CIN_PAD * COUT_PAD * L_pad,
        transcendentals=0,
        bytes_accessed=int(z_ext.size * 2 + w_taps.size * 2
                           + bias_col.size * 4 + COUT_PAD * L_pad * 4))

    out = pl.pallas_call(
        kernel,
        out_shape=jax.ShapeDtypeStruct((COUT_PAD, L_pad), jnp.float32),
        grid=(num_tiles,),
        in_specs=[
            pl.BlockSpec(memory_space=pl.ANY),                           # padded input (HBM)
            pl.BlockSpec((T, COUT_PAD, CIN_PAD), lambda t: (0, 0, 0)),   # tap weights, resident
            pl.BlockSpec((COUT_PAD, 1), lambda t: (0, 0)),               # bias, resident
        ],
        out_specs=pl.BlockSpec((COUT_PAD, TL), lambda t: (0, t)),        # lane-dense f32
        scratch_shapes=[pltpu.VMEM((CIN_PAD, BLK), compute_dtype),
                        pltpu.SemaphoreType.DMA((1,))],
        compiler_params=pltpu.CompilerParams(
            dimension_semantics=("parallel",),
            vmem_limit_bytes=vmem_limit),
        cost_estimate=cost,
    )(z_ext, w_taps, bias_col)

    # ---- crop the padded grid back to the true output (cheap, ~1x output size).
    out = out[:Cout, :L].reshape(Cout, N, Dp, Hp, Wp)
    out = jnp.transpose(out, (1, 0, 2, 3, 4))
    return out[:, :, hp[0]:hp[0] + Do, hp[1]:hp[1] + Ho, hp[2]:hp[2] + Wo]


def _reference(x, params, kernel_sizes, paddings):
    """Pure-JAX f32 reference matching the PyTorch forward (sum reduction)."""
    outs = []
    for (w, b), ks, pad in zip(params, kernel_sizes, paddings):
        y = jax.lax.conv_general_dilated(
            x, w, window_strides=(1, 1, 1),
            padding=[(pad[0], pad[0]), (pad[1], pad[1]), (pad[2], pad[2])],
            dimension_numbers=("NCDHW", "OIDHW", "NCDHW"),
            precision=jax.lax.Precision.HIGHEST)
        if b is not None:
            y = y + b.reshape(1, -1, 1, 1, 1)
        outs.append(y)
    return jnp.stack(outs, axis=0).sum(axis=0)


if __name__ == "__main__":
    # Module configuration (two conv branches, summed).
    in_channels, out_channels = 4, 8
    kernel_sizes = ((1, 1, 1), (3, 3, 3))
    paddings = ((0, 0, 0), (1, 1, 1))

    # Small input (N, C_in, D, H, W).
    N, D, H, W = 2, 4, 16, 16

    key = jax.random.PRNGKey(0)
    kx, k0w, k0b, k1w, k1b = jax.random.split(key, 5)
    x = jax.random.normal(kx, (N, in_channels, D, H, W), jnp.float32)

    params = []
    for wk, bk, ks in ((k0w, k0b, kernel_sizes[0]), (k1w, k1b, kernel_sizes[1])):
        w = 0.1 * jax.random.normal(wk, (out_channels, in_channels) + tuple(ks), jnp.float32)
        b = 0.1 * jax.random.normal(bk, (out_channels,), jnp.float32)
        params.append((w, b))

    out = conv_reduce_3d(x, params, kernel_sizes, paddings)
    out = jax.block_until_ready(out)

    ref = _reference(x, params, kernel_sizes, paddings)
    assert out.shape == ref.shape, (out.shape, ref.shape)
    # Branch fold / tap gather are exact; the only numerical change vs the f32
    # reference is bf16 MXU operands (f32 accumulation).
    err = float(jnp.max(jnp.abs(out - ref)))
    assert err < 2e-2, f"max abs error {err}"
    print("KERNEL_OK")
</pallas_src>

<mosaic_0001>
module attributes {stable_mosaic.version = 11 : i64} {
  func.func @kernel(%arg0: i32, %arg1: memref<8x4864xbf16, #tpu.memory_space<any>>, %arg2: memref<27x8x8xbf16, #tpu.memory_space<vmem>>, %arg3: memref<8x1xf32, #tpu.memory_space<vmem>>, %arg4: memref<8x1024xf32, #tpu.memory_space<vmem>>, %arg5: memref<8x1792xbf16, #tpu.memory_space<vmem>>, %arg6: memref<1x!tpu.dma_semaphore, #tpu.memory_space<semaphore_mem>>) attributes {dimension_semantics = [#tpu.dimension_semantics<parallel>], iteration_bounds = array<i64: 4>, scalar_prefetch = 0 : i64, scratch_operands = 2 : i64, tpu.core_type = #tpu.core_type<tc>, window_params = [{}, {pipeline_mode = #tpu.pipeline_mode<synchronous>, transform_indices = @transform_1, window_bounds = array<i64: 27, 8, 8>}, {pipeline_mode = #tpu.pipeline_mode<synchronous>, transform_indices = @transform_2, window_bounds = array<i64: 8, 1>}, {transform_indices = @transform_3, window_bounds = array<i64: 8, 1024>}]} {
    %c1024_i32 = arith.constant 1024 : i32
    %0 = arith.muli %arg0, %c1024_i32 : i32
    %1 = tpu.assume_multiple %0, 128 : i32
    %c0_i32 = arith.constant 0 : i32
    %c0_i32_0 = arith.constant 0 : i32
    %2 = tpu.memref_slice %arg1[%c0_i32_0, %1] : memref<8x4864xbf16, #tpu.memory_space<any>> -> memref<8x1792xbf16, #tpu.memory_space<any>>
    %3 = tpu.memref_slice %arg6[%c0_i32] : memref<1x!tpu.dma_semaphore, #tpu.memory_space<semaphore_mem>> -> memref<1x!tpu.dma_semaphore, #tpu.memory_space<semaphore_mem>>
    %4 = tpu.memref_squeeze %3 : memref<1x!tpu.dma_semaphore, #tpu.memory_space<semaphore_mem>> -> memref<!tpu.dma_semaphore, #tpu.memory_space<semaphore_mem>>
    tpu.enqueue_dma source(%2 : memref<8x1792xbf16, #tpu.memory_space<any>>) target(%arg5 : memref<8x1792xbf16, #tpu.memory_space<vmem>>) target_semaphore(%4 : memref<!tpu.dma_semaphore, #tpu.memory_space<semaphore_mem>>)
    %c0_i32_1 = arith.constant 0 : i32
    %c0_i32_2 = arith.constant 0 : i32
    %5 = tpu.memref_slice %arg1[%c0_i32_2, %1] : memref<8x4864xbf16, #tpu.memory_space<any>> -> memref<8x1792xbf16, #tpu.memory_space<any>>
    %6 = tpu.memref_slice %arg6[%c0_i32_1] : memref<1x!tpu.dma_semaphore, #tpu.memory_space<semaphore_mem>> -> memref<1x!tpu.dma_semaphore, #tpu.memory_space<semaphore_mem>>
    %7 = tpu.memref_squeeze %6 : memref<1x!tpu.dma_semaphore, #tpu.memory_space<semaphore_mem>> -> memref<!tpu.dma_semaphore, #tpu.memory_space<semaphore_mem>>
    tpu.wait_dma2 semaphore(%7 : memref<!tpu.dma_semaphore, #tpu.memory_space<semaphore_mem>>) src(%5 : memref<8x1792xbf16, #tpu.memory_space<any>>) dst(%arg5 : memref<8x1792xbf16, #tpu.memory_space<vmem>>)
    %c0 = arith.constant 0 : index
    %c0_3 = arith.constant 0 : index
    %8 = vector.load %arg3[%c0, %c0_3] : memref<8x1xf32, #tpu.memory_space<vmem>>, vector<8x1xf32>
    %9 = vector.shape_cast %8 : vector<8x1xf32> to vector<8x1xf32>
    %10 = vector.broadcast %9 : vector<8x1xf32> to vector<8x1024xf32>
    %c0_4 = arith.constant 0 : index
    %c41 = arith.constant 41 : index
    %11 = vector.load %arg5[%c0_4, %c41] : memref<8x1792xbf16, #tpu.memory_space<vmem>>, vector<8x1024xbf16>
    %c0_5 = arith.constant 0 : index
    %c0_6 = arith.constant 0 : index
    %c0_7 = arith.constant 0 : index
    %12 = vector.load %arg2[%c0_5, %c0_6, %c0_7] : memref<27x8x8xbf16, #tpu.memory_space<vmem>>, vector<1x8x8xbf16>
    %13 = vector.shape_cast %12 : vector<1x8x8xbf16> to vector<8x8xbf16>
    %cst = arith.constant dense<0.000000e+00> : vector<8x1024xf32>
    %14 = tpu.matmul %13, %11, %cst {dimension_numbers = #tpu.dot_dimension_numbers<[1], [0], [0], [1], [0, 0, 1, 1], [], []>} : vector<8x8xbf16>, vector<8x1024xbf16>, vector<8x1024xf32> -> vector<8x1024xf32>
    %15 = arith.addf %10, %14 : vector<8x1024xf32>
    %c0_8 = arith.constant 0 : index
    %c42 = arith.constant 42 : index
    %16 = vector.load %arg5[%c0_8, %c42] : memref<8x1792xbf16, #tpu.memory_space<vmem>>, vector<8x1024xbf16>
    %c1 = arith.constant 1 : index
    %c0_9 = arith.constant 0 : index
    %c0_10 = arith.constant 0 : index
    %17 = vector.load %arg2[%c1, %c0_9, %c0_10] : memref<27x8x8xbf16, #tpu.memory_space<vmem>>, vector<1x8x8xbf16>
    %18 = vector.shape_cast %17 : vector<1x8x8xbf16> to vector<8x8xbf16>
    %cst_11 = arith.constant dense<0.000000e+00> : vector<8x1024xf32>
    %19 = tpu.matmul %18, %16, %cst_11 {dimension_numbers = #tpu.dot_dimension_numbers<[1], [0], [0], [1], [0, 0, 1, 1], [], []>} : vector<8x8xbf16>, vector<8x1024xbf16>, vector<8x1024xf32> -> vector<8x1024xf32>
    %20 = arith.addf %15, %19 : vector<8x1024xf32>
    %c0_12 = arith.constant 0 : index
    %c43 = arith.constant 43 : index
    %21 = vector.load %arg5[%c0_12, %c43] : memref<8x1792xbf16, #tpu.memory_space<vmem>>, vector<8x1024xbf16>
    %c2 = arith.constant 2 : index
    %c0_13 = arith.constant 0 : index
    %c0_14 = arith.constant 0 : index
    %22 = vector.load %arg2[%c2, %c0_13, %c0_14] : memref<27x8x8xbf16, #tpu.memory_space<vmem>>, vector<1x8x8xbf16>
    %23 = vector.shape_cast %22 : vector<1x8x8xbf16> to vector<8x8xbf16>
    %cst_15 = arith.constant dense<0.000000e+00> : vector<8x1024xf32>
    %24 = tpu.matmul %23, %21, %cst_15 {dimension_numbers = #tpu.dot_dimension_numbers<[1], [0], [0], [1], [0, 0, 1, 1], [], []>} : vector<8x8xbf16>, vector<8x1024xbf16>, vector<8x1024xf32> -> vector<8x1024xf32>
    %25 = arith.addf %20, %24 : vector<8x1024xf32>
    %c0_16 = arith.constant 0 : index
    %c59 = arith.constant 59 : index
    %26 = vector.load %arg5[%c0_16, %c59] : memref<8x1792xbf16, #tpu.memory_space<vmem>>, vector<8x1024xbf16>
    %c3 = arith.constant 3 : index
    %c0_17 = arith.constant 0 : index
    %c0_18 = arith.constant 0 : index
    %27 = vector.load %arg2[%c3, %c0_17, %c0_18] : memref<27x8x8xbf16, #tpu.memory_space<vmem>>, vector<1x8x8xbf16>
    %28 = vector.shape_cast %27 : vector<1x8x8xbf16> to vector<8x8xbf16>
    %cst_19 = arith.constant dense<0.000000e+00> : vector<8x1024xf32>
    %29 = tpu.matmul %28, %26, %cst_19 {dimension_numbers = #tpu.dot_dimension_numbers<[1], [0], [0], [1], [0, 0, 1, 1], [], []>} : vector<8x8xbf16>, vector<8x1024xbf16>, vector<8x1024xf32> -> vector<8x1024xf32>
    %30 = arith.addf %25, %29 : vector<8x1024xf32>
    %c0_20 = arith.constant 0 : index
    %c60 = arith.constant 60 : index
    %31 = vector.load %arg5[%c0_20, %c60] : memref<8x1792xbf16, #tpu.memory_space<vmem>>, vector<8x1024xbf16>
    %c4 = arith.constant 4 : index
    %c0_21 = arith.constant 0 : index
    %c0_22 = arith.constant 0 : index
    %32 = vector.load %arg2[%c4, %c0_21, %c0_22] : memref<27x8x8xbf16, #tpu.memory_space<vmem>>, vector<1x8x8xbf16>
    %33 = vector.shape_cast %32 : vector<1x8x8xbf16> to vector<8x8xbf16>
    %cst_23 = arith.constant dense<0.000000e+00> : vector<8x1024xf32>
    %34 = tpu.matmul %33, %31, %cst_23 {dimension_numbers = #tpu.dot_dimension_numbers<[1], [0], [0], [1], [0, 0, 1, 1], [], []>} : vector<8x8xbf16>, vector<8x1024xbf16>, vector<8x1024xf32> -> vector<8x1024xf32>
    %35 = arith.addf %30, %34 : vector<8x1024xf32>
    %c0_24 = arith.constant 0 : index
    %c61 = arith.constant 61 : index
    %36 = vector.load %arg5[%c0_24, %c61] : memref<8x1792xbf16, #tpu.memory_space<vmem>>, vector<8x1024xbf16>
    %c5 = arith.constant 5 : index
    %c0_25 = arith.constant 0 : index
    %c0_26 = arith.constant 0 : index
    %37 = vector.load %arg2[%c5, %c0_25, %c0_26] : memref<27x8x8xbf16, #tpu.memory_space<vmem>>, vector<1x8x8xbf16>
    %38 = vector.shape_cast %37 : vector<1x8x8xbf16> to vector<8x8xbf16>
    %cst_27 = arith.constant dense<0.000000e+00> : vector<8x1024xf32>
    %39 = tpu.matmul %38, %36, %cst_27 {dimension_numbers = #tpu.dot_dimension_numbers<[1], [0], [0], [1], [0, 0, 1, 1], [], []>} : vector<8x8xbf16>, vector<8x1024xbf16>, vector<8x1024xf32> -> vector<8x1024xf32>
    %40 = arith.addf %35, %39 : vector<8x1024xf32>
    %c0_28 = arith.constant 0 : index
    %c77 = arith.constant 77 : index
    %41 = vector.load %arg5[%c0_28, %c77] : memref<8x1792xbf16, #tpu.memory_space<vmem>>, vector<8x1024xbf16>
    %c6 = arith.constant 6 : index
    %c0_29 = arith.constant 0 : index
    %c0_30 = arith.constant 0 : index
    %42 = vector.load %arg2[%c6, %c0_29, %c0_30] : memref<27x8x8xbf16, #tpu.memory_space<vmem>>, vector<1x8x8xbf16>
    %43 = vector.shape_cast %42 : vector<1x8x8xbf16> to vector<8x8xbf16>
    %cst_31 = arith.constant dense<0.000000e+00> : vector<8x1024xf32>
    %44 = tpu.matmul %43, %41, %cst_31 {dimension_numbers = #tpu.dot_dimension_numbers<[1], [0], [0], [1], [0, 0, 1, 1], [], []>} : vector<8x8xbf16>, vector<8x1024xbf16>, vector<8x1024xf32> -> vector<8x1024xf32>
    %45 = arith.addf %40, %44 : vector<8x1024xf32>
    %c0_32 = arith.constant 0 : index
    %c78 = arith.constant 78 : index
    %46 = vector.load %arg5[%c0_32, %c78] : memref<8x1792xbf16, #tpu.memory_space<vmem>>, vector<8x1024xbf16>
    %c7 = arith.constant 7 : index
    %c0_33 = arith.constant 0 : index
    %c0_34 = arith.constant 0 : index
    %47 = vector.load %arg2[%c7, %c0_33, %c0_34] : memref<27x8x8xbf16, #tpu.memory_space<vmem>>, vector<1x8x8xbf16>
    %48 = vector.shape_cast %47 : vector<1x8x8xbf16> to vector<8x8xbf16>
    %cst_35 = arith.constant dense<0.000000e+00> : vector<8x1024xf32>
    %49 = tpu.matmul %48, %46, %cst_35 {dimension_numbers = #tpu.dot_dimension_numbers<[1], [0], [0], [1], [0, 0, 1, 1], [], []>} : vector<8x8xbf16>, vector<8x1024xbf16>, vector<8x1024xf32> -> vector<8x1024xf32>
    %50 = arith.addf %45, %49 : vector<8x1024xf32>
    %c0_36 = arith.constant 0 : index
    %c79 = arith.constant 79 : index
    %51 = vector.load %arg5[%c0_36, %c79] : memref<8x1792xbf16, #tpu.memory_space<vmem>>, vector<8x1024xbf16>
    %c8 = arith.constant 8 : index
    %c0_37 = arith.constant 0 : index
    %c0_38 = arith.constant 0 : index
    %52 = vector.load %arg2[%c8, %c0_37, %c0_38] : memref<27x8x8xbf16, #tpu.memory_space<vmem>>, vector<1x8x8xbf16>
    %53 = vector.shape_cast %52 : vector<1x8x8xbf16> to vector<8x8xbf16>
    %cst_39 = arith.constant dense<0.000000e+00> : vector<8x1024xf32>
    %54 = tpu.matmul %53, %51, %cst_39 {dimension_numbers = #tpu.dot_dimension_numbers<[1], [0], [0], [1], [0, 0, 1, 1], [], []>} : vector<8x8xbf16>, vector<8x1024xbf16>, vector<8x1024xf32> -> vector<8x1024xf32>
    %55 = arith.addf %50, %54 : vector<8x1024xf32>
    %c0_40 = arith.constant 0 : index
    %c365 = arith.constant 365 : index
    %56 = vector.load %arg5[%c0_40, %c365] : memref<8x1792xbf16, #tpu.memory_space<vmem>>, vector<8x1024xbf16>
    %c9 = arith.constant 9 : index
    %c0_41 = arith.constant 0 : index
    %c0_42 = arith.constant 0 : index
    %57 = vector.load %arg2[%c9, %c0_41, %c0_42] : memref<27x8x8xbf16, #tpu.memory_space<vmem>>, vector<1x8x8xbf16>
    %58 = vector.shape_cast %57 : vector<1x8x8xbf16> to vector<8x8xbf16>
    %cst_43 = arith.constant dense<0.000000e+00> : vector<8x1024xf32>
    %59 = tpu.matmul %58, %56, %cst_43 {dimension_numbers = #tpu.dot_dimension_numbers<[1], [0], [0], [1], [0, 0, 1, 1], [], []>} : vector<8x8xbf16>, vector<8x1024xbf16>, vector<8x1024xf32> -> vector<8x1024xf32>
    %60 = arith.addf %55, %59 : vector<8x1024xf32>
    %c0_44 = arith.constant 0 : index
    %c366 = arith.constant 366 : index
    %61 = vector.load %arg5[%c0_44, %c366] : memref<8x1792xbf16, #tpu.memory_space<vmem>>, vector<8x1024xbf16>
    %c10 = arith.constant 10 : index
    %c0_45 = arith.constant 0 : index
    %c0_46 = arith.constant 0 : index
    %62 = vector.load %arg2[%c10, %c0_45, %c0_46] : memref<27x8x8xbf16, #tpu.memory_space<vmem>>, vector<1x8x8xbf16>
    %63 = vector.shape_cast %62 : vector<1x8x8xbf16> to vector<8x8xbf16>
    %cst_47 = arith.constant dense<0.000000e+00> : vector<8x1024xf32>
    %64 = tpu.matmul %63, %61, %cst_47 {dimension_numbers = #tpu.dot_dimension_numbers<[1], [0], [0], [1], [0, 0, 1, 1], [], []>} : vector<8x8xbf16>, vector<8x1024xbf16>, vector<8x1024xf32> -> vector<8x1024xf32>
    %65 = arith.addf %60, %64 : vector<8x1024xf32>
    %c0_48 = arith.constant 0 : index
    %c367 = arith.constant 367 : index
    %66 = vector.load %arg5[%c0_48, %c367] : memref<8x1792xbf16, #tpu.memory_space<vmem>>, vector<8x1024xbf16>
    %c11 = arith.constant 11 : index
    %c0_49 = arith.constant 0 : index
    %c0_50 = arith.constant 0 : index
    %67 = vector.load %arg2[%c11, %c0_49, %c0_50] : memref<27x8x8xbf16, #tpu.memory_space<vmem>>, vector<1x8x8xbf16>
    %68 = vector.shape_cast %67 : vector<1x8x8xbf16> to vector<8x8xbf16>
    %cst_51 = arith.constant dense<0.000000e+00> : vector<8x1024xf32>
    %69 = tpu.matmul %68, %66, %cst_51 {dimension_numbers = #tpu.dot_dimension_numbers<[1], [0], [0], [1], [0, 0, 1, 1], [], []>} : vector<8x8xbf16>, vector<8x1024xbf16>, vector<8x1024xf32> -> vector<8x1024xf32>
    %70 = arith.addf %65, %69 : vector<8x1024xf32>
    %c0_52 = arith.constant 0 : index
    %c383 = arith.constant 383 : index
    %71 = vector.load %arg5[%c0_52, %c383] : memref<8x1792xbf16, #tpu.memory_space<vmem>>, vector<8x1024xbf16>
    %c12 = arith.constant 12 : index
    %c0_53 = arith.constant 0 : index
    %c0_54 = arith.constant 0 : index
    %72 = vector.load %arg2[%c12, %c0_53, %c0_54] : memref<27x8x8xbf16, #tpu.memory_space<vmem>>, vector<1x8x8xbf16>
    %73 = vector.shape_cast %72 : vector<1x8x8xbf16> to vector<8x8xbf16>
    %cst_55 = arith.constant dense<0.000000e+00> : vector<8x1024xf32>
    %74 = tpu.matmul %73, %71, %cst_55 {dimension_numbers = #tpu.dot_dimension_numbers<[1], [0], [0], [1], [0, 0, 1, 1], [], []>} : vector<8x8xbf16>, vector<8x1024xbf16>, vector<8x1024xf32> -> vector<8x1024xf32>
    %75 = arith.addf %70, %74 : vector<8x1024xf32>
    %c0_56 = arith.constant 0 : index
    %c384 = arith.constant 384 : index
    %76 = vector.load %arg5[%c0_56, %c384] : memref<8x1792xbf16, #tpu.memory_space<vmem>>, vector<8x1024xbf16>
    %c13 = arith.constant 13 : index
    %c0_57 = arith.constant 0 : index
    %c0_58 = arith.constant 0 : index
    %77 = vector.load %arg2[%c13, %c0_57, %c0_58] : memref<27x8x8xbf16, #tpu.memory_space<vmem>>, vector<1x8x8xbf16>
    %78 = vector.shape_cast %77 : vector<1x8x8xbf16> to vector<8x8xbf16>
    %cst_59 = arith.constant dense<0.000000e+00> : vector<8x1024xf32>
    %79 = tpu.matmul %78, %76, %cst_59 {dimension_numbers = #tpu.dot_dimension_numbers<[1], [0], [0], [1], [0, 0, 1, 1], [], []>} : vector<8x8xbf16>, vector<8x1024xbf16>, vector<8x1024xf32> -> vector<8x1024xf32>
    %80 = arith.addf %75, %79 : vector<8x1024xf32>
    %c0_60 = arith.constant 0 : index
    %c385 = arith.constant 385 : index
    %81 = vector.load %arg5[%c0_60, %c385] : memref<8x1792xbf16, #tpu.memory_space<vmem>>, vector<8x1024xbf16>
    %c14 = arith.constant 14 : index
    %c0_61 = arith.constant 0 : index
    %c0_62 = arith.constant 0 : index
    %82 = vector.load %arg2[%c14, %c0_61, %c0_62] : memref<27x8x8xbf16, #tpu.memory_space<vmem>>, vector<1x8x8xbf16>
    %83 = vector.shape_cast %82 : vector<1x8x8xbf16> to vector<8x8xbf16>
    %cst_63 = arith.constant dense<0.000000e+00> : vector<8x1024xf32>
    %84 = tpu.matmul %83, %81, %cst_63 {dimension_numbers = #tpu.dot_dimension_numbers<[1], [0], [0], [1], [0, 0, 1, 1], [], []>} : vector<8x8xbf16>, vector<8x1024xbf16>, vector<8x1024xf32> -> vector<8x1024xf32>
    %85 = arith.addf %80, %84 : vector<8x1024xf32>
    %c0_64 = arith.constant 0 : index
    %c401 = arith.constant 401 : index
    %86 = vector.load %arg5[%c0_64, %c401] : memref<8x1792xbf16, #tpu.memory_space<vmem>>, vector<8x1024xbf16>
    %c15 = arith.constant 15 : index
    %c0_65 = arith.constant 0 : index
    %c0_66 = arith.constant 0 : index
    %87 = vector.load %arg2[%c15, %c0_65, %c0_66] : memref<27x8x8xbf16, #tpu.memory_space<vmem>>, vector<1x8x8xbf16>
    %88 = vector.shape_cast %87 : vector<1x8x8xbf16> to vector<8x8xbf16>
    %cst_67 = arith.constant dense<0.000000e+00> : vector<8x1024xf32>
    %89 = tpu.matmul %88, %86, %cst_67 {dimension_numbers = #tpu.dot_dimension_numbers<[1], [0], [0], [1], [0, 0, 1, 1], [], []>} : vector<8x8xbf16>, vector<8x1024xbf16>, vector<8x1024xf32> -> vector<8x1024xf32>
    %90 = arith.addf %85, %89 : vector<8x1024xf32>
    %c0_68 = arith.constant 0 : index
    %c402 = arith.constant 402 : index
    %91 = vector.load %arg5[%c0_68, %c402] : memref<8x1792xbf16, #tpu.memory_space<vmem>>, vector<8x1024xbf16>
    %c16 = arith.constant 16 : index
    %c0_69 = arith.constant 0 : index
    %c0_70 = arith.constant 0 : index
    %92 = vector.load %arg2[%c16, %c0_69, %c0_70] : memref<27x8x8xbf16, #tpu.memory_space<vmem>>, vector<1x8x8xbf16>
    %93 = vector.shape_cast %92 : vector<1x8x8xbf16> to vector<8x8xbf16>
    %cst_71 = arith.constant dense<0.000000e+00> : vector<8x1024xf32>
    %94 = tpu.matmul %93, %91, %cst_71 {dimension_numbers = #tpu.dot_dimension_numbers<[1], [0], [0], [1], [0, 0, 1, 1], [], []>} : vector<8x8xbf16>, vector<8x1024xbf16>, vector<8x1024xf32> -> vector<8x1024xf32>
    %95 = arith.addf %90, %94 : vector<8x1024xf32>
    %c0_72 = arith.constant 0 : index
    %c403 = arith.constant 403 : index
    %96 = vector.load %arg5[%c0_72, %c403] : memref<8x1792xbf16, #tpu.memory_space<vmem>>, vector<8x1024xbf16>
    %c17 = arith.constant 17 : index
    %c0_73 = arith.constant 0 : index
    %c0_74 = arith.constant 0 : index
    %97 = vector.load %arg2[%c17, %c0_73, %c0_74] : memref<27x8x8xbf16, #tpu.memory_space<vmem>>, vector<1x8x8xbf16>
    %98 = vector.shape_cast %97 : vector<1x8x8xbf16> to vector<8x8xbf16>
    %cst_75 = arith.constant dense<0.000000e+00> : vector<8x1024xf32>
    %99 = tpu.matmul %98, %96, %cst_75 {dimension_numbers = #tpu.dot_dimension_numbers<[1], [0], [0], [1], [0, 0, 1, 1], [], []>} : vector<8x8xbf16>, vector<8x1024xbf16>, vector<8x1024xf32> -> vector<8x1024xf32>
    %100 = arith.addf %95, %99 : vector<8x1024xf32>
    %c0_76 = arith.constant 0 : index
    %c689 = arith.constant 689 : index
    %101 = vector.load %arg5[%c0_76, %c689] : memref<8x1792xbf16, #tpu.memory_space<vmem>>, vector<8x1024xbf16>
    %c18 = arith.constant 18 : index
    %c0_77 = arith.constant 0 : index
    %c0_78 = arith.constant 0 : index
    %102 = vector.load %arg2[%c18, %c0_77, %c0_78] : memref<27x8x8xbf16, #tpu.memory_space<vmem>>, vector<1x8x8xbf16>
    %103 = vector.shape_cast %102 : vector<1x8x8xbf16> to vector<8x8xbf16>
    %cst_79 = arith.constant dense<0.000000e+00> : vector<8x1024xf32>
    %104 = tpu.matmul %103, %101, %cst_79 {dimension_numbers = #tpu.dot_dimension_numbers<[1], [0], [0], [1], [0, 0, 1, 1], [], []>} : vector<8x8xbf16>, vector<8x1024xbf16>, vector<8x1024xf32> -> vector<8x1024xf32>
    %105 = arith.addf %100, %104 : vector<8x1024xf32>
    %c0_80 = arith.constant 0 : index
    %c690 = arith.constant 690 : index
    %106 = vector.load %arg5[%c0_80, %c690] : memref<8x1792xbf16, #tpu.memory_space<vmem>>, vector<8x1024xbf16>
    %c19 = arith.constant 19 : index
    %c0_81 = arith.constant 0 : index
    %c0_82 = arith.constant 0 : index
    %107 = vector.load %arg2[%c19, %c0_81, %c0_82] : memref<27x8x8xbf16, #tpu.memory_space<vmem>>, vector<1x8x8xbf16>
    %108 = vector.shape_cast %107 : vector<1x8x8xbf16> to vector<8x8xbf16>
    %cst_83 = arith.constant dense<0.000000e+00> : vector<8x1024xf32>
    %109 = tpu.matmul %108, %106, %cst_83 {dimension_numbers = #tpu.dot_dimension_numbers<[1], [0], [0], [1], [0, 0, 1, 1], [], []>} : vector<8x8xbf16>, vector<8x1024xbf16>, vector<8x1024xf32> -> vector<8x1024xf32>
    %110 = arith.addf %105, %109 : vector<8x1024xf32>
    %c0_84 = arith.constant 0 : index
    %c691 = arith.constant 691 : index
    %111 = vector.load %arg5[%c0_84, %c691] : memref<8x1792xbf16, #tpu.memory_space<vmem>>, vector<8x1024xbf16>
    %c20 = arith.constant 20 : index
    %c0_85 = arith.constant 0 : index
    %c0_86 = arith.constant 0 : index
    %112 = vector.load %arg2[%c20, %c0_85, %c0_86] : memref<27x8x8xbf16, #tpu.memory_space<vmem>>, vector<1x8x8xbf16>
    %113 = vector.shape_cast %112 : vector<1x8x8xbf16> to vector<8x8xbf16>
    %cst_87 = arith.constant dense<0.000000e+00> : vector<8x1024xf32>
    %114 = tpu.matmul %113, %111, %cst_87 {dimension_numbers = #tpu.dot_dimension_numbers<[1], [0], [0], [1], [0, 0, 1, 1], [], []>} : vector<8x8xbf16>, vector<8x1024xbf16>, vector<8x1024xf32> -> vector<8x1024xf32>
    %115 = arith.addf %110, %114 : vector<8x1024xf32>
    %c0_88 = arith.constant 0 : index
    %c707 = arith.constant 707 : index
    %116 = vector.load %arg5[%c0_88, %c707] : memref<8x1792xbf16, #tpu.memory_space<vmem>>, vector<8x1024xbf16>
    %c21 = arith.constant 21 : index
    %c0_89 = arith.constant 0 : index
    %c0_90 = arith.constant 0 : index
    %117 = vector.load %arg2[%c21, %c0_89, %c0_90] : memref<27x8x8xbf16, #tpu.memory_space<vmem>>, vector<1x8x8xbf16>
    %118 = vector.shape_cast %117 : vector<1x8x8xbf16> to vector<8x8xbf16>
    %cst_91 = arith.constant dense<0.000000e+00> : vector<8x1024xf32>
    %119 = tpu.matmul %118, %116, %cst_91 {dimension_numbers = #tpu.dot_dimension_numbers<[1], [0], [0], [1], [0, 0, 1, 1], [], []>} : vector<8x8xbf16>, vector<8x1024xbf16>, vector<8x1024xf32> -> vector<8x1024xf32>
    %120 = arith.addf %115, %119 : vector<8x1024xf32>
    %c0_92 = arith.constant 0 : index
    %c708 = arith.constant 708 : index
    %121 = vector.load %arg5[%c0_92, %c708] : memref<8x1792xbf16, #tpu.memory_space<vmem>>, vector<8x1024xbf16>
    %c22 = arith.constant 22 : index
    %c0_93 = arith.constant 0 : index
    %c0_94 = arith.constant 0 : index
    %122 = vector.load %arg2[%c22, %c0_93, %c0_94] : memref<27x8x8xbf16, #tpu.memory_space<vmem>>, vector<1x8x8xbf16>
    %123 = vector.shape_cast %122 : vector<1x8x8xbf16> to vector<8x8xbf16>
    %cst_95 = arith.constant dense<0.000000e+00> : vector<8x1024xf32>
    %124 = tpu.matmul %123, %121, %cst_95 {dimension_numbers = #tpu.dot_dimension_numbers<[1], [0], [0], [1], [0, 0, 1, 1], [], []>} : vector<8x8xbf16>, vector<8x1024xbf16>, vector<8x1024xf32> -> vector<8x1024xf32>
    %125 = arith.addf %120, %124 : vector<8x1024xf32>
    %c0_96 = arith.constant 0 : index
    %c709 = arith.constant 709 : index
    %126 = vector.load %arg5[%c0_96, %c709] : memref<8x1792xbf16, #tpu.memory_space<vmem>>, vector<8x1024xbf16>
    %c23 = arith.constant 23 : index
    %c0_97 = arith.constant 0 : index
    %c0_98 = arith.constant 0 : index
    %127 = vector.load %arg2[%c23, %c0_97, %c0_98] : memref<27x8x8xbf16, #tpu.memory_space<vmem>>, vector<1x8x8xbf16>
    %128 = vector.shape_cast %127 : vector<1x8x8xbf16> to vector<8x8xbf16>
    %cst_99 = arith.constant dense<0.000000e+00> : vector<8x1024xf32>
    %129 = tpu.matmul %128, %126, %cst_99 {dimension_numbers = #tpu.dot_dimension_numbers<[1], [0], [0], [1], [0, 0, 1, 1], [], []>} : vector<8x8xbf16>, vector<8x1024xbf16>, vector<8x1024xf32> -> vector<8x1024xf32>
    %130 = arith.addf %125, %129 : vector<8x1024xf32>
    %c0_100 = arith.constant 0 : index
    %c725 = arith.constant 725 : index
    %131 = vector.load %arg5[%c0_100, %c725] : memref<8x1792xbf16, #tpu.memory_space<vmem>>, vector<8x1024xbf16>
    %c24 = arith.constant 24 : index
    %c0_101 = arith.constant 0 : index
    %c0_102 = arith.constant 0 : index
    %132 = vector.load %arg2[%c24, %c0_101, %c0_102] : memref<27x8x8xbf16, #tpu.memory_space<vmem>>, vector<1x8x8xbf16>
    %133 = vector.shape_cast %132 : vector<1x8x8xbf16> to vector<8x8xbf16>
    %cst_103 = arith.constant dense<0.000000e+00> : vector<8x1024xf32>
    %134 = tpu.matmul %133, %131, %cst_103 {dimension_numbers = #tpu.dot_dimension_numbers<[1], [0], [0], [1], [0, 0, 1, 1], [], []>} : vector<8x8xbf16>, vector<8x1024xbf16>, vector<8x1024xf32> -> vector<8x1024xf32>
    %135 = arith.addf %130, %134 : vector<8x1024xf32>
    %c0_104 = arith.constant 0 : index
    %c726 = arith.constant 726 : index
    %136 = vector.load %arg5[%c0_104, %c726] : memref<8x1792xbf16, #tpu.memory_space<vmem>>, vector<8x1024xbf16>
    %c25 = arith.constant 25 : index
    %c0_105 = arith.constant 0 : index
    %c0_106 = arith.constant 0 : index
    %137 = vector.load %arg2[%c25, %c0_105, %c0_106] : memref<27x8x8xbf16, #tpu.memory_space<vmem>>, vector<1x8x8xbf16>
    %138 = vector.shape_cast %137 : vector<1x8x8xbf16> to vector<8x8xbf16>
    %cst_107 = arith.constant dense<0.000000e+00> : vector<8x1024xf32>
    %139 = tpu.matmul %138, %136, %cst_107 {dimension_numbers = #tpu.dot_dimension_numbers<[1], [0], [0], [1], [0, 0, 1, 1], [], []>} : vector<8x8xbf16>, vector<8x1024xbf16>, vector<8x1024xf32> -> vector<8x1024xf32>
    %140 = arith.addf %135, %139 : vector<8x1024xf32>
    %c0_108 = arith.constant 0 : index
    %c727 = arith.constant 727 : index
    %141 = vector.load %arg5[%c0_108, %c727] : memref<8x1792xbf16, #tpu.memory_space<vmem>>, vector<8x1024xbf16>
    %c26 = arith.constant 26 : index
    %c0_109 = arith.constant 0 : index
    %c0_110 = arith.constant 0 : index
    %142 = vector.load %arg2[%c26, %c0_109, %c0_110] : memref<27x8x8xbf16, #tpu.memory_space<vmem>>, vector<1x8x8xbf16>
    %143 = vector.shape_cast %142 : vector<1x8x8xbf16> to vector<8x8xbf16>
    %cst_111 = arith.constant dense<0.000000e+00> : vector<8x1024xf32>
    %144 = tpu.matmul %143, %141, %cst_111 {dimension_numbers = #tpu.dot_dimension_numbers<[1], [0], [0], [1], [0, 0, 1, 1], [], []>} : vector<8x8xbf16>, vector<8x1024xbf16>, vector<8x1024xf32> -> vector<8x1024xf32>
    %145 = arith.addf %140, %144 : vector<8x1024xf32>
    %c0_112 = arith.constant 0 : index
    %c0_113 = arith.constant 0 : index
    %146 = vector.load %arg4[%c0_112, %c0_113] : memref<8x1024xf32, #tpu.memory_space<vmem>>, vector<8x1024xf32>
    tpu.vector_store %arg4[%c0_112, %c0_113], %145 {strides = array<i32>} : memref<8x1024xf32, #tpu.memory_space<vmem>>, vector<8x1024xf32>,
    return
  }
  func.func @transform_1(%arg0: i32) -> (i32, i32, i32) {
    %c0_i32 = arith.constant 0 : i32
    %c0_i32_0 = arith.constant 0 : i32
    %c0_i32_1 = arith.constant 0 : i32
    %c0_i32_2 = arith.constant 0 : i32
    return %c0_i32, %c0_i32_0, %c0_i32_1 : i32, i32, i32
  }
  func.func @transform_2(%arg0: i32) -> (i32, i32) {
    %c0_i32 = arith.constant 0 : i32
    %c0_i32_0 = arith.constant 0 : i32
    %c0_i32_1 = arith.constant 0 : i32
    return %c0_i32, %c0_i32_0 : i32, i32
  }
  func.func @transform_3(%arg0: i32) -> (i32, i32) {
    %c0_i32 = arith.constant 0 : i32
    %c0_i32_0 = arith.constant 0 : i32
    return %c0_i32, %arg0 : i32, i32
  }
}

</mosaic_0001>

<llo_original>
// kernel: tpu_custom_call.1
$region0: #{tpu_custom_call.1}
  #allocation0 [shape = 'u32[]', space=smem, size = 0x4, offset = 0x4, fixed_abs, tag = 'smem constant byte address 0x4 - core index']
  #allocation1 [shape = 'u32[144,128]{1,0:T(1,128)}', space=vmem, size = 0x12000, scoped, tag = 'internal scratch']
  #allocation2 [shape = 'bf16[8,1792]{1,0:T(8,128)(2,1)}', space=vmem, size = 0x7000, scoped, tag = 'scratch operand']
  #allocation3 [shape = 's32[1]{0}', space=sflag, size = 0x4, scoped, tag = 'scratch operand']
  #allocation6 [shape = 's32[]', space=sflag, size = 0x4, offset = 0, fixed_abs, tag = 'sflag constant byte address 0x0 - dummy sync flag']
  #allocation7 [shape = 's32[]', space=sflag, size = 0x4, offset = 0, fixed_abs, tag = 'sflag constant byte address 0x0 - dummy sync flag']
  #allocation8 [shape = 'u32[]', space=smem, size = 0x4, offset = 0x44, fixed_abs, tag = 'smem constant byte address 0x44 - assertion arg 0']
  #allocation9 [shape = 'u32[]', space=smem, size = 0x4, offset = 0x48, fixed_abs, tag = 'smem constant byte address 0x48 - assertion arg 1']
  %s0 = inlined_call_operand.hbm [shape: bf16[8,4864], index: 0, kind: input, shape index: {}]
  %s1 = inlined_call_operand.vmem [shape: bf16[27,8,8], index: 1, kind: input, shape index: {}]
  %s2 = inlined_call_operand.vmem [shape: f32[8,1], index: 2, kind: input, shape index: {}]
  %s3 = inlined_call_operand.hbm [shape: f32[8,4096], index: 3, kind: output, shape index: {}]
  %s4 = sld [smem:[#allocation0]]
  $region45: #{tpu_custom_call.1} parent=0
    _
  %s6 = ssub.s32 1, %s4
  %s7 = scalar_select 0, %s6, %s4
  $region1: #{tpu_custom_call.1} parent=0
    #allocation4 [shape = 'u8[65536]{0}', space=vmem, size = 0x10000, scoped, tag = 'output window, operand 0']
    #allocation5 [shape = 's32[2]{0}', space=sflag, size = 0x8, scoped, tag = 'scoped memory for tpu_custom_call.1']
    %8 = vsyncpa [#allocation5], 0
    %s9 = scalar_lea.sflag [#allocation5], 1
    %10 = vsyncpa %s9, 0
    loop: start=0, step=1, limit=6
    $region2: #{tpu_custom_call.1} parent=1 // loop_pre_header
      _
    $region3: #{tpu_custom_call.1} parent=1 // loop_header
      %s12 = sphi 0, %s16
      %p13 = scmp.ge.s32.totalorder %s12, 6
      %s20 = sphi 0, %s20
      %s22 = sphi 0, %s20
      %s23 = sphi 0, %s22
      %s37 = sphi 0, %s23
      %s41 = sphi 0, %s41
      %s43 = sphi 0, %s41
      %s44 = sphi 0, %s43
      %s58 = sphi 0, %s44
      %s64 = sphi 0, %s66
      %s67 = sphi 0, %s64
      %s68 = sphi 0, %s67
      %s84 = sphi 0, %s68
    $region4: #{tpu_custom_call.1} parent=1 // loop_header_branch
      %15 = sbr.rel (%p13) target = $region8
    $region5: #{tpu_custom_call.1} parent=1 // loop_body
      %s17 = ssub.s32 %s12, 1
      %s18 = ssub.s32 %s12, 2
      %s19 = sadd.s32 %s12, 1
      %s21 = sadd.s32 %s20, 1
      %p24 = scmp.eq.s32.totalorder %s12, 3
      %p25 = scmp.ne.s32.totalorder %s20, %s22
      %p26 = scmp.eq.s32.totalorder %s12, 0
      %p27 = por %p25, %p26
      %p28 = scmp.ne.s32.totalorder %s20, %s22
      %p29 = scmp.eq.s32.totalorder %s17, 3
      %p30 = por %p28, %p29
      %p31 = scmp.ne.s32.totalorder %s22, %s23
      %p32 = scmp.eq.s32.totalorder %s17, 0
      %p33 = por %p31, %p32
      %p34 = scmp.ne.s32.totalorder %s22, %s23
      %p35 = scmp.eq.s32.totalorder %s18, 3
      %p36 = por %p34, %p35
      %p38 = scmp.ne.s32.totalorder %s23, %s37
      %p39 = scmp.eq.s32.totalorder %s18, 0
      %p40 = por %p38, %p39
      %s42 = sadd.s32 %s41, 1
      %p45 = scmp.eq.s32.totalorder %s12, 3
      %p46 = scmp.ne.s32.totalorder %s41, %s43
      %p47 = scmp.eq.s32.totalorder %s12, 0
      %p48 = por %p46, %p47
      %p49 = scmp.ne.s32.totalorder %s41, %s43
      %p50 = scmp.eq.s32.totalorder %s17, 3
      %p51 = por %p49, %p50
      %p52 = scmp.ne.s32.totalorder %s43, %s44
      %p53 = scmp.eq.s32.totalorder %s17, 0
      %p54 = por %p52, %p53
      %p55 = scmp.ne.s32.totalorder %s43, %s44
      %p56 = scmp.eq.s32.totalorder %s18, 3
      %p57 = por %p55, %p56
      %p59 = scmp.ne.s32.totalorder %s44, %s58
      %p60 = scmp.eq.s32.totalorder %s18, 0
      %p61 = por %p59, %p60
      %s62 = ssub.s32 %s12, %s19
      %p63 = scmp.eq.s32.totalorder %s62, 0
      %s65 = sadd.s32 %s64, 1
      %s66 = scalar_select %p63, %s64, %s65
      %p69 = pneg %p63
      %p70 = scmp.eq.s32.totalorder %s12, 3
      %p71 = por %p69, %p70
      %p72 = scmp.ne.s32.totalorder %s64, %s67
      %p73 = scmp.eq.s32.totalorder %s12, 0
      %p74 = por %p72, %p73
      %p75 = scmp.ne.s32.totalorder %s64, %s67
      %p76 = scmp.eq.s32.totalorder %s17, 3
      %p77 = por %p75, %p76
      %p78 = scmp.ne.s32.totalorder %s67, %s68
      %p79 = scmp.eq.s32.totalorder %s17, 0
      %p80 = por %p78, %p79
      %p81 = scmp.ne.s32.totalorder %s67, %s68
      %p82 = scmp.eq.s32.totalorder %s18, 3
      %p83 = por %p81, %p82
      %p85 = scmp.ne.s32.totalorder %s68, %s84
      %p86 = scmp.eq.s32.totalorder %s18, 0
      %p87 = por %p85, %p86
      %p88 = scmp.le.s32.totalorder 1, %s12
      %p89 = scmp.lt.s32.totalorder %s12, 5
      %p90 = pnand %p88, %p89
      %p91 = pneg %p90
      // Predicated region
      $region9: #{tpu_custom_call.1} parent=5 // pred_check
        _
      $region10: #{tpu_custom_call.1} parent=5 // pred_check_branch
        %93 = sbr.rel (%p90) target = $region12
      $region11: #{tpu_custom_call.1} parent=5 // pred_region
        %s94 = ssub.s32 %s12, 1
        // Predicated region
        $region13: #{tpu_custom_call.1} parent=11 // pred_check
          %p95 = pneg %p33
        $region14: #{tpu_custom_call.1} parent=11 // pred_check_branch
          %97 = sbr.rel (%p95) target = $region16
        $region15: #{tpu_custom_call.1} parent=11 // pred_region
          _
        $region16: #{tpu_custom_call.1} parent=11 // pred_fallthru
          _
        // Predicated region
        $region17: #{tpu_custom_call.1} parent=11 // pred_check
          %p98 = pneg %p54
        $region18: #{tpu_custom_call.1} parent=11 // pred_check_branch
          %100 = sbr.rel (%p98) target = $region20
        $region19: #{tpu_custom_call.1} parent=11 // pred_region
          _
        $region20: #{tpu_custom_call.1} parent=11 // pred_fallthru
          _
      $region12: #{tpu_custom_call.1} parent=5 // pred_fallthru
        _
      %p101 = scmp.lt.s32.totalorder %s12, 4
      // Predicated region
      $region21: #{tpu_custom_call.1} parent=5 // pred_check
        %p102 = pneg %p101
      $region22: #{tpu_custom_call.1} parent=5 // pred_check_branch
        %104 = sbr.rel (%p102) target = $region24
      $region23: #{tpu_custom_call.1} parent=5 // pred_region
        _
      $region24: #{tpu_custom_call.1} parent=5 // pred_fallthru
        _
      %p105 = scmp.le.s32.totalorder 1, %s12
      %p106 = scmp.lt.s32.totalorder %s12, 5
      %p107 = pnand %p105, %p106
      %p108 = pneg %p107
      // Predicated region
      $region25: #{tpu_custom_call.1} parent=5 // pred_check
        _
      $region26: #{tpu_custom_call.1} parent=5 // pred_check_branch
        %110 = sbr.rel (%p107) target = $region28
      $region27: #{tpu_custom_call.1} parent=5 // pred_region
        %s111 = ssub.s32 %s12, 1
        %p112 = pneg %p33
        %p113 = pneg %p30
        %p114 = pneg %p54
        %p115 = pneg %p51
        %p116 = pneg %p80
        %p117 = pneg %p77
        %s118 = sand.u32 %s67, 1
        %s119 = scalar_lea.sflag [#allocation5], %s118
        %s120 = sand.u32 %s67, 1
        %s121 = smul.addr %s120, 64
        %s122 = scalar_lea.vmem [#allocation4], %s121
        %s123 = smul.u32 8, %s17
        %s125 = smul.u32 %s17, 1024
        %s126 = sshra.s32 %s125, 7
        %s127 = sand.u32 %s125, 127
        %s128 = smul.addr %s126, 64
        %s129 = scalar_lea.hbm %s0, %s128
        // Predicated region
        $region29: #{tpu_custom_call.1} parent=27 // pred_check
          _
        $region30: #{tpu_custom_call.1} parent=27 // pred_check_branch
          %131 = sbr.rel target = $region32
        $region31: #{tpu_custom_call.1} parent=27 // pred_region
          %132 = sst [smem:[#allocation8]] [#allocation7]
          %133 = sst [smem:[#allocation9]] [#allocation6]
        $region32: #{tpu_custom_call.1} parent=27 // pred_fallthru
          _
        %135 = shalt.err (0)
        %s137 = sshll.u32 [#allocation2], 4
        %s138 = int_to_ptr.vmem [resolvable:$true] %s137
        %140 = dma.hbm_to_vmem [thread:$0]  %s129, 896, %s138, [#allocation3]
        %s141 = smul.u32 4, 1
        %s142 = smul.u32 %s141, 14
        %s143 = sshll.u32 %s142, 4
        %144 = dma.done [#allocation3], %s143
        %v145 = vld [vmem:[%s2] sm:$0xff]
        %147 = vset.pattern.permute.xlu0 0
        %148 = vperm.xlu0 %147, %v145
        %v149 = vpop.permute.xlu0 %148
        %v151 = vld [vmem:[#allocation2] sm:$0xff]
        %v152 = vld [vmem:[#allocation2 + $0x8] sm:$0xff]
        %v153 = vld [vmem:[#allocation2 + $0x10] sm:$0xff]
        %v154 = vld [vmem:[#allocation2 + $0x18] sm:$0xff]
        %v155 = vld [vmem:[#allocation2 + $0x20] sm:$0xf]
        %v156 = vld [vmem:[%s1] sm:$0xf]
        %v162 = vunpack.c.l.b16 %v151
        %v163 = vunpack.c.h.b16 %v151
        %v164 = vunpack.c.l.b16 %v152
        %v165 = vunpack.c.h.b16 %v152
        %v166 = vunpack.c.l.b16 %v153
        %v167 = vunpack.c.h.b16 %v153
        %v168 = vunpack.c.l.b16 %v154
        %v169 = vunpack.c.h.b16 %v154
        %v170 = vunpack.c.l.b16 %v155
        %v171 = vpack.c.b16 %v162, %v162
        %v172 = vpack.c.b16 %v163, %v163
        %v173 = vpack.c.b16 %v164, %v164
        %v174 = vpack.c.b16 %v165, %v165
        %v175 = vpack.c.b16 %v166, %v166
        %v176 = vpack.c.b16 %v167, %v167
        %v177 = vpack.c.b16 %v168, %v168
        %v178 = vpack.c.b16 %v169, %v169
        %v179 = vpack.c.b16 %v170, %v170
        %180 = vrot.lane.b32.xlu0 %v171, 87
        %v181 = vpop.permute.xlu0 %180
        %182 = vrot.lane.b32.xlu0 %v172, 87
        %v183 = vpop.permute.xlu0 %182
        %184 = vrot.lane.b32.xlu0 %v173, 87
        %v185 = vpop.permute.xlu0 %184
        %186 = vrot.lane.b32.xlu0 %v174, 87
        %v187 = vpop.permute.xlu0 %186
        %188 = vrot.lane.b32.xlu0 %v175, 87
        %v189 = vpop.permute.xlu0 %188
        %190 = vrot.lane.b32.xlu0 %v176, 87
        %v191 = vpop.permute.xlu0 %190
        %192 = vrot.lane.b32.xlu0 %v177, 87
        %v193 = vpop.permute.xlu0 %192
        %194 = vrot.lane.b32.xlu0 %v178, 87
        %v195 = vpop.permute.xlu0 %194
        %196 = vrot.lane.b32.xlu0 %v179, 87
        %v197 = vpop.permute.xlu0 %196
        %vm198 = vcmask 711680
        %v199 = vsel %vm198, %v181, %v183
        %v200 = vsel %vm198, %v183, %v185
        %v201 = vsel %vm198, %v185, %v187
        %v202 = vsel %vm198, %v187, %v189
        %v203 = vsel %vm198, %v189, %v191
        %v204 = vsel %vm198, %v191, %v193
        %v205 = vsel %vm198, %v193, %v195
        %v206 = vsel %vm198, %v195, %v197
        %vm207 = vcmask 64512
        %v209 = vsel %vm207, %v156, 0
        %vm211 = vcmask 1043456
        %v213 = vsel %vm211, %v199, 0
        %v216 = vsel %vm211, %v200, 0
        %v219 = vsel %vm211, %v201, 0
        %v222 = vsel %vm211, %v202, 0
        %v225 = vsel %vm211, %v203, 0
        %v228 = vsel %vm211, %v204, 0
        %v231 = vsel %vm211, %v205, 0
        %v234 = vsel %vm211, %v206, 0
        %236 = vmatprep.subr.bf16.mxu0 0
        %237 = vmatpush1.bf16.msra.mxu0 0
        %238 = vmatprep.subr.bf16.mxu0 0
        %239 = vmatpush1.bf16.msra.mxu0 0
        %240 = vmatprep.subr.bf16.mxu0 0
        %241 = vmatpush1.bf16.msra.mxu0 0
        %242 = vmatprep.subr.bf16.mxu0 0
        %243 = vmatpush1.bf16.msra.mxu0 0
        %244 = vmatprep.subr.bf16.mxu0 0
        %245 = vmatpush1.bf16.msra.mxu0 0
        %246 = vmatprep.subr.bf16.mxu0 0
        %247 = vmatpush1.bf16.msra.mxu0 0
        %248 = vmatprep.subr.bf16.mxu0 0
        %249 = vmatpush1.bf16.msra.mxu0 0
        %250 = vmatprep.subr.bf16.mxu0 %v216
        %251 = vmatpush1.bf16.msra.mxu0 %v213
        %252 = vmatprep.subr.bf16.mxu0 0
        %253 = vmatpush2.bf16.msra.mxu0 0
        %254 = vmatprep.subr.bf16.mxu0 0
        %255 = vmatpush2.bf16.msra.mxu0 0
        %256 = vmatprep.subr.bf16.mxu0 0
        %257 = vmatpush2.bf16.msra.mxu0 0
        %258 = vmatprep.subr.bf16.mxu0 0
        %259 = vmatpush2.bf16.msra.mxu0 0
        %260 = vmatprep.subr.bf16.mxu0 0
        %261 = vmatpush2.bf16.msra.mxu0 0
        %262 = vmatprep.subr.bf16.mxu0 0
        %263 = vmatpush2.bf16.msra.mxu0 0
        %264 = vmatprep.subr.bf16.mxu0 0
        %265 = vmatpush2.bf16.msra.mxu0 0
        %266 = vmatprep.subr.bf16.mxu0 0
        %267 = vmatpush2.bf16.msra.mxu0 0
        %268 = vmatprep.mubr.bf16.mxu0 0
        %269 = vmatmul.mubr.bf16.gmra.mxu0 %v209
        %v270 = vpop.f32.mrf.mxu0
        %v271 = vadd.f32 0.0, %v270
        %v272 = vpop.f32.mrf.mxu0
        %v273 = vadd.f32 0.0, %v272
        %v274 = vpop.f32.mrf.mxu0
        %v275 = vpop.f32.mrf.mxu0
        %276 = vdwg.mxu0
        %277 = vmatprep.subr.bf16.mxu0 0
        %278 = vmatpush1.bf16.msra.mxu0 0
        %279 = vmatprep.subr.bf16.mxu0 0
        %280 = vmatpush1.bf16.msra.mxu0 0
        %281 = vmatprep.subr.bf16.mxu0 0
        %282 = vmatpush1.bf16.msra.mxu0 0
        %283 = vmatprep.subr.bf16.mxu0 0
        %284 = vmatpush1.bf16.msra.mxu0 0
        %285 = vmatprep.subr.bf16.mxu0 0
        %286 = vmatpush1.bf16.msra.mxu0 0
        %287 = vmatprep.subr.bf16.mxu0 0
        %288 = vmatpush1.bf16.msra.mxu0 0
        %289 = vmatprep.subr.bf16.mxu0 0
        %290 = vmatpush1.bf16.msra.mxu0 0
        %291 = vmatprep.subr.bf16.mxu0 %v222
        %292 = vmatpush1.bf16.msra.mxu0 %v219
        %293 = vmatprep.subr.bf16.mxu0 0
        %294 = vmatpush2.bf16.msra.mxu0 0
        %295 = vmatprep.subr.bf16.mxu0 0
        %296 = vmatpush2.bf16.msra.mxu0 0
        %297 = vmatprep.subr.bf16.mxu0 0
        %298 = vmatpush2.bf16.msra.mxu0 0
        %299 = vmatprep.subr.bf16.mxu0 0
        %300 = vmatpush2.bf16.msra.mxu0 0
        %301 = vmatprep.subr.bf16.mxu0 0
        %302 = vmatpush2.bf16.msra.mxu0 0
        %303 = vmatprep.subr.bf16.mxu0 0
        %304 = vmatpush2.bf16.msra.mxu0 0
        %305 = vmatprep.subr.bf16.mxu0 0
        %306 = vmatpush2.bf16.msra.mxu0 0
        %307 = vmatprep.subr.bf16.mxu0 0
        %308 = vmatpush2.bf16.msra.mxu0 0
        %309 = vmatprep.mubr.bf16.mxu0 0
        %310 = vmatmul.mubr.bf16.gmra.mxu0 %v209
        %v311 = vpop.f32.mrf.mxu0
        %v312 = vadd.f32 0.0, %v311
        %v313 = vpop.f32.mrf.mxu0
        %v314 = vadd.f32 0.0, %v313
        %v315 = vpop.f32.mrf.mxu0
        %v316 = vpop.f32.mrf.mxu0
        %317 = vdwg.mxu0
        %318 = vmatprep.subr.bf16.mxu0 0
        %319 = vmatpush1.bf16.msra.mxu0 0
        %320 = vmatprep.subr.bf16.mxu0 0
        %321 = vmatpush1.bf16.msra.mxu0 0
        %322 = vmatprep.subr.bf16.mxu0 0
        %323 = vmatpush1.bf16.msra.mxu0 0
        %324 = vmatprep.subr.bf16.mxu0 0
        %325 = vmatpush1.bf16.msra.mxu0 0
        %326 = vmatprep.subr.bf16.mxu0 0
        %327 = vmatpush1.bf16.msra.mxu0 0
        %328 = vmatprep.subr.bf16.mxu0 0
        %329 = vmatpush1.bf16.msra.mxu0 0
        %330 = vmatprep.subr.bf16.mxu0 0
        %331 = vmatpush1.bf16.msra.mxu0 0
        %332 = vmatprep.subr.bf16.mxu0 %v228
        %333 = vmatpush1.bf16.msra.mxu0 %v225
        %334 = vmatprep.subr.bf16.mxu0 0
        %335 = vmatpush2.bf16.msra.mxu0 0
        %336 = vmatprep.subr.bf16.mxu0 0
        %337 = vmatpush2.bf16.msra.mxu0 0
        %338 = vmatprep.subr.bf16.mxu0 0
        %339 = vmatpush2.bf16.msra.mxu0 0
        %340 = vmatprep.subr.bf16.mxu0 0
        %341 = vmatpush2.bf16.msra.mxu0 0
        %342 = vmatprep.subr.bf16.mxu0 0
        %343 = vmatpush2.bf16.msra.mxu0 0
        %344 = vmatprep.subr.bf16.mxu0 0
        %345 = vmatpush2.bf16.msra.mxu0 0
        %346 = vmatprep.subr.bf16.mxu0 0
        %347 = vmatpush2.bf16.msra.mxu0 0
        %348 = vmatprep.subr.bf16.mxu0 0
        %349 = vmatpush2.bf16.msra.mxu0 0
        %350 = vmatprep.mubr.bf16.mxu0 0
        %351 = vmatmul.mubr.bf16.gmra.mxu0 %v209
        %v352 = vpop.f32.mrf.mxu0
        %v353 = vadd.f32 0.0, %v352
        %v354 = vpop.f32.mrf.mxu0
        %v355 = vadd.f32 0.0, %v354
        %v356 = vpop.f32.mrf.mxu0
        %v357 = vpop.f32.mrf.mxu0
        %358 = vdwg.mxu0
        %359 = vmatprep.subr.bf16.mxu0 0
        %360 = vmatpush1.bf16.msra.mxu0 0
        %361 = vmatprep.subr.bf16.mxu0 0
        %362 = vmatpush1.bf16.msra.mxu0 0
        %363 = vmatprep.subr.bf16.mxu0 0
        %364 = vmatpush1.bf16.msra.mxu0 0
        %365 = vmatprep.subr.bf16.mxu0 0
        %366 = vmatpush1.bf16.msra.mxu0 0
        %367 = vmatprep.subr.bf16.mxu0 0
        %368 = vmatpush1.bf16.msra.mxu0 0
        %369 = vmatprep.subr.bf16.mxu0 0
        %370 = vmatpush1.bf16.msra.mxu0 0
        %371 = vmatprep.subr.bf16.mxu0 0
        %372 = vmatpush1.bf16.msra.mxu0 0
        %373 = vmatprep.subr.bf16.mxu0 %v234
        %374 = vmatpush1.bf16.msra.mxu0 %v231
        %375 = vmatprep.subr.bf16.mxu0 0
        %376 = vmatpush2.bf16.msra.mxu0 0
        %377 = vmatprep.subr.bf16.mxu0 0
        %378 = vmatpush2.bf16.msra.mxu0 0
        %379 = vmatprep.subr.bf16.mxu0 0
        %380 = vmatpush2.bf16.msra.mxu0 0
        %381 = vmatprep.subr.bf16.mxu0 0
        %382 = vmatpush2.bf16.msra.mxu0 0
        %383 = vmatprep.subr.bf16.mxu0 0
        %384 = vmatpush2.bf16.msra.mxu0 0
        %385 = vmatprep.subr.bf16.mxu0 0
        %386 = vmatpush2.bf16.msra.mxu0 0
        %387 = vmatprep.subr.bf16.mxu0 0
        %388 = vmatpush2.bf16.msra.mxu0 0
        %389 = vmatprep.subr.bf16.mxu0 0
        %390 = vmatpush2.bf16.msra.mxu0 0
        %391 = vmatprep.mubr.bf16.mxu0 0
        %392 = vmatmul.mubr.bf16.gmra.mxu0 %v209
        %v393 = vpop.f32.mrf.mxu0
        %v394 = vadd.f32 0.0, %v393
        %v395 = vpop.f32.mrf.mxu0
        %v396 = vadd.f32 0.0, %v395
        %v397 = vpop.f32.mrf.mxu0
        %v398 = vpop.f32.mrf.mxu0
        %399 = vdwg.mxu0
        %v400 = vadd.f32 %v149, %v271
        %v401 = vadd.f32 %v149, %v273
        %v402 = vadd.f32 %v149, %v312
        %v403 = vadd.f32 %v149, %v314
        %v404 = vadd.f32 %v149, %v353
        %v405 = vadd.f32 %v149, %v355
        %v406 = vadd.f32 %v149, %v394
        %v407 = vadd.f32 %v149, %v396
        %s408 = scalar_lea.vmem %s1, 4
        %v409 = vld [vmem:[%s408] sm:$0xf]
        %410 = vrot.lane.b32.xlu0 %v171, 86
        %v411 = vpop.permute.xlu0 %410
        %412 = vrot.lane.b32.xlu0 %v172, 86
        %v413 = vpop.permute.xlu0 %412
        %414 = vrot.lane.b32.xlu0 %v173, 86
        %v415 = vpop.permute.xlu0 %414
        %416 = vrot.lane.b32.xlu0 %v174, 86
        %v417 = vpop.permute.xlu0 %416
        %418 = vrot.lane.b32.xlu0 %v175, 86
        %v419 = vpop.permute.xlu0 %418
        %420 = vrot.lane.b32.xlu0 %v176, 86
        %v421 = vpop.permute.xlu0 %420
        %422 = vrot.lane.b32.xlu0 %v177, 86
        %v423 = vpop.permute.xlu0 %422
        %424 = vrot.lane.b32.xlu0 %v178, 86
        %v425 = vpop.permute.xlu0 %424
        %426 = vrot.lane.b32.xlu0 %v179, 86
        %v427 = vpop.permute.xlu0 %426
        %vm428 = vcmask 703488
        %v429 = vsel %vm428, %v411, %v413
        %v430 = vsel %vm428, %v413, %v415
        %v431 = vsel %vm428, %v415, %v417
        %v432 = vsel %vm428, %v417, %v419
        %v433 = vsel %vm428, %v419, %v421
        %v434 = vsel %vm428, %v421, %v423
        %v435 = vsel %vm428, %v423, %v425
        %v436 = vsel %vm428, %v425, %v427
        %v438 = vsel %vm207, %v409, 0
        %v441 = vsel %vm211, %v429, 0
        %v444 = vsel %vm211, %v430, 0
        %v447 = vsel %vm211, %v431, 0
        %v450 = vsel %vm211, %v432, 0
        %v453 = vsel %vm211, %v433, 0
        %v456 = vsel %vm211, %v434, 0
        %v459 = vsel %vm211, %v435, 0
        %v462 = vsel %vm211, %v436, 0
        %464 = vmatprep.subr.bf16.mxu0 0
        %465 = vmatpush1.bf16.msra.mxu0 0
        %466 = vmatprep.subr.bf16.mxu0 0
        %467 = vmatpush1.bf16.msra.mxu0 0
        %468 = vmatprep.subr.bf16.mxu0 0
        %469 = vmatpush1.bf16.msra.mxu0 0
        %470 = vmatprep.subr.bf16.mxu0 0
        %471 = vmatpush1.bf16.msra.mxu0 0
        %472 = vmatprep.subr.bf16.mxu0 0
        %473 = vmatpush1.bf16.msra.mxu0 0
        %474 = vmatprep.subr.bf16.mxu0 0
        %475 = vmatpush1.bf16.msra.mxu0 0
        %476 = vmatprep.subr.bf16.mxu0 0
        %477 = vmatpush1.bf16.msra.mxu0 0
        %478 = vmatprep.subr.bf16.mxu0 %v444
        %479 = vmatpush1.bf16.msra.mxu0 %v441
        %480 = vmatprep.subr.bf16.mxu0 0
        %481 = vmatpush2.bf16.msra.mxu0 0
        %482 = vmatprep.subr.bf16.mxu0 0
        %483 = vmatpush2.bf16.msra.mxu0 0
        %484 = vmatprep.subr.bf16.mxu0 0
        %485 = vmatpush2.bf16.msra.mxu0 0
        %486 = vmatprep.subr.bf16.mxu0 0
        %487 = vmatpush2.bf16.msra.mxu0 0
        %488 = vmatprep.subr.bf16.mxu0 0
        %489 = vmatpush2.bf16.msra.mxu0 0
        %490 = vmatprep.subr.bf16.mxu0 0
        %491 = vmatpush2.bf16.msra.mxu0 0
        %492 = vmatprep.subr.bf16.mxu0 0
        %493 = vmatpush2.bf16.msra.mxu0 0
        %494 = vmatprep.subr.bf16.mxu0 0
        %495 = vmatpush2.bf16.msra.mxu0 0
        %496 = vmatprep.mubr.bf16.mxu0 0
        %497 = vmatmul.mubr.bf16.gmra.mxu0 %v438
        %v498 = vpop.f32.mrf.mxu0
        %v499 = vadd.f32 0.0, %v498
        %v500 = vpop.f32.mrf.mxu0
        %v501 = vadd.f32 0.0, %v500
        %v502 = vpop.f32.mrf.mxu0
        %v503 = vpop.f32.mrf.mxu0
        %504 = vdwg.mxu0
        %505 = vmatprep.subr.bf16.mxu0 0
        %506 = vmatpush1.bf16.msra.mxu0 0
        %507 = vmatprep.subr.bf16.mxu0 0
        %508 = vmatpush1.bf16.msra.mxu0 0
        %509 = vmatprep.subr.bf16.mxu0 0
        %510 = vmatpush1.bf16.msra.mxu0 0
        %511 = vmatprep.subr.bf16.mxu0 0
        %512 = vmatpush1.bf16.msra.mxu0 0
        %513 = vmatprep.subr.bf16.mxu0 0
        %514 = vmatpush1.bf16.msra.mxu0 0
        %515 = vmatprep.subr.bf16.mxu0 0
        %516 = vmatpush1.bf16.msra.mxu0 0
        %517 = vmatprep.subr.bf16.mxu0 0
        %518 = vmatpush1.bf16.msra.mxu0 0
        %519 = vmatprep.subr.bf16.mxu0 %v450
        %520 = vmatpush1.bf16.msra.mxu0 %v447
        %521 = vmatprep.subr.bf16.mxu0 0
        %522 = vmatpush2.bf16.msra.mxu0 0
        %523 = vmatprep.subr.bf16.mxu0 0
        %524 = vmatpush2.bf16.msra.mxu0 0
        %525 = vmatprep.subr.bf16.mxu0 0
        %526 = vmatpush2.bf16.msra.mxu0 0
        %527 = vmatprep.subr.bf16.mxu0 0
        %528 = vmatpush2.bf16.msra.mxu0 0
        %529 = vmatprep.subr.bf16.mxu0 0
        %530 = vmatpush2.bf16.msra.mxu0 0
        %531 = vmatprep.subr.bf16.mxu0 0
        %532 = vmatpush2.bf16.msra.mxu0 0
        %533 = vmatprep.subr.bf16.mxu0 0
        %534 = vmatpush2.bf16.msra.mxu0 0
        %535 = vmatprep.subr.bf16.mxu0 0
        %536 = vmatpush2.bf16.msra.mxu0 0
        %537 = vmatprep.mubr.bf16.mxu0 0
        %538 = vmatmul.mubr.bf16.gmra.mxu0 %v438
        %v539 = vpop.f32.mrf.mxu0
        %v540 = vadd.f32 0.0, %v539
        %v541 = vpop.f32.mrf.mxu0
        %v542 = vadd.f32 0.0, %v541
        %v543 = vpop.f32.mrf.mxu0
        %v544 = vpop.f32.mrf.mxu0
        %545 = vdwg.mxu0
        %546 = vmatprep.subr.bf16.mxu0 0
        %547 = vmatpush1.bf16.msra.mxu0 0
        %548 = vmatprep.subr.bf16.mxu0 0
        %549 = vmatpush1.bf16.msra.mxu0 0
        %550 = vmatprep.subr.bf16.mxu0 0
        %551 = vmatpush1.bf16.msra.mxu0 0
        %552 = vmatprep.subr.bf16.mxu0 0
        %553 = vmatpush1.bf16.msra.mxu0 0
        %554 = vmatprep.subr.bf16.mxu0 0
        %555 = vmatpush1.bf16.msra.mxu0 0
        %556 = vmatprep.subr.bf16.mxu0 0
        %557 = vmatpush1.bf16.msra.mxu0 0
        %558 = vmatprep.subr.bf16.mxu0 0
        %559 = vmatpush1.bf16.msra.mxu0 0
        %560 = vmatprep.subr.bf16.mxu0 %v456
        %561 = vmatpush1.bf16.msra.mxu0 %v453
        %562 = vmatprep.subr.bf16.mxu0 0
        %563 = vmatpush2.bf16.msra.mxu0 0
        %564 = vmatprep.subr.bf16.mxu0 0
        %565 = vmatpush2.bf16.msra.mxu0 0
        %566 = vmatprep.subr.bf16.mxu0 0
        %567 = vmatpush2.bf16.msra.mxu0 0
        %568 = vmatprep.subr.bf16.mxu0 0
        %569 = vmatpush2.bf16.msra.mxu0 0
        %570 = vmatprep.subr.bf16.mxu0 0
        %571 = vmatpush2.bf16.msra.mxu0 0
        %572 = vmatprep.subr.bf16.mxu0 0
        %573 = vmatpush2.bf16.msra.mxu0 0
        %574 = vmatprep.subr.bf16.mxu0 0
        %575 = vmatpush2.bf16.msra.mxu0 0
        %576 = vmatprep.subr.bf16.mxu0 0
        %577 = vmatpush2.bf16.msra.mxu0 0
        %578 = vmatprep.mubr.bf16.mxu0 0
        %579 = vmatmul.mubr.bf16.gmra.mxu0 %v438
        %v580 = vpop.f32.mrf.mxu0
        %v581 = vadd.f32 0.0, %v580
        %v582 = vpop.f32.mrf.mxu0
        %v583 = vadd.f32 0.0, %v582
        %v584 = vpop.f32.mrf.mxu0
        %v585 = vpop.f32.mrf.mxu0
        %586 = vdwg.mxu0
        %587 = vmatprep.subr.bf16.mxu0 0
        %588 = vmatpush1.bf16.msra.mxu0 0
        %589 = vmatprep.subr.bf16.mxu0 0
        %590 = vmatpush1.bf16.msra.mxu0 0
        %591 = vmatprep.subr.bf16.mxu0 0
        %592 = vmatpush1.bf16.msra.mxu0 0
        %593 = vmatprep.subr.bf16.mxu0 0
        %594 = vmatpush1.bf16.msra.mxu0 0
        %595 = vmatprep.subr.bf16.mxu0 0
        %596 = vmatpush1.bf16.msra.mxu0 0
        %597 = vmatprep.subr.bf16.mxu0 0
        %598 = vmatpush1.bf16.msra.mxu0 0
        %599 = vmatprep.subr.bf16.mxu0 0
        %600 = vmatpush1.bf16.msra.mxu0 0
        %601 = vmatprep.subr.bf16.mxu0 %v462
        %602 = vmatpush1.bf16.msra.mxu0 %v459
        %603 = vmatprep.subr.bf16.mxu0 0
        %604 = vmatpush2.bf16.msra.mxu0 0
        %605 = vmatprep.subr.bf16.mxu0 0
        %606 = vmatpush2.bf16.msra.mxu0 0
        %607 = vmatprep.subr.bf16.mxu0 0
        %608 = vmatpush2.bf16.msra.mxu0 0
        %609 = vmatprep.subr.bf16.mxu0 0
        %610 = vmatpush2.bf16.msra.mxu0 0
        %611 = vmatprep.subr.bf16.mxu0 0
        %612 = vmatpush2.bf16.msra.mxu0 0
        %613 = vmatprep.subr.bf16.mxu0 0
        %614 = vmatpush2.bf16.msra.mxu0 0
        %615 = vmatprep.subr.bf16.mxu0 0
        %616 = vmatpush2.bf16.msra.mxu0 0
        %617 = vmatprep.subr.bf16.mxu0 0
        %618 = vmatpush2.bf16.msra.mxu0 0
        %619 = vmatprep.mubr.bf16.mxu0 0
        %620 = vmatmul.mubr.bf16.gmra.mxu0 %v438
        %v621 = vpop.f32.mrf.mxu0
        %v622 = vadd.f32 0.0, %v621
        %v623 = vpop.f32.mrf.mxu0
        %v624 = vadd.f32 0.0, %v623
        %v625 = vpop.f32.mrf.mxu0
        %v626 = vpop.f32.mrf.mxu0
        %627 = vdwg.mxu0
        %v628 = vadd.f32 %v400, %v499
        %v629 = vadd.f32 %v401, %v501
        %v630 = vadd.f32 %v402, %v540
        %v631 = vadd.f32 %v403, %v542
        %v632 = vadd.f32 %v404, %v581
        %v633 = vadd.f32 %v405, %v583
        %v634 = vadd.f32 %v406, %v622
        %v635 = vadd.f32 %v407, %v624
        %s636 = scalar_lea.vmem %s1, 8
        %v637 = vld [vmem:[%s636] sm:$0xf]
        %638 = vrot.lane.b32.xlu0 %v171, 85
        %v639 = vpop.permute.xlu0 %638
        %640 = vrot.lane.b32.xlu0 %v172, 85
        %v641 = vpop.permute.xlu0 %640
        %642 = vrot.lane.b32.xlu0 %v173, 85
        %v643 = vpop.permute.xlu0 %642
        %644 = vrot.lane.b32.xlu0 %v174, 85
        %v645 = vpop.permute.xlu0 %644
        %646 = vrot.lane.b32.xlu0 %v175, 85
        %v647 = vpop.permute.xlu0 %646
        %648 = vrot.lane.b32.xlu0 %v176, 85
        %v649 = vpop.permute.xlu0 %648
        %650 = vrot.lane.b32.xlu0 %v177, 85
        %v651 = vpop.permute.xlu0 %650
        %652 = vrot.lane.b32.xlu0 %v178, 85
        %v653 = vpop.permute.xlu0 %652
        %654 = vrot.lane.b32.xlu0 %v179, 85
        %v655 = vpop.permute.xlu0 %654
        %vm656 = vcmask 695296
        %v657 = vsel %vm656, %v639, %v641
        %v658 = vsel %vm656, %v641, %v643
        %v659 = vsel %vm656, %v643, %v645
        %v660 = vsel %vm656, %v645, %v647
        %v661 = vsel %vm656, %v647, %v649
        %v662 = vsel %vm656, %v649, %v651
        %v663 = vsel %vm656, %v651, %v653
        %v664 = vsel %vm656, %v653, %v655
        %v666 = vsel %vm207, %v637, 0
        %v669 = vsel %vm211, %v657, 0
        %v672 = vsel %vm211, %v658, 0
        %v675 = vsel %vm211, %v659, 0
        %v678 = vsel %vm211, %v660, 0
        %v681 = vsel %vm211, %v661, 0
        %v684 = vsel %vm211, %v662, 0
        %v687 = vsel %vm211, %v663, 0
        %v690 = vsel %vm211, %v664, 0
        %692 = vmatprep.subr.bf16.mxu0 0
        %693 = vmatpush1.bf16.msra.mxu0 0
        %694 = vmatprep.subr.bf16.mxu0 0
        %695 = vmatpush1.bf16.msra.mxu0 0
        %696 = vmatprep.subr.bf16.mxu0 0
        %697 = vmatpush1.bf16.msra.mxu0 0
        %698 = vmatprep.subr.bf16.mxu0 0
        %699 = vmatpush1.bf16.msra.mxu0 0
        %700 = vmatprep.subr.bf16.mxu0 0
        %701 = vmatpush1.bf16.msra.mxu0 0
        %702 = vmatprep.subr.bf16.mxu0 0
        %703 = vmatpush1.bf16.msra.mxu0 0
        %704 = vmatprep.subr.bf16.mxu0 0
        %705 = vmatpush1.bf16.msra.mxu0 0
        %706 = vmatprep.subr.bf16.mxu0 %v672
        %707 = vmatpush1.bf16.msra.mxu0 %v669
        %708 = vmatprep.subr.bf16.mxu0 0
        %709 = vmatpush2.bf16.msra.mxu0 0
        %710 = vmatprep.subr.bf16.mxu0 0
        %711 = vmatpush2.bf16.msra.mxu0 0
        %712 = vmatprep.subr.bf16.mxu0 0
        %713 = vmatpush2.bf16.msra.mxu0 0
        %714 = vmatprep.subr.bf16.mxu0 0
        %715 = vmatpush2.bf16.msra.mxu0 0
        %716 = vmatprep.subr.bf16.mxu0 0
        %717 = vmatpush2.bf16.msra.mxu0 0
        %718 = vmatprep.subr.bf16.mxu0 0
        %719 = vmatpush2.bf16.msra.mxu0 0
        %720 = vmatprep.subr.bf16.mxu0 0
        %721 = vmatpush2.bf16.msra.mxu0 0
        %722 = vmatprep.subr.bf16.mxu0 0
        %723 = vmatpush2.bf16.msra.mxu0 0
        %724 = vmatprep.mubr.bf16.mxu0 0
        %725 = vmatmul.mubr.bf16.gmra.mxu0 %v666
        %v726 = vpop.f32.mrf.mxu0
        %v727 = vadd.f32 0.0, %v726
        %v728 = vpop.f32.mrf.mxu0
        %v729 = vadd.f32 0.0, %v728
        %v730 = vpop.f32.mrf.mxu0
        %v731 = vpop.f32.mrf.mxu0
        %732 = vdwg.mxu0
        %733 = vmatprep.subr.bf16.mxu0 0
        %734 = vmatpush1.bf16.msra.mxu0 0
        %735 = vmatprep.subr.bf16.mxu0 0
        %736 = vmatpush1.bf16.msra.mxu0 0
        %737 = vmatprep.subr.bf16.mxu0 0
        %738 = vmatpush1.bf16.msra.mxu0 0
        %739 = vmatprep.subr.bf16.mxu0 0
        %740 = vmatpush1.bf16.msra.mxu0 0
        %741 = vmatprep.subr.bf16.mxu0 0
        %742 = vmatpush1.bf16.msra.mxu0 0
        %743 = vmatprep.subr.bf16.mxu0 0
        %744 = vmatpush1.bf16.msra.mxu0 0
        %745 = vmatprep.subr.bf16.mxu0 0
        %746 = vmatpush1.bf16.msra.mxu0 0
        %747 = vmatprep.subr.bf16.mxu0 %v678
        %748 = vmatpush1.bf16.msra.mxu0 %v675
        %749 = vmatprep.subr.bf16.mxu0 0
        %750 = vmatpush2.bf16.msra.mxu0 0
        %751 = vmatprep.subr.bf16.mxu0 0
        %752 = vmatpush2.bf16.msra.mxu0 0
        %753 = vmatprep.subr.bf16.mxu0 0
        %754 = vmatpush2.bf16.msra.mxu0 0
        %755 = vmatprep.subr.bf16.mxu0 0
        %756 = vmatpush2.bf16.msra.mxu0 0
        %757 = vmatprep.subr.bf16.mxu0 0
        %758 = vmatpush2.bf16.msra.mxu0 0
        %759 = vmatprep.subr.bf16.mxu0 0
        %760 = vmatpush2.bf16.msra.mxu0 0
        %761 = vmatprep.subr.bf16.mxu0 0
        %762 = vmatpush2.bf16.msra.mxu0 0
        %763 = vmatprep.subr.bf16.mxu0 0
        %764 = vmatpush2.bf16.msra.mxu0 0
        %765 = vmatprep.mubr.bf16.mxu0 0
        %766 = vmatmul.mubr.bf16.gmra.mxu0 %v666
        %v767 = vpop.f32.mrf.mxu0
        %v768 = vadd.f32 0.0, %v767
        %v769 = vpop.f32.mrf.mxu0
        %v770 = vadd.f32 0.0, %v769
        %v771 = vpop.f32.mrf.mxu0
        %v772 = vpop.f32.mrf.mxu0
        %773 = vdwg.mxu0
        %774 = vmatprep.subr.bf16.mxu0 0
        %775 = vmatpush1.bf16.msra.mxu0 0
        %776 = vmatprep.subr.bf16.mxu0 0
        %777 = vmatpush1.bf16.msra.mxu0 0
        %778 = vmatprep.subr.bf16.mxu0 0
        %779 = vmatpush1.bf16.msra.mxu0 0
        %780 = vmatprep.subr.bf16.mxu0 0
        %781 = vmatpush1.bf16.msra.mxu0 0
        %782 = vmatprep.subr.bf16.mxu0 0
        %783 = vmatpush1.bf16.msra.mxu0 0
        %784 = vmatprep.subr.bf16.mxu0 0
        %785 = vmatpush1.bf16.msra.mxu0 0
        %786 = vmatprep.subr.bf16.mxu0 0
        %787 = vmatpush1.bf16.msra.mxu0 0
        %788 = vmatprep.subr.bf16.mxu0 %v684
        %789 = vmatpush1.bf16.msra.mxu0 %v681
        %790 = vmatprep.subr.bf16.mxu0 0
        %791 = vmatpush2.bf16.msra.mxu0 0
        %792 = vmatprep.subr.bf16.mxu0 0
        %793 = vmatpush2.bf16.msra.mxu0 0
        %794 = vmatprep.subr.bf16.mxu0 0
        %795 = vmatpush2.bf16.msra.mxu0 0
        %796 = vmatprep.subr.bf16.mxu0 0
        %797 = vmatpush2.bf16.msra.mxu0 0
        %798 = vmatprep.subr.bf16.mxu0 0
        %799 = vmatpush2.bf16.msra.mxu0 0
        %800 = vmatprep.subr.bf16.mxu0 0
        %801 = vmatpush2.bf16.msra.mxu0 0
        %802 = vmatprep.subr.bf16.mxu0 0
        %803 = vmatpush2.bf16.msra.mxu0 0
        %804 = vmatprep.subr.bf16.mxu0 0
        %805 = vmatpush2.bf16.msra.mxu0 0
        %806 = vmatprep.mubr.bf16.mxu0 0
        %807 = vmatmul.mubr.bf16.gmra.mxu0 %v666
        %v808 = vpop.f32.mrf.mxu0
        %v809 = vadd.f32 0.0, %v808
        %v810 = vpop.f32.mrf.mxu0
        %v811 = vadd.f32 0.0, %v810
        %v812 = vpop.f32.mrf.mxu0
        %v813 = vpop.f32.mrf.mxu0
        %814 = vdwg.mxu0
        %815 = vmatprep.subr.bf16.mxu0 0
        %816 = vmatpush1.bf16.msra.mxu0 0
        %817 = vmatprep.subr.bf16.mxu0 0
        %818 = vmatpush1.bf16.msra.mxu0 0
        %819 = vmatprep.subr.bf16.mxu0 0
        %820 = vmatpush1.bf16.msra.mxu0 0
        %821 = vmatprep.subr.bf16.mxu0 0
        %822 = vmatpush1.bf16.msra.mxu0 0
        %823 = vmatprep.subr.bf16.mxu0 0
        %824 = vmatpush1.bf16.msra.mxu0 0
        %825 = vmatprep.subr.bf16.mxu0 0
        %826 = vmatpush1.bf16.msra.mxu0 0
        %827 = vmatprep.subr.bf16.mxu0 0
        %828 = vmatpush1.bf16.msra.mxu0 0
        %829 = vmatprep.subr.bf16.mxu0 %v690
        %830 = vmatpush1.bf16.msra.mxu0 %v687
        %831 = vmatprep.subr.bf16.mxu0 0
        %832 = vmatpush2.bf16.msra.mxu0 0
        %833 = vmatprep.subr.bf16.mxu0 0
        %834 = vmatpush2.bf16.msra.mxu0 0
        %835 = vmatprep.subr.bf16.mxu0 0
        %836 = vmatpush2.bf16.msra.mxu0 0
        %837 = vmatprep.subr.bf16.mxu0 0
        %838 = vmatpush2.bf16.msra.mxu0 0
        %839 = vmatprep.subr.bf16.mxu0 0
        %840 = vmatpush2.bf16.msra.mxu0 0
        %841 = vmatprep.subr.bf16.mxu0 0
        %842 = vmatpush2.bf16.msra.mxu0 0
        %843 = vmatprep.subr.bf16.mxu0 0
        %844 = vmatpush2.bf16.msra.mxu0 0
        %845 = vmatprep.subr.bf16.mxu0 0
        %846 = vmatpush2.bf16.msra.mxu0 0
        %847 = vmatprep.mubr.bf16.mxu0 0
        %848 = vmatmul.mubr.bf16.gmra.mxu0 %v666
        %v849 = vpop.f32.mrf.mxu0
        %v850 = vadd.f32 0.0, %v849
        %v851 = vpop.f32.mrf.mxu0
        %v852 = vadd.f32 0.0, %v851
        %v853 = vpop.f32.mrf.mxu0
        %v854 = vpop.f32.mrf.mxu0
        %855 = vdwg.mxu0
        %v856 = vadd.f32 %v628, %v727
        %v857 = vadd.f32 %v629, %v729
        %v858 = vadd.f32 %v630, %v768
        %v859 = vadd.f32 %v631, %v770
        %v860 = vadd.f32 %v632, %v809
        %v861 = vadd.f32 %v633, %v811
        %v862 = vadd.f32 %v634, %v850
        %v863 = vadd.f32 %v635, %v852
        %s864 = scalar_lea.vmem %s1, 12
        %v865 = vld [vmem:[%s864] sm:$0xf]
        %866 = vrot.lane.b32.xlu0 %v171, 69
        %v867 = vpop.permute.xlu0 %866
        %868 = vrot.lane.b32.xlu0 %v172, 69
        %v869 = vpop.permute.xlu0 %868
        %870 = vrot.lane.b32.xlu0 %v173, 69
        %v871 = vpop.permute.xlu0 %870
        %872 = vrot.lane.b32.xlu0 %v174, 69
        %v873 = vpop.permute.xlu0 %872
        %874 = vrot.lane.b32.xlu0 %v175, 69
        %v875 = vpop.permute.xlu0 %874
        %876 = vrot.lane.b32.xlu0 %v176, 69
        %v877 = vpop.permute.xlu0 %876
        %878 = vrot.lane.b32.xlu0 %v177, 69
        %v879 = vpop.permute.xlu0 %878
        %880 = vrot.lane.b32.xlu0 %v178, 69
        %v881 = vpop.permute.xlu0 %880
        %882 = vrot.lane.b32.xlu0 %v179, 69
        %v883 = vpop.permute.xlu0 %882
        %vm884 = vcmask 564224
        %v885 = vsel %vm884, %v867, %v869
        %v886 = vsel %vm884, %v869, %v871
        %v887 = vsel %vm884, %v871, %v873
        %v888 = vsel %vm884, %v873, %v875
        %v889 = vsel %vm884, %v875, %v877
        %v890 = vsel %vm884, %v877, %v879
        %v891 = vsel %vm884, %v879, %v881
        %v892 = vsel %vm884, %v881, %v883
        %v894 = vsel %vm207, %v865, 0
        %v897 = vsel %vm211, %v885, 0
        %v900 = vsel %vm211, %v886, 0
        %v903 = vsel %vm211, %v887, 0
        %v906 = vsel %vm211, %v888, 0
        %v909 = vsel %vm211, %v889, 0
        %v912 = vsel %vm211, %v890, 0
        %v915 = vsel %vm211, %v891, 0
        %v918 = vsel %vm211, %v892, 0
        %920 = vmatprep.subr.bf16.mxu0 0
        %921 = vmatpush1.bf16.msra.mxu0 0
        %922 = vmatprep.subr.bf16.mxu0 0
        %923 = vmatpush1.bf16.msra.mxu0 0
        %924 = vmatprep.subr.bf16.mxu0 0
        %925 = vmatpush1.bf16.msra.mxu0 0
        %926 = vmatprep.subr.bf16.mxu0 0
        %927 = vmatpush1.bf16.msra.mxu0 0
        %928 = vmatprep.subr.bf16.mxu0 0
        %929 = vmatpush1.bf16.msra.mxu0 0
        %930 = vmatprep.subr.bf16.mxu0 0
        %931 = vmatpush1.bf16.msra.mxu0 0
        %932 = vmatprep.subr.bf16.mxu0 0
        %933 = vmatpush1.bf16.msra.mxu0 0
        %934 = vmatprep.subr.bf16.mxu0 %v900
        %935 = vmatpush1.bf16.msra.mxu0 %v897
        %936 = vmatprep.subr.bf16.mxu0 0
        %937 = vmatpush2.bf16.msra.mxu0 0
        %938 = vmatprep.subr.bf16.mxu0 0
        %939 = vmatpush2.bf16.msra.mxu0 0
        %940 = vmatprep.subr.bf16.mxu0 0
        %941 = vmatpush2.bf16.msra.mxu0 0
        %942 = vmatprep.subr.bf16.mxu0 0
        %943 = vmatpush2.bf16.msra.mxu0 0
        %944 = vmatprep.subr.bf16.mxu0 0
        %945 = vmatpush2.bf16.msra.mxu0 0
        %946 = vmatprep.subr.bf16.mxu0 0
        %947 = vmatpush2.bf16.msra.mxu0 0
        %948 = vmatprep.subr.bf16.mxu0 0
        %949 = vmatpush2.bf16.msra.mxu0 0
        %950 = vmatprep.subr.bf16.mxu0 0
        %951 = vmatpush2.bf16.msra.mxu0 0
        %952 = vmatprep.mubr.bf16.mxu0 0
        %953 = vmatmul.mubr.bf16.gmra.mxu0 %v894
        %v954 = vpop.f32.mrf.mxu0
        %v955 = vadd.f32 0.0, %v954
        %v956 = vpop.f32.mrf.mxu0
        %v957 = vadd.f32 0.0, %v956
        %v958 = vpop.f32.mrf.mxu0
        %v959 = vpop.f32.mrf.mxu0
        %960 = vdwg.mxu0
        %961 = vmatprep.subr.bf16.mxu0 0
        %962 = vmatpush1.bf16.msra.mxu0 0
        %963 = vmatprep.subr.bf16.mxu0 0
        %964 = vmatpush1.bf16.msra.mxu0 0
        %965 = vmatprep.subr.bf16.mxu0 0
        %966 = vmatpush1.bf16.msra.mxu0 0
        %967 = vmatprep.subr.bf16.mxu0 0
        %968 = vmatpush1.bf16.msra.mxu0 0
        %969 = vmatprep.subr.bf16.mxu0 0
        %970 = vmatpush1.bf16.msra.mxu0 0
        %971 = vmatprep.subr.bf16.mxu0 0
        %972 = vmatpush1.bf16.msra.mxu0 0
        %973 = vmatprep.subr.bf16.mxu0 0
        %974 = vmatpush1.bf16.msra.mxu0 0
        %975 = vmatprep.subr.bf16.mxu0 %v906
        %976 = vmatpush1.bf16.msra.mxu0 %v903
        %977 = vmatprep.subr.bf16.mxu0 0
        %978 = vmatpush2.bf16.msra.mxu0 0
        %979 = vmatprep.subr.bf16.mxu0 0
        %980 = vmatpush2.bf16.msra.mxu0 0
        %981 = vmatprep.subr.bf16.mxu0 0
        %982 = vmatpush2.bf16.msra.mxu0 0
        %983 = vmatprep.subr.bf16.mxu0 0
        %984 = vmatpush2.bf16.msra.mxu0 0
        %985 = vmatprep.subr.bf16.mxu0 0
        %986 = vmatpush2.bf16.msra.mxu0 0
        %987 = vmatprep.subr.bf16.mxu0 0
        %988 = vmatpush2.bf16.msra.mxu0 0
        %989 = vmatprep.subr.bf16.mxu0 0
        %990 = vmatpush2.bf16.msra.mxu0 0
        %991 = vmatprep.subr.bf16.mxu0 0
        %992 = vmatpush2.bf16.msra.mxu0 0
        %993 = vmatprep.mubr.bf16.mxu0 0
        %994 = vmatmul.mubr.bf16.gmra.mxu0 %v894
        %v995 = vpop.f32.mrf.mxu0
        %v996 = vadd.f32 0.0, %v995
        %v997 = vpop.f32.mrf.mxu0
        %v998 = vadd.f32 0.0, %v997
        %v999 = vpop.f32.mrf.mxu0
        %v1000 = vpop.f32.mrf.mxu0
        %1001 = vdwg.mxu0
        %1002 = vmatprep.subr.bf16.mxu0 0
        %1003 = vmatpush1.bf16.msra.mxu0 0
        %1004 = vmatprep.subr.bf16.mxu0 0
        %1005 = vmatpush1.bf16.msra.mxu0 0
        %1006 = vmatprep.subr.bf16.mxu0 0
        %1007 = vmatpush1.bf16.msra.mxu0 0
        %1008 = vmatprep.subr.bf16.mxu0 0
        %1009 = vmatpush1.bf16.msra.mxu0 0
        %1010 = vmatprep.subr.bf16.mxu0 0
        %1011 = vmatpush1.bf16.msra.mxu0 0
        %1012 = vmatprep.subr.bf16.mxu0 0
        %1013 = vmatpush1.bf16.msra.mxu0 0
        %1014 = vmatprep.subr.bf16.mxu0 0
        %1015 = vmatpush1.bf16.msra.mxu0 0
        %1016 = vmatprep.subr.bf16.mxu0 %v912
        %1017 = vmatpush1.bf16.msra.mxu0 %v909
        %1018 = vmatprep.subr.bf16.mxu0 0
        %1019 = vmatpush2.bf16.msra.mxu0 0
        %1020 = vmatprep.subr.bf16.mxu0 0
        %1021 = vmatpush2.bf16.msra.mxu0 0
        %1022 = vmatprep.subr.bf16.mxu0 0
        %1023 = vmatpush2.bf16.msra.mxu0 0
        %1024 = vmatprep.subr.bf16.mxu0 0
        %1025 = vmatpush2.bf16.msra.mxu0 0
        %1026 = vmatprep.subr.bf16.mxu0 0
        %1027 = vmatpush2.bf16.msra.mxu0 0
        %1028 = vmatprep.subr.bf16.mxu0 0
        %1029 = vmatpush2.bf16.msra.mxu0 0
        %1030 = vmatprep.subr.bf16.mxu0 0
        %1031 = vmatpush2.bf16.msra.mxu0 0
        %1032 = vmatprep.subr.bf16.mxu0 0
        %1033 = vmatpush2.bf16.msra.mxu0 0
        %1034 = vmatprep.mubr.bf16.mxu0 0
        %1035 = vmatmul.mubr.bf16.gmra.mxu0 %v894
        %v1036 = vpop.f32.mrf.mxu0
        %v1037 = vadd.f32 0.0, %v1036
        %v1038 = vpop.f32.mrf.mxu0
        %v1039 = vadd.f32 0.0, %v1038
        %v1040 = vpop.f32.mrf.mxu0
        %v1041 = vpop.f32.mrf.mxu0
        %1042 = vdwg.mxu0
        %1043 = vmatprep.subr.bf16.mxu0 0
        %1044 = vmatpush1.bf16.msra.mxu0 0
        %1045 = vmatprep.subr.bf16.mxu0 0
        %1046 = vmatpush1.bf16.msra.mxu0 0
        %1047 = vmatprep.subr.bf16.mxu0 0
        %1048 = vmatpush1.bf16.msra.mxu0 0
        %1049 = vmatprep.subr.bf16.mxu0 0
        %1050 = vmatpush1.bf16.msra.mxu0 0
        %1051 = vmatprep.subr.bf16.mxu0 0
        %1052 = vmatpush1.bf16.msra.mxu0 0
        %1053 = vmatprep.subr.bf16.mxu0 0
        %1054 = vmatpush1.bf16.msra.mxu0 0
        %1055 = vmatprep.subr.bf16.mxu0 0
        %1056 = vmatpush1.bf16.msra.mxu0 0
        %1057 = vmatprep.subr.bf16.mxu0 %v918
        %1058 = vmatpush1.bf16.msra.mxu0 %v915
        %1059 = vmatprep.subr.bf16.mxu0 0
        %1060 = vmatpush2.bf16.msra.mxu0 0
        %1061 = vmatprep.subr.bf16.mxu0 0
        %1062 = vmatpush2.bf16.msra.mxu0 0
        %1063 = vmatprep.subr.bf16.mxu0 0
        %1064 = vmatpush2.bf16.msra.mxu0 0
        %1065 = vmatprep.subr.bf16.mxu0 0
        %1066 = vmatpush2.bf16.msra.mxu0 0
        %1067 = vmatprep.subr.bf16.mxu0 0
        %1068 = vmatpush2.bf16.msra.mxu0 0
        %1069 = vmatprep.subr.bf16.mxu0 0
        %1070 = vmatpush2.bf16.msra.mxu0 0
        %1071 = vmatprep.subr.bf16.mxu0 0
        %1072 = vmatpush2.bf16.msra.mxu0 0
        %1073 = vmatprep.subr.bf16.mxu0 0
        %1074 = vmatpush2.bf16.msra.mxu0 0
        %1075 = vmatprep.mubr.bf16.mxu0 0
        %1076 = vmatmul.mubr.bf16.gmra.mxu0 %v894
        %v1077 = vpop.f32.mrf.mxu0
        %v1078 = vadd.f32 0.0, %v1077
        %v1079 = vpop.f32.mrf.mxu0
        %v1080 = vadd.f32 0.0, %v1079
        %v1081 = vpop.f32.mrf.mxu0
        %v1082 = vpop.f32.mrf.mxu0
        %1083 = vdwg.mxu0
        %v1084 = vadd.f32 %v856, %v955
        %v1085 = vadd.f32 %v857, %v957
        %v1086 = vadd.f32 %v858, %v996
        %v1087 = vadd.f32 %v859, %v998
        %v1088 = vadd.f32 %v860, %v1037
        %v1089 = vadd.f32 %v861, %v1039
        %v1090 = vadd.f32 %v862, %v1078
        %v1091 = vadd.f32 %v863, %v1080
        %s1092 = scalar_lea.vmem %s1, 16
        %v1093 = vld [vmem:[%s1092] sm:$0xf]
        %1094 = vrot.lane.b32.xlu0 %v171, 68
        %v1095 = vpop.permute.xlu0 %1094
        %1096 = vrot.lane.b32.xlu0 %v172, 68
        %v1097 = vpop.permute.xlu0 %1096
        %1098 = vrot.lane.b32.xlu0 %v173, 68
        %v1099 = vpop.permute.xlu0 %1098
        %1100 = vrot.lane.b32.xlu0 %v174, 68
        %v1101 = vpop.permute.xlu0 %1100
        %1102 = vrot.lane.b32.xlu0 %v175, 68
        %v1103 = vpop.permute.xlu0 %1102
        %1104 = vrot.lane.b32.xlu0 %v176, 68
        %v1105 = vpop.permute.xlu0 %1104
        %1106 = vrot.lane.b32.xlu0 %v177, 68
        %v1107 = vpop.permute.xlu0 %1106
        %1108 = vrot.lane.b32.xlu0 %v178, 68
        %v1109 = vpop.permute.xlu0 %1108
        %1110 = vrot.lane.b32.xlu0 %v179, 68
        %v1111 = vpop.permute.xlu0 %1110
        %vm1112 = vcmask 556032
        %v1113 = vsel %vm1112, %v1095, %v1097
        %v1114 = vsel %vm1112, %v1097, %v1099
        %v1115 = vsel %vm1112, %v1099, %v1101
        %v1116 = vsel %vm1112, %v1101, %v1103
        %v1117 = vsel %vm1112, %v1103, %v1105
        %v1118 = vsel %vm1112, %v1105, %v1107
        %v1119 = vsel %vm1112, %v1107, %v1109
        %v1120 = vsel %vm1112, %v1109, %v1111
        %v1122 = vsel %vm207, %v1093, 0
        %v1125 = vsel %vm211, %v1113, 0
        %v1128 = vsel %vm211, %v1114, 0
        %v1131 = vsel %vm211, %v1115, 0
        %v1134 = vsel %vm211, %v1116, 0
        %v1137 = vsel %vm211, %v1117, 0
        %v1140 = vsel %vm211, %v1118, 0
        %v1143 = vsel %vm211, %v1119, 0
        %v1146 = vsel %vm211, %v1120, 0
        %1148 = vmatprep.subr.bf16.mxu0 0
        %1149 = vmatpush1.bf16.msra.mxu0 0
        %1150 = vmatprep.subr.bf16.mxu0 0
        %1151 = vmatpush1.bf16.msra.mxu0 0
        %1152 = vmatprep.subr.bf16.mxu0 0
        %1153 = vmatpush1.bf16.msra.mxu0 0
        %1154 = vmatprep.subr.bf16.mxu0 0
        %1155 = vmatpush1.bf16.msra.mxu0 0
        %1156 = vmatprep.subr.bf16.mxu0 0
        %1157 = vmatpush1.bf16.msra.mxu0 0
        %1158 = vmatprep.subr.bf16.mxu0 0
        %1159 = vmatpush1.bf16.msra.mxu0 0
        %1160 = vmatprep.subr.bf16.mxu0 0
        %1161 = vmatpush1.bf16.msra.mxu0 0
        %1162 = vmatprep.subr.bf16.mxu0 %v1128
        %1163 = vmatpush1.bf16.msra.mxu0 %v1125
        %1164 = vmatprep.subr.bf16.mxu0 0
        %1165 = vmatpush2.bf16.msra.mxu0 0
        %1166 = vmatprep.subr.bf16.mxu0 0
        %1167 = vmatpush2.bf16.msra.mxu0 0
        %1168 = vmatprep.subr.bf16.mxu0 0
        %1169 = vmatpush2.bf16.msra.mxu0 0
        %1170 = vmatprep.subr.bf16.mxu0 0
        %1171 = vmatpush2.bf16.msra.mxu0 0
        %1172 = vmatprep.subr.bf16.mxu0 0
        %1173 = vmatpush2.bf16.msra.mxu0 0
        %1174 = vmatprep.subr.bf16.mxu0 0
        %1175 = vmatpush2.bf16.msra.mxu0 0
        %1176 = vmatprep.subr.bf16.mxu0 0
        %1177 = vmatpush2.bf16.msra.mxu0 0
        %1178 = vmatprep.subr.bf16.mxu0 0
        %1179 = vmatpush2.bf16.msra.mxu0 0
        %1180 = vmatprep.mubr.bf16.mxu0 0
        %1181 = vmatmul.mubr.bf16.gmra.mxu0 %v1122
        %v1182 = vpop.f32.mrf.mxu0
        %v1183 = vadd.f32 0.0, %v1182
        %v1184 = vpop.f32.mrf.mxu0
        %v1185 = vadd.f32 0.0, %v1184
        %v1186 = vpop.f32.mrf.mxu0
        %v1187 = vpop.f32.mrf.mxu0
        %1188 = vdwg.mxu0
        %1189 = vmatprep.subr.bf16.mxu0 0
        %1190 = vmatpush1.bf16.msra.mxu0 0
        %1191 = vmatprep.subr.bf16.mxu0 0
        %1192 = vmatpush1.bf16.msra.mxu0 0
        %1193 = vmatprep.subr.bf16.mxu0 0
        %1194 = vmatpush1.bf16.msra.mxu0 0
        %1195 = vmatprep.subr.bf16.mxu0 0
        %1196 = vmatpush1.bf16.msra.mxu0 0
        %1197 = vmatprep.subr.bf16.mxu0 0
        %1198 = vmatpush1.bf16.msra.mxu0 0
        %1199 = vmatprep.subr.bf16.mxu0 0
        %1200 = vmatpush1.bf16.msra.mxu0 0
        %1201 = vmatprep.subr.bf16.mxu0 0
        %1202 = vmatpush1.bf16.msra.mxu0 0
        %1203 = vmatprep.subr.bf16.mxu0 %v1134
        %1204 = vmatpush1.bf16.msra.mxu0 %v1131
        %1205 = vmatprep.subr.bf16.mxu0 0
        %1206 = vmatpush2.bf16.msra.mxu0 0
        %1207 = vmatprep.subr.bf16.mxu0 0
        %1208 = vmatpush2.bf16.msra.mxu0 0
        %1209 = vmatprep.subr.bf16.mxu0 0
        %1210 = vmatpush2.bf16.msra.mxu0 0
        %1211 = vmatprep.subr.bf16.mxu0 0
        %1212 = vmatpush2.bf16.msra.mxu0 0
        %1213 = vmatprep.subr.bf16.mxu0 0
        %1214 = vmatpush2.bf16.msra.mxu0 0
        %1215 = vmatprep.subr.bf16.mxu0 0
        %1216 = vmatpush2.bf16.msra.mxu0 0
        %1217 = vmatprep.subr.bf16.mxu0 0
        %1218 = vmatpush2.bf16.msra.mxu0 0
        %1219 = vmatprep.subr.bf16.mxu0 0
        %1220 = vmatpush2.bf16.msra.mxu0 0
        %1221 = vmatprep.mubr.bf16.mxu0 0
        %1222 = vmatmul.mubr.bf16.gmra.mxu0 %v1122
        %v1223 = vpop.f32.mrf.mxu0
        %v1224 = vadd.f32 0.0, %v1223
        %v1225 = vpop.f32.mrf.mxu0
        %v1226 = vadd.f32 0.0, %v1225
        %v1227 = vpop.f32.mrf.mxu0
        %v1228 = vpop.f32.mrf.mxu0
        %1229 = vdwg.mxu0
        %1230 = vmatprep.subr.bf16.mxu0 0
        %1231 = vmatpush1.bf16.msra.mxu0 0
        %1232 = vmatprep.subr.bf16.mxu0 0
        %1233 = vmatpush1.bf16.msra.mxu0 0
        %1234 = vmatprep.subr.bf16.mxu0 0
        %1235 = vmatpush1.bf16.msra.mxu0 0
        %1236 = vmatprep.subr.bf16.mxu0 0
        %1237 = vmatpush1.bf16.msra.mxu0 0
        %1238 = vmatprep.subr.bf16.mxu0 0
        %1239 = vmatpush1.bf16.msra.mxu0 0
        %1240 = vmatprep.subr.bf16.mxu0 0
        %1241 = vmatpush1.bf16.msra.mxu0 0
        %1242 = vmatprep.subr.bf16.mxu0 0
        %1243 = vmatpush1.bf16.msra.mxu0 0
        %1244 = vmatprep.subr.bf16.mxu0 %v1140
        %1245 = vmatpush1.bf16.msra.mxu0 %v1137
        %1246 = vmatprep.subr.bf16.mxu0 0
        %1247 = vmatpush2.bf16.msra.mxu0 0
        %1248 = vmatprep.subr.bf16.mxu0 0
        %1249 = vmatpush2.bf16.msra.mxu0 0
        %1250 = vmatprep.subr.bf16.mxu0 0
        %1251 = vmatpush2.bf16.msra.mxu0 0
        %1252 = vmatprep.subr.bf16.mxu0 0
        %1253 = vmatpush2.bf16.msra.mxu0 0
        %1254 = vmatprep.subr.bf16.mxu0 0
        %1255 = vmatpush2.bf16.msra.mxu0 0
        %1256 = vmatprep.subr.bf16.mxu0 0
        %1257 = vmatpush2.bf16.msra.mxu0 0
        %1258 = vmatprep.subr.bf16.mxu0 0
        %1259 = vmatpush2.bf16.msra.mxu0 0
        %1260 = vmatprep.subr.bf16.mxu0 0
        %1261 = vmatpush2.bf16.msra.mxu0 0
        %1262 = vmatprep.mubr.bf16.mxu0 0
        %1263 = vmatmul.mubr.bf16.gmra.mxu0 %v1122
        %v1264 = vpop.f32.mrf.mxu0
        %v1265 = vadd.f32 0.0, %v1264
        %v1266 = vpop.f32.mrf.mxu0
        %v1267 = vadd.f32 0.0, %v1266
        %v1268 = vpop.f32.mrf.mxu0
        %v1269 = vpop.f32.mrf.mxu0
        %1270 = vdwg.mxu0
        %1271 = vmatprep.subr.bf16.mxu0 0
        %1272 = vmatpush1.bf16.msra.mxu0 0
        %1273 = vmatprep.subr.bf16.mxu0 0
        %1274 = vmatpush1.bf16.msra.mxu0 0
        %1275 = vmatprep.subr.bf16.mxu0 0
        %1276 = vmatpush1.bf16.msra.mxu0 0
        %1277 = vmatprep.subr.bf16.mxu0 0
        %1278 = vmatpush1.bf16.msra.mxu0 0
        %1279 = vmatprep.subr.bf16.mxu0 0
        %1280 = vmatpush1.bf16.msra.mxu0 0
        %1281 = vmatprep.subr.bf16.mxu0 0
        %1282 = vmatpush1.bf16.msra.mxu0 0
        %1283 = vmatprep.subr.bf16.mxu0 0
        %1284 = vmatpush1.bf16.msra.mxu0 0
        %1285 = vmatprep.subr.bf16.mxu0 %v1146
        %1286 = vmatpush1.bf16.msra.mxu0 %v1143
        %1287 = vmatprep.subr.bf16.mxu0 0
        %1288 = vmatpush2.bf16.msra.mxu0 0
        %1289 = vmatprep.subr.bf16.mxu0 0
        %1290 = vmatpush2.bf16.msra.mxu0 0
        %1291 = vmatprep.subr.bf16.mxu0 0
        %1292 = vmatpush2.bf16.msra.mxu0 0
        %1293 = vmatprep.subr.bf16.mxu0 0
        %1294 = vmatpush2.bf16.msra.mxu0 0
        %1295 = vmatprep.subr.bf16.mxu0 0
        %1296 = vmatpush2.bf16.msra.mxu0 0
        %1297 = vmatprep.subr.bf16.mxu0 0
        %1298 = vmatpush2.bf16.msra.mxu0 0
        %1299 = vmatprep.subr.bf16.mxu0 0
        %1300 = vmatpush2.bf16.msra.mxu0 0
        %1301 = vmatprep.subr.bf16.mxu0 0
        %1302 = vmatpush2.bf16.msra.mxu0 0
        %1303 = vmatprep.mubr.bf16.mxu0 0
        %1304 = vmatmul.mubr.bf16.gmra.mxu0 %v1122
        %v1305 = vpop.f32.mrf.mxu0
        %v1306 = vadd.f32 0.0, %v1305
        %v1307 = vpop.f32.mrf.mxu0
        %v1308 = vadd.f32 0.0, %v1307
        %v1309 = vpop.f32.mrf.mxu0
        %v1310 = vpop.f32.mrf.mxu0
        %1311 = vdwg.mxu0
        %v1312 = vadd.f32 %v1084, %v1183
        %v1313 = vadd.f32 %v1085, %v1185
        %v1314 = vadd.f32 %v1086, %v1224
        %v1315 = vadd.f32 %v1087, %v1226
        %v1316 = vadd.f32 %v1088, %v1265
        %v1317 = vadd.f32 %v1089, %v1267
        %v1318 = vadd.f32 %v1090, %v1306
        %v1319 = vadd.f32 %v1091, %v1308
        %s1320 = scalar_lea.vmem %s1, 20
        %v1321 = vld [vmem:[%s1320] sm:$0xf]
        %1322 = vrot.lane.b32.xlu0 %v171, 67
        %v1323 = vpop.permute.xlu0 %1322
        %1324 = vrot.lane.b32.xlu0 %v172, 67
        %v1325 = vpop.permute.xlu0 %1324
        %1326 = vrot.lane.b32.xlu0 %v173, 67
        %v1327 = vpop.permute.xlu0 %1326
        %1328 = vrot.lane.b32.xlu0 %v174, 67
        %v1329 = vpop.permute.xlu0 %1328
        %1330 = vrot.lane.b32.xlu0 %v175, 67
        %v1331 = vpop.permute.xlu0 %1330
        %1332 = vrot.lane.b32.xlu0 %v176, 67
        %v1333 = vpop.permute.xlu0 %1332
        %1334 = vrot.lane.b32.xlu0 %v177, 67
        %v1335 = vpop.permute.xlu0 %1334
        %1336 = vrot.lane.b32.xlu0 %v178, 67
        %v1337 = vpop.permute.xlu0 %1336
        %1338 = vrot.lane.b32.xlu0 %v179, 67
        %v1339 = vpop.permute.xlu0 %1338
        %vm1340 = vcmask 547840
        %v1341 = vsel %vm1340, %v1323, %v1325
        %v1342 = vsel %vm1340, %v1325, %v1327
        %v1343 = vsel %vm1340, %v1327, %v1329
        %v1344 = vsel %vm1340, %v1329, %v1331
        %v1345 = vsel %vm1340, %v1331, %v1333
        %v1346 = vsel %vm1340, %v1333, %v1335
        %v1347 = vsel %vm1340, %v1335, %v1337
        %v1348 = vsel %vm1340, %v1337, %v1339
        %v1350 = vsel %vm207, %v1321, 0
        %v1353 = vsel %vm211, %v1341, 0
        %v1356 = vsel %vm211, %v1342, 0
        %v1359 = vsel %vm211, %v1343, 0
        %v1362 = vsel %vm211, %v1344, 0
        %v1365 = vsel %vm211, %v1345, 0
        %v1368 = vsel %vm211, %v1346, 0
        %v1371 = vsel %vm211, %v1347, 0
        %v1374 = vsel %vm211, %v1348, 0
        %1376 = vmatprep.subr.bf16.mxu0 0
        %1377 = vmatpush1.bf16.msra.mxu0 0
        %1378 = vmatprep.subr.bf16.mxu0 0
        %1379 = vmatpush1.bf16.msra.mxu0 0
        %1380 = vmatprep.subr.bf16.mxu0 0
        %1381 = vmatpush1.bf16.msra.mxu0 0
        %1382 = vmatprep.subr.bf16.mxu0 0
        %1383 = vmatpush1.bf16.msra.mxu0 0
        %1384 = vmatprep.subr.bf16.mxu0 0
        %1385 = vmatpush1.bf16.msra.mxu0 0
        %1386 = vmatprep.subr.bf16.mxu0 0
        %1387 = vmatpush1.bf16.msra.mxu0 0
        %1388 = vmatprep.subr.bf16.mxu0 0
        %1389 = vmatpush1.bf16.msra.mxu0 0
        %1390 = vmatprep.subr.bf16.mxu0 %v1356
        %1391 = vmatpush1.bf16.msra.mxu0 %v1353
        %1392 = vmatprep.subr.bf16.mxu0 0
        %1393 = vmatpush2.bf16.msra.mxu0 0
        %1394 = vmatprep.subr.bf16.mxu0 0
        %1395 = vmatpush2.bf16.msra.mxu0 0
        %1396 = vmatprep.subr.bf16.mxu0 0
        %1397 = vmatpush2.bf16.msra.mxu0 0
        %1398 = vmatprep.subr.bf16.mxu0 0
        %1399 = vmatpush2.bf16.msra.mxu0 0
        %1400 = vmatprep.subr.bf16.mxu0 0
        %1401 = vmatpush2.bf16.msra.mxu0 0
        %1402 = vmatprep.subr.bf16.mxu0 0
        %1403 = vmatpush2.bf16.msra.mxu0 0
        %1404 = vmatprep.subr.bf16.mxu0 0
        %1405 = vmatpush2.bf16.msra.mxu0 0
        %1406 = vmatprep.subr.bf16.mxu0 0
        %1407 = vmatpush2.bf16.msra.mxu0 0
        %1408 = vmatprep.mubr.bf16.mxu0 0
        %1409 = vmatmul.mubr.bf16.gmra.mxu0 %v1350
        %v1410 = vpop.f32.mrf.mxu0
        %v1411 = vadd.f32 0.0, %v1410
        %v1412 = vpop.f32.mrf.mxu0
        %v1413 = vadd.f32 0.0, %v1412
        %v1414 = vpop.f32.mrf.mxu0
        %v1415 = vpop.f32.mrf.mxu0
        %1416 = vdwg.mxu0
        %1417 = vmatprep.subr.bf16.mxu0 0
        %1418 = vmatpush1.bf16.msra.mxu0 0
        %1419 = vmatprep.subr.bf16.mxu0 0
        %1420 = vmatpush1.bf16.msra.mxu0 0
        %1421 = vmatprep.subr.bf16.mxu0 0
        %1422 = vmatpush1.bf16.msra.mxu0 0
        %1423 = vmatprep.subr.bf16.mxu0 0
        %1424 = vmatpush1.bf16.msra.mxu0 0
        %1425 = vmatprep.subr.bf16.mxu0 0
        %1426 = vmatpush1.bf16.msra.mxu0 0
        %1427 = vmatprep.subr.bf16.mxu0 0
        %1428 = vmatpush1.bf16.msra.mxu0 0
        %1429 = vmatprep.subr.bf16.mxu0 0
        %1430 = vmatpush1.bf16.msra.mxu0 0
        %1431 = vmatprep.subr.bf16.mxu0 %v1362
        %1432 = vmatpush1.bf16.msra.mxu0 %v1359
        %1433 = vmatprep.subr.bf16.mxu0 0
        %1434 = vmatpush2.bf16.msra.mxu0 0
        %1435 = vmatprep.subr.bf16.mxu0 0
        %1436 = vmatpush2.bf16.msra.mxu0 0
        %1437 = vmatprep.subr.bf16.mxu0 0
        %1438 = vmatpush2.bf16.msra.mxu0 0
        %1439 = vmatprep.subr.bf16.mxu0 0
        %1440 = vmatpush2.bf16.msra.mxu0 0
        %1441 = vmatprep.subr.bf16.mxu0 0
        %1442 = vmatpush2.bf16.msra.mxu0 0
        %1443 = vmatprep.subr.bf16.mxu0 0
        %1444 = vmatpush2.bf16.msra.mxu0 0
        %1445 = vmatprep.subr.bf16.mxu0 0
        %1446 = vmatpush2.bf16.msra.mxu0 0
        %1447 = vmatprep.subr.bf16.mxu0 0
        %1448 = vmatpush2.bf16.msra.mxu0 0
        %1449 = vmatprep.mubr.bf16.mxu0 0
        %1450 = vmatmul.mubr.bf16.gmra.mxu0 %v1350
        %v1451 = vpop.f32.mrf.mxu0
        %v1452 = vadd.f32 0.0, %v1451
        %v1453 = vpop.f32.mrf.mxu0
        %v1454 = vadd.f32 0.0, %v1453
        %v1455 = vpop.f32.mrf.mxu0
        %v1456 = vpop.f32.mrf.mxu0
        %1457 = vdwg.mxu0
        %1458 = vmatprep.subr.bf16.mxu0 0
        %1459 = vmatpush1.bf16.msra.mxu0 0
        %1460 = vmatprep.subr.bf16.mxu0 0
        %1461 = vmatpush1.bf16.msra.mxu0 0
        %1462 = vmatprep.subr.bf16.mxu0 0
        %1463 = vmatpush1.bf16.msra.mxu0 0
        %1464 = vmatprep.subr.bf16.mxu0 0
        %1465 = vmatpush1.bf16.msra.mxu0 0
        %1466 = vmatprep.subr.bf16.mxu0 0
        %1467 = vmatpush1.bf16.msra.mxu0 0
        %1468 = vmatprep.subr.bf16.mxu0 0
        %1469 = vmatpush1.bf16.msra.mxu0 0
        %1470 = vmatprep.subr.bf16.mxu0 0
        %1471 = vmatpush1.bf16.msra.mxu0 0
        %1472 = vmatprep.subr.bf16.mxu0 %v1368
        %1473 = vmatpush1.bf16.msra.mxu0 %v1365
        %1474 = vmatprep.subr.bf16.mxu0 0
        %1475 = vmatpush2.bf16.msra.mxu0 0
        %1476 = vmatprep.subr.bf16.mxu0 0
        %1477 = vmatpush2.bf16.msra.mxu0 0
        %1478 = vmatprep.subr.bf16.mxu0 0
        %1479 = vmatpush2.bf16.msra.mxu0 0
        %1480 = vmatprep.subr.bf16.mxu0 0
        %1481 = vmatpush2.bf16.msra.mxu0 0
        %1482 = vmatprep.subr.bf16.mxu0 0
        %1483 = vmatpush2.bf16.msra.mxu0 0
        %1484 = vmatprep.subr.bf16.mxu0 0
        %1485 = vmatpush2.bf16.msra.mxu0 0
        %1486 = vmatprep.subr.bf16.mxu0 0
        %1487 = vmatpush2.bf16.msra.mxu0 0
        %1488 = vmatprep.subr.bf16.mxu0 0
        %1489 = vmatpush2.bf16.msra.mxu0 0
        %1490 = vmatprep.mubr.bf16.mxu0 0
        %1491 = vmatmul.mubr.bf16.gmra.mxu0 %v1350
        %v1492 = vpop.f32.mrf.mxu0
        %v1493 = vadd.f32 0.0, %v1492
        %v1494 = vpop.f32.mrf.mxu0
        %v1495 = vadd.f32 0.0, %v1494
        %v1496 = vpop.f32.mrf.mxu0
        %v1497 = vpop.f32.mrf.mxu0
        %1498 = vdwg.mxu0
        %1499 = vmatprep.subr.bf16.mxu0 0
        %1500 = vmatpush1.bf16.msra.mxu0 0
        %1501 = vmatprep.subr.bf16.mxu0 0
        %1502 = vmatpush1.bf16.msra.mxu0 0
        %1503 = vmatprep.subr.bf16.mxu0 0
        %1504 = vmatpush1.bf16.msra.mxu0 0
        %1505 = vmatprep.subr.bf16.mxu0 0
        %1506 = vmatpush1.bf16.msra.mxu0 0
        %1507 = vmatprep.subr.bf16.mxu0 0
        %1508 = vmatpush1.bf16.msra.mxu0 0
        %1509 = vmatprep.subr.bf16.mxu0 0
        %1510 = vmatpush1.bf16.msra.mxu0 0
        %1511 = vmatprep.subr.bf16.mxu0 0
        %1512 = vmatpush1.bf16.msra.mxu0 0
        %1513 = vmatprep.subr.bf16.mxu0 %v1374
        %1514 = vmatpush1.bf16.msra.mxu0 %v1371
        %1515 = vmatprep.subr.bf16.mxu0 0
        %1516 = vmatpush2.bf16.msra.mxu0 0
        %1517 = vmatprep.subr.bf16.mxu0 0
        %1518 = vmatpush2.bf16.msra.mxu0 0
        %1519 = vmatprep.subr.bf16.mxu0 0
        %1520 = vmatpush2.bf16.msra.mxu0 0
        %1521 = vmatprep.subr.bf16.mxu0 0
        %1522 = vmatpush2.bf16.msra.mxu0 0
        %1523 = vmatprep.subr.bf16.mxu0 0
        %1524 = vmatpush2.bf16.msra.mxu0 0
        %1525 = vmatprep.subr.bf16.mxu0 0
        %1526 = vmatpush2.bf16.msra.mxu0 0
        %1527 = vmatprep.subr.bf16.mxu0 0
        %1528 = vmatpush2.bf16.msra.mxu0 0
        %1529 = vmatprep.subr.bf16.mxu0 0
        %1530 = vmatpush2.bf16.msra.mxu0 0
        %1531 = vmatprep.mubr.bf16.mxu0 0
        %1532 = vmatmul.mubr.bf16.gmra.mxu0 %v1350
        %v1533 = vpop.f32.mrf.mxu0
        %v1534 = vadd.f32 0.0, %v1533
        %v1535 = vpop.f32.mrf.mxu0
        %v1536 = vadd.f32 0.0, %v1535
        %v1537 = vpop.f32.mrf.mxu0
        %v1538 = vpop.f32.mrf.mxu0
        %1539 = vdwg.mxu0
        %v1540 = vadd.f32 %v1312, %v1411
        %v1541 = vadd.f32 %v1313, %v1413
        %v1542 = vadd.f32 %v1314, %v1452
        %v1543 = vadd.f32 %v1315, %v1454
        %v1544 = vadd.f32 %v1316, %v1493
        %v1545 = vadd.f32 %v1317, %v1495
        %v1546 = vadd.f32 %v1318, %v1534
        %v1547 = vadd.f32 %v1319, %v1536
        %s1548 = scalar_lea.vmem %s1, 24
        %v1549 = vld [vmem:[%s1548] sm:$0xf]
        %1550 = vrot.lane.b32.xlu0 %v171, 51
        %v1551 = vpop.permute.xlu0 %1550
        %1552 = vrot.lane.b32.xlu0 %v172, 51
        %v1553 = vpop.permute.xlu0 %1552
        %1554 = vrot.lane.b32.xlu0 %v173, 51
        %v1555 = vpop.permute.xlu0 %1554
        %1556 = vrot.lane.b32.xlu0 %v174, 51
        %v1557 = vpop.permute.xlu0 %1556
        %1558 = vrot.lane.b32.xlu0 %v175, 51
        %v1559 = vpop.permute.xlu0 %1558
        %1560 = vrot.lane.b32.xlu0 %v176, 51
        %v1561 = vpop.permute.xlu0 %1560
        %1562 = vrot.lane.b32.xlu0 %v177, 51
        %v1563 = vpop.permute.xlu0 %1562
        %1564 = vrot.lane.b32.xlu0 %v178, 51
        %v1565 = vpop.permute.xlu0 %1564
        %1566 = vrot.lane.b32.xlu0 %v179, 51
        %v1567 = vpop.permute.xlu0 %1566
        %vm1568 = vcmask 416768
        %v1569 = vsel %vm1568, %v1551, %v1553
        %v1570 = vsel %vm1568, %v1553, %v1555
        %v1571 = vsel %vm1568, %v1555, %v1557
        %v1572 = vsel %vm1568, %v1557, %v1559
        %v1573 = vsel %vm1568, %v1559, %v1561
        %v1574 = vsel %vm1568, %v1561, %v1563
        %v1575 = vsel %vm1568, %v1563, %v1565
        %v1576 = vsel %vm1568, %v1565, %v1567
        %v1578 = vsel %vm207, %v1549, 0
        %v1581 = vsel %vm211, %v1569, 0
        %v1584 = vsel %vm211, %v1570, 0
        %v1587 = vsel %vm211, %v1571, 0
        %v1590 = vsel %vm211, %v1572, 0
        %v1593 = vsel %vm211, %v1573, 0
        %v1596 = vsel %vm211, %v1574, 0
        %v1599 = vsel %vm211, %v1575, 0
        %v1602 = vsel %vm211, %v1576, 0
        %1604 = vmatprep.subr.bf16.mxu0 0
        %1605 = vmatpush1.bf16.msra.mxu0 0
        %1606 = vmatprep.subr.bf16.mxu0 0
        %1607 = vmatpush1.bf16.msra.mxu0 0
        %1608 = vmatprep.subr.bf16.mxu0 0
        %1609 = vmatpush1.bf16.msra.mxu0 0
        %1610 = vmatprep.subr.bf16.mxu0 0
        %1611 = vmatpush1.bf16.msra.mxu0 0
        %1612 = vmatprep.subr.bf16.mxu0 0
        %1613 = vmatpush1.bf16.msra.mxu0 0
        %1614 = vmatprep.subr.bf16.mxu0 0
        %1615 = vmatpush1.bf16.msra.mxu0 0
        %1616 = vmatprep.subr.bf16.mxu0 0
        %1617 = vmatpush1.bf16.msra.mxu0 0
        %1618 = vmatprep.subr.bf16.mxu0 %v1584
        %1619 = vmatpush1.bf16.msra.mxu0 %v1581
        %1620 = vmatprep.subr.bf16.mxu0 0
        %1621 = vmatpush2.bf16.msra.mxu0 0
        %1622 = vmatprep.subr.bf16.mxu0 0
        %1623 = vmatpush2.bf16.msra.mxu0 0
        %1624 = vmatprep.subr.bf16.mxu0 0
        %1625 = vmatpush2.bf16.msra.mxu0 0
        %1626 = vmatprep.subr.bf16.mxu0 0
        %1627 = vmatpush2.bf16.msra.mxu0 0
        %1628 = vmatprep.subr.bf16.mxu0 0
        %1629 = vmatpush2.bf16.msra.mxu0 0
        %1630 = vmatprep.subr.bf16.mxu0 0
        %1631 = vmatpush2.bf16.msra.mxu0 0
        %1632 = vmatprep.subr.bf16.mxu0 0
        %1633 = vmatpush2.bf16.msra.mxu0 0
        %1634 = vmatprep.subr.bf16.mxu0 0
        %1635 = vmatpush2.bf16.msra.mxu0 0
        %1636 = vmatprep.mubr.bf16.mxu0 0
        %1637 = vmatmul.mubr.bf16.gmra.mxu0 %v1578
        %v1638 = vpop.f32.mrf.mxu0
        %v1639 = vadd.f32 0.0, %v1638
        %v1640 = vpop.f32.mrf.mxu0
        %v1641 = vadd.f32 0.0, %v1640
        %v1642 = vpop.f32.mrf.mxu0
        %v1643 = vpop.f32.mrf.mxu0
        %1644 = vdwg.mxu0
        %1645 = vmatprep.subr.bf16.mxu0 0
        %1646 = vmatpush1.bf16.msra.mxu0 0
        %1647 = vmatprep.subr.bf16.mxu0 0
        %1648 = vmatpush1.bf16.msra.mxu0 0
        %1649 = vmatprep.subr.bf16.mxu0 0
        %1650 = vmatpush1.bf16.msra.mxu0 0
        %1651 = vmatprep.subr.bf16.mxu0 0
        %1652 = vmatpush1.bf16.msra.mxu0 0
        %1653 = vmatprep.subr.bf16.mxu0 0
        %1654 = vmatpush1.bf16.msra.mxu0 0
        %1655 = vmatprep.subr.bf16.mxu0 0
        %1656 = vmatpush1.bf16.msra.mxu0 0
        %1657 = vmatprep.subr.bf16.mxu0 0
        %1658 = vmatpush1.bf16.msra.mxu0 0
        %1659 = vmatprep.subr.bf16.mxu0 %v1590
        %1660 = vmatpush1.bf16.msra.mxu0 %v1587
        %1661 = vmatprep.subr.bf16.mxu0 0
        %1662 = vmatpush2.bf16.msra.mxu0 0
        %1663 = vmatprep.subr.bf16.mxu0 0
        %1664 = vmatpush2.bf16.msra.mxu0 0
        %1665 = vmatprep.subr.bf16.mxu0 0
        %1666 = vmatpush2.bf16.msra.mxu0 0
        %1667 = vmatprep.subr.bf16.mxu0 0
        %1668 = vmatpush2.bf16.msra.mxu0 0
        %1669 = vmatprep.subr.bf16.mxu0 0
        %1670 = vmatpush2.bf16.msra.mxu0 0
        %1671 = vmatprep.subr.bf16.mxu0 0
        %1672 = vmatpush2.bf16.msra.mxu0 0
        %1673 = vmatprep.subr.bf16.mxu0 0
        %1674 = vmatpush2.bf16.msra.mxu0 0
        %1675 = vmatprep.subr.bf16.mxu0 0
        %1676 = vmatpush2.bf16.msra.mxu0 0
        %1677 = vmatprep.mubr.bf16.mxu0 0
        %1678 = vmatmul.mubr.bf16.gmra.mxu0 %v1578
        %v1679 = vpop.f32.mrf.mxu0
        %v1680 = vadd.f32 0.0, %v1679
        %v1681 = vpop.f32.mrf.mxu0
        %v1682 = vadd.f32 0.0, %v1681
        %v1683 = vpop.f32.mrf.mxu0
        %v1684 = vpop.f32.mrf.mxu0
        %1685 = vdwg.mxu0
        %1686 = vmatprep.subr.bf16.mxu0 0
        %1687 = vmatpush1.bf16.msra.mxu0 0
        %1688 = vmatprep.subr.bf16.mxu0 0
        %1689 = vmatpush1.bf16.msra.mxu0 0
        %1690 = vmatprep.subr.bf16.mxu0 0
        %1691 = vmatpush1.bf16.msra.mxu0 0
        %1692 = vmatprep.subr.bf16.mxu0 0
        %1693 = vmatpush1.bf16.msra.mxu0 0
        %1694 = vmatprep.subr.bf16.mxu0 0
        %1695 = vmatpush1.bf16.msra.mxu0 0
        %1696 = vmatprep.subr.bf16.mxu0 0
        %1697 = vmatpush1.bf16.msra.mxu0 0
        %1698 = vmatprep.subr.bf16.mxu0 0
        %1699 = vmatpush1.bf16.msra.mxu0 0
        %1700 = vmatprep.subr.bf16.mxu0 %v1596
        %1701 = vmatpush1.bf16.msra.mxu0 %v1593
        %1702 = vmatprep.subr.bf16.mxu0 0
        %1703 = vmatpush2.bf16.msra.mxu0 0
        %1704 = vmatprep.subr.bf16.mxu0 0
        %1705 = vmatpush2.bf16.msra.mxu0 0
        %1706 = vmatprep.subr.bf16.mxu0 0
        %1707 = vmatpush2.bf16.msra.mxu0 0
        %1708 = vmatprep.subr.bf16.mxu0 0
        %1709 = vmatpush2.bf16.msra.mxu0 0
        %1710 = vmatprep.subr.bf16.mxu0 0
        %1711 = vmatpush2.bf16.msra.mxu0 0
        %1712 = vmatprep.subr.bf16.mxu0 0
        %1713 = vmatpush2.bf16.msra.mxu0 0
        %1714 = vmatprep.subr.bf16.mxu0 0
        %1715 = vmatpush2.bf16.msra.mxu0 0
        %1716 = vmatprep.subr.bf16.mxu0 0
        %1717 = vmatpush2.bf16.msra.mxu0 0
        %1718 = vmatprep.mubr.bf16.mxu0 0
        %1719 = vmatmul.mubr.bf16.gmra.mxu0 %v1578
        %v1720 = vpop.f32.mrf.mxu0
        %v1721 = vadd.f32 0.0, %v1720
        %v1722 = vpop.f32.mrf.mxu0
        %v1723 = vadd.f32 0.0, %v1722
        %v1724 = vpop.f32.mrf.mxu0
        %v1725 = vpop.f32.mrf.mxu0
        %1726 = vdwg.mxu0
        %1727 = vmatprep.subr.bf16.mxu0 0
        %1728 = vmatpush1.bf16.msra.mxu0 0
        %1729 = vmatprep.subr.bf16.mxu0 0
        %1730 = vmatpush1.bf16.msra.mxu0 0
        %1731 = vmatprep.subr.bf16.mxu0 0
        %1732 = vmatpush1.bf16.msra.mxu0 0
        %1733 = vmatprep.subr.bf16.mxu0 0
        %1734 = vmatpush1.bf16.msra.mxu0 0
        %1735 = vmatprep.subr.bf16.mxu0 0
        %1736 = vmatpush1.bf16.msra.mxu0 0
        %1737 = vmatprep.subr.bf16.mxu0 0
        %1738 = vmatpush1.bf16.msra.mxu0 0
        %1739 = vmatprep.subr.bf16.mxu0 0
        %1740 = vmatpush1.bf16.msra.mxu0 0
        %1741 = vmatprep.subr.bf16.mxu0 %v1602
        %1742 = vmatpush1.bf16.msra.mxu0 %v1599
        %1743 = vmatprep.subr.bf16.mxu0 0
        %1744 = vmatpush2.bf16.msra.mxu0 0
        %1745 = vmatprep.subr.bf16.mxu0 0
        %1746 = vmatpush2.bf16.msra.mxu0 0
        %1747 = vmatprep.subr.bf16.mxu0 0
        %1748 = vmatpush2.bf16.msra.mxu0 0
        %1749 = vmatprep.subr.bf16.mxu0 0
        %1750 = vmatpush2.bf16.msra.mxu0 0
        %1751 = vmatprep.subr.bf16.mxu0 0
        %1752 = vmatpush2.bf16.msra.mxu0 0
        %1753 = vmatprep.subr.bf16.mxu0 0
        %1754 = vmatpush2.bf16.msra.mxu0 0
        %1755 = vmatprep.subr.bf16.mxu0 0
        %1756 = vmatpush2.bf16.msra.mxu0 0
        %1757 = vmatprep.subr.bf16.mxu0 0
        %1758 = vmatpush2.bf16.msra.mxu0 0
        %1759 = vmatprep.mubr.bf16.mxu0 0
        %1760 = vmatmul.mubr.bf16.gmra.mxu0 %v1578
        %v1761 = vpop.f32.mrf.mxu0
        %v1762 = vadd.f32 0.0, %v1761
        %v1763 = vpop.f32.mrf.mxu0
        %v1764 = vadd.f32 0.0, %v1763
        %v1765 = vpop.f32.mrf.mxu0
        %v1766 = vpop.f32.mrf.mxu0
        %1767 = vdwg.mxu0
        %v1768 = vadd.f32 %v1540, %v1639
        %v1769 = vadd.f32 %v1541, %v1641
        %v1770 = vadd.f32 %v1542, %v1680
        %v1771 = vadd.f32 %v1543, %v1682
        %v1772 = vadd.f32 %v1544, %v1721
        %v1773 = vadd.f32 %v1545, %v1723
        %v1774 = vadd.f32 %v1546, %v1762
        %v1775 = vadd.f32 %v1547, %v1764
        %s1776 = scalar_lea.vmem %s1, 28
        %v1777 = vld [vmem:[%s1776] sm:$0xf]
        %1778 = vrot.lane.b32.xlu0 %v171, 50
        %v1779 = vpop.permute.xlu0 %1778
        %1780 = vrot.lane.b32.xlu0 %v172, 50
        %v1781 = vpop.permute.xlu0 %1780
        %1782 = vrot.lane.b32.xlu0 %v173, 50
        %v1783 = vpop.permute.xlu0 %1782
        %1784 = vrot.lane.b32.xlu0 %v174, 50
        %v1785 = vpop.permute.xlu0 %1784
        %1786 = vrot.lane.b32.xlu0 %v175, 50
        %v1787 = vpop.permute.xlu0 %1786
        %1788 = vrot.lane.b32.xlu0 %v176, 50
        %v1789 = vpop.permute.xlu0 %1788
        %1790 = vrot.lane.b32.xlu0 %v177, 50
        %v1791 = vpop.permute.xlu0 %1790
        %1792 = vrot.lane.b32.xlu0 %v178, 50
        %v1793 = vpop.permute.xlu0 %1792
        %1794 = vrot.lane.b32.xlu0 %v179, 50
        %v1795 = vpop.permute.xlu0 %1794
        %vm1796 = vcmask 408576
        %v1797 = vsel %vm1796, %v1779, %v1781
        %v1798 = vsel %vm1796, %v1781, %v1783
        %v1799 = vsel %vm1796, %v1783, %v1785
        %v1800 = vsel %vm1796, %v1785, %v1787
        %v1801 = vsel %vm1796, %v1787, %v1789
        %v1802 = vsel %vm1796, %v1789, %v1791
        %v1803 = vsel %vm1796, %v1791, %v1793
        %v1804 = vsel %vm1796, %v1793, %v1795
        %v1806 = vsel %vm207, %v1777, 0
        %v1809 = vsel %vm211, %v1797, 0
        %v1812 = vsel %vm211, %v1798, 0
        %v1815 = vsel %vm211, %v1799, 0
        %v1818 = vsel %vm211, %v1800, 0
        %v1821 = vsel %vm211, %v1801, 0
        %v1824 = vsel %vm211, %v1802, 0
        %v1827 = vsel %vm211, %v1803, 0
        %v1830 = vsel %vm211, %v1804, 0
        %1832 = vmatprep.subr.bf16.mxu0 0
        %1833 = vmatpush1.bf16.msra.mxu0 0
        %1834 = vmatprep.subr.bf16.mxu0 0
        %1835 = vmatpush1.bf16.msra.mxu0 0
        %1836 = vmatprep.subr.bf16.mxu0 0
        %1837 = vmatpush1.bf16.msra.mxu0 0
        %1838 = vmatprep.subr.bf16.mxu0 0
        %1839 = vmatpush1.bf16.msra.mxu0 0
        %1840 = vmatprep.subr.bf16.mxu0 0
        %1841 = vmatpush1.bf16.msra.mxu0 0
        %1842 = vmatprep.subr.bf16.mxu0 0
        %1843 = vmatpush1.bf16.msra.mxu0 0
        %1844 = vmatprep.subr.bf16.mxu0 0
        %1845 = vmatpush1.bf16.msra.mxu0 0
        %1846 = vmatprep.subr.bf16.mxu0 %v1812
        %1847 = vmatpush1.bf16.msra.mxu0 %v1809
        %1848 = vmatprep.subr.bf16.mxu0 0
        %1849 = vmatpush2.bf16.msra.mxu0 0
        %1850 = vmatprep.subr.bf16.mxu0 0
        %1851 = vmatpush2.bf16.msra.mxu0 0
        %1852 = vmatprep.subr.bf16.mxu0 0
        %1853 = vmatpush2.bf16.msra.mxu0 0
        %1854 = vmatprep.subr.bf16.mxu0 0
        %1855 = vmatpush2.bf16.msra.mxu0 0
        %1856 = vmatprep.subr.bf16.mxu0 0
        %1857 = vmatpush2.bf16.msra.mxu0 0
        %1858 = vmatprep.subr.bf16.mxu0 0
        %1859 = vmatpush2.bf16.msra.mxu0 0
        %1860 = vmatprep.subr.bf16.mxu0 0
        %1861 = vmatpush2.bf16.msra.mxu0 0
        %1862 = vmatprep.subr.bf16.mxu0 0
        %1863 = vmatpush2.bf16.msra.mxu0 0
        %1864 = vmatprep.mubr.bf16.mxu0 0
        %1865 = vmatmul.mubr.bf16.gmra.mxu0 %v1806
        %v1866 = vpop.f32.mrf.mxu0
        %v1867 = vadd.f32 0.0, %v1866
        %v1868 = vpop.f32.mrf.mxu0
        %v1869 = vadd.f32 0.0, %v1868
        %v1870 = vpop.f32.mrf.mxu0
        %v1871 = vpop.f32.mrf.mxu0
        %1872 = vdwg.mxu0
        %1873 = vmatprep.subr.bf16.mxu0 0
        %1874 = vmatpush1.bf16.msra.mxu0 0
        %1875 = vmatprep.subr.bf16.mxu0 0
        %1876 = vmatpush1.bf16.msra.mxu0 0
        %1877 = vmatprep.subr.bf16.mxu0 0
        %1878 = vmatpush1.bf16.msra.mxu0 0
        %1879 = vmatprep.subr.bf16.mxu0 0
        %1880 = vmatpush1.bf16.msra.mxu0 0
        %1881 = vmatprep.subr.bf16.mxu0 0
        %1882 = vmatpush1.bf16.msra.mxu0 0
        %1883 = vmatprep.subr.bf16.mxu0 0
        %1884 = vmatpush1.bf16.msra.mxu0 0
        %1885 = vmatprep.subr.bf16.mxu0 0
        %1886 = vmatpush1.bf16.msra.mxu0 0
        %1887 = vmatprep.subr.bf16.mxu0 %v1818
        %1888 = vmatpush1.bf16.msra.mxu0 %v1815
        %1889 = vmatprep.subr.bf16.mxu0 0
        %1890 = vmatpush2.bf16.msra.mxu0 0
        %1891 = vmatprep.subr.bf16.mxu0 0
        %1892 = vmatpush2.bf16.msra.mxu0 0
        %1893 = vmatprep.subr.bf16.mxu0 0
        %1894 = vmatpush2.bf16.msra.mxu0 0
        %1895 = vmatprep.subr.bf16.mxu0 0
        %1896 = vmatpush2.bf16.msra.mxu0 0
        %1897 = vmatprep.subr.bf16.mxu0 0
        %1898 = vmatpush2.bf16.msra.mxu0 0
        %1899 = vmatprep.subr.bf16.mxu0 0
        %1900 = vmatpush2.bf16.msra.mxu0 0
        %1901 = vmatprep.subr.bf16.mxu0 0
        %1902 = vmatpush2.bf16.msra.mxu0 0
        %1903 = vmatprep.subr.bf16.mxu0 0
        %1904 = vmatpush2.bf16.msra.mxu0 0
        %1905 = vmatprep.mubr.bf16.mxu0 0
        %1906 = vmatmul.mubr.bf16.gmra.mxu0 %v1806
        %v1907 = vpop.f32.mrf.mxu0
        %v1908 = vadd.f32 0.0, %v1907
        %v1909 = vpop.f32.mrf.mxu0
        %v1910 = vadd.f32 0.0, %v1909
        %v1911 = vpop.f32.mrf.mxu0
        %v1912 = vpop.f32.mrf.mxu0
        %1913 = vdwg.mxu0
        %1914 = vmatprep.subr.bf16.mxu0 0
        %1915 = vmatpush1.bf16.msra.mxu0 0
        %1916 = vmatprep.subr.bf16.mxu0 0
        %1917 = vmatpush1.bf16.msra.mxu0 0
        %1918 = vmatprep.subr.bf16.mxu0 0
        %1919 = vmatpush1.bf16.msra.mxu0 0
        %1920 = vmatprep.subr.bf16.mxu0 0
        %1921 = vmatpush1.bf16.msra.mxu0 0
        %1922 = vmatprep.subr.bf16.mxu0 0
        %1923 = vmatpush1.bf16.msra.mxu0 0
        %1924 = vmatprep.subr.bf16.mxu0 0
        %1925 = vmatpush1.bf16.msra.mxu0 0
        %1926 = vmatprep.subr.bf16.mxu0 0
        %1927 = vmatpush1.bf16.msra.mxu0 0
        %1928 = vmatprep.subr.bf16.mxu0 %v1824
        %1929 = vmatpush1.bf16.msra.mxu0 %v1821
        %1930 = vmatprep.subr.bf16.mxu0 0
        %1931 = vmatpush2.bf16.msra.mxu0 0
        %1932 = vmatprep.subr.bf16.mxu0 0
        %1933 = vmatpush2.bf16.msra.mxu0 0
        %1934 = vmatprep.subr.bf16.mxu0 0
        %1935 = vmatpush2.bf16.msra.mxu0 0
        %1936 = vmatprep.subr.bf16.mxu0 0
        %1937 = vmatpush2.bf16.msra.mxu0 0
        %1938 = vmatprep.subr.bf16.mxu0 0
        %1939 = vmatpush2.bf16.msra.mxu0 0
        %1940 = vmatprep.subr.bf16.mxu0 0
        %1941 = vmatpush2.bf16.msra.mxu0 0
        %1942 = vmatprep.subr.bf16.mxu0 0
        %1943 = vmatpush2.bf16.msra.mxu0 0
        %1944 = vmatprep.subr.bf16.mxu0 0
        %1945 = vmatpush2.bf16.msra.mxu0 0
        %1946 = vmatprep.mubr.bf16.mxu0 0
        %1947 = vmatmul.mubr.bf16.gmra.mxu0 %v1806
        %v1948 = vpop.f32.mrf.mxu0
        %v1949 = vadd.f32 0.0, %v1948
        %v1950 = vpop.f32.mrf.mxu0
        %v1951 = vadd.f32 0.0, %v1950
        %v1952 = vpop.f32.mrf.mxu0
        %v1953 = vpop.f32.mrf.mxu0
        %1954 = vdwg.mxu0
        %1955 = vmatprep.subr.bf16.mxu0 0
        %1956 = vmatpush1.bf16.msra.mxu0 0
        %1957 = vmatprep.subr.bf16.mxu0 0
        %1958 = vmatpush1.bf16.msra.mxu0 0
        %1959 = vmatprep.subr.bf16.mxu0 0
        %1960 = vmatpush1.bf16.msra.mxu0 0
        %1961 = vmatprep.subr.bf16.mxu0 0
        %1962 = vmatpush1.bf16.msra.mxu0 0
        %1963 = vmatprep.subr.bf16.mxu0 0
        %1964 = vmatpush1.bf16.msra.mxu0 0
        %1965 = vmatprep.subr.bf16.mxu0 0
        %1966 = vmatpush1.bf16.msra.mxu0 0
        %1967 = vmatprep.subr.bf16.mxu0 0
        %1968 = vmatpush1.bf16.msra.mxu0 0
        %1969 = vmatprep.subr.bf16.mxu0 %v1830
        %1970 = vmatpush1.bf16.msra.mxu0 %v1827
        %1971 = vmatprep.subr.bf16.mxu0 0
        %1972 = vmatpush2.bf16.msra.mxu0 0
        %1973 = vmatprep.subr.bf16.mxu0 0
        %1974 = vmatpush2.bf16.msra.mxu0 0
        %1975 = vmatprep.subr.bf16.mxu0 0
        %1976 = vmatpush2.bf16.msra.mxu0 0
        %1977 = vmatprep.subr.bf16.mxu0 0
        %1978 = vmatpush2.bf16.msra.mxu0 0
        %1979 = vmatprep.subr.bf16.mxu0 0
        %1980 = vmatpush2.bf16.msra.mxu0 0
        %1981 = vmatprep.subr.bf16.mxu0 0
        %1982 = vmatpush2.bf16.msra.mxu0 0
        %1983 = vmatprep.subr.bf16.mxu0 0
        %1984 = vmatpush2.bf16.msra.mxu0 0
        %1985 = vmatprep.subr.bf16.mxu0 0
        %1986 = vmatpush2.bf16.msra.mxu0 0
        %1987 = vmatprep.mubr.bf16.mxu0 0
        %1988 = vmatmul.mubr.bf16.gmra.mxu0 %v1806
        %v1989 = vpop.f32.mrf.mxu0
        %v1990 = vadd.f32 0.0, %v1989
        %v1991 = vpop.f32.mrf.mxu0
        %v1992 = vadd.f32 0.0, %v1991
        %v1993 = vpop.f32.mrf.mxu0
        %v1994 = vpop.f32.mrf.mxu0
        %1995 = vdwg.mxu0
        %v1996 = vadd.f32 %v1768, %v1867
        %v1997 = vadd.f32 %v1769, %v1869
        %v1998 = vadd.f32 %v1770, %v1908
        %v1999 = vadd.f32 %v1771, %v1910
        %v2000 = vadd.f32 %v1772, %v1949
        %v2001 = vadd.f32 %v1773, %v1951
        %v2002 = vadd.f32 %v1774, %v1990
        %v2003 = vadd.f32 %v1775, %v1992
        %s2004 = scalar_lea.vmem %s1, 32
        %v2005 = vld [vmem:[%s2004] sm:$0xf]
        %2006 = vrot.lane.b32.xlu0 %v171, 49
        %v2007 = vpop.permute.xlu0 %2006
        %2008 = vrot.lane.b32.xlu0 %v172, 49
        %v2009 = vpop.permute.xlu0 %2008
        %2010 = vrot.lane.b32.xlu0 %v173, 49
        %v2011 = vpop.permute.xlu0 %2010
        %2012 = vrot.lane.b32.xlu0 %v174, 49
        %v2013 = vpop.permute.xlu0 %2012
        %2014 = vrot.lane.b32.xlu0 %v175, 49
        %v2015 = vpop.permute.xlu0 %2014
        %2016 = vrot.lane.b32.xlu0 %v176, 49
        %v2017 = vpop.permute.xlu0 %2016
        %2018 = vrot.lane.b32.xlu0 %v177, 49
        %v2019 = vpop.permute.xlu0 %2018
        %2020 = vrot.lane.b32.xlu0 %v178, 49
        %v2021 = vpop.permute.xlu0 %2020
        %2022 = vrot.lane.b32.xlu0 %v179, 49
        %v2023 = vpop.permute.xlu0 %2022
        %vm2024 = vcmask 400384
        %v2025 = vsel %vm2024, %v2007, %v2009
        %v2026 = vsel %vm2024, %v2009, %v2011
        %v2027 = vsel %vm2024, %v2011, %v2013
        %v2028 = vsel %vm2024, %v2013, %v2015
        %v2029 = vsel %vm2024, %v2015, %v2017
        %v2030 = vsel %vm2024, %v2017, %v2019
        %v2031 = vsel %vm2024, %v2019, %v2021
        %v2032 = vsel %vm2024, %v2021, %v2023
        %v2034 = vsel %vm207, %v2005, 0
        %v2037 = vsel %vm211, %v2025, 0
        %v2040 = vsel %vm211, %v2026, 0
        %v2043 = vsel %vm211, %v2027, 0
        %v2046 = vsel %vm211, %v2028, 0
        %v2049 = vsel %vm211, %v2029, 0
        %v2052 = vsel %vm211, %v2030, 0
        %v2055 = vsel %vm211, %v2031, 0
        %v2058 = vsel %vm211, %v2032, 0
        %2060 = vmatprep.subr.bf16.mxu0 0
        %2061 = vmatpush1.bf16.msra.mxu0 0
        %2062 = vmatprep.subr.bf16.mxu0 0
        %2063 = vmatpush1.bf16.msra.mxu0 0
        %2064 = vmatprep.subr.bf16.mxu0 0
        %2065 = vmatpush1.bf16.msra.mxu0 0
        %2066 = vmatprep.subr.bf16.mxu0 0
        %2067 = vmatpush1.bf16.msra.mxu0 0
        %2068 = vmatprep.subr.bf16.mxu0 0
        %2069 = vmatpush1.bf16.msra.mxu0 0
        %2070 = vmatprep.subr.bf16.mxu0 0
        %2071 = vmatpush1.bf16.msra.mxu0 0
        %2072 = vmatprep.subr.bf16.mxu0 0
        %2073 = vmatpush1.bf16.msra.mxu0 0
        %2074 = vmatprep.subr.bf16.mxu0 %v2040
        %2075 = vmatpush1.bf16.msra.mxu0 %v2037
        %2076 = vmatprep.subr.bf16.mxu0 0
        %2077 = vmatpush2.bf16.msra.mxu0 0
        %2078 = vmatprep.subr.bf16.mxu0 0
        %2079 = vmatpush2.bf16.msra.mxu0 0
        %2080 = vmatprep.subr.bf16.mxu0 0
        %2081 = vmatpush2.bf16.msra.mxu0 0
        %2082 = vmatprep.subr.bf16.mxu0 0
        %2083 = vmatpush2.bf16.msra.mxu0 0
        %2084 = vmatprep.subr.bf16.mxu0 0
        %2085 = vmatpush2.bf16.msra.mxu0 0
        %2086 = vmatprep.subr.bf16.mxu0 0
        %2087 = vmatpush2.bf16.msra.mxu0 0
        %2088 = vmatprep.subr.bf16.mxu0 0
        %2089 = vmatpush2.bf16.msra.mxu0 0
        %2090 = vmatprep.subr.bf16.mxu0 0
        %2091 = vmatpush2.bf16.msra.mxu0 0
        %2092 = vmatprep.mubr.bf16.mxu0 0
        %2093 = vmatmul.mubr.bf16.gmra.mxu0 %v2034
        %v2094 = vpop.f32.mrf.mxu0
        %v2095 = vadd.f32 0.0, %v2094
        %v2096 = vpop.f32.mrf.mxu0
        %v2097 = vadd.f32 0.0, %v2096
        %v2098 = vpop.f32.mrf.mxu0
        %v2099 = vpop.f32.mrf.mxu0
        %2100 = vdwg.mxu0
        %2101 = vmatprep.subr.bf16.mxu0 0
        %2102 = vmatpush1.bf16.msra.mxu0 0
        %2103 = vmatprep.subr.bf16.mxu0 0
        %2104 = vmatpush1.bf16.msra.mxu0 0
        %2105 = vmatprep.subr.bf16.mxu0 0
        %2106 = vmatpush1.bf16.msra.mxu0 0
        %2107 = vmatprep.subr.bf16.mxu0 0
        %2108 = vmatpush1.bf16.msra.mxu0 0
        %2109 = vmatprep.subr.bf16.mxu0 0
        %2110 = vmatpush1.bf16.msra.mxu0 0
        %2111 = vmatprep.subr.bf16.mxu0 0
        %2112 = vmatpush1.bf16.msra.mxu0 0
        %2113 = vmatprep.subr.bf16.mxu0 0
        %2114 = vmatpush1.bf16.msra.mxu0 0
        %2115 = vmatprep.subr.bf16.mxu0 %v2046
        %2116 = vmatpush1.bf16.msra.mxu0 %v2043
        %2117 = vmatprep.subr.bf16.mxu0 0
        %2118 = vmatpush2.bf16.msra.mxu0 0
        %2119 = vmatprep.subr.bf16.mxu0 0
        %2120 = vmatpush2.bf16.msra.mxu0 0
        %2121 = vmatprep.subr.bf16.mxu0 0
        %2122 = vmatpush2.bf16.msra.mxu0 0
        %2123 = vmatprep.subr.bf16.mxu0 0
        %2124 = vmatpush2.bf16.msra.mxu0 0
        %2125 = vmatprep.subr.bf16.mxu0 0
        %2126 = vmatpush2.bf16.msra.mxu0 0
        %2127 = vmatprep.subr.bf16.mxu0 0
        %2128 = vmatpush2.bf16.msra.mxu0 0
        %2129 = vmatprep.subr.bf16.mxu0 0
        %2130 = vmatpush2.bf16.msra.mxu0 0
        %2131 = vmatprep.subr.bf16.mxu0 0
        %2132 = vmatpush2.bf16.msra.mxu0 0
        %2133 = vmatprep.mubr.bf16.mxu0 0
        %2134 = vmatmul.mubr.bf16.gmra.mxu0 %v2034
        %v2135 = vpop.f32.mrf.mxu0
        %v2136 = vadd.f32 0.0, %v2135
        %v2137 = vpop.f32.mrf.mxu0
        %v2138 = vadd.f32 0.0, %v2137
        %v2139 = vpop.f32.mrf.mxu0
        %v2140 = vpop.f32.mrf.mxu0
        %2141 = vdwg.mxu0
        %2142 = vmatprep.subr.bf16.mxu0 0
        %2143 = vmatpush1.bf16.msra.mxu0 0
        %2144 = vmatprep.subr.bf16.mxu0 0
        %2145 = vmatpush1.bf16.msra.mxu0 0
        %2146 = vmatprep.subr.bf16.mxu0 0
        %2147 = vmatpush1.bf16.msra.mxu0 0
        %2148 = vmatprep.subr.bf16.mxu0 0
        %2149 = vmatpush1.bf16.msra.mxu0 0
        %2150 = vmatprep.subr.bf16.mxu0 0
        %2151 = vmatpush1.bf16.msra.mxu0 0
        %2152 = vmatprep.subr.bf16.mxu0 0
        %2153 = vmatpush1.bf16.msra.mxu0 0
        %2154 = vmatprep.subr.bf16.mxu0 0
        %2155 = vmatpush1.bf16.msra.mxu0 0
        %2156 = vmatprep.subr.bf16.mxu0 %v2052
        %2157 = vmatpush1.bf16.msra.mxu0 %v2049
        %2158 = vmatprep.subr.bf16.mxu0 0
        %2159 = vmatpush2.bf16.msra.mxu0 0
        %2160 = vmatprep.subr.bf16.mxu0 0
        %2161 = vmatpush2.bf16.msra.mxu0 0
        %2162 = vmatprep.subr.bf16.mxu0 0
        %2163 = vmatpush2.bf16.msra.mxu0 0
        %2164 = vmatprep.subr.bf16.mxu0 0
        %2165 = vmatpush2.bf16.msra.mxu0 0
        %2166 = vmatprep.subr.bf16.mxu0 0
        %2167 = vmatpush2.bf16.msra.mxu0 0
        %2168 = vmatprep.subr.bf16.mxu0 0
        %2169 = vmatpush2.bf16.msra.mxu0 0
        %2170 = vmatprep.subr.bf16.mxu0 0
        %2171 = vmatpush2.bf16.msra.mxu0 0
        %2172 = vmatprep.subr.bf16.mxu0 0
        %2173 = vmatpush2.bf16.msra.mxu0 0
        %2174 = vmatprep.mubr.bf16.mxu0 0
        %2175 = vmatmul.mubr.bf16.gmra.mxu0 %v2034
        %v2176 = vpop.f32.mrf.mxu0
        %v2177 = vadd.f32 0.0, %v2176
        %v2178 = vpop.f32.mrf.mxu0
        %v2179 = vadd.f32 0.0, %v2178
        %v2180 = vpop.f32.mrf.mxu0
        %v2181 = vpop.f32.mrf.mxu0
        %2182 = vdwg.mxu0
        %2183 = vmatprep.subr.bf16.mxu0 0
        %2184 = vmatpush1.bf16.msra.mxu0 0
        %2185 = vmatprep.subr.bf16.mxu0 0
        %2186 = vmatpush1.bf16.msra.mxu0 0
        %2187 = vmatprep.subr.bf16.mxu0 0
        %2188 = vmatpush1.bf16.msra.mxu0 0
        %2189 = vmatprep.subr.bf16.mxu0 0
        %2190 = vmatpush1.bf16.msra.mxu0 0
        %2191 = vmatprep.subr.bf16.mxu0 0
        %2192 = vmatpush1.bf16.msra.mxu0 0
        %2193 = vmatprep.subr.bf16.mxu0 0
        %2194 = vmatpush1.bf16.msra.mxu0 0
        %2195 = vmatprep.subr.bf16.mxu0 0
        %2196 = vmatpush1.bf16.msra.mxu0 0
        %2197 = vmatprep.subr.bf16.mxu0 %v2058
        %2198 = vmatpush1.bf16.msra.mxu0 %v2055
        %2199 = vmatprep.subr.bf16.mxu0 0
        %2200 = vmatpush2.bf16.msra.mxu0 0
        %2201 = vmatprep.subr.bf16.mxu0 0
        %2202 = vmatpush2.bf16.msra.mxu0 0
        %2203 = vmatprep.subr.bf16.mxu0 0
        %2204 = vmatpush2.bf16.msra.mxu0 0
        %2205 = vmatprep.subr.bf16.mxu0 0
        %2206 = vmatpush2.bf16.msra.mxu0 0
        %2207 = vmatprep.subr.bf16.mxu0 0
        %2208 = vmatpush2.bf16.msra.mxu0 0
        %2209 = vmatprep.subr.bf16.mxu0 0
        %2210 = vmatpush2.bf16.msra.mxu0 0
        %2211 = vmatprep.subr.bf16.mxu0 0
        %2212 = vmatpush2.bf16.msra.mxu0 0
        %2213 = vmatprep.subr.bf16.mxu0 0
        %2214 = vmatpush2.bf16.msra.mxu0 0
        %2215 = vmatprep.mubr.bf16.mxu0 0
        %2216 = vmatmul.mubr.bf16.gmra.mxu0 %v2034
        %v2217 = vpop.f32.mrf.mxu0
        %v2218 = vadd.f32 0.0, %v2217
        %v2219 = vpop.f32.mrf.mxu0
        %v2220 = vadd.f32 0.0, %v2219
        %v2221 = vpop.f32.mrf.mxu0
        %v2222 = vpop.f32.mrf.mxu0
        %2223 = vdwg.mxu0
        %v2224 = vadd.f32 %v1996, %v2095
        %v2225 = vadd.f32 %v1997, %v2097
        %v2226 = vadd.f32 %v1998, %v2136
        %v2227 = vadd.f32 %v1999, %v2138
        %v2228 = vadd.f32 %v2000, %v2177
        %v2229 = vadd.f32 %v2001, %v2179
        %v2230 = vadd.f32 %v2002, %v2218
        %v2231 = vadd.f32 %v2003, %v2220
        %v2232 = vld [vmem:[#allocation2 + $0x8] sm:$0xff]
        %v2233 = vld [vmem:[#allocation2 + $0x10] sm:$0xff]
        %v2234 = vld [vmem:[#allocation2 + $0x18] sm:$0xff]
        %v2235 = vld [vmem:[#allocation2 + $0x20] sm:$0xff]
        %v2236 = vld [vmem:[#allocation2 + $0x28] sm:$0xf]
        %s2237 = scalar_lea.vmem %s1, 36
        %v2238 = vld [vmem:[%s2237] sm:$0xf]
        %v2244 = vunpack.c.l.b16 %v2232
        %v2245 = vunpack.c.h.b16 %v2232
        %v2246 = vunpack.c.l.b16 %v2233
        %v2247 = vunpack.c.h.b16 %v2233
        %v2248 = vunpack.c.l.b16 %v2234
        %v2249 = vunpack.c.h.b16 %v2234
        %v2250 = vunpack.c.l.b16 %v2235
        %v2251 = vunpack.c.h.b16 %v2235
        %v2252 = vunpack.c.l.b16 %v2236
        %v2253 = vpack.c.b16 %v2244, %v2244
        %v2254 = vpack.c.b16 %v2245, %v2245
        %v2255 = vpack.c.b16 %v2246, %v2246
        %v2256 = vpack.c.b16 %v2247, %v2247
        %v2257 = vpack.c.b16 %v2248, %v2248
        %v2258 = vpack.c.b16 %v2249, %v2249
        %v2259 = vpack.c.b16 %v2250, %v2250
        %v2260 = vpack.c.b16 %v2251, %v2251
        %v2261 = vpack.c.b16 %v2252, %v2252
        %2262 = vrot.lane.b32.xlu0 %v2253, 19
        %v2263 = vpop.permute.xlu0 %2262
        %2264 = vrot.lane.b32.xlu0 %v2254, 19
        %v2265 = vpop.permute.xlu0 %2264
        %2266 = vrot.lane.b32.xlu0 %v2255, 19
        %v2267 = vpop.permute.xlu0 %2266
        %2268 = vrot.lane.b32.xlu0 %v2256, 19
        %v2269 = vpop.permute.xlu0 %2268
        %2270 = vrot.lane.b32.xlu0 %v2257, 19
        %v2271 = vpop.permute.xlu0 %2270
        %2272 = vrot.lane.b32.xlu0 %v2258, 19
        %v2273 = vpop.permute.xlu0 %2272
        %2274 = vrot.lane.b32.xlu0 %v2259, 19
        %v2275 = vpop.permute.xlu0 %2274
        %2276 = vrot.lane.b32.xlu0 %v2260, 19
        %v2277 = vpop.permute.xlu0 %2276
        %2278 = vrot.lane.b32.xlu0 %v2261, 19
        %v2279 = vpop.permute.xlu0 %2278
        %vm2280 = vcmask 154624
        %v2281 = vsel %vm2280, %v2263, %v2265
        %v2282 = vsel %vm2280, %v2265, %v2267
        %v2283 = vsel %vm2280, %v2267, %v2269
        %v2284 = vsel %vm2280, %v2269, %v2271
        %v2285 = vsel %vm2280, %v2271, %v2273
        %v2286 = vsel %vm2280, %v2273, %v2275
        %v2287 = vsel %vm2280, %v2275, %v2277
        %v2288 = vsel %vm2280, %v2277, %v2279
        %v2290 = vsel %vm207, %v2238, 0
        %v2293 = vsel %vm211, %v2281, 0
        %v2296 = vsel %vm211, %v2282, 0
        %v2299 = vsel %vm211, %v2283, 0
        %v2302 = vsel %vm211, %v2284, 0
        %v2305 = vsel %vm211, %v2285, 0
        %v2308 = vsel %vm211, %v2286, 0
        %v2311 = vsel %vm211, %v2287, 0
        %v2314 = vsel %vm211, %v2288, 0
        %2316 = vmatprep.subr.bf16.mxu0 0
        %2317 = vmatpush1.bf16.msra.mxu0 0
        %2318 = vmatprep.subr.bf16.mxu0 0
        %2319 = vmatpush1.bf16.msra.mxu0 0
        %2320 = vmatprep.subr.bf16.mxu0 0
        %2321 = vmatpush1.bf16.msra.mxu0 0
        %2322 = vmatprep.subr.bf16.mxu0 0
        %2323 = vmatpush1.bf16.msra.mxu0 0
        %2324 = vmatprep.subr.bf16.mxu0 0
        %2325 = vmatpush1.bf16.msra.mxu0 0
        %2326 = vmatprep.subr.bf16.mxu0 0
        %2327 = vmatpush1.bf16.msra.mxu0 0
        %2328 = vmatprep.subr.bf16.mxu0 0
        %2329 = vmatpush1.bf16.msra.mxu0 0
        %2330 = vmatprep.subr.bf16.mxu0 %v2296
        %2331 = vmatpush1.bf16.msra.mxu0 %v2293
        %2332 = vmatprep.subr.bf16.mxu0 0
        %2333 = vmatpush2.bf16.msra.mxu0 0
        %2334 = vmatprep.subr.bf16.mxu0 0
        %2335 = vmatpush2.bf16.msra.mxu0 0
        %2336 = vmatprep.subr.bf16.mxu0 0
        %2337 = vmatpush2.bf16.msra.mxu0 0
        %2338 = vmatprep.subr.bf16.mxu0 0
        %2339 = vmatpush2.bf16.msra.mxu0 0
        %2340 = vmatprep.subr.bf16.mxu0 0
        %2341 = vmatpush2.bf16.msra.mxu0 0
        %2342 = vmatprep.subr.bf16.mxu0 0
        %2343 = vmatpush2.bf16.msra.mxu0 0
        %2344 = vmatprep.subr.bf16.mxu0 0
        %2345 = vmatpush2.bf16.msra.mxu0 0
        %2346 = vmatprep.subr.bf16.mxu0 0
        %2347 = vmatpush2.bf16.msra.mxu0 0
        %2348 = vmatprep.mubr.bf16.mxu0 0
        %2349 = vmatmul.mubr.bf16.gmra.mxu0 %v2290
        %v2350 = vpop.f32.mrf.mxu0
        %v2351 = vadd.f32 0.0, %v2350
        %v2352 = vpop.f32.mrf.mxu0
        %v2353 = vadd.f32 0.0, %v2352
        %v2354 = vpop.f32.mrf.mxu0
        %v2355 = vpop.f32.mrf.mxu0
        %2356 = vdwg.mxu0
        %2357 = vmatprep.subr.bf16.mxu0 0
        %2358 = vmatpush1.bf16.msra.mxu0 0
        %2359 = vmatprep.subr.bf16.mxu0 0
        %2360 = vmatpush1.bf16.msra.mxu0 0
        %2361 = vmatprep.subr.bf16.mxu0 0
        %2362 = vmatpush1.bf16.msra.mxu0 0
        %2363 = vmatprep.subr.bf16.mxu0 0
        %2364 = vmatpush1.bf16.msra.mxu0 0
        %2365 = vmatprep.subr.bf16.mxu0 0
        %2366 = vmatpush1.bf16.msra.mxu0 0
        %2367 = vmatprep.subr.bf16.mxu0 0
        %2368 = vmatpush1.bf16.msra.mxu0 0
        %2369 = vmatprep.subr.bf16.mxu0 0
        %2370 = vmatpush1.bf16.msra.mxu0 0
        %2371 = vmatprep.subr.bf16.mxu0 %v2302
        %2372 = vmatpush1.bf16.msra.mxu0 %v2299
        %2373 = vmatprep.subr.bf16.mxu0 0
        %2374 = vmatpush2.bf16.msra.mxu0 0
        %2375 = vmatprep.subr.bf16.mxu0 0
        %2376 = vmatpush2.bf16.msra.mxu0 0
        %2377 = vmatprep.subr.bf16.mxu0 0
        %2378 = vmatpush2.bf16.msra.mxu0 0
        %2379 = vmatprep.subr.bf16.mxu0 0
        %2380 = vmatpush2.bf16.msra.mxu0 0
        %2381 = vmatprep.subr.bf16.mxu0 0
        %2382 = vmatpush2.bf16.msra.mxu0 0
        %2383 = vmatprep.subr.bf16.mxu0 0
        %2384 = vmatpush2.bf16.msra.mxu0 0
        %2385 = vmatprep.subr.bf16.mxu0 0
        %2386 = vmatpush2.bf16.msra.mxu0 0
        %2387 = vmatprep.subr.bf16.mxu0 0
        %2388 = vmatpush2.bf16.msra.mxu0 0
        %2389 = vmatprep.mubr.bf16.mxu0 0
        %2390 = vmatmul.mubr.bf16.gmra.mxu0 %v2290
        %v2391 = vpop.f32.mrf.mxu0
        %v2392 = vadd.f32 0.0, %v2391
        %v2393 = vpop.f32.mrf.mxu0
        %v2394 = vadd.f32 0.0, %v2393
        %v2395 = vpop.f32.mrf.mxu0
        %v2396 = vpop.f32.mrf.mxu0
        %2397 = vdwg.mxu0
        %2398 = vmatprep.subr.bf16.mxu0 0
        %2399 = vmatpush1.bf16.msra.mxu0 0
        %2400 = vmatprep.subr.bf16.mxu0 0
        %2401 = vmatpush1.bf16.msra.mxu0 0
        %2402 = vmatprep.subr.bf16.mxu0 0
        %2403 = vmatpush1.bf16.msra.mxu0 0
        %2404 = vmatprep.subr.bf16.mxu0 0
        %2405 = vmatpush1.bf16.msra.mxu0 0
        %2406 = vmatprep.subr.bf16.mxu0 0
        %2407 = vmatpush1.bf16.msra.mxu0 0
        %2408 = vmatprep.subr.bf16.mxu0 0
        %2409 = vmatpush1.bf16.msra.mxu0 0
        %2410 = vmatprep.subr.bf16.mxu0 0
        %2411 = vmatpush1.bf16.msra.mxu0 0
        %2412 = vmatprep.subr.bf16.mxu0 %v2308
        %2413 = vmatpush1.bf16.msra.mxu0 %v2305
        %2414 = vmatprep.subr.bf16.mxu0 0
        %2415 = vmatpush2.bf16.msra.mxu0 0
        %2416 = vmatprep.subr.bf16.mxu0 0
        %2417 = vmatpush2.bf16.msra.mxu0 0
        %2418 = vmatprep.subr.bf16.mxu0 0
        %2419 = vmatpush2.bf16.msra.mxu0 0
        %2420 = vmatprep.subr.bf16.mxu0 0
        %2421 = vmatpush2.bf16.msra.mxu0 0
        %2422 = vmatprep.subr.bf16.mxu0 0
        %2423 = vmatpush2.bf16.msra.mxu0 0
        %2424 = vmatprep.subr.bf16.mxu0 0
        %2425 = vmatpush2.bf16.msra.mxu0 0
        %2426 = vmatprep.subr.bf16.mxu0 0
        %2427 = vmatpush2.bf16.msra.mxu0 0
        %2428 = vmatprep.subr.bf16.mxu0 0
        %2429 = vmatpush2.bf16.msra.mxu0 0
        %2430 = vmatprep.mubr.bf16.mxu0 0
        %2431 = vmatmul.mubr.bf16.gmra.mxu0 %v2290
        %v2432 = vpop.f32.mrf.mxu0
        %v2433 = vadd.f32 0.0, %v2432
        %v2434 = vpop.f32.mrf.mxu0
        %v2435 = vadd.f32 0.0, %v2434
        %v2436 = vpop.f32.mrf.mxu0
        %v2437 = vpop.f32.mrf.mxu0
        %2438 = vdwg.mxu0
        %2439 = vmatprep.subr.bf16.mxu0 0
        %2440 = vmatpush1.bf16.msra.mxu0 0
        %2441 = vmatprep.subr.bf16.mxu0 0
        %2442 = vmatpush1.bf16.msra.mxu0 0
        %2443 = vmatprep.subr.bf16.mxu0 0
        %2444 = vmatpush1.bf16.msra.mxu0 0
        %2445 = vmatprep.subr.bf16.mxu0 0
        %2446 = vmatpush1.bf16.msra.mxu0 0
        %2447 = vmatprep.subr.bf16.mxu0 0
        %2448 = vmatpush1.bf16.msra.mxu0 0
        %2449 = vmatprep.subr.bf16.mxu0 0
        %2450 = vmatpush1.bf16.msra.mxu0 0
        %2451 = vmatprep.subr.bf16.mxu0 0
        %2452 = vmatpush1.bf16.msra.mxu0 0
        %2453 = vmatprep.subr.bf16.mxu0 %v2314
        %2454 = vmatpush1.bf16.msra.mxu0 %v2311
        %2455 = vmatprep.subr.bf16.mxu0 0
        %2456 = vmatpush2.bf16.msra.mxu0 0
        %2457 = vmatprep.subr.bf16.mxu0 0
        %2458 = vmatpush2.bf16.msra.mxu0 0
        %2459 = vmatprep.subr.bf16.mxu0 0
        %2460 = vmatpush2.bf16.msra.mxu0 0
        %2461 = vmatprep.subr.bf16.mxu0 0
        %2462 = vmatpush2.bf16.msra.mxu0 0
        %2463 = vmatprep.subr.bf16.mxu0 0
        %2464 = vmatpush2.bf16.msra.mxu0 0
        %2465 = vmatprep.subr.bf16.mxu0 0
        %2466 = vmatpush2.bf16.msra.mxu0 0
        %2467 = vmatprep.subr.bf16.mxu0 0
        %2468 = vmatpush2.bf16.msra.mxu0 0
        %2469 = vmatprep.subr.bf16.mxu0 0
        %2470 = vmatpush2.bf16.msra.mxu0 0
        %2471 = vmatprep.mubr.bf16.mxu0 0
        %2472 = vmatmul.mubr.bf16.gmra.mxu0 %v2290
        %v2473 = vpop.f32.mrf.mxu0
        %v2474 = vadd.f32 0.0, %v2473
        %v2475 = vpop.f32.mrf.mxu0
        %v2476 = vadd.f32 0.0, %v2475
        %v2477 = vpop.f32.mrf.mxu0
        %v2478 = vpop.f32.mrf.mxu0
        %2479 = vdwg.mxu0
        %v2480 = vadd.f32 %v2224, %v2351
        %v2481 = vadd.f32 %v2225, %v2353
        %v2482 = vadd.f32 %v2226, %v2392
        %v2483 = vadd.f32 %v2227, %v2394
        %v2484 = vadd.f32 %v2228, %v2433
        %v2485 = vadd.f32 %v2229, %v2435
        %v2486 = vadd.f32 %v2230, %v2474
        %v2487 = vadd.f32 %v2231, %v2476
        %s2488 = scalar_lea.vmem %s1, 40
        %v2489 = vld [vmem:[%s2488] sm:$0xf]
        %2490 = vrot.lane.b32.xlu0 %v2253, 18
        %v2491 = vpop.permute.xlu0 %2490
        %2492 = vrot.lane.b32.xlu0 %v2254, 18
        %v2493 = vpop.permute.xlu0 %2492
        %2494 = vrot.lane.b32.xlu0 %v2255, 18
        %v2495 = vpop.permute.xlu0 %2494
        %2496 = vrot.lane.b32.xlu0 %v2256, 18
        %v2497 = vpop.permute.xlu0 %2496
        %2498 = vrot.lane.b32.xlu0 %v2257, 18
        %v2499 = vpop.permute.xlu0 %2498
        %2500 = vrot.lane.b32.xlu0 %v2258, 18
        %v2501 = vpop.permute.xlu0 %2500
        %2502 = vrot.lane.b32.xlu0 %v2259, 18
        %v2503 = vpop.permute.xlu0 %2502
        %2504 = vrot.lane.b32.xlu0 %v2260, 18
        %v2505 = vpop.permute.xlu0 %2504
        %2506 = vrot.lane.b32.xlu0 %v2261, 18
        %v2507 = vpop.permute.xlu0 %2506
        %vm2508 = vcmask 146432
        %v2509 = vsel %vm2508, %v2491, %v2493
        %v2510 = vsel %vm2508, %v2493, %v2495
        %v2511 = vsel %vm2508, %v2495, %v2497
        %v2512 = vsel %vm2508, %v2497, %v2499
        %v2513 = vsel %vm2508, %v2499, %v2501
        %v2514 = vsel %vm2508, %v2501, %v2503
        %v2515 = vsel %vm2508, %v2503, %v2505
        %v2516 = vsel %vm2508, %v2505, %v2507
        %v2518 = vsel %vm207, %v2489, 0
        %v2521 = vsel %vm211, %v2509, 0
        %v2524 = vsel %vm211, %v2510, 0
        %v2527 = vsel %vm211, %v2511, 0
        %v2530 = vsel %vm211, %v2512, 0
        %v2533 = vsel %vm211, %v2513, 0
        %v2536 = vsel %vm211, %v2514, 0
        %v2539 = vsel %vm211, %v2515, 0
        %v2542 = vsel %vm211, %v2516, 0
        %2544 = vmatprep.subr.bf16.mxu0 0
        %2545 = vmatpush1.bf16.msra.mxu0 0
        %2546 = vmatprep.subr.bf16.mxu0 0
        %2547 = vmatpush1.bf16.msra.mxu0 0
        %2548 = vmatprep.subr.bf16.mxu0 0
        %2549 = vmatpush1.bf16.msra.mxu0 0
        %2550 = vmatprep.subr.bf16.mxu0 0
        %2551 = vmatpush1.bf16.msra.mxu0 0
        %2552 = vmatprep.subr.bf16.mxu0 0
        %2553 = vmatpush1.bf16.msra.mxu0 0
        %2554 = vmatprep.subr.bf16.mxu0 0
        %2555 = vmatpush1.bf16.msra.mxu0 0
        %2556 = vmatprep.subr.bf16.mxu0 0
        %2557 = vmatpush1.bf16.msra.mxu0 0
        %2558 = vmatprep.subr.bf16.mxu0 %v2524
        %2559 = vmatpush1.bf16.msra.mxu0 %v2521
        %2560 = vmatprep.subr.bf16.mxu0 0
        %2561 = vmatpush2.bf16.msra.mxu0 0
        %2562 = vmatprep.subr.bf16.mxu0 0
        %2563 = vmatpush2.bf16.msra.mxu0 0
        %2564 = vmatprep.subr.bf16.mxu0 0
        %2565 = vmatpush2.bf16.msra.mxu0 0
        %2566 = vmatprep.subr.bf16.mxu0 0
        %2567 = vmatpush2.bf16.msra.mxu0 0
        %2568 = vmatprep.subr.bf16.mxu0 0
        %2569 = vmatpush2.bf16.msra.mxu0 0
        %2570 = vmatprep.subr.bf16.mxu0 0
        %2571 = vmatpush2.bf16.msra.mxu0 0
        %2572 = vmatprep.subr.bf16.mxu0 0
        %2573 = vmatpush2.bf16.msra.mxu0 0
        %2574 = vmatprep.subr.bf16.mxu0 0
        %2575 = vmatpush2.bf16.msra.mxu0 0
        %2576 = vmatprep.mubr.bf16.mxu0 0
        %2577 = vmatmul.mubr.bf16.gmra.mxu0 %v2518
        %v2578 = vpop.f32.mrf.mxu0
        %v2579 = vadd.f32 0.0, %v2578
        %v2580 = vpop.f32.mrf.mxu0
        %v2581 = vadd.f32 0.0, %v2580
        %v2582 = vpop.f32.mrf.mxu0
        %v2583 = vpop.f32.mrf.mxu0
        %2584 = vdwg.mxu0
        %2585 = vmatprep.subr.bf16.mxu0 0
        %2586 = vmatpush1.bf16.msra.mxu0 0
        %2587 = vmatprep.subr.bf16.mxu0 0
        %2588 = vmatpush1.bf16.msra.mxu0 0
        %2589 = vmatprep.subr.bf16.mxu0 0
        %2590 = vmatpush1.bf16.msra.mxu0 0
        %2591 = vmatprep.subr.bf16.mxu0 0
        %2592 = vmatpush1.bf16.msra.mxu0 0
        %2593 = vmatprep.subr.bf16.mxu0 0
        %2594 = vmatpush1.bf16.msra.mxu0 0
        %2595 = vmatprep.subr.bf16.mxu0 0
        %2596 = vmatpush1.bf16.msra.mxu0 0
        %2597 = vmatprep.subr.bf16.mxu0 0
        %2598 = vmatpush1.bf16.msra.mxu0 0
        %2599 = vmatprep.subr.bf16.mxu0 %v2530
        %2600 = vmatpush1.bf16.msra.mxu0 %v2527
        %2601 = vmatprep.subr.bf16.mxu0 0
        %2602 = vmatpush2.bf16.msra.mxu0 0
        %2603 = vmatprep.subr.bf16.mxu0 0
        %2604 = vmatpush2.bf16.msra.mxu0 0
        %2605 = vmatprep.subr.bf16.mxu0 0
        %2606 = vmatpush2.bf16.msra.mxu0 0
        %2607 = vmatprep.subr.bf16.mxu0 0
        %2608 = vmatpush2.bf16.msra.mxu0 0
        %2609 = vmatprep.subr.bf16.mxu0 0
        %2610 = vmatpush2.bf16.msra.mxu0 0
        %2611 = vmatprep.subr.bf16.mxu0 0
        %2612 = vmatpush2.bf16.msra.mxu0 0
        %2613 = vmatprep.subr.bf16.mxu0 0
        %2614 = vmatpush2.bf16.msra.mxu0 0
        %2615 = vmatprep.subr.bf16.mxu0 0
        %2616 = vmatpush2.bf16.msra.mxu0 0
        %2617 = vmatprep.mubr.bf16.mxu0 0
        %2618 = vmatmul.mubr.bf16.gmra.mxu0 %v2518
        %v2619 = vpop.f32.mrf.mxu0
        %v2620 = vadd.f32 0.0, %v2619
        %v2621 = vpop.f32.mrf.mxu0
        %v2622 = vadd.f32 0.0, %v2621
        %v2623 = vpop.f32.mrf.mxu0
        %v2624 = vpop.f32.mrf.mxu0
        %2625 = vdwg.mxu0
        %2626 = vmatprep.subr.bf16.mxu0 0
        %2627 = vmatpush1.bf16.msra.mxu0 0
        %2628 = vmatprep.subr.bf16.mxu0 0
        %2629 = vmatpush1.bf16.msra.mxu0 0
        %2630 = vmatprep.subr.bf16.mxu0 0
        %2631 = vmatpush1.bf16.msra.mxu0 0
        %2632 = vmatprep.subr.bf16.mxu0 0
        %2633 = vmatpush1.bf16.msra.mxu0 0
        %2634 = vmatprep.subr.bf16.mxu0 0
        %2635 = vmatpush1.bf16.msra.mxu0 0
        %2636 = vmatprep.subr.bf16.mxu0 0
        %2637 = vmatpush1.bf16.msra.mxu0 0
        %2638 = vmatprep.subr.bf16.mxu0 0
        %2639 = vmatpush1.bf16.msra.mxu0 0
        %2640 = vmatprep.subr.bf16.mxu0 %v2536
        %2641 = vmatpush1.bf16.msra.mxu0 %v2533
        %2642 = vmatprep.subr.bf16.mxu0 0
        %2643 = vmatpush2.bf16.msra.mxu0 0
        %2644 = vmatprep.subr.bf16.mxu0 0
        %2645 = vmatpush2.bf16.msra.mxu0 0
        %2646 = vmatprep.subr.bf16.mxu0 0
        %2647 = vmatpush2.bf16.msra.mxu0 0
        %2648 = vmatprep.subr.bf16.mxu0 0
        %2649 = vmatpush2.bf16.msra.mxu0 0
        %2650 = vmatprep.subr.bf16.mxu0 0
        %2651 = vmatpush2.bf16.msra.mxu0 0
        %2652 = vmatprep.subr.bf16.mxu0 0
        %2653 = vmatpush2.bf16.msra.mxu0 0
        %2654 = vmatprep.subr.bf16.mxu0 0
        %2655 = vmatpush2.bf16.msra.mxu0 0
        %2656 = vmatprep.subr.bf16.mxu0 0
        %2657 = vmatpush2.bf16.msra.mxu0 0
        %2658 = vmatprep.mubr.bf16.mxu0 0
        %2659 = vmatmul.mubr.bf16.gmra.mxu0 %v2518
        %v2660 = vpop.f32.mrf.mxu0
        %v2661 = vadd.f32 0.0, %v2660
        %v2662 = vpop.f32.mrf.mxu0
        %v2663 = vadd.f32 0.0, %v2662
        %v2664 = vpop.f32.mrf.mxu0
        %v2665 = vpop.f32.mrf.mxu0
        %2666 = vdwg.mxu0
        %2667 = vmatprep.subr.bf16.mxu0 0
        %2668 = vmatpush1.bf16.msra.mxu0 0
        %2669 = vmatprep.subr.bf16.mxu0 0
        %2670 = vmatpush1.bf16.msra.mxu0 0
        %2671 = vmatprep.subr.bf16.mxu0 0
        %2672 = vmatpush1.bf16.msra.mxu0 0
        %2673 = vmatprep.subr.bf16.mxu0 0
        %2674 = vmatpush1.bf16.msra.mxu0 0
        %2675 = vmatprep.subr.bf16.mxu0 0
        %2676 = vmatpush1.bf16.msra.mxu0 0
        %2677 = vmatprep.subr.bf16.mxu0 0
        %2678 = vmatpush1.bf16.msra.mxu0 0
        %2679 = vmatprep.subr.bf16.mxu0 0
        %2680 = vmatpush1.bf16.msra.mxu0 0
        %2681 = vmatprep.subr.bf16.mxu0 %v2542
        %2682 = vmatpush1.bf16.msra.mxu0 %v2539
        %2683 = vmatprep.subr.bf16.mxu0 0
        %2684 = vmatpush2.bf16.msra.mxu0 0
        %2685 = vmatprep.subr.bf16.mxu0 0
        %2686 = vmatpush2.bf16.msra.mxu0 0
        %2687 = vmatprep.subr.bf16.mxu0 0
        %2688 = vmatpush2.bf16.msra.mxu0 0
        %2689 = vmatprep.subr.bf16.mxu0 0
        %2690 = vmatpush2.bf16.msra.mxu0 0
        %2691 = vmatprep.subr.bf16.mxu0 0
        %2692 = vmatpush2.bf16.msra.mxu0 0
        %2693 = vmatprep.subr.bf16.mxu0 0
        %2694 = vmatpush2.bf16.msra.mxu0 0
        %2695 = vmatprep.subr.bf16.mxu0 0
        %2696 = vmatpush2.bf16.msra.mxu0 0
        %2697 = vmatprep.subr.bf16.mxu0 0
        %2698 = vmatpush2.bf16.msra.mxu0 0
        %2699 = vmatprep.mubr.bf16.mxu0 0
        %2700 = vmatmul.mubr.bf16.gmra.mxu0 %v2518
        %v2701 = vpop.f32.mrf.mxu0
        %v2702 = vadd.f32 0.0, %v2701
        %v2703 = vpop.f32.mrf.mxu0
        %v2704 = vadd.f32 0.0, %v2703
        %v2705 = vpop.f32.mrf.mxu0
        %v2706 = vpop.f32.mrf.mxu0
        %2707 = vdwg.mxu0
        %v2708 = vadd.f32 %v2480, %v2579
        %v2709 = vadd.f32 %v2481, %v2581
        %v2710 = vadd.f32 %v2482, %v2620
        %v2711 = vadd.f32 %v2483, %v2622
        %v2712 = vadd.f32 %v2484, %v2661
        %v2713 = vadd.f32 %v2485, %v2663
        %v2714 = vadd.f32 %v2486, %v2702
        %v2715 = vadd.f32 %v2487, %v2704
        %s2716 = scalar_lea.vmem %s1, 44
        %v2717 = vld [vmem:[%s2716] sm:$0xf]
        %2718 = vrot.lane.b32.xlu0 %v2253, 17
        %v2719 = vpop.permute.xlu0 %2718
        %2720 = vrot.lane.b32.xlu0 %v2254, 17
        %v2721 = vpop.permute.xlu0 %2720
        %2722 = vrot.lane.b32.xlu0 %v2255, 17
        %v2723 = vpop.permute.xlu0 %2722
        %2724 = vrot.lane.b32.xlu0 %v2256, 17
        %v2725 = vpop.permute.xlu0 %2724
        %2726 = vrot.lane.b32.xlu0 %v2257, 17
        %v2727 = vpop.permute.xlu0 %2726
        %2728 = vrot.lane.b32.xlu0 %v2258, 17
        %v2729 = vpop.permute.xlu0 %2728
        %2730 = vrot.lane.b32.xlu0 %v2259, 17
        %v2731 = vpop.permute.xlu0 %2730
        %2732 = vrot.lane.b32.xlu0 %v2260, 17
        %v2733 = vpop.permute.xlu0 %2732
        %2734 = vrot.lane.b32.xlu0 %v2261, 17
        %v2735 = vpop.permute.xlu0 %2734
        %vm2736 = vcmask 138240
        %v2737 = vsel %vm2736, %v2719, %v2721
        %v2738 = vsel %vm2736, %v2721, %v2723
        %v2739 = vsel %vm2736, %v2723, %v2725
        %v2740 = vsel %vm2736, %v2725, %v2727
        %v2741 = vsel %vm2736, %v2727, %v2729
        %v2742 = vsel %vm2736, %v2729, %v2731
        %v2743 = vsel %vm2736, %v2731, %v2733
        %v2744 = vsel %vm2736, %v2733, %v2735
        %v2746 = vsel %vm207, %v2717, 0
        %v2749 = vsel %vm211, %v2737, 0
        %v2752 = vsel %vm211, %v2738, 0
        %v2755 = vsel %vm211, %v2739, 0
        %v2758 = vsel %vm211, %v2740, 0
        %v2761 = vsel %vm211, %v2741, 0
        %v2764 = vsel %vm211, %v2742, 0
        %v2767 = vsel %vm211, %v2743, 0
        %v2770 = vsel %vm211, %v2744, 0
        %2772 = vmatprep.subr.bf16.mxu0 0
        %2773 = vmatpush1.bf16.msra.mxu0 0
        %2774 = vmatprep.subr.bf16.mxu0 0
        %2775 = vmatpush1.bf16.msra.mxu0 0
        %2776 = vmatprep.subr.bf16.mxu0 0
        %2777 = vmatpush1.bf16.msra.mxu0 0
        %2778 = vmatprep.subr.bf16.mxu0 0
        %2779 = vmatpush1.bf16.msra.mxu0 0
        %2780 = vmatprep.subr.bf16.mxu0 0
        %2781 = vmatpush1.bf16.msra.mxu0 0
        %2782 = vmatprep.subr.bf16.mxu0 0
        %2783 = vmatpush1.bf16.msra.mxu0 0
        %2784 = vmatprep.subr.bf16.mxu0 0
        %2785 = vmatpush1.bf16.msra.mxu0 0
        %2786 = vmatprep.subr.bf16.mxu0 %v2752
        %2787 = vmatpush1.bf16.msra.mxu0 %v2749
        %2788 = vmatprep.subr.bf16.mxu0 0
        %2789 = vmatpush2.bf16.msra.mxu0 0
        %2790 = vmatprep.subr.bf16.mxu0 0
        %2791 = vmatpush2.bf16.msra.mxu0 0
        %2792 = vmatprep.subr.bf16.mxu0 0
        %2793 = vmatpush2.bf16.msra.mxu0 0
        %2794 = vmatprep.subr.bf16.mxu0 0
        %2795 = vmatpush2.bf16.msra.mxu0 0
        %2796 = vmatprep.subr.bf16.mxu0 0
        %2797 = vmatpush2.bf16.msra.mxu0 0
        %2798 = vmatprep.subr.bf16.mxu0 0
        %2799 = vmatpush2.bf16.msra.mxu0 0
        %2800 = vmatprep.subr.bf16.mxu0 0
        %2801 = vmatpush2.bf16.msra.mxu0 0
        %2802 = vmatprep.subr.bf16.mxu0 0
        %2803 = vmatpush2.bf16.msra.mxu0 0
        %2804 = vmatprep.mubr.bf16.mxu0 0
        %2805 = vmatmul.mubr.bf16.gmra.mxu0 %v2746
        %v2806 = vpop.f32.mrf.mxu0
        %v2807 = vadd.f32 0.0, %v2806
        %v2808 = vpop.f32.mrf.mxu0
        %v2809 = vadd.f32 0.0, %v2808
        %v2810 = vpop.f32.mrf.mxu0
        %v2811 = vpop.f32.mrf.mxu0
        %2812 = vdwg.mxu0
        %2813 = vmatprep.subr.bf16.mxu0 0
        %2814 = vmatpush1.bf16.msra.mxu0 0
        %2815 = vmatprep.subr.bf16.mxu0 0
        %2816 = vmatpush1.bf16.msra.mxu0 0
        %2817 = vmatprep.subr.bf16.mxu0 0
        %2818 = vmatpush1.bf16.msra.mxu0 0
        %2819 = vmatprep.subr.bf16.mxu0 0
        %2820 = vmatpush1.bf16.msra.mxu0 0
        %2821 = vmatprep.subr.bf16.mxu0 0
        %2822 = vmatpush1.bf16.msra.mxu0 0
        %2823 = vmatprep.subr.bf16.mxu0 0
        %2824 = vmatpush1.bf16.msra.mxu0 0
        %2825 = vmatprep.subr.bf16.mxu0 0
        %2826 = vmatpush1.bf16.msra.mxu0 0
        %2827 = vmatprep.subr.bf16.mxu0 %v2758
        %2828 = vmatpush1.bf16.msra.mxu0 %v2755
        %2829 = vmatprep.subr.bf16.mxu0 0
        %2830 = vmatpush2.bf16.msra.mxu0 0
        %2831 = vmatprep.subr.bf16.mxu0 0
        %2832 = vmatpush2.bf16.msra.mxu0 0
        %2833 = vmatprep.subr.bf16.mxu0 0
        %2834 = vmatpush2.bf16.msra.mxu0 0
        %2835 = vmatprep.subr.bf16.mxu0 0
        %2836 = vmatpush2.bf16.msra.mxu0 0
        %2837 = vmatprep.subr.bf16.mxu0 0
        %2838 = vmatpush2.bf16.msra.mxu0 0
        %2839 = vmatprep.subr.bf16.mxu0 0
        %2840 = vmatpush2.bf16.msra.mxu0 0
        %2841 = vmatprep.subr.bf16.mxu0 0
        %2842 = vmatpush2.bf16.msra.mxu0 0
        %2843 = vmatprep.subr.bf16.mxu0 0
        %2844 = vmatpush2.bf16.msra.mxu0 0
        %2845 = vmatprep.mubr.bf16.mxu0 0
        %2846 = vmatmul.mubr.bf16.gmra.mxu0 %v2746
        %v2847 = vpop.f32.mrf.mxu0
        %v2848 = vadd.f32 0.0, %v2847
        %v2849 = vpop.f32.mrf.mxu0
        %v2850 = vadd.f32 0.0, %v2849
        %v2851 = vpop.f32.mrf.mxu0
        %v2852 = vpop.f32.mrf.mxu0
        %2853 = vdwg.mxu0
        %2854 = vmatprep.subr.bf16.mxu0 0
        %2855 = vmatpush1.bf16.msra.mxu0 0
        %2856 = vmatprep.subr.bf16.mxu0 0
        %2857 = vmatpush1.bf16.msra.mxu0 0
        %2858 = vmatprep.subr.bf16.mxu0 0
        %2859 = vmatpush1.bf16.msra.mxu0 0
        %2860 = vmatprep.subr.bf16.mxu0 0
        %2861 = vmatpush1.bf16.msra.mxu0 0
        %2862 = vmatprep.subr.bf16.mxu0 0
        %2863 = vmatpush1.bf16.msra.mxu0 0
        %2864 = vmatprep.subr.bf16.mxu0 0
        %2865 = vmatpush1.bf16.msra.mxu0 0
        %2866 = vmatprep.subr.bf16.mxu0 0
        %2867 = vmatpush1.bf16.msra.mxu0 0
        %2868 = vmatprep.subr.bf16.mxu0 %v2764
        %2869 = vmatpush1.bf16.msra.mxu0 %v2761
        %2870 = vmatprep.subr.bf16.mxu0 0
        %2871 = vmatpush2.bf16.msra.mxu0 0
        %2872 = vmatprep.subr.bf16.mxu0 0
        %2873 = vmatpush2.bf16.msra.mxu0 0
        %2874 = vmatprep.subr.bf16.mxu0 0
        %2875 = vmatpush2.bf16.msra.mxu0 0
        %2876 = vmatprep.subr.bf16.mxu0 0
        %2877 = vmatpush2.bf16.msra.mxu0 0
        %2878 = vmatprep.subr.bf16.mxu0 0
        %2879 = vmatpush2.bf16.msra.mxu0 0
        %2880 = vmatprep.subr.bf16.mxu0 0
        %2881 = vmatpush2.bf16.msra.mxu0 0
        %2882 = vmatprep.subr.bf16.mxu0 0
        %2883 = vmatpush2.bf16.msra.mxu0 0
        %2884 = vmatprep.subr.bf16.mxu0 0
        %2885 = vmatpush2.bf16.msra.mxu0 0
        %2886 = vmatprep.mubr.bf16.mxu0 0
        %2887 = vmatmul.mubr.bf16.gmra.mxu0 %v2746
        %v2888 = vpop.f32.mrf.mxu0
        %v2889 = vadd.f32 0.0, %v2888
        %v2890 = vpop.f32.mrf.mxu0
        %v2891 = vadd.f32 0.0, %v2890
        %v2892 = vpop.f32.mrf.mxu0
        %v2893 = vpop.f32.mrf.mxu0
        %2894 = vdwg.mxu0
        %2895 = vmatprep.subr.bf16.mxu0 0
        %2896 = vmatpush1.bf16.msra.mxu0 0
        %2897 = vmatprep.subr.bf16.mxu0 0
        %2898 = vmatpush1.bf16.msra.mxu0 0
        %2899 = vmatprep.subr.bf16.mxu0 0
        %2900 = vmatpush1.bf16.msra.mxu0 0
        %2901 = vmatprep.subr.bf16.mxu0 0
        %2902 = vmatpush1.bf16.msra.mxu0 0
        %2903 = vmatprep.subr.bf16.mxu0 0
        %2904 = vmatpush1.bf16.msra.mxu0 0
        %2905 = vmatprep.subr.bf16.mxu0 0
        %2906 = vmatpush1.bf16.msra.mxu0 0
        %2907 = vmatprep.subr.bf16.mxu0 0
        %2908 = vmatpush1.bf16.msra.mxu0 0
        %2909 = vmatprep.subr.bf16.mxu0 %v2770
        %2910 = vmatpush1.bf16.msra.mxu0 %v2767
        %2911 = vmatprep.subr.bf16.mxu0 0
        %2912 = vmatpush2.bf16.msra.mxu0 0
        %2913 = vmatprep.subr.bf16.mxu0 0
        %2914 = vmatpush2.bf16.msra.mxu0 0
        %2915 = vmatprep.subr.bf16.mxu0 0
        %2916 = vmatpush2.bf16.msra.mxu0 0
        %2917 = vmatprep.subr.bf16.mxu0 0
        %2918 = vmatpush2.bf16.msra.mxu0 0
        %2919 = vmatprep.subr.bf16.mxu0 0
        %2920 = vmatpush2.bf16.msra.mxu0 0
        %2921 = vmatprep.subr.bf16.mxu0 0
        %2922 = vmatpush2.bf16.msra.mxu0 0
        %2923 = vmatprep.subr.bf16.mxu0 0
        %2924 = vmatpush2.bf16.msra.mxu0 0
        %2925 = vmatprep.subr.bf16.mxu0 0
        %2926 = vmatpush2.bf16.msra.mxu0 0
        %2927 = vmatprep.mubr.bf16.mxu0 0
        %2928 = vmatmul.mubr.bf16.gmra.mxu0 %v2746
        %v2929 = vpop.f32.mrf.mxu0
        %v2930 = vadd.f32 0.0, %v2929
        %v2931 = vpop.f32.mrf.mxu0
        %v2932 = vadd.f32 0.0, %v2931
        %v2933 = vpop.f32.mrf.mxu0
        %v2934 = vpop.f32.mrf.mxu0
        %2935 = vdwg.mxu0
        %v2936 = vadd.f32 %v2708, %v2807
        %v2937 = vadd.f32 %v2709, %v2809
        %v2938 = vadd.f32 %v2710, %v2848
        %v2939 = vadd.f32 %v2711, %v2850
        %v2940 = vadd.f32 %v2712, %v2889
        %v2941 = vadd.f32 %v2713, %v2891
        %v2942 = vadd.f32 %v2714, %v2930
        %v2943 = vadd.f32 %v2715, %v2932
        %s2944 = scalar_lea.vmem %s1, 48
        %v2945 = vld [vmem:[%s2944] sm:$0xf]
        %2946 = vrot.lane.b32.xlu0 %v2253, 1
        %v2947 = vpop.permute.xlu0 %2946
        %2948 = vrot.lane.b32.xlu0 %v2254, 1
        %v2949 = vpop.permute.xlu0 %2948
        %2950 = vrot.lane.b32.xlu0 %v2255, 1
        %v2951 = vpop.permute.xlu0 %2950
        %2952 = vrot.lane.b32.xlu0 %v2256, 1
        %v2953 = vpop.permute.xlu0 %2952
        %2954 = vrot.lane.b32.xlu0 %v2257, 1
        %v2955 = vpop.permute.xlu0 %2954
        %2956 = vrot.lane.b32.xlu0 %v2258, 1
        %v2957 = vpop.permute.xlu0 %2956
        %2958 = vrot.lane.b32.xlu0 %v2259, 1
        %v2959 = vpop.permute.xlu0 %2958
        %2960 = vrot.lane.b32.xlu0 %v2260, 1
        %v2961 = vpop.permute.xlu0 %2960
        %2962 = vrot.lane.b32.xlu0 %v2261, 1
        %v2963 = vpop.permute.xlu0 %2962
        %vm2964 = vcmask 7168
        %v2965 = vsel %vm2964, %v2947, %v2949
        %v2966 = vsel %vm2964, %v2949, %v2951
        %v2967 = vsel %vm2964, %v2951, %v2953
        %v2968 = vsel %vm2964, %v2953, %v2955
        %v2969 = vsel %vm2964, %v2955, %v2957
        %v2970 = vsel %vm2964, %v2957, %v2959
        %v2971 = vsel %vm2964, %v2959, %v2961
        %v2972 = vsel %vm2964, %v2961, %v2963
        %v2974 = vsel %vm207, %v2945, 0
        %v2977 = vsel %vm211, %v2965, 0
        %v2980 = vsel %vm211, %v2966, 0
        %v2983 = vsel %vm211, %v2967, 0
        %v2986 = vsel %vm211, %v2968, 0
        %v2989 = vsel %vm211, %v2969, 0
        %v2992 = vsel %vm211, %v2970, 0
        %v2995 = vsel %vm211, %v2971, 0
        %v2998 = vsel %vm211, %v2972, 0
        %3000 = vmatprep.subr.bf16.mxu0 0
        %3001 = vmatpush1.bf16.msra.mxu0 0
        %3002 = vmatprep.subr.bf16.mxu0 0
        %3003 = vmatpush1.bf16.msra.mxu0 0
        %3004 = vmatprep.subr.bf16.mxu0 0
        %3005 = vmatpush1.bf16.msra.mxu0 0
        %3006 = vmatprep.subr.bf16.mxu0 0
        %3007 = vmatpush1.bf16.msra.mxu0 0
        %3008 = vmatprep.subr.bf16.mxu0 0
        %3009 = vmatpush1.bf16.msra.mxu0 0
        %3010 = vmatprep.subr.bf16.mxu0 0
        %3011 = vmatpush1.bf16.msra.mxu0 0
        %3012 = vmatprep.subr.bf16.mxu0 0
        %3013 = vmatpush1.bf16.msra.mxu0 0
        %3014 = vmatprep.subr.bf16.mxu0 %v2980
        %3015 = vmatpush1.bf16.msra.mxu0 %v2977
        %3016 = vmatprep.subr.bf16.mxu0 0
        %3017 = vmatpush2.bf16.msra.mxu0 0
        %3018 = vmatprep.subr.bf16.mxu0 0
        %3019 = vmatpush2.bf16.msra.mxu0 0
        %3020 = vmatprep.subr.bf16.mxu0 0
        %3021 = vmatpush2.bf16.msra.mxu0 0
        %3022 = vmatprep.subr.bf16.mxu0 0
        %3023 = vmatpush2.bf16.msra.mxu0 0
        %3024 = vmatprep.subr.bf16.mxu0 0
        %3025 = vmatpush2.bf16.msra.mxu0 0
        %3026 = vmatprep.subr.bf16.mxu0 0
        %3027 = vmatpush2.bf16.msra.mxu0 0
        %3028 = vmatprep.subr.bf16.mxu0 0
        %3029 = vmatpush2.bf16.msra.mxu0 0
        %3030 = vmatprep.subr.bf16.mxu0 0
        %3031 = vmatpush2.bf16.msra.mxu0 0
        %3032 = vmatprep.mubr.bf16.mxu0 0
        %3033 = vmatmul.mubr.bf16.gmra.mxu0 %v2974
        %v3034 = vpop.f32.mrf.mxu0
        %v3035 = vadd.f32 0.0, %v3034
        %v3036 = vpop.f32.mrf.mxu0
        %v3037 = vadd.f32 0.0, %v3036
        %v3038 = vpop.f32.mrf.mxu0
        %v3039 = vpop.f32.mrf.mxu0
        %3040 = vdwg.mxu0
        %3041 = vmatprep.subr.bf16.mxu0 0
        %3042 = vmatpush1.bf16.msra.mxu0 0
        %3043 = vmatprep.subr.bf16.mxu0 0
        %3044 = vmatpush1.bf16.msra.mxu0 0
        %3045 = vmatprep.subr.bf16.mxu0 0
        %3046 = vmatpush1.bf16.msra.mxu0 0
        %3047 = vmatprep.subr.bf16.mxu0 0
        %3048 = vmatpush1.bf16.msra.mxu0 0
        %3049 = vmatprep.subr.bf16.mxu0 0
        %3050 = vmatpush1.bf16.msra.mxu0 0
        %3051 = vmatprep.subr.bf16.mxu0 0
        %3052 = vmatpush1.bf16.msra.mxu0 0
        %3053 = vmatprep.subr.bf16.mxu0 0
        %3054 = vmatpush1.bf16.msra.mxu0 0
        %3055 = vmatprep.subr.bf16.mxu0 %v2986
        %3056 = vmatpush1.bf16.msra.mxu0 %v2983
        %3057 = vmatprep.subr.bf16.mxu0 0
        %3058 = vmatpush2.bf16.msra.mxu0 0
        %3059 = vmatprep.subr.bf16.mxu0 0
        %3060 = vmatpush2.bf16.msra.mxu0 0
        %3061 = vmatprep.subr.bf16.mxu0 0
        %3062 = vmatpush2.bf16.msra.mxu0 0
        %3063 = vmatprep.subr.bf16.mxu0 0
        %3064 = vmatpush2.bf16.msra.mxu0 0
        %3065 = vmatprep.subr.bf16.mxu0 0
        %3066 = vmatpush2.bf16.msra.mxu0 0
        %3067 = vmatprep.subr.bf16.mxu0 0
        %3068 = vmatpush2.bf16.msra.mxu0 0
        %3069 = vmatprep.subr.bf16.mxu0 0
        %3070 = vmatpush2.bf16.msra.mxu0 0
        %3071 = vmatprep.subr.bf16.mxu0 0
        %3072 = vmatpush2.bf16.msra.mxu0 0
        %3073 = vmatprep.mubr.bf16.mxu0 0
        %3074 = vmatmul.mubr.bf16.gmra.mxu0 %v2974
        %v3075 = vpop.f32.mrf.mxu0
        %v3076 = vadd.f32 0.0, %v3075
        %v3077 = vpop.f32.mrf.mxu0
        %v3078 = vadd.f32 0.0, %v3077
        %v3079 = vpop.f32.mrf.mxu0
        %v3080 = vpop.f32.mrf.mxu0
        %3081 = vdwg.mxu0
        %3082 = vmatprep.subr.bf16.mxu0 0
        %3083 = vmatpush1.bf16.msra.mxu0 0
        %3084 = vmatprep.subr.bf16.mxu0 0
        %3085 = vmatpush1.bf16.msra.mxu0 0
        %3086 = vmatprep.subr.bf16.mxu0 0
        %3087 = vmatpush1.bf16.msra.mxu0 0
        %3088 = vmatprep.subr.bf16.mxu0 0
        %3089 = vmatpush1.bf16.msra.mxu0 0
        %3090 = vmatprep.subr.bf16.mxu0 0
        %3091 = vmatpush1.bf16.msra.mxu0 0
        %3092 = vmatprep.subr.bf16.mxu0 0
        %3093 = vmatpush1.bf16.msra.mxu0 0
        %3094 = vmatprep.subr.bf16.mxu0 0
        %3095 = vmatpush1.bf16.msra.mxu0 0
        %3096 = vmatprep.subr.bf16.mxu0 %v2992
        %3097 = vmatpush1.bf16.msra.mxu0 %v2989
        %3098 = vmatprep.subr.bf16.mxu0 0
        %3099 = vmatpush2.bf16.msra.mxu0 0
        %3100 = vmatprep.subr.bf16.mxu0 0
        %3101 = vmatpush2.bf16.msra.mxu0 0
        %3102 = vmatprep.subr.bf16.mxu0 0
        %3103 = vmatpush2.bf16.msra.mxu0 0
        %3104 = vmatprep.subr.bf16.mxu0 0
        %3105 = vmatpush2.bf16.msra.mxu0 0
        %3106 = vmatprep.subr.bf16.mxu0 0
        %3107 = vmatpush2.bf16.msra.mxu0 0
        %3108 = vmatprep.subr.bf16.mxu0 0
        %3109 = vmatpush2.bf16.msra.mxu0 0
        %3110 = vmatprep.subr.bf16.mxu0 0
        %3111 = vmatpush2.bf16.msra.mxu0 0
        %3112 = vmatprep.subr.bf16.mxu0 0
        %3113 = vmatpush2.bf16.msra.mxu0 0
        %3114 = vmatprep.mubr.bf16.mxu0 0
        %3115 = vmatmul.mubr.bf16.gmra.mxu0 %v2974
        %v3116 = vpop.f32.mrf.mxu0
        %v3117 = vadd.f32 0.0, %v3116
        %v3118 = vpop.f32.mrf.mxu0
        %v3119 = vadd.f32 0.0, %v3118
        %v3120 = vpop.f32.mrf.mxu0
        %v3121 = vpop.f32.mrf.mxu0
        %3122 = vdwg.mxu0
        %3123 = vmatprep.subr.bf16.mxu0 0
        %3124 = vmatpush1.bf16.msra.mxu0 0
        %3125 = vmatprep.subr.bf16.mxu0 0
        %3126 = vmatpush1.bf16.msra.mxu0 0
        %3127 = vmatprep.subr.bf16.mxu0 0
        %3128 = vmatpush1.bf16.msra.mxu0 0
        %3129 = vmatprep.subr.bf16.mxu0 0
        %3130 = vmatpush1.bf16.msra.mxu0 0
        %3131 = vmatprep.subr.bf16.mxu0 0
        %3132 = vmatpush1.bf16.msra.mxu0 0
        %3133 = vmatprep.subr.bf16.mxu0 0
        %3134 = vmatpush1.bf16.msra.mxu0 0
        %3135 = vmatprep.subr.bf16.mxu0 0
        %3136 = vmatpush1.bf16.msra.mxu0 0
        %3137 = vmatprep.subr.bf16.mxu0 %v2998
        %3138 = vmatpush1.bf16.msra.mxu0 %v2995
        %3139 = vmatprep.subr.bf16.mxu0 0
        %3140 = vmatpush2.bf16.msra.mxu0 0
        %3141 = vmatprep.subr.bf16.mxu0 0
        %3142 = vmatpush2.bf16.msra.mxu0 0
        %3143 = vmatprep.subr.bf16.mxu0 0
        %3144 = vmatpush2.bf16.msra.mxu0 0
        %3145 = vmatprep.subr.bf16.mxu0 0
        %3146 = vmatpush2.bf16.msra.mxu0 0
        %3147 = vmatprep.subr.bf16.mxu0 0
        %3148 = vmatpush2.bf16.msra.mxu0 0
        %3149 = vmatprep.subr.bf16.mxu0 0
        %3150 = vmatpush2.bf16.msra.mxu0 0
        %3151 = vmatprep.subr.bf16.mxu0 0
        %3152 = vmatpush2.bf16.msra.mxu0 0
        %3153 = vmatprep.subr.bf16.mxu0 0
        %3154 = vmatpush2.bf16.msra.mxu0 0
        %3155 = vmatprep.mubr.bf16.mxu0 0
        %3156 = vmatmul.mubr.bf16.gmra.mxu0 %v2974
        %v3157 = vpop.f32.mrf.mxu0
        %v3158 = vadd.f32 0.0, %v3157
        %v3159 = vpop.f32.mrf.mxu0
        %v3160 = vadd.f32 0.0, %v3159
        %v3161 = vpop.f32.mrf.mxu0
        %v3162 = vpop.f32.mrf.mxu0
        %3163 = vdwg.mxu0
        %v3164 = vadd.f32 %v2936, %v3035
        %v3165 = vadd.f32 %v2937, %v3037
        %v3166 = vadd.f32 %v2938, %v3076
        %v3167 = vadd.f32 %v2939, %v3078
        %v3168 = vadd.f32 %v2940, %v3117
        %v3169 = vadd.f32 %v2941, %v3119
        %v3170 = vadd.f32 %v2942, %v3158
        %v3171 = vadd.f32 %v2943, %v3160
        %v3172 = vld [vmem:[#allocation2 + $0xc] sm:$0xff]
        %v3173 = vld [vmem:[#allocation2 + $0x14] sm:$0xff]
        %v3174 = vld [vmem:[#allocation2 + $0x1c] sm:$0xff]
        %v3175 = vld [vmem:[#allocation2 + $0x24] sm:$0xff]
        %s3176 = scalar_lea.vmem %s1, 52
        %v3177 = vld [vmem:[%s3176] sm:$0xf]
        %v3182 = vunpack.c.l.b16 %v3172
        %v3183 = vunpack.c.h.b16 %v3172
        %v3184 = vunpack.c.l.b16 %v3173
        %v3185 = vunpack.c.h.b16 %v3173
        %v3186 = vunpack.c.l.b16 %v3174
        %v3187 = vunpack.c.h.b16 %v3174
        %v3188 = vunpack.c.l.b16 %v3175
        %v3189 = vunpack.c.h.b16 %v3175
        %v3190 = vpack.c.b16 %v3182, %v3182
        %v3191 = vpack.c.b16 %v3183, %v3183
        %v3192 = vpack.c.b16 %v3184, %v3184
        %v3193 = vpack.c.b16 %v3185, %v3185
        %v3194 = vpack.c.b16 %v3186, %v3186
        %v3195 = vpack.c.b16 %v3187, %v3187
        %v3196 = vpack.c.b16 %v3188, %v3188
        %v3197 = vpack.c.b16 %v3189, %v3189
        %v3199 = vsel %vm207, %v3177, 0
        %v3202 = vsel %vm211, %v3190, 0
        %v3205 = vsel %vm211, %v3191, 0
        %v3208 = vsel %vm211, %v3192, 0
        %v3211 = vsel %vm211, %v3193, 0
        %v3214 = vsel %vm211, %v3194, 0
        %v3217 = vsel %vm211, %v3195, 0
        %v3220 = vsel %vm211, %v3196, 0
        %v3223 = vsel %vm211, %v3197, 0
        %3225 = vmatprep.subr.bf16.mxu0 0
        %3226 = vmatpush1.bf16.msra.mxu0 0
        %3227 = vmatprep.subr.bf16.mxu0 0
        %3228 = vmatpush1.bf16.msra.mxu0 0
        %3229 = vmatprep.subr.bf16.mxu0 0
        %3230 = vmatpush1.bf16.msra.mxu0 0
        %3231 = vmatprep.subr.bf16.mxu0 0
        %3232 = vmatpush1.bf16.msra.mxu0 0
        %3233 = vmatprep.subr.bf16.mxu0 0
        %3234 = vmatpush1.bf16.msra.mxu0 0
        %3235 = vmatprep.subr.bf16.mxu0 0
        %3236 = vmatpush1.bf16.msra.mxu0 0
        %3237 = vmatprep.subr.bf16.mxu0 0
        %3238 = vmatpush1.bf16.msra.mxu0 0
        %3239 = vmatprep.subr.bf16.mxu0 %v3205
        %3240 = vmatpush1.bf16.msra.mxu0 %v3202
        %3241 = vmatprep.subr.bf16.mxu0 0
        %3242 = vmatpush2.bf16.msra.mxu0 0
        %3243 = vmatprep.subr.bf16.mxu0 0
        %3244 = vmatpush2.bf16.msra.mxu0 0
        %3245 = vmatprep.subr.bf16.mxu0 0
        %3246 = vmatpush2.bf16.msra.mxu0 0
        %3247 = vmatprep.subr.bf16.mxu0 0
        %3248 = vmatpush2.bf16.msra.mxu0 0
        %3249 = vmatprep.subr.bf16.mxu0 0
        %3250 = vmatpush2.bf16.msra.mxu0 0
        %3251 = vmatprep.subr.bf16.mxu0 0
        %3252 = vmatpush2.bf16.msra.mxu0 0
        %3253 = vmatprep.subr.bf16.mxu0 0
        %3254 = vmatpush2.bf16.msra.mxu0 0
        %3255 = vmatprep.subr.bf16.mxu0 0
        %3256 = vmatpush2.bf16.msra.mxu0 0
        %3257 = vmatprep.mubr.bf16.mxu0 0
        %3258 = vmatmul.mubr.bf16.gmra.mxu0 %v3199
        %v3259 = vpop.f32.mrf.mxu0
        %v3260 = vadd.f32 0.0, %v3259
        %v3261 = vpop.f32.mrf.mxu0
        %v3262 = vadd.f32 0.0, %v3261
        %v3263 = vpop.f32.mrf.mxu0
        %v3264 = vpop.f32.mrf.mxu0
        %3265 = vdwg.mxu0
        %3266 = vmatprep.subr.bf16.mxu0 0
        %3267 = vmatpush1.bf16.msra.mxu0 0
        %3268 = vmatprep.subr.bf16.mxu0 0
        %3269 = vmatpush1.bf16.msra.mxu0 0
        %3270 = vmatprep.subr.bf16.mxu0 0
        %3271 = vmatpush1.bf16.msra.mxu0 0
        %3272 = vmatprep.subr.bf16.mxu0 0
        %3273 = vmatpush1.bf16.msra.mxu0 0
        %3274 = vmatprep.subr.bf16.mxu0 0
        %3275 = vmatpush1.bf16.msra.mxu0 0
        %3276 = vmatprep.subr.bf16.mxu0 0
        %3277 = vmatpush1.bf16.msra.mxu0 0
        %3278 = vmatprep.subr.bf16.mxu0 0
        %3279 = vmatpush1.bf16.msra.mxu0 0
        %3280 = vmatprep.subr.bf16.mxu0 %v3211
        %3281 = vmatpush1.bf16.msra.mxu0 %v3208
        %3282 = vmatprep.subr.bf16.mxu0 0
        %3283 = vmatpush2.bf16.msra.mxu0 0
        %3284 = vmatprep.subr.bf16.mxu0 0
        %3285 = vmatpush2.bf16.msra.mxu0 0
        %3286 = vmatprep.subr.bf16.mxu0 0
        %3287 = vmatpush2.bf16.msra.mxu0 0
        %3288 = vmatprep.subr.bf16.mxu0 0
        %3289 = vmatpush2.bf16.msra.mxu0 0
        %3290 = vmatprep.subr.bf16.mxu0 0
        %3291 = vmatpush2.bf16.msra.mxu0 0
        %3292 = vmatprep.subr.bf16.mxu0 0
        %3293 = vmatpush2.bf16.msra.mxu0 0
        %3294 = vmatprep.subr.bf16.mxu0 0
        %3295 = vmatpush2.bf16.msra.mxu0 0
        %3296 = vmatprep.subr.bf16.mxu0 0
        %3297 = vmatpush2.bf16.msra.mxu0 0
        %3298 = vmatprep.mubr.bf16.mxu0 0
        %3299 = vmatmul.mubr.bf16.gmra.mxu0 %v3199
        %v3300 = vpop.f32.mrf.mxu0
        %v3301 = vadd.f32 0.0, %v3300
        %v3302 = vpop.f32.mrf.mxu0
        %v3303 = vadd.f32 0.0, %v3302
        %v3304 = vpop.f32.mrf.mxu0
        %v3305 = vpop.f32.mrf.mxu0
        %3306 = vdwg.mxu0
        %3307 = vmatprep.subr.bf16.mxu0 0
        %3308 = vmatpush1.bf16.msra.mxu0 0
        %3309 = vmatprep.subr.bf16.mxu0 0
        %3310 = vmatpush1.bf16.msra.mxu0 0
        %3311 = vmatprep.subr.bf16.mxu0 0
        %3312 = vmatpush1.bf16.msra.mxu0 0
        %3313 = vmatprep.subr.bf16.mxu0 0
        %3314 = vmatpush1.bf16.msra.mxu0 0
        %3315 = vmatprep.subr.bf16.mxu0 0
        %3316 = vmatpush1.bf16.msra.mxu0 0
        %3317 = vmatprep.subr.bf16.mxu0 0
        %3318 = vmatpush1.bf16.msra.mxu0 0
        %3319 = vmatprep.subr.bf16.mxu0 0
        %3320 = vmatpush1.bf16.msra.mxu0 0
        %3321 = vmatprep.subr.bf16.mxu0 %v3217
        %3322 = vmatpush1.bf16.msra.mxu0 %v3214
        %3323 = vmatprep.subr.bf16.mxu0 0
        %3324 = vmatpush2.bf16.msra.mxu0 0
        %3325 = vmatprep.subr.bf16.mxu0 0
        %3326 = vmatpush2.bf16.msra.mxu0 0
        %3327 = vmatprep.subr.bf16.mxu0 0
        %3328 = vmatpush2.bf16.msra.mxu0 0
        %3329 = vmatprep.subr.bf16.mxu0 0
        %3330 = vmatpush2.bf16.msra.mxu0 0
        %3331 = vmatprep.subr.bf16.mxu0 0
        %3332 = vmatpush2.bf16.msra.mxu0 0
        %3333 = vmatprep.subr.bf16.mxu0 0
        %3334 = vmatpush2.bf16.msra.mxu0 0
        %3335 = vmatprep.subr.bf16.mxu0 0
        %3336 = vmatpush2.bf16.msra.mxu0 0
        %3337 = vmatprep.subr.bf16.mxu0 0
        %3338 = vmatpush2.bf16.msra.mxu0 0
        %3339 = vmatprep.mubr.bf16.mxu0 0
        %3340 = vmatmul.mubr.bf16.gmra.mxu0 %v3199
        %v3341 = vpop.f32.mrf.mxu0
        %v3342 = vadd.f32 0.0, %v3341
        %v3343 = vpop.f32.mrf.mxu0
        %v3344 = vadd.f32 0.0, %v3343
        %v3345 = vpop.f32.mrf.mxu0
        %v3346 = vpop.f32.mrf.mxu0
        %3347 = vdwg.mxu0
        %3348 = vmatprep.subr.bf16.mxu0 0
        %3349 = vmatpush1.bf16.msra.mxu0 0
        %3350 = vmatprep.subr.bf16.mxu0 0
        %3351 = vmatpush1.bf16.msra.mxu0 0
        %3352 = vmatprep.subr.bf16.mxu0 0
        %3353 = vmatpush1.bf16.msra.mxu0 0
        %3354 = vmatprep.subr.bf16.mxu0 0
        %3355 = vmatpush1.bf16.msra.mxu0 0
        %3356 = vmatprep.subr.bf16.mxu0 0
        %3357 = vmatpush1.bf16.msra.mxu0 0
        %3358 = vmatprep.subr.bf16.mxu0 0
        %3359 = vmatpush1.bf16.msra.mxu0 0
        %3360 = vmatprep.subr.bf16.mxu0 0
        %3361 = vmatpush1.bf16.msra.mxu0 0
        %3362 = vmatprep.subr.bf16.mxu0 %v3223
        %3363 = vmatpush1.bf16.msra.mxu0 %v3220
        %3364 = vmatprep.subr.bf16.mxu0 0
        %3365 = vmatpush2.bf16.msra.mxu0 0
        %3366 = vmatprep.subr.bf16.mxu0 0
        %3367 = vmatpush2.bf16.msra.mxu0 0
        %3368 = vmatprep.subr.bf16.mxu0 0
        %3369 = vmatpush2.bf16.msra.mxu0 0
        %3370 = vmatprep.subr.bf16.mxu0 0
        %3371 = vmatpush2.bf16.msra.mxu0 0
        %3372 = vmatprep.subr.bf16.mxu0 0
        %3373 = vmatpush2.bf16.msra.mxu0 0
        %3374 = vmatprep.subr.bf16.mxu0 0
        %3375 = vmatpush2.bf16.msra.mxu0 0
        %3376 = vmatprep.subr.bf16.mxu0 0
        %3377 = vmatpush2.bf16.msra.mxu0 0
        %3378 = vmatprep.subr.bf16.mxu0 0
        %3379 = vmatpush2.bf16.msra.mxu0 0
        %3380 = vmatprep.mubr.bf16.mxu0 0
        %3381 = vmatmul.mubr.bf16.gmra.mxu0 %v3199
        %v3382 = vpop.f32.mrf.mxu0
        %v3383 = vadd.f32 0.0, %v3382
        %v3384 = vpop.f32.mrf.mxu0
        %v3385 = vadd.f32 0.0, %v3384
        %v3386 = vpop.f32.mrf.mxu0
        %v3387 = vpop.f32.mrf.mxu0
        %3388 = vdwg.mxu0
        %v3389 = vadd.f32 %v3164, %v3260
        %v3390 = vadd.f32 %v3165, %v3262
        %v3391 = vadd.f32 %v3166, %v3301
        %v3392 = vadd.f32 %v3167, %v3303
        %v3393 = vadd.f32 %v3168, %v3342
        %v3394 = vadd.f32 %v3169, %v3344
        %v3395 = vadd.f32 %v3170, %v3383
        %v3396 = vadd.f32 %v3171, %v3385
        %v3397 = vld [vmem:[#allocation2 + $0xc] sm:$0xff]
        %v3398 = vld [vmem:[#allocation2 + $0x14] sm:$0xff]
        %v3399 = vld [vmem:[#allocation2 + $0x1c] sm:$0xff]
        %v3400 = vld [vmem:[#allocation2 + $0x24] sm:$0xff]
        %v3401 = vld [vmem:[#allocation2 + $0x2c] sm:$0xf]
        %s3402 = scalar_lea.vmem %s1, 56
        %v3403 = vld [vmem:[%s3402] sm:$0xf]
        %v3409 = vunpack.c.l.b16 %v3397
        %v3410 = vunpack.c.h.b16 %v3397
        %v3411 = vunpack.c.l.b16 %v3398
        %v3412 = vunpack.c.h.b16 %v3398
        %v3413 = vunpack.c.l.b16 %v3399
        %v3414 = vunpack.c.h.b16 %v3399
        %v3415 = vunpack.c.l.b16 %v3400
        %v3416 = vunpack.c.h.b16 %v3400
        %v3417 = vunpack.c.l.b16 %v3401
        %v3418 = vpack.c.b16 %v3409, %v3409
        %v3419 = vpack.c.b16 %v3410, %v3410
        %v3420 = vpack.c.b16 %v3411, %v3411
        %v3421 = vpack.c.b16 %v3412, %v3412
        %v3422 = vpack.c.b16 %v3413, %v3413
        %v3423 = vpack.c.b16 %v3414, %v3414
        %v3424 = vpack.c.b16 %v3415, %v3415
        %v3425 = vpack.c.b16 %v3416, %v3416
        %v3426 = vpack.c.b16 %v3417, %v3417
        %3427 = vrot.lane.b32.xlu0 %v3418, 127
        %v3428 = vpop.permute.xlu0 %3427
        %3429 = vrot.lane.b32.xlu0 %v3419, 127
        %v3430 = vpop.permute.xlu0 %3429
        %3431 = vrot.lane.b32.xlu0 %v3420, 127
        %v3432 = vpop.permute.xlu0 %3431
        %3433 = vrot.lane.b32.xlu0 %v3421, 127
        %v3434 = vpop.permute.xlu0 %3433
        %3435 = vrot.lane.b32.xlu0 %v3422, 127
        %v3436 = vpop.permute.xlu0 %3435
        %3437 = vrot.lane.b32.xlu0 %v3423, 127
        %v3438 = vpop.permute.xlu0 %3437
        %3439 = vrot.lane.b32.xlu0 %v3424, 127
        %v3440 = vpop.permute.xlu0 %3439
        %3441 = vrot.lane.b32.xlu0 %v3425, 127
        %v3442 = vpop.permute.xlu0 %3441
        %3443 = vrot.lane.b32.xlu0 %v3426, 127
        %v3444 = vpop.permute.xlu0 %3443
        %vm3445 = vcmask 1039360
        %v3446 = vsel %vm3445, %v3428, %v3430
        %v3447 = vsel %vm3445, %v3430, %v3432
        %v3448 = vsel %vm3445, %v3432, %v3434
        %v3449 = vsel %vm3445, %v3434, %v3436
        %v3450 = vsel %vm3445, %v3436, %v3438
        %v3451 = vsel %vm3445, %v3438, %v3440
        %v3452 = vsel %vm3445, %v3440, %v3442
        %v3453 = vsel %vm3445, %v3442, %v3444
        %v3455 = vsel %vm207, %v3403, 0
        %v3458 = vsel %vm211, %v3446, 0
        %v3461 = vsel %vm211, %v3447, 0
        %v3464 = vsel %vm211, %v3448, 0
        %v3467 = vsel %vm211, %v3449, 0
        %v3470 = vsel %vm211, %v3450, 0
        %v3473 = vsel %vm211, %v3451, 0
        %v3476 = vsel %vm211, %v3452, 0
        %v3479 = vsel %vm211, %v3453, 0
        %3481 = vmatprep.subr.bf16.mxu0 0
        %3482 = vmatpush1.bf16.msra.mxu0 0
        %3483 = vmatprep.subr.bf16.mxu0 0
        %3484 = vmatpush1.bf16.msra.mxu0 0
        %3485 = vmatprep.subr.bf16.mxu0 0
        %3486 = vmatpush1.bf16.msra.mxu0 0
        %3487 = vmatprep.subr.bf16.mxu0 0
        %3488 = vmatpush1.bf16.msra.mxu0 0
        %3489 = vmatprep.subr.bf16.mxu0 0
        %3490 = vmatpush1.bf16.msra.mxu0 0
        %3491 = vmatprep.subr.bf16.mxu0 0
        %3492 = vmatpush1.bf16.msra.mxu0 0
        %3493 = vmatprep.subr.bf16.mxu0 0
        %3494 = vmatpush1.bf16.msra.mxu0 0
        %3495 = vmatprep.subr.bf16.mxu0 %v3461
        %3496 = vmatpush1.bf16.msra.mxu0 %v3458
        %3497 = vmatprep.subr.bf16.mxu0 0
        %3498 = vmatpush2.bf16.msra.mxu0 0
        %3499 = vmatprep.subr.bf16.mxu0 0
        %3500 = vmatpush2.bf16.msra.mxu0 0
        %3501 = vmatprep.subr.bf16.mxu0 0
        %3502 = vmatpush2.bf16.msra.mxu0 0
        %3503 = vmatprep.subr.bf16.mxu0 0
        %3504 = vmatpush2.bf16.msra.mxu0 0
        %3505 = vmatprep.subr.bf16.mxu0 0
        %3506 = vmatpush2.bf16.msra.mxu0 0
        %3507 = vmatprep.subr.bf16.mxu0 0
        %3508 = vmatpush2.bf16.msra.mxu0 0
        %3509 = vmatprep.subr.bf16.mxu0 0
        %3510 = vmatpush2.bf16.msra.mxu0 0
        %3511 = vmatprep.subr.bf16.mxu0 0
        %3512 = vmatpush2.bf16.msra.mxu0 0
        %3513 = vmatprep.mubr.bf16.mxu0 0
        %3514 = vmatmul.mubr.bf16.gmra.mxu0 %v3455
        %v3515 = vpop.f32.mrf.mxu0
        %v3516 = vadd.f32 0.0, %v3515
        %v3517 = vpop.f32.mrf.mxu0
        %v3518 = vadd.f32 0.0, %v3517
        %v3519 = vpop.f32.mrf.mxu0
        %v3520 = vpop.f32.mrf.mxu0
        %3521 = vdwg.mxu0
        %3522 = vmatprep.subr.bf16.mxu0 0
        %3523 = vmatpush1.bf16.msra.mxu0 0
        %3524 = vmatprep.subr.bf16.mxu0 0
        %3525 = vmatpush1.bf16.msra.mxu0 0
        %3526 = vmatprep.subr.bf16.mxu0 0
        %3527 = vmatpush1.bf16.msra.mxu0 0
        %3528 = vmatprep.subr.bf16.mxu0 0
        %3529 = vmatpush1.bf16.msra.mxu0 0
        %3530 = vmatprep.subr.bf16.mxu0 0
        %3531 = vmatpush1.bf16.msra.mxu0 0
        %3532 = vmatprep.subr.bf16.mxu0 0
        %3533 = vmatpush1.bf16.msra.mxu0 0
        %3534 = vmatprep.subr.bf16.mxu0 0
        %3535 = vmatpush1.bf16.msra.mxu0 0
        %3536 = vmatprep.subr.bf16.mxu0 %v3467
        %3537 = vmatpush1.bf16.msra.mxu0 %v3464
        %3538 = vmatprep.subr.bf16.mxu0 0
        %3539 = vmatpush2.bf16.msra.mxu0 0
        %3540 = vmatprep.subr.bf16.mxu0 0
        %3541 = vmatpush2.bf16.msra.mxu0 0
        %3542 = vmatprep.subr.bf16.mxu0 0
        %3543 = vmatpush2.bf16.msra.mxu0 0
        %3544 = vmatprep.subr.bf16.mxu0 0
        %3545 = vmatpush2.bf16.msra.mxu0 0
        %3546 = vmatprep.subr.bf16.mxu0 0
        %3547 = vmatpush2.bf16.msra.mxu0 0
        %3548 = vmatprep.subr.bf16.mxu0 0
        %3549 = vmatpush2.bf16.msra.mxu0 0
        %3550 = vmatprep.subr.bf16.mxu0 0
        %3551 = vmatpush2.bf16.msra.mxu0 0
        %3552 = vmatprep.subr.bf16.mxu0 0
        %3553 = vmatpush2.bf16.msra.mxu0 0
        %3554 = vmatprep.mubr.bf16.mxu0 0
        %3555 = vmatmul.mubr.bf16.gmra.mxu0 %v3455
        %v3556 = vpop.f32.mrf.mxu0
        %v3557 = vadd.f32 0.0, %v3556
        %v3558 = vpop.f32.mrf.mxu0
        %v3559 = vadd.f32 0.0, %v3558
        %v3560 = vpop.f32.mrf.mxu0
        %v3561 = vpop.f32.mrf.mxu0
        %3562 = vdwg.mxu0
        %3563 = vmatprep.subr.bf16.mxu0 0
        %3564 = vmatpush1.bf16.msra.mxu0 0
        %3565 = vmatprep.subr.bf16.mxu0 0
        %3566 = vmatpush1.bf16.msra.mxu0 0
        %3567 = vmatprep.subr.bf16.mxu0 0
        %3568 = vmatpush1.bf16.msra.mxu0 0
        %3569 = vmatprep.subr.bf16.mxu0 0
        %3570 = vmatpush1.bf16.msra.mxu0 0
        %3571 = vmatprep.subr.bf16.mxu0 0
        %3572 = vmatpush1.bf16.msra.mxu0 0
        %3573 = vmatprep.subr.bf16.mxu0 0
        %3574 = vmatpush1.bf16.msra.mxu0 0
        %3575 = vmatprep.subr.bf16.mxu0 0
        %3576 = vmatpush1.bf16.msra.mxu0 0
        %3577 = vmatprep.subr.bf16.mxu0 %v3473
        %3578 = vmatpush1.bf16.msra.mxu0 %v3470
        %3579 = vmatprep.subr.bf16.mxu0 0
        %3580 = vmatpush2.bf16.msra.mxu0 0
        %3581 = vmatprep.subr.bf16.mxu0 0
        %3582 = vmatpush2.bf16.msra.mxu0 0
        %3583 = vmatprep.subr.bf16.mxu0 0
        %3584 = vmatpush2.bf16.msra.mxu0 0
        %3585 = vmatprep.subr.bf16.mxu0 0
        %3586 = vmatpush2.bf16.msra.mxu0 0
        %3587 = vmatprep.subr.bf16.mxu0 0
        %3588 = vmatpush2.bf16.msra.mxu0 0
        %3589 = vmatprep.subr.bf16.mxu0 0
        %3590 = vmatpush2.bf16.msra.mxu0 0
        %3591 = vmatprep.subr.bf16.mxu0 0
        %3592 = vmatpush2.bf16.msra.mxu0 0
        %3593 = vmatprep.subr.bf16.mxu0 0
        %3594 = vmatpush2.bf16.msra.mxu0 0
        %3595 = vmatprep.mubr.bf16.mxu0 0
        %3596 = vmatmul.mubr.bf16.gmra.mxu0 %v3455
        %v3597 = vpop.f32.mrf.mxu0
        %v3598 = vadd.f32 0.0, %v3597
        %v3599 = vpop.f32.mrf.mxu0
        %v3600 = vadd.f32 0.0, %v3599
        %v3601 = vpop.f32.mrf.mxu0
        %v3602 = vpop.f32.mrf.mxu0
        %3603 = vdwg.mxu0
        %3604 = vmatprep.subr.bf16.mxu0 0
        %3605 = vmatpush1.bf16.msra.mxu0 0
        %3606 = vmatprep.subr.bf16.mxu0 0
        %3607 = vmatpush1.bf16.msra.mxu0 0
        %3608 = vmatprep.subr.bf16.mxu0 0
        %3609 = vmatpush1.bf16.msra.mxu0 0
        %3610 = vmatprep.subr.bf16.mxu0 0
        %3611 = vmatpush1.bf16.msra.mxu0 0
        %3612 = vmatprep.subr.bf16.mxu0 0
        %3613 = vmatpush1.bf16.msra.mxu0 0
        %3614 = vmatprep.subr.bf16.mxu0 0
        %3615 = vmatpush1.bf16.msra.mxu0 0
        %3616 = vmatprep.subr.bf16.mxu0 0
        %3617 = vmatpush1.bf16.msra.mxu0 0
        %3618 = vmatprep.subr.bf16.mxu0 %v3479
        %3619 = vmatpush1.bf16.msra.mxu0 %v3476
        %3620 = vmatprep.subr.bf16.mxu0 0
        %3621 = vmatpush2.bf16.msra.mxu0 0
        %3622 = vmatprep.subr.bf16.mxu0 0
        %3623 = vmatpush2.bf16.msra.mxu0 0
        %3624 = vmatprep.subr.bf16.mxu0 0
        %3625 = vmatpush2.bf16.msra.mxu0 0
        %3626 = vmatprep.subr.bf16.mxu0 0
        %3627 = vmatpush2.bf16.msra.mxu0 0
        %3628 = vmatprep.subr.bf16.mxu0 0
        %3629 = vmatpush2.bf16.msra.mxu0 0
        %3630 = vmatprep.subr.bf16.mxu0 0
        %3631 = vmatpush2.bf16.msra.mxu0 0
        %3632 = vmatprep.subr.bf16.mxu0 0
        %3633 = vmatpush2.bf16.msra.mxu0 0
        %3634 = vmatprep.subr.bf16.mxu0 0
        %3635 = vmatpush2.bf16.msra.mxu0 0
        %3636 = vmatprep.mubr.bf16.mxu0 0
        %3637 = vmatmul.mubr.bf16.gmra.mxu0 %v3455
        %v3638 = vpop.f32.mrf.mxu0
        %v3639 = vadd.f32 0.0, %v3638
        %v3640 = vpop.f32.mrf.mxu0
        %v3641 = vadd.f32 0.0, %v3640
        %v3642 = vpop.f32.mrf.mxu0
        %v3643 = vpop.f32.mrf.mxu0
        %3644 = vdwg.mxu0
        %v3645 = vadd.f32 %v3389, %v3516
        %v3646 = vadd.f32 %v3390, %v3518
        %v3647 = vadd.f32 %v3391, %v3557
        %v3648 = vadd.f32 %v3392, %v3559
        %v3649 = vadd.f32 %v3393, %v3598
        %v3650 = vadd.f32 %v3394, %v3600
        %v3651 = vadd.f32 %v3395, %v3639
        %v3652 = vadd.f32 %v3396, %v3641
        %s3653 = scalar_lea.vmem %s1, 60
        %v3654 = vld [vmem:[%s3653] sm:$0xf]
        %3655 = vrot.lane.b32.xlu0 %v3418, 111
        %v3656 = vpop.permute.xlu0 %3655
        %3657 = vrot.lane.b32.xlu0 %v3419, 111
        %v3658 = vpop.permute.xlu0 %3657
        %3659 = vrot.lane.b32.xlu0 %v3420, 111
        %v3660 = vpop.permute.xlu0 %3659
        %3661 = vrot.lane.b32.xlu0 %v3421, 111
        %v3662 = vpop.permute.xlu0 %3661
        %3663 = vrot.lane.b32.xlu0 %v3422, 111
        %v3664 = vpop.permute.xlu0 %3663
        %3665 = vrot.lane.b32.xlu0 %v3423, 111
        %v3666 = vpop.permute.xlu0 %3665
        %3667 = vrot.lane.b32.xlu0 %v3424, 111
        %v3668 = vpop.permute.xlu0 %3667
        %3669 = vrot.lane.b32.xlu0 %v3425, 111
        %v3670 = vpop.permute.xlu0 %3669
        %3671 = vrot.lane.b32.xlu0 %v3426, 111
        %v3672 = vpop.permute.xlu0 %3671
        %vm3673 = vcmask 908288
        %v3674 = vsel %vm3673, %v3656, %v3658
        %v3675 = vsel %vm3673, %v3658, %v3660
        %v3676 = vsel %vm3673, %v3660, %v3662
        %v3677 = vsel %vm3673, %v3662, %v3664
        %v3678 = vsel %vm3673, %v3664, %v3666
        %v3679 = vsel %vm3673, %v3666, %v3668
        %v3680 = vsel %vm3673, %v3668, %v3670
        %v3681 = vsel %vm3673, %v3670, %v3672
        %v3683 = vsel %vm207, %v3654, 0
        %v3686 = vsel %vm211, %v3674, 0
        %v3689 = vsel %vm211, %v3675, 0
        %v3692 = vsel %vm211, %v3676, 0
        %v3695 = vsel %vm211, %v3677, 0
        %v3698 = vsel %vm211, %v3678, 0
        %v3701 = vsel %vm211, %v3679, 0
        %v3704 = vsel %vm211, %v3680, 0
        %v3707 = vsel %vm211, %v3681, 0
        %3709 = vmatprep.subr.bf16.mxu0 0
        %3710 = vmatpush1.bf16.msra.mxu0 0
        %3711 = vmatprep.subr.bf16.mxu0 0
        %3712 = vmatpush1.bf16.msra.mxu0 0
        %3713 = vmatprep.subr.bf16.mxu0 0
        %3714 = vmatpush1.bf16.msra.mxu0 0
        %3715 = vmatprep.subr.bf16.mxu0 0
        %3716 = vmatpush1.bf16.msra.mxu0 0
        %3717 = vmatprep.subr.bf16.mxu0 0
        %3718 = vmatpush1.bf16.msra.mxu0 0
        %3719 = vmatprep.subr.bf16.mxu0 0
        %3720 = vmatpush1.bf16.msra.mxu0 0
        %3721 = vmatprep.subr.bf16.mxu0 0
        %3722 = vmatpush1.bf16.msra.mxu0 0
        %3723 = vmatprep.subr.bf16.mxu0 %v3689
        %3724 = vmatpush1.bf16.msra.mxu0 %v3686
        %3725 = vmatprep.subr.bf16.mxu0 0
        %3726 = vmatpush2.bf16.msra.mxu0 0
        %3727 = vmatprep.subr.bf16.mxu0 0
        %3728 = vmatpush2.bf16.msra.mxu0 0
        %3729 = vmatprep.subr.bf16.mxu0 0
        %3730 = vmatpush2.bf16.msra.mxu0 0
        %3731 = vmatprep.subr.bf16.mxu0 0
        %3732 = vmatpush2.bf16.msra.mxu0 0
        %3733 = vmatprep.subr.bf16.mxu0 0
        %3734 = vmatpush2.bf16.msra.mxu0 0
        %3735 = vmatprep.subr.bf16.mxu0 0
        %3736 = vmatpush2.bf16.msra.mxu0 0
        %3737 = vmatprep.subr.bf16.mxu0 0
        %3738 = vmatpush2.bf16.msra.mxu0 0
        %3739 = vmatprep.subr.bf16.mxu0 0
        %3740 = vmatpush2.bf16.msra.mxu0 0
        %3741 = vmatprep.mubr.bf16.mxu0 0
        %3742 = vmatmul.mubr.bf16.gmra.mxu0 %v3683
        %v3743 = vpop.f32.mrf.mxu0
        %v3744 = vadd.f32 0.0, %v3743
        %v3745 = vpop.f32.mrf.mxu0
        %v3746 = vadd.f32 0.0, %v3745
        %v3747 = vpop.f32.mrf.mxu0
        %v3748 = vpop.f32.mrf.mxu0
        %3749 = vdwg.mxu0
        %3750 = vmatprep.subr.bf16.mxu0 0
        %3751 = vmatpush1.bf16.msra.mxu0 0
        %3752 = vmatprep.subr.bf16.mxu0 0
        %3753 = vmatpush1.bf16.msra.mxu0 0
        %3754 = vmatprep.subr.bf16.mxu0 0
        %3755 = vmatpush1.bf16.msra.mxu0 0
        %3756 = vmatprep.subr.bf16.mxu0 0
        %3757 = vmatpush1.bf16.msra.mxu0 0
        %3758 = vmatprep.subr.bf16.mxu0 0
        %3759 = vmatpush1.bf16.msra.mxu0 0
        %3760 = vmatprep.subr.bf16.mxu0 0
        %3761 = vmatpush1.bf16.msra.mxu0 0
        %3762 = vmatprep.subr.bf16.mxu0 0
        %3763 = vmatpush1.bf16.msra.mxu0 0
        %3764 = vmatprep.subr.bf16.mxu0 %v3695
        %3765 = vmatpush1.bf16.msra.mxu0 %v3692
        %3766 = vmatprep.subr.bf16.mxu0 0
        %3767 = vmatpush2.bf16.msra.mxu0 0
        %3768 = vmatprep.subr.bf16.mxu0 0
        %3769 = vmatpush2.bf16.msra.mxu0 0
        %3770 = vmatprep.subr.bf16.mxu0 0
        %3771 = vmatpush2.bf16.msra.mxu0 0
        %3772 = vmatprep.subr.bf16.mxu0 0
        %3773 = vmatpush2.bf16.msra.mxu0 0
        %3774 = vmatprep.subr.bf16.mxu0 0
        %3775 = vmatpush2.bf16.msra.mxu0 0
        %3776 = vmatprep.subr.bf16.mxu0 0
        %3777 = vmatpush2.bf16.msra.mxu0 0
        %3778 = vmatprep.subr.bf16.mxu0 0
        %3779 = vmatpush2.bf16.msra.mxu0 0
        %3780 = vmatprep.subr.bf16.mxu0 0
        %3781 = vmatpush2.bf16.msra.mxu0 0
        %3782 = vmatprep.mubr.bf16.mxu0 0
        %3783 = vmatmul.mubr.bf16.gmra.mxu0 %v3683
        %v3784 = vpop.f32.mrf.mxu0
        %v3785 = vadd.f32 0.0, %v3784
        %v3786 = vpop.f32.mrf.mxu0
        %v3787 = vadd.f32 0.0, %v3786
        %v3788 = vpop.f32.mrf.mxu0
        %v3789 = vpop.f32.mrf.mxu0
        %3790 = vdwg.mxu0
        %3791 = vmatprep.subr.bf16.mxu0 0
        %3792 = vmatpush1.bf16.msra.mxu0 0
        %3793 = vmatprep.subr.bf16.mxu0 0
        %3794 = vmatpush1.bf16.msra.mxu0 0
        %3795 = vmatprep.subr.bf16.mxu0 0
        %3796 = vmatpush1.bf16.msra.mxu0 0
        %3797 = vmatprep.subr.bf16.mxu0 0
        %3798 = vmatpush1.bf16.msra.mxu0 0
        %3799 = vmatprep.subr.bf16.mxu0 0
        %3800 = vmatpush1.bf16.msra.mxu0 0
        %3801 = vmatprep.subr.bf16.mxu0 0
        %3802 = vmatpush1.bf16.msra.mxu0 0
        %3803 = vmatprep.subr.bf16.mxu0 0
        %3804 = vmatpush1.bf16.msra.mxu0 0
        %3805 = vmatprep.subr.bf16.mxu0 %v3701
        %3806 = vmatpush1.bf16.msra.mxu0 %v3698
        %3807 = vmatprep.subr.bf16.mxu0 0
        %3808 = vmatpush2.bf16.msra.mxu0 0
        %3809 = vmatprep.subr.bf16.mxu0 0
        %3810 = vmatpush2.bf16.msra.mxu0 0
        %3811 = vmatprep.subr.bf16.mxu0 0
        %3812 = vmatpush2.bf16.msra.mxu0 0
        %3813 = vmatprep.subr.bf16.mxu0 0
        %3814 = vmatpush2.bf16.msra.mxu0 0
        %3815 = vmatprep.subr.bf16.mxu0 0
        %3816 = vmatpush2.bf16.msra.mxu0 0
        %3817 = vmatprep.subr.bf16.mxu0 0
        %3818 = vmatpush2.bf16.msra.mxu0 0
        %3819 = vmatprep.subr.bf16.mxu0 0
        %3820 = vmatpush2.bf16.msra.mxu0 0
        %3821 = vmatprep.subr.bf16.mxu0 0
        %3822 = vmatpush2.bf16.msra.mxu0 0
        %3823 = vmatprep.mubr.bf16.mxu0 0
        %3824 = vmatmul.mubr.bf16.gmra.mxu0 %v3683
        %v3825 = vpop.f32.mrf.mxu0
        %v3826 = vadd.f32 0.0, %v3825
        %v3827 = vpop.f32.mrf.mxu0
        %v3828 = vadd.f32 0.0, %v3827
        %v3829 = vpop.f32.mrf.mxu0
        %v3830 = vpop.f32.mrf.mxu0
        %3831 = vdwg.mxu0
        %3832 = vmatprep.subr.bf16.mxu0 0
        %3833 = vmatpush1.bf16.msra.mxu0 0
        %3834 = vmatprep.subr.bf16.mxu0 0
        %3835 = vmatpush1.bf16.msra.mxu0 0
        %3836 = vmatprep.subr.bf16.mxu0 0
        %3837 = vmatpush1.bf16.msra.mxu0 0
        %3838 = vmatprep.subr.bf16.mxu0 0
        %3839 = vmatpush1.bf16.msra.mxu0 0
        %3840 = vmatprep.subr.bf16.mxu0 0
        %3841 = vmatpush1.bf16.msra.mxu0 0
        %3842 = vmatprep.subr.bf16.mxu0 0
        %3843 = vmatpush1.bf16.msra.mxu0 0
        %3844 = vmatprep.subr.bf16.mxu0 0
        %3845 = vmatpush1.bf16.msra.mxu0 0
        %3846 = vmatprep.subr.bf16.mxu0 %v3707
        %3847 = vmatpush1.bf16.msra.mxu0 %v3704
        %3848 = vmatprep.subr.bf16.mxu0 0
        %3849 = vmatpush2.bf16.msra.mxu0 0
        %3850 = vmatprep.subr.bf16.mxu0 0
        %3851 = vmatpush2.bf16.msra.mxu0 0
        %3852 = vmatprep.subr.bf16.mxu0 0
        %3853 = vmatpush2.bf16.msra.mxu0 0
        %3854 = vmatprep.subr.bf16.mxu0 0
        %3855 = vmatpush2.bf16.msra.mxu0 0
        %3856 = vmatprep.subr.bf16.mxu0 0
        %3857 = vmatpush2.bf16.msra.mxu0 0
        %3858 = vmatprep.subr.bf16.mxu0 0
        %3859 = vmatpush2.bf16.msra.mxu0 0
        %3860 = vmatprep.subr.bf16.mxu0 0
        %3861 = vmatpush2.bf16.msra.mxu0 0
        %3862 = vmatprep.subr.bf16.mxu0 0
        %3863 = vmatpush2.bf16.msra.mxu0 0
        %3864 = vmatprep.mubr.bf16.mxu0 0
        %3865 = vmatmul.mubr.bf16.gmra.mxu0 %v3683
        %v3866 = vpop.f32.mrf.mxu0
        %v3867 = vadd.f32 0.0, %v3866
        %v3868 = vpop.f32.mrf.mxu0
        %v3869 = vadd.f32 0.0, %v3868
        %v3870 = vpop.f32.mrf.mxu0
        %v3871 = vpop.f32.mrf.mxu0
        %3872 = vdwg.mxu0
        %v3873 = vadd.f32 %v3645, %v3744
        %v3874 = vadd.f32 %v3646, %v3746
        %v3875 = vadd.f32 %v3647, %v3785
        %v3876 = vadd.f32 %v3648, %v3787
        %v3877 = vadd.f32 %v3649, %v3826
        %v3878 = vadd.f32 %v3650, %v3828
        %v3879 = vadd.f32 %v3651, %v3867
        %v3880 = vadd.f32 %v3652, %v3869
        %s3881 = scalar_lea.vmem %s1, 64
        %v3882 = vld [vmem:[%s3881] sm:$0xf]
        %3883 = vrot.lane.b32.xlu0 %v3418, 110
        %v3884 = vpop.permute.xlu0 %3883
        %3885 = vrot.lane.b32.xlu0 %v3419, 110
        %v3886 = vpop.permute.xlu0 %3885
        %3887 = vrot.lane.b32.xlu0 %v3420, 110
        %v3888 = vpop.permute.xlu0 %3887
        %3889 = vrot.lane.b32.xlu0 %v3421, 110
        %v3890 = vpop.permute.xlu0 %3889
        %3891 = vrot.lane.b32.xlu0 %v3422, 110
        %v3892 = vpop.permute.xlu0 %3891
        %3893 = vrot.lane.b32.xlu0 %v3423, 110
        %v3894 = vpop.permute.xlu0 %3893
        %3895 = vrot.lane.b32.xlu0 %v3424, 110
        %v3896 = vpop.permute.xlu0 %3895
        %3897 = vrot.lane.b32.xlu0 %v3425, 110
        %v3898 = vpop.permute.xlu0 %3897
        %3899 = vrot.lane.b32.xlu0 %v3426, 110
        %v3900 = vpop.permute.xlu0 %3899
        %vm3901 = vcmask 900096
        %v3902 = vsel %vm3901, %v3884, %v3886
        %v3903 = vsel %vm3901, %v3886, %v3888
        %v3904 = vsel %vm3901, %v3888, %v3890
        %v3905 = vsel %vm3901, %v3890, %v3892
        %v3906 = vsel %vm3901, %v3892, %v3894
        %v3907 = vsel %vm3901, %v3894, %v3896
        %v3908 = vsel %vm3901, %v3896, %v3898
        %v3909 = vsel %vm3901, %v3898, %v3900
        %v3911 = vsel %vm207, %v3882, 0
        %v3914 = vsel %vm211, %v3902, 0
        %v3917 = vsel %vm211, %v3903, 0
        %v3920 = vsel %vm211, %v3904, 0
        %v3923 = vsel %vm211, %v3905, 0
        %v3926 = vsel %vm211, %v3906, 0
        %v3929 = vsel %vm211, %v3907, 0
        %v3932 = vsel %vm211, %v3908, 0
        %v3935 = vsel %vm211, %v3909, 0
        %3937 = vmatprep.subr.bf16.mxu0 0
        %3938 = vmatpush1.bf16.msra.mxu0 0
        %3939 = vmatprep.subr.bf16.mxu0 0
        %3940 = vmatpush1.bf16.msra.mxu0 0
        %3941 = vmatprep.subr.bf16.mxu0 0
        %3942 = vmatpush1.bf16.msra.mxu0 0
        %3943 = vmatprep.subr.bf16.mxu0 0
        %3944 = vmatpush1.bf16.msra.mxu0 0
        %3945 = vmatprep.subr.bf16.mxu0 0
        %3946 = vmatpush1.bf16.msra.mxu0 0
        %3947 = vmatprep.subr.bf16.mxu0 0
        %3948 = vmatpush1.bf16.msra.mxu0 0
        %3949 = vmatprep.subr.bf16.mxu0 0
        %3950 = vmatpush1.bf16.msra.mxu0 0
        %3951 = vmatprep.subr.bf16.mxu0 %v3917
        %3952 = vmatpush1.bf16.msra.mxu0 %v3914
        %3953 = vmatprep.subr.bf16.mxu0 0
        %3954 = vmatpush2.bf16.msra.mxu0 0
        %3955 = vmatprep.subr.bf16.mxu0 0
        %3956 = vmatpush2.bf16.msra.mxu0 0
        %3957 = vmatprep.subr.bf16.mxu0 0
        %3958 = vmatpush2.bf16.msra.mxu0 0
        %3959 = vmatprep.subr.bf16.mxu0 0
        %3960 = vmatpush2.bf16.msra.mxu0 0
        %3961 = vmatprep.subr.bf16.mxu0 0
        %3962 = vmatpush2.bf16.msra.mxu0 0
        %3963 = vmatprep.subr.bf16.mxu0 0
        %3964 = vmatpush2.bf16.msra.mxu0 0
        %3965 = vmatprep.subr.bf16.mxu0 0
        %3966 = vmatpush2.bf16.msra.mxu0 0
        %3967 = vmatprep.subr.bf16.mxu0 0
        %3968 = vmatpush2.bf16.msra.mxu0 0
        %3969 = vmatprep.mubr.bf16.mxu0 0
        %3970 = vmatmul.mubr.bf16.gmra.mxu0 %v3911
        %v3971 = vpop.f32.mrf.mxu0
        %v3972 = vadd.f32 0.0, %v3971
        %v3973 = vpop.f32.mrf.mxu0
        %v3974 = vadd.f32 0.0, %v3973
        %v3975 = vpop.f32.mrf.mxu0
        %v3976 = vpop.f32.mrf.mxu0
        %3977 = vdwg.mxu0
        %3978 = vmatprep.subr.bf16.mxu0 0
        %3979 = vmatpush1.bf16.msra.mxu0 0
        %3980 = vmatprep.subr.bf16.mxu0 0
        %3981 = vmatpush1.bf16.msra.mxu0 0
        %3982 = vmatprep.subr.bf16.mxu0 0
        %3983 = vmatpush1.bf16.msra.mxu0 0
        %3984 = vmatprep.subr.bf16.mxu0 0
        %3985 = vmatpush1.bf16.msra.mxu0 0
        %3986 = vmatprep.subr.bf16.mxu0 0
        %3987 = vmatpush1.bf16.msra.mxu0 0
        %3988 = vmatprep.subr.bf16.mxu0 0
        %3989 = vmatpush1.bf16.msra.mxu0 0
        %3990 = vmatprep.subr.bf16.mxu0 0
        %3991 = vmatpush1.bf16.msra.mxu0 0
        %3992 = vmatprep.subr.bf16.mxu0 %v3923
        %3993 = vmatpush1.bf16.msra.mxu0 %v3920
        %3994 = vmatprep.subr.bf16.mxu0 0
        %3995 = vmatpush2.bf16.msra.mxu0 0
        %3996 = vmatprep.subr.bf16.mxu0 0
        %3997 = vmatpush2.bf16.msra.mxu0 0
        %3998 = vmatprep.subr.bf16.mxu0 0
        %3999 = vmatpush2.bf16.msra.mxu0 0
        %4000 = vmatprep.subr.bf16.mxu0 0
        %4001 = vmatpush2.bf16.msra.mxu0 0
        %4002 = vmatprep.subr.bf16.mxu0 0
        %4003 = vmatpush2.bf16.msra.mxu0 0
        %4004 = vmatprep.subr.bf16.mxu0 0
        %4005 = vmatpush2.bf16.msra.mxu0 0
        %4006 = vmatprep.subr.bf16.mxu0 0
        %4007 = vmatpush2.bf16.msra.mxu0 0
        %4008 = vmatprep.subr.bf16.mxu0 0
        %4009 = vmatpush2.bf16.msra.mxu0 0
        %4010 = vmatprep.mubr.bf16.mxu0 0
        %4011 = vmatmul.mubr.bf16.gmra.mxu0 %v3911
        %v4012 = vpop.f32.mrf.mxu0
        %v4013 = vadd.f32 0.0, %v4012
        %v4014 = vpop.f32.mrf.mxu0
        %v4015 = vadd.f32 0.0, %v4014
        %v4016 = vpop.f32.mrf.mxu0
        %v4017 = vpop.f32.mrf.mxu0
        %4018 = vdwg.mxu0
        %4019 = vmatprep.subr.bf16.mxu0 0
        %4020 = vmatpush1.bf16.msra.mxu0 0
        %4021 = vmatprep.subr.bf16.mxu0 0
        %4022 = vmatpush1.bf16.msra.mxu0 0
        %4023 = vmatprep.subr.bf16.mxu0 0
        %4024 = vmatpush1.bf16.msra.mxu0 0
        %4025 = vmatprep.subr.bf16.mxu0 0
        %4026 = vmatpush1.bf16.msra.mxu0 0
        %4027 = vmatprep.subr.bf16.mxu0 0
        %4028 = vmatpush1.bf16.msra.mxu0 0
        %4029 = vmatprep.subr.bf16.mxu0 0
        %4030 = vmatpush1.bf16.msra.mxu0 0
        %4031 = vmatprep.subr.bf16.mxu0 0
        %4032 = vmatpush1.bf16.msra.mxu0 0
        %4033 = vmatprep.subr.bf16.mxu0 %v3929
        %4034 = vmatpush1.bf16.msra.mxu0 %v3926
        %4035 = vmatprep.subr.bf16.mxu0 0
        %4036 = vmatpush2.bf16.msra.mxu0 0
        %4037 = vmatprep.subr.bf16.mxu0 0
        %4038 = vmatpush2.bf16.msra.mxu0 0
        %4039 = vmatprep.subr.bf16.mxu0 0
        %4040 = vmatpush2.bf16.msra.mxu0 0
        %4041 = vmatprep.subr.bf16.mxu0 0
        %4042 = vmatpush2.bf16.msra.mxu0 0
        %4043 = vmatprep.subr.bf16.mxu0 0
        %4044 = vmatpush2.bf16.msra.mxu0 0
        %4045 = vmatprep.subr.bf16.mxu0 0
        %4046 = vmatpush2.bf16.msra.mxu0 0
        %4047 = vmatprep.subr.bf16.mxu0 0
        %4048 = vmatpush2.bf16.msra.mxu0 0
        %4049 = vmatprep.subr.bf16.mxu0 0
        %4050 = vmatpush2.bf16.msra.mxu0 0
        %4051 = vmatprep.mubr.bf16.mxu0 0
        %4052 = vmatmul.mubr.bf16.gmra.mxu0 %v3911
        %v4053 = vpop.f32.mrf.mxu0
        %v4054 = vadd.f32 0.0, %v4053
        %v4055 = vpop.f32.mrf.mxu0
        %v4056 = vadd.f32 0.0, %v4055
        %v4057 = vpop.f32.mrf.mxu0
        %v4058 = vpop.f32.mrf.mxu0
        %4059 = vdwg.mxu0
        %4060 = vmatprep.subr.bf16.mxu0 0
        %4061 = vmatpush1.bf16.msra.mxu0 0
        %4062 = vmatprep.subr.bf16.mxu0 0
        %4063 = vmatpush1.bf16.msra.mxu0 0
        %4064 = vmatprep.subr.bf16.mxu0 0
        %4065 = vmatpush1.bf16.msra.mxu0 0
        %4066 = vmatprep.subr.bf16.mxu0 0
        %4067 = vmatpush1.bf16.msra.mxu0 0
        %4068 = vmatprep.subr.bf16.mxu0 0
        %4069 = vmatpush1.bf16.msra.mxu0 0
        %4070 = vmatprep.subr.bf16.mxu0 0
        %4071 = vmatpush1.bf16.msra.mxu0 0
        %4072 = vmatprep.subr.bf16.mxu0 0
        %4073 = vmatpush1.bf16.msra.mxu0 0
        %4074 = vmatprep.subr.bf16.mxu0 %v3935
        %4075 = vmatpush1.bf16.msra.mxu0 %v3932
        %4076 = vmatprep.subr.bf16.mxu0 0
        %4077 = vmatpush2.bf16.msra.mxu0 0
        %4078 = vmatprep.subr.bf16.mxu0 0
        %4079 = vmatpush2.bf16.msra.mxu0 0
        %4080 = vmatprep.subr.bf16.mxu0 0
        %4081 = vmatpush2.bf16.msra.mxu0 0
        %4082 = vmatprep.subr.bf16.mxu0 0
        %4083 = vmatpush2.bf16.msra.mxu0 0
        %4084 = vmatprep.subr.bf16.mxu0 0
        %4085 = vmatpush2.bf16.msra.mxu0 0
        %4086 = vmatprep.subr.bf16.mxu0 0
        %4087 = vmatpush2.bf16.msra.mxu0 0
        %4088 = vmatprep.subr.bf16.mxu0 0
        %4089 = vmatpush2.bf16.msra.mxu0 0
        %4090 = vmatprep.subr.bf16.mxu0 0
        %4091 = vmatpush2.bf16.msra.mxu0 0
        %4092 = vmatprep.mubr.bf16.mxu0 0
        %4093 = vmatmul.mubr.bf16.gmra.mxu0 %v3911
        %v4094 = vpop.f32.mrf.mxu0
        %v4095 = vadd.f32 0.0, %v4094
        %v4096 = vpop.f32.mrf.mxu0
        %v4097 = vadd.f32 0.0, %v4096
        %v4098 = vpop.f32.mrf.mxu0
        %v4099 = vpop.f32.mrf.mxu0
        %4100 = vdwg.mxu0
        %v4101 = vadd.f32 %v3873, %v3972
        %v4102 = vadd.f32 %v3874, %v3974
        %v4103 = vadd.f32 %v3875, %v4013
        %v4104 = vadd.f32 %v3876, %v4015
        %v4105 = vadd.f32 %v3877, %v4054
        %v4106 = vadd.f32 %v3878, %v4056
        %v4107 = vadd.f32 %v3879, %v4095
        %v4108 = vadd.f32 %v3880, %v4097
        %s4109 = scalar_lea.vmem %s1, 68
        %v4110 = vld [vmem:[%s4109] sm:$0xf]
        %4111 = vrot.lane.b32.xlu0 %v3418, 109
        %v4112 = vpop.permute.xlu0 %4111
        %4113 = vrot.lane.b32.xlu0 %v3419, 109
        %v4114 = vpop.permute.xlu0 %4113
        %4115 = vrot.lane.b32.xlu0 %v3420, 109
        %v4116 = vpop.permute.xlu0 %4115
        %4117 = vrot.lane.b32.xlu0 %v3421, 109
        %v4118 = vpop.permute.xlu0 %4117
        %4119 = vrot.lane.b32.xlu0 %v3422, 109
        %v4120 = vpop.permute.xlu0 %4119
        %4121 = vrot.lane.b32.xlu0 %v3423, 109
        %v4122 = vpop.permute.xlu0 %4121
        %4123 = vrot.lane.b32.xlu0 %v3424, 109
        %v4124 = vpop.permute.xlu0 %4123
        %4125 = vrot.lane.b32.xlu0 %v3425, 109
        %v4126 = vpop.permute.xlu0 %4125
        %4127 = vrot.lane.b32.xlu0 %v3426, 109
        %v4128 = vpop.permute.xlu0 %4127
        %vm4129 = vcmask 891904
        %v4130 = vsel %vm4129, %v4112, %v4114
        %v4131 = vsel %vm4129, %v4114, %v4116
        %v4132 = vsel %vm4129, %v4116, %v4118
        %v4133 = vsel %vm4129, %v4118, %v4120
        %v4134 = vsel %vm4129, %v4120, %v4122
        %v4135 = vsel %vm4129, %v4122, %v4124
        %v4136 = vsel %vm4129, %v4124, %v4126
        %v4137 = vsel %vm4129, %v4126, %v4128
        %v4139 = vsel %vm207, %v4110, 0
        %v4142 = vsel %vm211, %v4130, 0
        %v4145 = vsel %vm211, %v4131, 0
        %v4148 = vsel %vm211, %v4132, 0
        %v4151 = vsel %vm211, %v4133, 0
        %v4154 = vsel %vm211, %v4134, 0
        %v4157 = vsel %vm211, %v4135, 0
        %v4160 = vsel %vm211, %v4136, 0
        %v4163 = vsel %vm211, %v4137, 0
        %4165 = vmatprep.subr.bf16.mxu0 0
        %4166 = vmatpush1.bf16.msra.mxu0 0
        %4167 = vmatprep.subr.bf16.mxu0 0
        %4168 = vmatpush1.bf16.msra.mxu0 0
        %4169 = vmatprep.subr.bf16.mxu0 0
        %4170 = vmatpush1.bf16.msra.mxu0 0
        %4171 = vmatprep.subr.bf16.mxu0 0
        %4172 = vmatpush1.bf16.msra.mxu0 0
        %4173 = vmatprep.subr.bf16.mxu0 0
        %4174 = vmatpush1.bf16.msra.mxu0 0
        %4175 = vmatprep.subr.bf16.mxu0 0
        %4176 = vmatpush1.bf16.msra.mxu0 0
        %4177 = vmatprep.subr.bf16.mxu0 0
        %4178 = vmatpush1.bf16.msra.mxu0 0
        %4179 = vmatprep.subr.bf16.mxu0 %v4145
        %4180 = vmatpush1.bf16.msra.mxu0 %v4142
        %4181 = vmatprep.subr.bf16.mxu0 0
        %4182 = vmatpush2.bf16.msra.mxu0 0
        %4183 = vmatprep.subr.bf16.mxu0 0
        %4184 = vmatpush2.bf16.msra.mxu0 0
        %4185 = vmatprep.subr.bf16.mxu0 0
        %4186 = vmatpush2.bf16.msra.mxu0 0
        %4187 = vmatprep.subr.bf16.mxu0 0
        %4188 = vmatpush2.bf16.msra.mxu0 0
        %4189 = vmatprep.subr.bf16.mxu0 0
        %4190 = vmatpush2.bf16.msra.mxu0 0
        %4191 = vmatprep.subr.bf16.mxu0 0
        %4192 = vmatpush2.bf16.msra.mxu0 0
        %4193 = vmatprep.subr.bf16.mxu0 0
        %4194 = vmatpush2.bf16.msra.mxu0 0
        %4195 = vmatprep.subr.bf16.mxu0 0
        %4196 = vmatpush2.bf16.msra.mxu0 0
        %4197 = vmatprep.mubr.bf16.mxu0 0
        %4198 = vmatmul.mubr.bf16.gmra.mxu0 %v4139
        %v4199 = vpop.f32.mrf.mxu0
        %v4200 = vadd.f32 0.0, %v4199
        %v4201 = vpop.f32.mrf.mxu0
        %v4202 = vadd.f32 0.0, %v4201
        %v4203 = vpop.f32.mrf.mxu0
        %v4204 = vpop.f32.mrf.mxu0
        %4205 = vdwg.mxu0
        %4206 = vmatprep.subr.bf16.mxu0 0
        %4207 = vmatpush1.bf16.msra.mxu0 0
        %4208 = vmatprep.subr.bf16.mxu0 0
        %4209 = vmatpush1.bf16.msra.mxu0 0
        %4210 = vmatprep.subr.bf16.mxu0 0
        %4211 = vmatpush1.bf16.msra.mxu0 0
        %4212 = vmatprep.subr.bf16.mxu0 0
        %4213 = vmatpush1.bf16.msra.mxu0 0
        %4214 = vmatprep.subr.bf16.mxu0 0
        %4215 = vmatpush1.bf16.msra.mxu0 0
        %4216 = vmatprep.subr.bf16.mxu0 0
        %4217 = vmatpush1.bf16.msra.mxu0 0
        %4218 = vmatprep.subr.bf16.mxu0 0
        %4219 = vmatpush1.bf16.msra.mxu0 0
        %4220 = vmatprep.subr.bf16.mxu0 %v4151
        %4221 = vmatpush1.bf16.msra.mxu0 %v4148
        %4222 = vmatprep.subr.bf16.mxu0 0
        %4223 = vmatpush2.bf16.msra.mxu0 0
        %4224 = vmatprep.subr.bf16.mxu0 0
        %4225 = vmatpush2.bf16.msra.mxu0 0
        %4226 = vmatprep.subr.bf16.mxu0 0
        %4227 = vmatpush2.bf16.msra.mxu0 0
        %4228 = vmatprep.subr.bf16.mxu0 0
        %4229 = vmatpush2.bf16.msra.mxu0 0
        %4230 = vmatprep.subr.bf16.mxu0 0
        %4231 = vmatpush2.bf16.msra.mxu0 0
        %4232 = vmatprep.subr.bf16.mxu0 0
        %4233 = vmatpush2.bf16.msra.mxu0 0
        %4234 = vmatprep.subr.bf16.mxu0 0
        %4235 = vmatpush2.bf16.msra.mxu0 0
        %4236 = vmatprep.subr.bf16.mxu0 0
        %4237 = vmatpush2.bf16.msra.mxu0 0
        %4238 = vmatprep.mubr.bf16.mxu0 0
        %4239 = vmatmul.mubr.bf16.gmra.mxu0 %v4139
        %v4240 = vpop.f32.mrf.mxu0
        %v4241 = vadd.f32 0.0, %v4240
        %v4242 = vpop.f32.mrf.mxu0
        %v4243 = vadd.f32 0.0, %v4242
        %v4244 = vpop.f32.mrf.mxu0
        %v4245 = vpop.f32.mrf.mxu0
        %4246 = vdwg.mxu0
        %4247 = vmatprep.subr.bf16.mxu0 0
        %4248 = vmatpush1.bf16.msra.mxu0 0
        %4249 = vmatprep.subr.bf16.mxu0 0
        %4250 = vmatpush1.bf16.msra.mxu0 0
        %4251 = vmatprep.subr.bf16.mxu0 0
        %4252 = vmatpush1.bf16.msra.mxu0 0
        %4253 = vmatprep.subr.bf16.mxu0 0
        %4254 = vmatpush1.bf16.msra.mxu0 0
        %4255 = vmatprep.subr.bf16.mxu0 0
        %4256 = vmatpush1.bf16.msra.mxu0 0
        %4257 = vmatprep.subr.bf16.mxu0 0
        %4258 = vmatpush1.bf16.msra.mxu0 0
        %4259 = vmatprep.subr.bf16.mxu0 0
        %4260 = vmatpush1.bf16.msra.mxu0 0
        %4261 = vmatprep.subr.bf16.mxu0 %v4157
        %4262 = vmatpush1.bf16.msra.mxu0 %v4154
        %4263 = vmatprep.subr.bf16.mxu0 0
        %4264 = vmatpush2.bf16.msra.mxu0 0
        %4265 = vmatprep.subr.bf16.mxu0 0
        %4266 = vmatpush2.bf16.msra.mxu0 0
        %4267 = vmatprep.subr.bf16.mxu0 0
        %4268 = vmatpush2.bf16.msra.mxu0 0
        %4269 = vmatprep.subr.bf16.mxu0 0
        %4270 = vmatpush2.bf16.msra.mxu0 0
        %4271 = vmatprep.subr.bf16.mxu0 0
        %4272 = vmatpush2.bf16.msra.mxu0 0
        %4273 = vmatprep.subr.bf16.mxu0 0
        %4274 = vmatpush2.bf16.msra.mxu0 0
        %4275 = vmatprep.subr.bf16.mxu0 0
        %4276 = vmatpush2.bf16.msra.mxu0 0
        %4277 = vmatprep.subr.bf16.mxu0 0
        %4278 = vmatpush2.bf16.msra.mxu0 0
        %4279 = vmatprep.mubr.bf16.mxu0 0
        %4280 = vmatmul.mubr.bf16.gmra.mxu0 %v4139
        %v4281 = vpop.f32.mrf.mxu0
        %v4282 = vadd.f32 0.0, %v4281
        %v4283 = vpop.f32.mrf.mxu0
        %v4284 = vadd.f32 0.0, %v4283
        %v4285 = vpop.f32.mrf.mxu0
        %v4286 = vpop.f32.mrf.mxu0
        %4287 = vdwg.mxu0
        %4288 = vmatprep.subr.bf16.mxu0 0
        %4289 = vmatpush1.bf16.msra.mxu0 0
        %4290 = vmatprep.subr.bf16.mxu0 0
        %4291 = vmatpush1.bf16.msra.mxu0 0
        %4292 = vmatprep.subr.bf16.mxu0 0
        %4293 = vmatpush1.bf16.msra.mxu0 0
        %4294 = vmatprep.subr.bf16.mxu0 0
        %4295 = vmatpush1.bf16.msra.mxu0 0
        %4296 = vmatprep.subr.bf16.mxu0 0
        %4297 = vmatpush1.bf16.msra.mxu0 0
        %4298 = vmatprep.subr.bf16.mxu0 0
        %4299 = vmatpush1.bf16.msra.mxu0 0
        %4300 = vmatprep.subr.bf16.mxu0 0
        %4301 = vmatpush1.bf16.msra.mxu0 0
        %4302 = vmatprep.subr.bf16.mxu0 %v4163
        %4303 = vmatpush1.bf16.msra.mxu0 %v4160
        %4304 = vmatprep.subr.bf16.mxu0 0
        %4305 = vmatpush2.bf16.msra.mxu0 0
        %4306 = vmatprep.subr.bf16.mxu0 0
        %4307 = vmatpush2.bf16.msra.mxu0 0
        %4308 = vmatprep.subr.bf16.mxu0 0
        %4309 = vmatpush2.bf16.msra.mxu0 0
        %4310 = vmatprep.subr.bf16.mxu0 0
        %4311 = vmatpush2.bf16.msra.mxu0 0
        %4312 = vmatprep.subr.bf16.mxu0 0
        %4313 = vmatpush2.bf16.msra.mxu0 0
        %4314 = vmatprep.subr.bf16.mxu0 0
        %4315 = vmatpush2.bf16.msra.mxu0 0
        %4316 = vmatprep.subr.bf16.mxu0 0
        %4317 = vmatpush2.bf16.msra.mxu0 0
        %4318 = vmatprep.subr.bf16.mxu0 0
        %4319 = vmatpush2.bf16.msra.mxu0 0
        %4320 = vmatprep.mubr.bf16.mxu0 0
        %4321 = vmatmul.mubr.bf16.gmra.mxu0 %v4139
        %v4322 = vpop.f32.mrf.mxu0
        %v4323 = vadd.f32 0.0, %v4322
        %v4324 = vpop.f32.mrf.mxu0
        %v4325 = vadd.f32 0.0, %v4324
        %v4326 = vpop.f32.mrf.mxu0
        %v4327 = vpop.f32.mrf.mxu0
        %4328 = vdwg.mxu0
        %v4329 = vadd.f32 %v4101, %v4200
        %v4330 = vadd.f32 %v4102, %v4202
        %v4331 = vadd.f32 %v4103, %v4241
        %v4332 = vadd.f32 %v4104, %v4243
        %v4333 = vadd.f32 %v4105, %v4282
        %v4334 = vadd.f32 %v4106, %v4284
        %v4335 = vadd.f32 %v4107, %v4323
        %v4336 = vadd.f32 %v4108, %v4325
        %v4337 = vld [vmem:[#allocation2 + $0x14] sm:$0xff]
        %v4338 = vld [vmem:[#allocation2 + $0x1c] sm:$0xff]
        %v4339 = vld [vmem:[#allocation2 + $0x24] sm:$0xff]
        %v4340 = vld [vmem:[#allocation2 + $0x2c] sm:$0xff]
        %v4341 = vld [vmem:[#allocation2 + $0x34] sm:$0xf]
        %s4342 = scalar_lea.vmem %s1, 72
        %v4343 = vld [vmem:[%s4342] sm:$0xf]
        %v4349 = vunpack.c.l.b16 %v4337
        %v4350 = vunpack.c.h.b16 %v4337
        %v4351 = vunpack.c.l.b16 %v4338
        %v4352 = vunpack.c.h.b16 %v4338
        %v4353 = vunpack.c.l.b16 %v4339
        %v4354 = vunpack.c.h.b16 %v4339
        %v4355 = vunpack.c.l.b16 %v4340
        %v4356 = vunpack.c.h.b16 %v4340
        %v4357 = vunpack.c.l.b16 %v4341
        %v4358 = vpack.c.b16 %v4349, %v4349
        %v4359 = vpack.c.b16 %v4350, %v4350
        %v4360 = vpack.c.b16 %v4351, %v4351
        %v4361 = vpack.c.b16 %v4352, %v4352
        %v4362 = vpack.c.b16 %v4353, %v4353
        %v4363 = vpack.c.b16 %v4354, %v4354
        %v4364 = vpack.c.b16 %v4355, %v4355
        %v4365 = vpack.c.b16 %v4356, %v4356
        %v4366 = vpack.c.b16 %v4357, %v4357
        %4367 = vrot.lane.b32.xlu0 %v4358, 79
        %v4368 = vpop.permute.xlu0 %4367
        %4369 = vrot.lane.b32.xlu0 %v4359, 79
        %v4370 = vpop.permute.xlu0 %4369
        %4371 = vrot.lane.b32.xlu0 %v4360, 79
        %v4372 = vpop.permute.xlu0 %4371
        %4373 = vrot.lane.b32.xlu0 %v4361, 79
        %v4374 = vpop.permute.xlu0 %4373
        %4375 = vrot.lane.b32.xlu0 %v4362, 79
        %v4376 = vpop.permute.xlu0 %4375
        %4377 = vrot.lane.b32.xlu0 %v4363, 79
        %v4378 = vpop.permute.xlu0 %4377
        %4379 = vrot.lane.b32.xlu0 %v4364, 79
        %v4380 = vpop.permute.xlu0 %4379
        %4381 = vrot.lane.b32.xlu0 %v4365, 79
        %v4382 = vpop.permute.xlu0 %4381
        %4383 = vrot.lane.b32.xlu0 %v4366, 79
        %v4384 = vpop.permute.xlu0 %4383
        %vm4385 = vcmask 646144
        %v4386 = vsel %vm4385, %v4368, %v4370
        %v4387 = vsel %vm4385, %v4370, %v4372
        %v4388 = vsel %vm4385, %v4372, %v4374
        %v4389 = vsel %vm4385, %v4374, %v4376
        %v4390 = vsel %vm4385, %v4376, %v4378
        %v4391 = vsel %vm4385, %v4378, %v4380
        %v4392 = vsel %vm4385, %v4380, %v4382
        %v4393 = vsel %vm4385, %v4382, %v4384
        %v4395 = vsel %vm207, %v4343, 0
        %v4398 = vsel %vm211, %v4386, 0
        %v4401 = vsel %vm211, %v4387, 0
        %v4404 = vsel %vm211, %v4388, 0
        %v4407 = vsel %vm211, %v4389, 0
        %v4410 = vsel %vm211, %v4390, 0
        %v4413 = vsel %vm211, %v4391, 0
        %v4416 = vsel %vm211, %v4392, 0
        %v4419 = vsel %vm211, %v4393, 0
        %4421 = vmatprep.subr.bf16.mxu0 0
        %4422 = vmatpush1.bf16.msra.mxu0 0
        %4423 = vmatprep.subr.bf16.mxu0 0
        %4424 = vmatpush1.bf16.msra.mxu0 0
        %4425 = vmatprep.subr.bf16.mxu0 0
        %4426 = vmatpush1.bf16.msra.mxu0 0
        %4427 = vmatprep.subr.bf16.mxu0 0
        %4428 = vmatpush1.bf16.msra.mxu0 0
        %4429 = vmatprep.subr.bf16.mxu0 0
        %4430 = vmatpush1.bf16.msra.mxu0 0
        %4431 = vmatprep.subr.bf16.mxu0 0
        %4432 = vmatpush1.bf16.msra.mxu0 0
        %4433 = vmatprep.subr.bf16.mxu0 0
        %4434 = vmatpush1.bf16.msra.mxu0 0
        %4435 = vmatprep.subr.bf16.mxu0 %v4401
        %4436 = vmatpush1.bf16.msra.mxu0 %v4398
        %4437 = vmatprep.subr.bf16.mxu0 0
        %4438 = vmatpush2.bf16.msra.mxu0 0
        %4439 = vmatprep.subr.bf16.mxu0 0
        %4440 = vmatpush2.bf16.msra.mxu0 0
        %4441 = vmatprep.subr.bf16.mxu0 0
        %4442 = vmatpush2.bf16.msra.mxu0 0
        %4443 = vmatprep.subr.bf16.mxu0 0
        %4444 = vmatpush2.bf16.msra.mxu0 0
        %4445 = vmatprep.subr.bf16.mxu0 0
        %4446 = vmatpush2.bf16.msra.mxu0 0
        %4447 = vmatprep.subr.bf16.mxu0 0
        %4448 = vmatpush2.bf16.msra.mxu0 0
        %4449 = vmatprep.subr.bf16.mxu0 0
        %4450 = vmatpush2.bf16.msra.mxu0 0
        %4451 = vmatprep.subr.bf16.mxu0 0
        %4452 = vmatpush2.bf16.msra.mxu0 0
        %4453 = vmatprep.mubr.bf16.mxu0 0
        %4454 = vmatmul.mubr.bf16.gmra.mxu0 %v4395
        %v4455 = vpop.f32.mrf.mxu0
        %v4456 = vadd.f32 0.0, %v4455
        %v4457 = vpop.f32.mrf.mxu0
        %v4458 = vadd.f32 0.0, %v4457
        %v4459 = vpop.f32.mrf.mxu0
        %v4460 = vpop.f32.mrf.mxu0
        %4461 = vdwg.mxu0
        %4462 = vmatprep.subr.bf16.mxu0 0
        %4463 = vmatpush1.bf16.msra.mxu0 0
        %4464 = vmatprep.subr.bf16.mxu0 0
        %4465 = vmatpush1.bf16.msra.mxu0 0
        %4466 = vmatprep.subr.bf16.mxu0 0
        %4467 = vmatpush1.bf16.msra.mxu0 0
        %4468 = vmatprep.subr.bf16.mxu0 0
        %4469 = vmatpush1.bf16.msra.mxu0 0
        %4470 = vmatprep.subr.bf16.mxu0 0
        %4471 = vmatpush1.bf16.msra.mxu0 0
        %4472 = vmatprep.subr.bf16.mxu0 0
        %4473 = vmatpush1.bf16.msra.mxu0 0
        %4474 = vmatprep.subr.bf16.mxu0 0
        %4475 = vmatpush1.bf16.msra.mxu0 0
        %4476 = vmatprep.subr.bf16.mxu0 %v4407
        %4477 = vmatpush1.bf16.msra.mxu0 %v4404
        %4478 = vmatprep.subr.bf16.mxu0 0
        %4479 = vmatpush2.bf16.msra.mxu0 0
        %4480 = vmatprep.subr.bf16.mxu0 0
        %4481 = vmatpush2.bf16.msra.mxu0 0
        %4482 = vmatprep.subr.bf16.mxu0 0
        %4483 = vmatpush2.bf16.msra.mxu0 0
        %4484 = vmatprep.subr.bf16.mxu0 0
        %4485 = vmatpush2.bf16.msra.mxu0 0
        %4486 = vmatprep.subr.bf16.mxu0 0
        %4487 = vmatpush2.bf16.msra.mxu0 0
        %4488 = vmatprep.subr.bf16.mxu0 0
        %4489 = vmatpush2.bf16.msra.mxu0 0
        %4490 = vmatprep.subr.bf16.mxu0 0
        %4491 = vmatpush2.bf16.msra.mxu0 0
        %4492 = vmatprep.subr.bf16.mxu0 0
        %4493 = vmatpush2.bf16.msra.mxu0 0
        %4494 = vmatprep.mubr.bf16.mxu0 0
        %4495 = vmatmul.mubr.bf16.gmra.mxu0 %v4395
        %v4496 = vpop.f32.mrf.mxu0
        %v4497 = vadd.f32 0.0, %v4496
        %v4498 = vpop.f32.mrf.mxu0
        %v4499 = vadd.f32 0.0, %v4498
        %v4500 = vpop.f32.mrf.mxu0
        %v4501 = vpop.f32.mrf.mxu0
        %4502 = vdwg.mxu0
        %4503 = vmatprep.subr.bf16.mxu0 0
        %4504 = vmatpush1.bf16.msra.mxu0 0
        %4505 = vmatprep.subr.bf16.mxu0 0
        %4506 = vmatpush1.bf16.msra.mxu0 0
        %4507 = vmatprep.subr.bf16.mxu0 0
        %4508 = vmatpush1.bf16.msra.mxu0 0
        %4509 = vmatprep.subr.bf16.mxu0 0
        %4510 = vmatpush1.bf16.msra.mxu0 0
        %4511 = vmatprep.subr.bf16.mxu0 0
        %4512 = vmatpush1.bf16.msra.mxu0 0
        %4513 = vmatprep.subr.bf16.mxu0 0
        %4514 = vmatpush1.bf16.msra.mxu0 0
        %4515 = vmatprep.subr.bf16.mxu0 0
        %4516 = vmatpush1.bf16.msra.mxu0 0
        %4517 = vmatprep.subr.bf16.mxu0 %v4413
        %4518 = vmatpush1.bf16.msra.mxu0 %v4410
        %4519 = vmatprep.subr.bf16.mxu0 0
        %4520 = vmatpush2.bf16.msra.mxu0 0
        %4521 = vmatprep.subr.bf16.mxu0 0
        %4522 = vmatpush2.bf16.msra.mxu0 0
        %4523 = vmatprep.subr.bf16.mxu0 0
        %4524 = vmatpush2.bf16.msra.mxu0 0
        %4525 = vmatprep.subr.bf16.mxu0 0
        %4526 = vmatpush2.bf16.msra.mxu0 0
        %4527 = vmatprep.subr.bf16.mxu0 0
        %4528 = vmatpush2.bf16.msra.mxu0 0
        %4529 = vmatprep.subr.bf16.mxu0 0
        %4530 = vmatpush2.bf16.msra.mxu0 0
        %4531 = vmatprep.subr.bf16.mxu0 0
        %4532 = vmatpush2.bf16.msra.mxu0 0
        %4533 = vmatprep.subr.bf16.mxu0 0
        %4534 = vmatpush2.bf16.msra.mxu0 0
        %4535 = vmatprep.mubr.bf16.mxu0 0
        %4536 = vmatmul.mubr.bf16.gmra.mxu0 %v4395
        %v4537 = vpop.f32.mrf.mxu0
        %v4538 = vadd.f32 0.0, %v4537
        %v4539 = vpop.f32.mrf.mxu0
        %v4540 = vadd.f32 0.0, %v4539
        %v4541 = vpop.f32.mrf.mxu0
        %v4542 = vpop.f32.mrf.mxu0
        %4543 = vdwg.mxu0
        %4544 = vmatprep.subr.bf16.mxu0 0
        %4545 = vmatpush1.bf16.msra.mxu0 0
        %4546 = vmatprep.subr.bf16.mxu0 0
        %4547 = vmatpush1.bf16.msra.mxu0 0
        %4548 = vmatprep.subr.bf16.mxu0 0
        %4549 = vmatpush1.bf16.msra.mxu0 0
        %4550 = vmatprep.subr.bf16.mxu0 0
        %4551 = vmatpush1.bf16.msra.mxu0 0
        %4552 = vmatprep.subr.bf16.mxu0 0
        %4553 = vmatpush1.bf16.msra.mxu0 0
        %4554 = vmatprep.subr.bf16.mxu0 0
        %4555 = vmatpush1.bf16.msra.mxu0 0
        %4556 = vmatprep.subr.bf16.mxu0 0
        %4557 = vmatpush1.bf16.msra.mxu0 0
        %4558 = vmatprep.subr.bf16.mxu0 %v4419
        %4559 = vmatpush1.bf16.msra.mxu0 %v4416
        %4560 = vmatprep.subr.bf16.mxu0 0
        %4561 = vmatpush2.bf16.msra.mxu0 0
        %4562 = vmatprep.subr.bf16.mxu0 0
        %4563 = vmatpush2.bf16.msra.mxu0 0
        %4564 = vmatprep.subr.bf16.mxu0 0
        %4565 = vmatpush2.bf16.msra.mxu0 0
        %4566 = vmatprep.subr.bf16.mxu0 0
        %4567 = vmatpush2.bf16.msra.mxu0 0
        %4568 = vmatprep.subr.bf16.mxu0 0
        %4569 = vmatpush2.bf16.msra.mxu0 0
        %4570 = vmatprep.subr.bf16.mxu0 0
        %4571 = vmatpush2.bf16.msra.mxu0 0
        %4572 = vmatprep.subr.bf16.mxu0 0
        %4573 = vmatpush2.bf16.msra.mxu0 0
        %4574 = vmatprep.subr.bf16.mxu0 0
        %4575 = vmatpush2.bf16.msra.mxu0 0
        %4576 = vmatprep.mubr.bf16.mxu0 0
        %4577 = vmatmul.mubr.bf16.gmra.mxu0 %v4395
        %v4578 = vpop.f32.mrf.mxu0
        %v4579 = vadd.f32 0.0, %v4578
        %v4580 = vpop.f32.mrf.mxu0
        %v4581 = vadd.f32 0.0, %v4580
        %v4582 = vpop.f32.mrf.mxu0
        %v4583 = vpop.f32.mrf.mxu0
        %4584 = vdwg.mxu0
        %v4585 = vadd.f32 %v4329, %v4456
        %v4586 = vadd.f32 %v4330, %v4458
        %v4587 = vadd.f32 %v4331, %v4497
        %v4588 = vadd.f32 %v4332, %v4499
        %v4589 = vadd.f32 %v4333, %v4538
        %v4590 = vadd.f32 %v4334, %v4540
        %v4591 = vadd.f32 %v4335, %v4579
        %v4592 = vadd.f32 %v4336, %v4581
        %s4593 = scalar_lea.vmem %s1, 76
        %v4594 = vld [vmem:[%s4593] sm:$0xf]
        %4595 = vrot.lane.b32.xlu0 %v4358, 78
        %v4596 = vpop.permute.xlu0 %4595
        %4597 = vrot.lane.b32.xlu0 %v4359, 78
        %v4598 = vpop.permute.xlu0 %4597
        %4599 = vrot.lane.b32.xlu0 %v4360, 78
        %v4600 = vpop.permute.xlu0 %4599
        %4601 = vrot.lane.b32.xlu0 %v4361, 78
        %v4602 = vpop.permute.xlu0 %4601
        %4603 = vrot.lane.b32.xlu0 %v4362, 78
        %v4604 = vpop.permute.xlu0 %4603
        %4605 = vrot.lane.b32.xlu0 %v4363, 78
        %v4606 = vpop.permute.xlu0 %4605
        %4607 = vrot.lane.b32.xlu0 %v4364, 78
        %v4608 = vpop.permute.xlu0 %4607
        %4609 = vrot.lane.b32.xlu0 %v4365, 78
        %v4610 = vpop.permute.xlu0 %4609
        %4611 = vrot.lane.b32.xlu0 %v4366, 78
        %v4612 = vpop.permute.xlu0 %4611
        %vm4613 = vcmask 637952
        %v4614 = vsel %vm4613, %v4596, %v4598
        %v4615 = vsel %vm4613, %v4598, %v4600
        %v4616 = vsel %vm4613, %v4600, %v4602
        %v4617 = vsel %vm4613, %v4602, %v4604
        %v4618 = vsel %vm4613, %v4604, %v4606
        %v4619 = vsel %vm4613, %v4606, %v4608
        %v4620 = vsel %vm4613, %v4608, %v4610
        %v4621 = vsel %vm4613, %v4610, %v4612
        %v4623 = vsel %vm207, %v4594, 0
        %v4626 = vsel %vm211, %v4614, 0
        %v4629 = vsel %vm211, %v4615, 0
        %v4632 = vsel %vm211, %v4616, 0
        %v4635 = vsel %vm211, %v4617, 0
        %v4638 = vsel %vm211, %v4618, 0
        %v4641 = vsel %vm211, %v4619, 0
        %v4644 = vsel %vm211, %v4620, 0
        %v4647 = vsel %vm211, %v4621, 0
        %4649 = vmatprep.subr.bf16.mxu0 0
        %4650 = vmatpush1.bf16.msra.mxu0 0
        %4651 = vmatprep.subr.bf16.mxu0 0
        %4652 = vmatpush1.bf16.msra.mxu0 0
        %4653 = vmatprep.subr.bf16.mxu0 0
        %4654 = vmatpush1.bf16.msra.mxu0 0
        %4655 = vmatprep.subr.bf16.mxu0 0
        %4656 = vmatpush1.bf16.msra.mxu0 0
        %4657 = vmatprep.subr.bf16.mxu0 0
        %4658 = vmatpush1.bf16.msra.mxu0 0
        %4659 = vmatprep.subr.bf16.mxu0 0
        %4660 = vmatpush1.bf16.msra.mxu0 0
        %4661 = vmatprep.subr.bf16.mxu0 0
        %4662 = vmatpush1.bf16.msra.mxu0 0
        %4663 = vmatprep.subr.bf16.mxu0 %v4629
        %4664 = vmatpush1.bf16.msra.mxu0 %v4626
        %4665 = vmatprep.subr.bf16.mxu0 0
        %4666 = vmatpush2.bf16.msra.mxu0 0
        %4667 = vmatprep.subr.bf16.mxu0 0
        %4668 = vmatpush2.bf16.msra.mxu0 0
        %4669 = vmatprep.subr.bf16.mxu0 0
        %4670 = vmatpush2.bf16.msra.mxu0 0
        %4671 = vmatprep.subr.bf16.mxu0 0
        %4672 = vmatpush2.bf16.msra.mxu0 0
        %4673 = vmatprep.subr.bf16.mxu0 0
        %4674 = vmatpush2.bf16.msra.mxu0 0
        %4675 = vmatprep.subr.bf16.mxu0 0
        %4676 = vmatpush2.bf16.msra.mxu0 0
        %4677 = vmatprep.subr.bf16.mxu0 0
        %4678 = vmatpush2.bf16.msra.mxu0 0
        %4679 = vmatprep.subr.bf16.mxu0 0
        %4680 = vmatpush2.bf16.msra.mxu0 0
        %4681 = vmatprep.mubr.bf16.mxu0 0
        %4682 = vmatmul.mubr.bf16.gmra.mxu0 %v4623
        %v4683 = vpop.f32.mrf.mxu0
        %v4684 = vadd.f32 0.0, %v4683
        %v4685 = vpop.f32.mrf.mxu0
        %v4686 = vadd.f32 0.0, %v4685
        %v4687 = vpop.f32.mrf.mxu0
        %v4688 = vpop.f32.mrf.mxu0
        %4689 = vdwg.mxu0
        %4690 = vmatprep.subr.bf16.mxu0 0
        %4691 = vmatpush1.bf16.msra.mxu0 0
        %4692 = vmatprep.subr.bf16.mxu0 0
        %4693 = vmatpush1.bf16.msra.mxu0 0
        %4694 = vmatprep.subr.bf16.mxu0 0
        %4695 = vmatpush1.bf16.msra.mxu0 0
        %4696 = vmatprep.subr.bf16.mxu0 0
        %4697 = vmatpush1.bf16.msra.mxu0 0
        %4698 = vmatprep.subr.bf16.mxu0 0
        %4699 = vmatpush1.bf16.msra.mxu0 0
        %4700 = vmatprep.subr.bf16.mxu0 0
        %4701 = vmatpush1.bf16.msra.mxu0 0
        %4702 = vmatprep.subr.bf16.mxu0 0
        %4703 = vmatpush1.bf16.msra.mxu0 0
        %4704 = vmatprep.subr.bf16.mxu0 %v4635
        %4705 = vmatpush1.bf16.msra.mxu0 %v4632
        %4706 = vmatprep.subr.bf16.mxu0 0
        %4707 = vmatpush2.bf16.msra.mxu0 0
        %4708 = vmatprep.subr.bf16.mxu0 0
        %4709 = vmatpush2.bf16.msra.mxu0 0
        %4710 = vmatprep.subr.bf16.mxu0 0
        %4711 = vmatpush2.bf16.msra.mxu0 0
        %4712 = vmatprep.subr.bf16.mxu0 0
        %4713 = vmatpush2.bf16.msra.mxu0 0
        %4714 = vmatprep.subr.bf16.mxu0 0
        %4715 = vmatpush2.bf16.msra.mxu0 0
        %4716 = vmatprep.subr.bf16.mxu0 0
        %4717 = vmatpush2.bf16.msra.mxu0 0
        %4718 = vmatprep.subr.bf16.mxu0 0
        %4719 = vmatpush2.bf16.msra.mxu0 0
        %4720 = vmatprep.subr.bf16.mxu0 0
        %4721 = vmatpush2.bf16.msra.mxu0 0
        %4722 = vmatprep.mubr.bf16.mxu0 0
        %4723 = vmatmul.mubr.bf16.gmra.mxu0 %v4623
        %v4724 = vpop.f32.mrf.mxu0
        %v4725 = vadd.f32 0.0, %v4724
        %v4726 = vpop.f32.mrf.mxu0
        %v4727 = vadd.f32 0.0, %v4726
        %v4728 = vpop.f32.mrf.mxu0
        %v4729 = vpop.f32.mrf.mxu0
        %4730 = vdwg.mxu0
        %4731 = vmatprep.subr.bf16.mxu0 0
        %4732 = vmatpush1.bf16.msra.mxu0 0
        %4733 = vmatprep.subr.bf16.mxu0 0
        %4734 = vmatpush1.bf16.msra.mxu0 0
        %4735 = vmatprep.subr.bf16.mxu0 0
        %4736 = vmatpush1.bf16.msra.mxu0 0
        %4737 = vmatprep.subr.bf16.mxu0 0
        %4738 = vmatpush1.bf16.msra.mxu0 0
        %4739 = vmatprep.subr.bf16.mxu0 0
        %4740 = vmatpush1.bf16.msra.mxu0 0
        %4741 = vmatprep.subr.bf16.mxu0 0
        %4742 = vmatpush1.bf16.msra.mxu0 0
        %4743 = vmatprep.subr.bf16.mxu0 0
        %4744 = vmatpush1.bf16.msra.mxu0 0
        %4745 = vmatprep.subr.bf16.mxu0 %v4641
        %4746 = vmatpush1.bf16.msra.mxu0 %v4638
        %4747 = vmatprep.subr.bf16.mxu0 0
        %4748 = vmatpush2.bf16.msra.mxu0 0
        %4749 = vmatprep.subr.bf16.mxu0 0
        %4750 = vmatpush2.bf16.msra.mxu0 0
        %4751 = vmatprep.subr.bf16.mxu0 0
        %4752 = vmatpush2.bf16.msra.mxu0 0
        %4753 = vmatprep.subr.bf16.mxu0 0
        %4754 = vmatpush2.bf16.msra.mxu0 0
        %4755 = vmatprep.subr.bf16.mxu0 0
        %4756 = vmatpush2.bf16.msra.mxu0 0
        %4757 = vmatprep.subr.bf16.mxu0 0
        %4758 = vmatpush2.bf16.msra.mxu0 0
        %4759 = vmatprep.subr.bf16.mxu0 0
        %4760 = vmatpush2.bf16.msra.mxu0 0
        %4761 = vmatprep.subr.bf16.mxu0 0
        %4762 = vmatpush2.bf16.msra.mxu0 0
        %4763 = vmatprep.mubr.bf16.mxu0 0
        %4764 = vmatmul.mubr.bf16.gmra.mxu0 %v4623
        %v4765 = vpop.f32.mrf.mxu0
        %v4766 = vadd.f32 0.0, %v4765
        %v4767 = vpop.f32.mrf.mxu0
        %v4768 = vadd.f32 0.0, %v4767
        %v4769 = vpop.f32.mrf.mxu0
        %v4770 = vpop.f32.mrf.mxu0
        %4771 = vdwg.mxu0
        %4772 = vmatprep.subr.bf16.mxu0 0
        %4773 = vmatpush1.bf16.msra.mxu0 0
        %4774 = vmatprep.subr.bf16.mxu0 0
        %4775 = vmatpush1.bf16.msra.mxu0 0
        %4776 = vmatprep.subr.bf16.mxu0 0
        %4777 = vmatpush1.bf16.msra.mxu0 0
        %4778 = vmatprep.subr.bf16.mxu0 0
        %4779 = vmatpush1.bf16.msra.mxu0 0
        %4780 = vmatprep.subr.bf16.mxu0 0
        %4781 = vmatpush1.bf16.msra.mxu0 0
        %4782 = vmatprep.subr.bf16.mxu0 0
        %4783 = vmatpush1.bf16.msra.mxu0 0
        %4784 = vmatprep.subr.bf16.mxu0 0
        %4785 = vmatpush1.bf16.msra.mxu0 0
        %4786 = vmatprep.subr.bf16.mxu0 %v4647
        %4787 = vmatpush1.bf16.msra.mxu0 %v4644
        %4788 = vmatprep.subr.bf16.mxu0 0
        %4789 = vmatpush2.bf16.msra.mxu0 0
        %4790 = vmatprep.subr.bf16.mxu0 0
        %4791 = vmatpush2.bf16.msra.mxu0 0
        %4792 = vmatprep.subr.bf16.mxu0 0
        %4793 = vmatpush2.bf16.msra.mxu0 0
        %4794 = vmatprep.subr.bf16.mxu0 0
        %4795 = vmatpush2.bf16.msra.mxu0 0
        %4796 = vmatprep.subr.bf16.mxu0 0
        %4797 = vmatpush2.bf16.msra.mxu0 0
        %4798 = vmatprep.subr.bf16.mxu0 0
        %4799 = vmatpush2.bf16.msra.mxu0 0
        %4800 = vmatprep.subr.bf16.mxu0 0
        %4801 = vmatpush2.bf16.msra.mxu0 0
        %4802 = vmatprep.subr.bf16.mxu0 0
        %4803 = vmatpush2.bf16.msra.mxu0 0
        %4804 = vmatprep.mubr.bf16.mxu0 0
        %4805 = vmatmul.mubr.bf16.gmra.mxu0 %v4623
        %v4806 = vpop.f32.mrf.mxu0
        %v4807 = vadd.f32 0.0, %v4806
        %v4808 = vpop.f32.mrf.mxu0
        %v4809 = vadd.f32 0.0, %v4808
        %v4810 = vpop.f32.mrf.mxu0
        %v4811 = vpop.f32.mrf.mxu0
        %4812 = vdwg.mxu0
        %v4813 = vadd.f32 %v4585, %v4684
        %v4814 = vadd.f32 %v4586, %v4686
        %v4815 = vadd.f32 %v4587, %v4725
        %v4816 = vadd.f32 %v4588, %v4727
        %v4817 = vadd.f32 %v4589, %v4766
        %v4818 = vadd.f32 %v4590, %v4768
        %v4819 = vadd.f32 %v4591, %v4807
        %v4820 = vadd.f32 %v4592, %v4809
        %s4821 = scalar_lea.vmem %s1, 80
        %v4822 = vld [vmem:[%s4821] sm:$0xf]
        %4823 = vrot.lane.b32.xlu0 %v4358, 77
        %v4824 = vpop.permute.xlu0 %4823
        %4825 = vrot.lane.b32.xlu0 %v4359, 77
        %v4826 = vpop.permute.xlu0 %4825
        %4827 = vrot.lane.b32.xlu0 %v4360, 77
        %v4828 = vpop.permute.xlu0 %4827
        %4829 = vrot.lane.b32.xlu0 %v4361, 77
        %v4830 = vpop.permute.xlu0 %4829
        %4831 = vrot.lane.b32.xlu0 %v4362, 77
        %v4832 = vpop.permute.xlu0 %4831
        %4833 = vrot.lane.b32.xlu0 %v4363, 77
        %v4834 = vpop.permute.xlu0 %4833
        %4835 = vrot.lane.b32.xlu0 %v4364, 77
        %v4836 = vpop.permute.xlu0 %4835
        %4837 = vrot.lane.b32.xlu0 %v4365, 77
        %v4838 = vpop.permute.xlu0 %4837
        %4839 = vrot.lane.b32.xlu0 %v4366, 77
        %v4840 = vpop.permute.xlu0 %4839
        %vm4841 = vcmask 629760
        %v4842 = vsel %vm4841, %v4824, %v4826
        %v4843 = vsel %vm4841, %v4826, %v4828
        %v4844 = vsel %vm4841, %v4828, %v4830
        %v4845 = vsel %vm4841, %v4830, %v4832
        %v4846 = vsel %vm4841, %v4832, %v4834
        %v4847 = vsel %vm4841, %v4834, %v4836
        %v4848 = vsel %vm4841, %v4836, %v4838
        %v4849 = vsel %vm4841, %v4838, %v4840
        %v4851 = vsel %vm207, %v4822, 0
        %v4854 = vsel %vm211, %v4842, 0
        %v4857 = vsel %vm211, %v4843, 0
        %v4860 = vsel %vm211, %v4844, 0
        %v4863 = vsel %vm211, %v4845, 0
        %v4866 = vsel %vm211, %v4846, 0
        %v4869 = vsel %vm211, %v4847, 0
        %v4872 = vsel %vm211, %v4848, 0
        %v4875 = vsel %vm211, %v4849, 0
        %4877 = vmatprep.subr.bf16.mxu0 0
        %4878 = vmatpush1.bf16.msra.mxu0 0
        %4879 = vmatprep.subr.bf16.mxu0 0
        %4880 = vmatpush1.bf16.msra.mxu0 0
        %4881 = vmatprep.subr.bf16.mxu0 0
        %4882 = vmatpush1.bf16.msra.mxu0 0
        %4883 = vmatprep.subr.bf16.mxu0 0
        %4884 = vmatpush1.bf16.msra.mxu0 0
        %4885 = vmatprep.subr.bf16.mxu0 0
        %4886 = vmatpush1.bf16.msra.mxu0 0
        %4887 = vmatprep.subr.bf16.mxu0 0
        %4888 = vmatpush1.bf16.msra.mxu0 0
        %4889 = vmatprep.subr.bf16.mxu0 0
        %4890 = vmatpush1.bf16.msra.mxu0 0
        %4891 = vmatprep.subr.bf16.mxu0 %v4857
        %4892 = vmatpush1.bf16.msra.mxu0 %v4854
        %4893 = vmatprep.subr.bf16.mxu0 0
        %4894 = vmatpush2.bf16.msra.mxu0 0
        %4895 = vmatprep.subr.bf16.mxu0 0
        %4896 = vmatpush2.bf16.msra.mxu0 0
        %4897 = vmatprep.subr.bf16.mxu0 0
        %4898 = vmatpush2.bf16.msra.mxu0 0
        %4899 = vmatprep.subr.bf16.mxu0 0
        %4900 = vmatpush2.bf16.msra.mxu0 0
        %4901 = vmatprep.subr.bf16.mxu0 0
        %4902 = vmatpush2.bf16.msra.mxu0 0
        %4903 = vmatprep.subr.bf16.mxu0 0
        %4904 = vmatpush2.bf16.msra.mxu0 0
        %4905 = vmatprep.subr.bf16.mxu0 0
        %4906 = vmatpush2.bf16.msra.mxu0 0
        %4907 = vmatprep.subr.bf16.mxu0 0
        %4908 = vmatpush2.bf16.msra.mxu0 0
        %4909 = vmatprep.mubr.bf16.mxu0 0
        %4910 = vmatmul.mubr.bf16.gmra.mxu0 %v4851
        %v4911 = vpop.f32.mrf.mxu0
        %v4912 = vadd.f32 0.0, %v4911
        %v4913 = vpop.f32.mrf.mxu0
        %v4914 = vadd.f32 0.0, %v4913
        %v4915 = vpop.f32.mrf.mxu0
        %v4916 = vpop.f32.mrf.mxu0
        %4917 = vdwg.mxu0
        %4918 = vmatprep.subr.bf16.mxu0 0
        %4919 = vmatpush1.bf16.msra.mxu0 0
        %4920 = vmatprep.subr.bf16.mxu0 0
        %4921 = vmatpush1.bf16.msra.mxu0 0
        %4922 = vmatprep.subr.bf16.mxu0 0
        %4923 = vmatpush1.bf16.msra.mxu0 0
        %4924 = vmatprep.subr.bf16.mxu0 0
        %4925 = vmatpush1.bf16.msra.mxu0 0
        %4926 = vmatprep.subr.bf16.mxu0 0
        %4927 = vmatpush1.bf16.msra.mxu0 0
        %4928 = vmatprep.subr.bf16.mxu0 0
        %4929 = vmatpush1.bf16.msra.mxu0 0
        %4930 = vmatprep.subr.bf16.mxu0 0
        %4931 = vmatpush1.bf16.msra.mxu0 0
        %4932 = vmatprep.subr.bf16.mxu0 %v4863
        %4933 = vmatpush1.bf16.msra.mxu0 %v4860
        %4934 = vmatprep.subr.bf16.mxu0 0
        %4935 = vmatpush2.bf16.msra.mxu0 0
        %4936 = vmatprep.subr.bf16.mxu0 0
        %4937 = vmatpush2.bf16.msra.mxu0 0
        %4938 = vmatprep.subr.bf16.mxu0 0
        %4939 = vmatpush2.bf16.msra.mxu0 0
        %4940 = vmatprep.subr.bf16.mxu0 0
        %4941 = vmatpush2.bf16.msra.mxu0 0
        %4942 = vmatprep.subr.bf16.mxu0 0
        %4943 = vmatpush2.bf16.msra.mxu0 0
        %4944 = vmatprep.subr.bf16.mxu0 0
        %4945 = vmatpush2.bf16.msra.mxu0 0
        %4946 = vmatprep.subr.bf16.mxu0 0
        %4947 = vmatpush2.bf16.msra.mxu0 0
        %4948 = vmatprep.subr.bf16.mxu0 0
        %4949 = vmatpush2.bf16.msra.mxu0 0
        %4950 = vmatprep.mubr.bf16.mxu0 0
        %4951 = vmatmul.mubr.bf16.gmra.mxu0 %v4851
        %v4952 = vpop.f32.mrf.mxu0
        %v4953 = vadd.f32 0.0, %v4952
        %v4954 = vpop.f32.mrf.mxu0
        %v4955 = vadd.f32 0.0, %v4954
        %v4956 = vpop.f32.mrf.mxu0
        %v4957 = vpop.f32.mrf.mxu0
        %4958 = vdwg.mxu0
        %4959 = vmatprep.subr.bf16.mxu0 0
        %4960 = vmatpush1.bf16.msra.mxu0 0
        %4961 = vmatprep.subr.bf16.mxu0 0
        %4962 = vmatpush1.bf16.msra.mxu0 0
        %4963 = vmatprep.subr.bf16.mxu0 0
        %4964 = vmatpush1.bf16.msra.mxu0 0
        %4965 = vmatprep.subr.bf16.mxu0 0
        %4966 = vmatpush1.bf16.msra.mxu0 0
        %4967 = vmatprep.subr.bf16.mxu0 0
        %4968 = vmatpush1.bf16.msra.mxu0 0
        %4969 = vmatprep.subr.bf16.mxu0 0
        %4970 = vmatpush1.bf16.msra.mxu0 0
        %4971 = vmatprep.subr.bf16.mxu0 0
        %4972 = vmatpush1.bf16.msra.mxu0 0
        %4973 = vmatprep.subr.bf16.mxu0 %v4869
        %4974 = vmatpush1.bf16.msra.mxu0 %v4866
        %4975 = vmatprep.subr.bf16.mxu0 0
        %4976 = vmatpush2.bf16.msra.mxu0 0
        %4977 = vmatprep.subr.bf16.mxu0 0
        %4978 = vmatpush2.bf16.msra.mxu0 0
        %4979 = vmatprep.subr.bf16.mxu0 0
        %4980 = vmatpush2.bf16.msra.mxu0 0
        %4981 = vmatprep.subr.bf16.mxu0 0
        %4982 = vmatpush2.bf16.msra.mxu0 0
        %4983 = vmatprep.subr.bf16.mxu0 0
        %4984 = vmatpush2.bf16.msra.mxu0 0
        %4985 = vmatprep.subr.bf16.mxu0 0
        %4986 = vmatpush2.bf16.msra.mxu0 0
        %4987 = vmatprep.subr.bf16.mxu0 0
        %4988 = vmatpush2.bf16.msra.mxu0 0
        %4989 = vmatprep.subr.bf16.mxu0 0
        %4990 = vmatpush2.bf16.msra.mxu0 0
        %4991 = vmatprep.mubr.bf16.mxu0 0
        %4992 = vmatmul.mubr.bf16.gmra.mxu0 %v4851
        %v4993 = vpop.f32.mrf.mxu0
        %v4994 = vadd.f32 0.0, %v4993
        %v4995 = vpop.f32.mrf.mxu0
        %v4996 = vadd.f32 0.0, %v4995
        %v4997 = vpop.f32.mrf.mxu0
        %v4998 = vpop.f32.mrf.mxu0
        %4999 = vdwg.mxu0
        %5000 = vmatprep.subr.bf16.mxu0 0
        %5001 = vmatpush1.bf16.msra.mxu0 0
        %5002 = vmatprep.subr.bf16.mxu0 0
        %5003 = vmatpush1.bf16.msra.mxu0 0
        %5004 = vmatprep.subr.bf16.mxu0 0
        %5005 = vmatpush1.bf16.msra.mxu0 0
        %5006 = vmatprep.subr.bf16.mxu0 0
        %5007 = vmatpush1.bf16.msra.mxu0 0
        %5008 = vmatprep.subr.bf16.mxu0 0
        %5009 = vmatpush1.bf16.msra.mxu0 0
        %5010 = vmatprep.subr.bf16.mxu0 0
        %5011 = vmatpush1.bf16.msra.mxu0 0
        %5012 = vmatprep.subr.bf16.mxu0 0
        %5013 = vmatpush1.bf16.msra.mxu0 0
        %5014 = vmatprep.subr.bf16.mxu0 %v4875
        %5015 = vmatpush1.bf16.msra.mxu0 %v4872
        %5016 = vmatprep.subr.bf16.mxu0 0
        %5017 = vmatpush2.bf16.msra.mxu0 0
        %5018 = vmatprep.subr.bf16.mxu0 0
        %5019 = vmatpush2.bf16.msra.mxu0 0
        %5020 = vmatprep.subr.bf16.mxu0 0
        %5021 = vmatpush2.bf16.msra.mxu0 0
        %5022 = vmatprep.subr.bf16.mxu0 0
        %5023 = vmatpush2.bf16.msra.mxu0 0
        %5024 = vmatprep.subr.bf16.mxu0 0
        %5025 = vmatpush2.bf16.msra.mxu0 0
        %5026 = vmatprep.subr.bf16.mxu0 0
        %5027 = vmatpush2.bf16.msra.mxu0 0
        %5028 = vmatprep.subr.bf16.mxu0 0
        %5029 = vmatpush2.bf16.msra.mxu0 0
        %5030 = vmatprep.subr.bf16.mxu0 0
        %5031 = vmatpush2.bf16.msra.mxu0 0
        %5032 = vmatprep.mubr.bf16.mxu0 0
        %5033 = vmatmul.mubr.bf16.gmra.mxu0 %v4851
        %v5034 = vpop.f32.mrf.mxu0
        %v5035 = vadd.f32 0.0, %v5034
        %v5036 = vpop.f32.mrf.mxu0
        %v5037 = vadd.f32 0.0, %v5036
        %v5038 = vpop.f32.mrf.mxu0
        %v5039 = vpop.f32.mrf.mxu0
        %5040 = vdwg.mxu0
        %v5041 = vadd.f32 %v4813, %v4912
        %v5042 = vadd.f32 %v4814, %v4914
        %v5043 = vadd.f32 %v4815, %v4953
        %v5044 = vadd.f32 %v4816, %v4955
        %v5045 = vadd.f32 %v4817, %v4994
        %v5046 = vadd.f32 %v4818, %v4996
        %v5047 = vadd.f32 %v4819, %v5035
        %v5048 = vadd.f32 %v4820, %v5037
        %s5049 = scalar_lea.vmem %s1, 84
        %v5050 = vld [vmem:[%s5049] sm:$0xf]
        %5051 = vrot.lane.b32.xlu0 %v4358, 61
        %v5052 = vpop.permute.xlu0 %5051
        %5053 = vrot.lane.b32.xlu0 %v4359, 61
        %v5054 = vpop.permute.xlu0 %5053
        %5055 = vrot.lane.b32.xlu0 %v4360, 61
        %v5056 = vpop.permute.xlu0 %5055
        %5057 = vrot.lane.b32.xlu0 %v4361, 61
        %v5058 = vpop.permute.xlu0 %5057
        %5059 = vrot.lane.b32.xlu0 %v4362, 61
        %v5060 = vpop.permute.xlu0 %5059
        %5061 = vrot.lane.b32.xlu0 %v4363, 61
        %v5062 = vpop.permute.xlu0 %5061
        %5063 = vrot.lane.b32.xlu0 %v4364, 61
        %v5064 = vpop.permute.xlu0 %5063
        %5065 = vrot.lane.b32.xlu0 %v4365, 61
        %v5066 = vpop.permute.xlu0 %5065
        %5067 = vrot.lane.b32.xlu0 %v4366, 61
        %v5068 = vpop.permute.xlu0 %5067
        %vm5069 = vcmask 498688
        %v5070 = vsel %vm5069, %v5052, %v5054
        %v5071 = vsel %vm5069, %v5054, %v5056
        %v5072 = vsel %vm5069, %v5056, %v5058
        %v5073 = vsel %vm5069, %v5058, %v5060
        %v5074 = vsel %vm5069, %v5060, %v5062
        %v5075 = vsel %vm5069, %v5062, %v5064
        %v5076 = vsel %vm5069, %v5064, %v5066
        %v5077 = vsel %vm5069, %v5066, %v5068
        %v5079 = vsel %vm207, %v5050, 0
        %v5082 = vsel %vm211, %v5070, 0
        %v5085 = vsel %vm211, %v5071, 0
        %v5088 = vsel %vm211, %v5072, 0
        %v5091 = vsel %vm211, %v5073, 0
        %v5094 = vsel %vm211, %v5074, 0
        %v5097 = vsel %vm211, %v5075, 0
        %v5100 = vsel %vm211, %v5076, 0
        %v5103 = vsel %vm211, %v5077, 0
        %5105 = vmatprep.subr.bf16.mxu0 0
        %5106 = vmatpush1.bf16.msra.mxu0 0
        %5107 = vmatprep.subr.bf16.mxu0 0
        %5108 = vmatpush1.bf16.msra.mxu0 0
        %5109 = vmatprep.subr.bf16.mxu0 0
        %5110 = vmatpush1.bf16.msra.mxu0 0
        %5111 = vmatprep.subr.bf16.mxu0 0
        %5112 = vmatpush1.bf16.msra.mxu0 0
        %5113 = vmatprep.subr.bf16.mxu0 0
        %5114 = vmatpush1.bf16.msra.mxu0 0
        %5115 = vmatprep.subr.bf16.mxu0 0
        %5116 = vmatpush1.bf16.msra.mxu0 0
        %5117 = vmatprep.subr.bf16.mxu0 0
        %5118 = vmatpush1.bf16.msra.mxu0 0
        %5119 = vmatprep.subr.bf16.mxu0 %v5085
        %5120 = vmatpush1.bf16.msra.mxu0 %v5082
        %5121 = vmatprep.subr.bf16.mxu0 0
        %5122 = vmatpush2.bf16.msra.mxu0 0
        %5123 = vmatprep.subr.bf16.mxu0 0
        %5124 = vmatpush2.bf16.msra.mxu0 0
        %5125 = vmatprep.subr.bf16.mxu0 0
        %5126 = vmatpush2.bf16.msra.mxu0 0
        %5127 = vmatprep.subr.bf16.mxu0 0
        %5128 = vmatpush2.bf16.msra.mxu0 0
        %5129 = vmatprep.subr.bf16.mxu0 0
        %5130 = vmatpush2.bf16.msra.mxu0 0
        %5131 = vmatprep.subr.bf16.mxu0 0
        %5132 = vmatpush2.bf16.msra.mxu0 0
        %5133 = vmatprep.subr.bf16.mxu0 0
        %5134 = vmatpush2.bf16.msra.mxu0 0
        %5135 = vmatprep.subr.bf16.mxu0 0
        %5136 = vmatpush2.bf16.msra.mxu0 0
        %5137 = vmatprep.mubr.bf16.mxu0 0
        %5138 = vmatmul.mubr.bf16.gmra.mxu0 %v5079
        %v5139 = vpop.f32.mrf.mxu0
        %v5140 = vadd.f32 0.0, %v5139
        %v5141 = vpop.f32.mrf.mxu0
        %v5142 = vadd.f32 0.0, %v5141
        %v5143 = vpop.f32.mrf.mxu0
        %v5144 = vpop.f32.mrf.mxu0
        %5145 = vdwg.mxu0
        %5146 = vmatprep.subr.bf16.mxu0 0
        %5147 = vmatpush1.bf16.msra.mxu0 0
        %5148 = vmatprep.subr.bf16.mxu0 0
        %5149 = vmatpush1.bf16.msra.mxu0 0
        %5150 = vmatprep.subr.bf16.mxu0 0
        %5151 = vmatpush1.bf16.msra.mxu0 0
        %5152 = vmatprep.subr.bf16.mxu0 0
        %5153 = vmatpush1.bf16.msra.mxu0 0
        %5154 = vmatprep.subr.bf16.mxu0 0
        %5155 = vmatpush1.bf16.msra.mxu0 0
        %5156 = vmatprep.subr.bf16.mxu0 0
        %5157 = vmatpush1.bf16.msra.mxu0 0
        %5158 = vmatprep.subr.bf16.mxu0 0
        %5159 = vmatpush1.bf16.msra.mxu0 0
        %5160 = vmatprep.subr.bf16.mxu0 %v5091
        %5161 = vmatpush1.bf16.msra.mxu0 %v5088
        %5162 = vmatprep.subr.bf16.mxu0 0
        %5163 = vmatpush2.bf16.msra.mxu0 0
        %5164 = vmatprep.subr.bf16.mxu0 0
        %5165 = vmatpush2.bf16.msra.mxu0 0
        %5166 = vmatprep.subr.bf16.mxu0 0
        %5167 = vmatpush2.bf16.msra.mxu0 0
        %5168 = vmatprep.subr.bf16.mxu0 0
        %5169 = vmatpush2.bf16.msra.mxu0 0
        %5170 = vmatprep.subr.bf16.mxu0 0
        %5171 = vmatpush2.bf16.msra.mxu0 0
        %5172 = vmatprep.subr.bf16.mxu0 0
        %5173 = vmatpush2.bf16.msra.mxu0 0
        %5174 = vmatprep.subr.bf16.mxu0 0
        %5175 = vmatpush2.bf16.msra.mxu0 0
        %5176 = vmatprep.subr.bf16.mxu0 0
        %5177 = vmatpush2.bf16.msra.mxu0 0
        %5178 = vmatprep.mubr.bf16.mxu0 0
        %5179 = vmatmul.mubr.bf16.gmra.mxu0 %v5079
        %v5180 = vpop.f32.mrf.mxu0
        %v5181 = vadd.f32 0.0, %v5180
        %v5182 = vpop.f32.mrf.mxu0
        %v5183 = vadd.f32 0.0, %v5182
        %v5184 = vpop.f32.mrf.mxu0
        %v5185 = vpop.f32.mrf.mxu0
        %5186 = vdwg.mxu0
        %5187 = vmatprep.subr.bf16.mxu0 0
        %5188 = vmatpush1.bf16.msra.mxu0 0
        %5189 = vmatprep.subr.bf16.mxu0 0
        %5190 = vmatpush1.bf16.msra.mxu0 0
        %5191 = vmatprep.subr.bf16.mxu0 0
        %5192 = vmatpush1.bf16.msra.mxu0 0
        %5193 = vmatprep.subr.bf16.mxu0 0
        %5194 = vmatpush1.bf16.msra.mxu0 0
        %5195 = vmatprep.subr.bf16.mxu0 0
        %5196 = vmatpush1.bf16.msra.mxu0 0
        %5197 = vmatprep.subr.bf16.mxu0 0
        %5198 = vmatpush1.bf16.msra.mxu0 0
        %5199 = vmatprep.subr.bf16.mxu0 0
        %5200 = vmatpush1.bf16.msra.mxu0 0
        %5201 = vmatprep.subr.bf16.mxu0 %v5097
        %5202 = vmatpush1.bf16.msra.mxu0 %v5094
        %5203 = vmatprep.subr.bf16.mxu0 0
        %5204 = vmatpush2.bf16.msra.mxu0 0
        %5205 = vmatprep.subr.bf16.mxu0 0
        %5206 = vmatpush2.bf16.msra.mxu0 0
        %5207 = vmatprep.subr.bf16.mxu0 0
        %5208 = vmatpush2.bf16.msra.mxu0 0
        %5209 = vmatprep.subr.bf16.mxu0 0
        %5210 = vmatpush2.bf16.msra.mxu0 0
        %5211 = vmatprep.subr.bf16.mxu0 0
        %5212 = vmatpush2.bf16.msra.mxu0 0
        %5213 = vmatprep.subr.bf16.mxu0 0
        %5214 = vmatpush2.bf16.msra.mxu0 0
        %5215 = vmatprep.subr.bf16.mxu0 0
        %5216 = vmatpush2.bf16.msra.mxu0 0
        %5217 = vmatprep.subr.bf16.mxu0 0
        %5218 = vmatpush2.bf16.msra.mxu0 0
        %5219 = vmatprep.mubr.bf16.mxu0 0
        %5220 = vmatmul.mubr.bf16.gmra.mxu0 %v5079
        %v5221 = vpop.f32.mrf.mxu0
        %v5222 = vadd.f32 0.0, %v5221
        %v5223 = vpop.f32.mrf.mxu0
        %v5224 = vadd.f32 0.0, %v5223
        %v5225 = vpop.f32.mrf.mxu0
        %v5226 = vpop.f32.mrf.mxu0
        %5227 = vdwg.mxu0
        %5228 = vmatprep.subr.bf16.mxu0 0
        %5229 = vmatpush1.bf16.msra.mxu0 0
        %5230 = vmatprep.subr.bf16.mxu0 0
        %5231 = vmatpush1.bf16.msra.mxu0 0
        %5232 = vmatprep.subr.bf16.mxu0 0
        %5233 = vmatpush1.bf16.msra.mxu0 0
        %5234 = vmatprep.subr.bf16.mxu0 0
        %5235 = vmatpush1.bf16.msra.mxu0 0
        %5236 = vmatprep.subr.bf16.mxu0 0
        %5237 = vmatpush1.bf16.msra.mxu0 0
        %5238 = vmatprep.subr.bf16.mxu0 0
        %5239 = vmatpush1.bf16.msra.mxu0 0
        %5240 = vmatprep.subr.bf16.mxu0 0
        %5241 = vmatpush1.bf16.msra.mxu0 0
        %5242 = vmatprep.subr.bf16.mxu0 %v5103
        %5243 = vmatpush1.bf16.msra.mxu0 %v5100
        %5244 = vmatprep.subr.bf16.mxu0 0
        %5245 = vmatpush2.bf16.msra.mxu0 0
        %5246 = vmatprep.subr.bf16.mxu0 0
        %5247 = vmatpush2.bf16.msra.mxu0 0
        %5248 = vmatprep.subr.bf16.mxu0 0
        %5249 = vmatpush2.bf16.msra.mxu0 0
        %5250 = vmatprep.subr.bf16.mxu0 0
        %5251 = vmatpush2.bf16.msra.mxu0 0
        %5252 = vmatprep.subr.bf16.mxu0 0
        %5253 = vmatpush2.bf16.msra.mxu0 0
        %5254 = vmatprep.subr.bf16.mxu0 0
        %5255 = vmatpush2.bf16.msra.mxu0 0
        %5256 = vmatprep.subr.bf16.mxu0 0
        %5257 = vmatpush2.bf16.msra.mxu0 0
        %5258 = vmatprep.subr.bf16.mxu0 0
        %5259 = vmatpush2.bf16.msra.mxu0 0
        %5260 = vmatprep.mubr.bf16.mxu0 0
        %5261 = vmatmul.mubr.bf16.gmra.mxu0 %v5079
        %v5262 = vpop.f32.mrf.mxu0
        %v5263 = vadd.f32 0.0, %v5262
        %v5264 = vpop.f32.mrf.mxu0
        %v5265 = vadd.f32 0.0, %v5264
        %v5266 = vpop.f32.mrf.mxu0
        %v5267 = vpop.f32.mrf.mxu0
        %5268 = vdwg.mxu0
        %v5269 = vadd.f32 %v5041, %v5140
        %v5270 = vadd.f32 %v5042, %v5142
        %v5271 = vadd.f32 %v5043, %v5181
        %v5272 = vadd.f32 %v5044, %v5183
        %v5273 = vadd.f32 %v5045, %v5222
        %v5274 = vadd.f32 %v5046, %v5224
        %v5275 = vadd.f32 %v5047, %v5263
        %v5276 = vadd.f32 %v5048, %v5265
        %s5277 = scalar_lea.vmem %s1, 88
        %v5278 = vld [vmem:[%s5277] sm:$0xf]
        %5279 = vrot.lane.b32.xlu0 %v4358, 60
        %v5280 = vpop.permute.xlu0 %5279
        %5281 = vrot.lane.b32.xlu0 %v4359, 60
        %v5282 = vpop.permute.xlu0 %5281
        %5283 = vrot.lane.b32.xlu0 %v4360, 60
        %v5284 = vpop.permute.xlu0 %5283
        %5285 = vrot.lane.b32.xlu0 %v4361, 60
        %v5286 = vpop.permute.xlu0 %5285
        %5287 = vrot.lane.b32.xlu0 %v4362, 60
        %v5288 = vpop.permute.xlu0 %5287
        %5289 = vrot.lane.b32.xlu0 %v4363, 60
        %v5290 = vpop.permute.xlu0 %5289
        %5291 = vrot.lane.b32.xlu0 %v4364, 60
        %v5292 = vpop.permute.xlu0 %5291
        %5293 = vrot.lane.b32.xlu0 %v4365, 60
        %v5294 = vpop.permute.xlu0 %5293
        %5295 = vrot.lane.b32.xlu0 %v4366, 60
        %v5296 = vpop.permute.xlu0 %5295
        %vm5297 = vcmask 490496
        %v5298 = vsel %vm5297, %v5280, %v5282
        %v5299 = vsel %vm5297, %v5282, %v5284
        %v5300 = vsel %vm5297, %v5284, %v5286
        %v5301 = vsel %vm5297, %v5286, %v5288
        %v5302 = vsel %vm5297, %v5288, %v5290
        %v5303 = vsel %vm5297, %v5290, %v5292
        %v5304 = vsel %vm5297, %v5292, %v5294
        %v5305 = vsel %vm5297, %v5294, %v5296
        %v5307 = vsel %vm207, %v5278, 0
        %v5310 = vsel %vm211, %v5298, 0
        %v5313 = vsel %vm211, %v5299, 0
        %v5316 = vsel %vm211, %v5300, 0
        %v5319 = vsel %vm211, %v5301, 0
        %v5322 = vsel %vm211, %v5302, 0
        %v5325 = vsel %vm211, %v5303, 0
        %v5328 = vsel %vm211, %v5304, 0
        %v5331 = vsel %vm211, %v5305, 0
        %5333 = vmatprep.subr.bf16.mxu0 0
        %5334 = vmatpush1.bf16.msra.mxu0 0
        %5335 = vmatprep.subr.bf16.mxu0 0
        %5336 = vmatpush1.bf16.msra.mxu0 0
        %5337 = vmatprep.subr.bf16.mxu0 0
        %5338 = vmatpush1.bf16.msra.mxu0 0
        %5339 = vmatprep.subr.bf16.mxu0 0
        %5340 = vmatpush1.bf16.msra.mxu0 0
        %5341 = vmatprep.subr.bf16.mxu0 0
        %5342 = vmatpush1.bf16.msra.mxu0 0
        %5343 = vmatprep.subr.bf16.mxu0 0
        %5344 = vmatpush1.bf16.msra.mxu0 0
        %5345 = vmatprep.subr.bf16.mxu0 0
        %5346 = vmatpush1.bf16.msra.mxu0 0
        %5347 = vmatprep.subr.bf16.mxu0 %v5313
        %5348 = vmatpush1.bf16.msra.mxu0 %v5310
        %5349 = vmatprep.subr.bf16.mxu0 0
        %5350 = vmatpush2.bf16.msra.mxu0 0
        %5351 = vmatprep.subr.bf16.mxu0 0
        %5352 = vmatpush2.bf16.msra.mxu0 0
        %5353 = vmatprep.subr.bf16.mxu0 0
        %5354 = vmatpush2.bf16.msra.mxu0 0
        %5355 = vmatprep.subr.bf16.mxu0 0
        %5356 = vmatpush2.bf16.msra.mxu0 0
        %5357 = vmatprep.subr.bf16.mxu0 0
        %5358 = vmatpush2.bf16.msra.mxu0 0
        %5359 = vmatprep.subr.bf16.mxu0 0
        %5360 = vmatpush2.bf16.msra.mxu0 0
        %5361 = vmatprep.subr.bf16.mxu0 0
        %5362 = vmatpush2.bf16.msra.mxu0 0
        %5363 = vmatprep.subr.bf16.mxu0 0
        %5364 = vmatpush2.bf16.msra.mxu0 0
        %5365 = vmatprep.mubr.bf16.mxu0 0
        %5366 = vmatmul.mubr.bf16.gmra.mxu0 %v5307
        %v5367 = vpop.f32.mrf.mxu0
        %v5368 = vadd.f32 0.0, %v5367
        %v5369 = vpop.f32.mrf.mxu0
        %v5370 = vadd.f32 0.0, %v5369
        %v5371 = vpop.f32.mrf.mxu0
        %v5372 = vpop.f32.mrf.mxu0
        %5373 = vdwg.mxu0
        %5374 = vmatprep.subr.bf16.mxu0 0
        %5375 = vmatpush1.bf16.msra.mxu0 0
        %5376 = vmatprep.subr.bf16.mxu0 0
        %5377 = vmatpush1.bf16.msra.mxu0 0
        %5378 = vmatprep.subr.bf16.mxu0 0
        %5379 = vmatpush1.bf16.msra.mxu0 0
        %5380 = vmatprep.subr.bf16.mxu0 0
        %5381 = vmatpush1.bf16.msra.mxu0 0
        %5382 = vmatprep.subr.bf16.mxu0 0
        %5383 = vmatpush1.bf16.msra.mxu0 0
        %5384 = vmatprep.subr.bf16.mxu0 0
        %5385 = vmatpush1.bf16.msra.mxu0 0
        %5386 = vmatprep.subr.bf16.mxu0 0
        %5387 = vmatpush1.bf16.msra.mxu0 0
        %5388 = vmatprep.subr.bf16.mxu0 %v5319
        %5389 = vmatpush1.bf16.msra.mxu0 %v5316
        %5390 = vmatprep.subr.bf16.mxu0 0
        %5391 = vmatpush2.bf16.msra.mxu0 0
        %5392 = vmatprep.subr.bf16.mxu0 0
        %5393 = vmatpush2.bf16.msra.mxu0 0
        %5394 = vmatprep.subr.bf16.mxu0 0
        %5395 = vmatpush2.bf16.msra.mxu0 0
        %5396 = vmatprep.subr.bf16.mxu0 0
        %5397 = vmatpush2.bf16.msra.mxu0 0
        %5398 = vmatprep.subr.bf16.mxu0 0
        %5399 = vmatpush2.bf16.msra.mxu0 0
        %5400 = vmatprep.subr.bf16.mxu0 0
        %5401 = vmatpush2.bf16.msra.mxu0 0
        %5402 = vmatprep.subr.bf16.mxu0 0
        %5403 = vmatpush2.bf16.msra.mxu0 0
        %5404 = vmatprep.subr.bf16.mxu0 0
        %5405 = vmatpush2.bf16.msra.mxu0 0
        %5406 = vmatprep.mubr.bf16.mxu0 0
        %5407 = vmatmul.mubr.bf16.gmra.mxu0 %v5307
        %v5408 = vpop.f32.mrf.mxu0
        %v5409 = vadd.f32 0.0, %v5408
        %v5410 = vpop.f32.mrf.mxu0
        %v5411 = vadd.f32 0.0, %v5410
        %v5412 = vpop.f32.mrf.mxu0
        %v5413 = vpop.f32.mrf.mxu0
        %5414 = vdwg.mxu0
        %5415 = vmatprep.subr.bf16.mxu0 0
        %5416 = vmatpush1.bf16.msra.mxu0 0
        %5417 = vmatprep.subr.bf16.mxu0 0
        %5418 = vmatpush1.bf16.msra.mxu0 0
        %5419 = vmatprep.subr.bf16.mxu0 0
        %5420 = vmatpush1.bf16.msra.mxu0 0
        %5421 = vmatprep.subr.bf16.mxu0 0
        %5422 = vmatpush1.bf16.msra.mxu0 0
        %5423 = vmatprep.subr.bf16.mxu0 0
        %5424 = vmatpush1.bf16.msra.mxu0 0
        %5425 = vmatprep.subr.bf16.mxu0 0
        %5426 = vmatpush1.bf16.msra.mxu0 0
        %5427 = vmatprep.subr.bf16.mxu0 0
        %5428 = vmatpush1.bf16.msra.mxu0 0
        %5429 = vmatprep.subr.bf16.mxu0 %v5325
        %5430 = vmatpush1.bf16.msra.mxu0 %v5322
        %5431 = vmatprep.subr.bf16.mxu0 0
        %5432 = vmatpush2.bf16.msra.mxu0 0
        %5433 = vmatprep.subr.bf16.mxu0 0
        %5434 = vmatpush2.bf16.msra.mxu0 0
        %5435 = vmatprep.subr.bf16.mxu0 0
        %5436 = vmatpush2.bf16.msra.mxu0 0
        %5437 = vmatprep.subr.bf16.mxu0 0
        %5438 = vmatpush2.bf16.msra.mxu0 0
        %5439 = vmatprep.subr.bf16.mxu0 0
        %5440 = vmatpush2.bf16.msra.mxu0 0
        %5441 = vmatprep.subr.bf16.mxu0 0
        %5442 = vmatpush2.bf16.msra.mxu0 0
        %5443 = vmatprep.subr.bf16.mxu0 0
        %5444 = vmatpush2.bf16.msra.mxu0 0
        %5445 = vmatprep.subr.bf16.mxu0 0
        %5446 = vmatpush2.bf16.msra.mxu0 0
        %5447 = vmatprep.mubr.bf16.mxu0 0
        %5448 = vmatmul.mubr.bf16.gmra.mxu0 %v5307
        %v5449 = vpop.f32.mrf.mxu0
        %v5450 = vadd.f32 0.0, %v5449
        %v5451 = vpop.f32.mrf.mxu0
        %v5452 = vadd.f32 0.0, %v5451
        %v5453 = vpop.f32.mrf.mxu0
        %v5454 = vpop.f32.mrf.mxu0
        %5455 = vdwg.mxu0
        %5456 = vmatprep.subr.bf16.mxu0 0
        %5457 = vmatpush1.bf16.msra.mxu0 0
        %5458 = vmatprep.subr.bf16.mxu0 0
        %5459 = vmatpush1.bf16.msra.mxu0 0
        %5460 = vmatprep.subr.bf16.mxu0 0
        %5461 = vmatpush1.bf16.msra.mxu0 0
        %5462 = vmatprep.subr.bf16.mxu0 0
        %5463 = vmatpush1.bf16.msra.mxu0 0
        %5464 = vmatprep.subr.bf16.mxu0 0
        %5465 = vmatpush1.bf16.msra.mxu0 0
        %5466 = vmatprep.subr.bf16.mxu0 0
        %5467 = vmatpush1.bf16.msra.mxu0 0
        %5468 = vmatprep.subr.bf16.mxu0 0
        %5469 = vmatpush1.bf16.msra.mxu0 0
        %5470 = vmatprep.subr.bf16.mxu0 %v5331
        %5471 = vmatpush1.bf16.msra.mxu0 %v5328
        %5472 = vmatprep.subr.bf16.mxu0 0
        %5473 = vmatpush2.bf16.msra.mxu0 0
        %5474 = vmatprep.subr.bf16.mxu0 0
        %5475 = vmatpush2.bf16.msra.mxu0 0
        %5476 = vmatprep.subr.bf16.mxu0 0
        %5477 = vmatpush2.bf16.msra.mxu0 0
        %5478 = vmatprep.subr.bf16.mxu0 0
        %5479 = vmatpush2.bf16.msra.mxu0 0
        %5480 = vmatprep.subr.bf16.mxu0 0
        %5481 = vmatpush2.bf16.msra.mxu0 0
        %5482 = vmatprep.subr.bf16.mxu0 0
        %5483 = vmatpush2.bf16.msra.mxu0 0
        %5484 = vmatprep.subr.bf16.mxu0 0
        %5485 = vmatpush2.bf16.msra.mxu0 0
        %5486 = vmatprep.subr.bf16.mxu0 0
        %5487 = vmatpush2.bf16.msra.mxu0 0
        %5488 = vmatprep.mubr.bf16.mxu0 0
        %5489 = vmatmul.mubr.bf16.gmra.mxu0 %v5307
        %v5490 = vpop.f32.mrf.mxu0
        %v5491 = vadd.f32 0.0, %v5490
        %v5492 = vpop.f32.mrf.mxu0
        %v5493 = vadd.f32 0.0, %v5492
        %v5494 = vpop.f32.mrf.mxu0
        %v5495 = vpop.f32.mrf.mxu0
        %5496 = vdwg.mxu0
        %v5497 = vadd.f32 %v5269, %v5368
        %v5498 = vadd.f32 %v5270, %v5370
        %v5499 = vadd.f32 %v5271, %v5409
        %v5500 = vadd.f32 %v5272, %v5411
        %v5501 = vadd.f32 %v5273, %v5450
        %v5502 = vadd.f32 %v5274, %v5452
        %v5503 = vadd.f32 %v5275, %v5491
        %v5504 = vadd.f32 %v5276, %v5493
        %s5505 = scalar_lea.vmem %s1, 92
        %v5506 = vld [vmem:[%s5505] sm:$0xf]
        %5507 = vrot.lane.b32.xlu0 %v4358, 59
        %v5508 = vpop.permute.xlu0 %5507
        %5509 = vrot.lane.b32.xlu0 %v4359, 59
        %v5510 = vpop.permute.xlu0 %5509
        %5511 = vrot.lane.b32.xlu0 %v4360, 59
        %v5512 = vpop.permute.xlu0 %5511
        %5513 = vrot.lane.b32.xlu0 %v4361, 59
        %v5514 = vpop.permute.xlu0 %5513
        %5515 = vrot.lane.b32.xlu0 %v4362, 59
        %v5516 = vpop.permute.xlu0 %5515
        %5517 = vrot.lane.b32.xlu0 %v4363, 59
        %v5518 = vpop.permute.xlu0 %5517
        %5519 = vrot.lane.b32.xlu0 %v4364, 59
        %v5520 = vpop.permute.xlu0 %5519
        %5521 = vrot.lane.b32.xlu0 %v4365, 59
        %v5522 = vpop.permute.xlu0 %5521
        %5523 = vrot.lane.b32.xlu0 %v4366, 59
        %v5524 = vpop.permute.xlu0 %5523
        %vm5525 = vcmask 482304
        %v5526 = vsel %vm5525, %v5508, %v5510
        %v5527 = vsel %vm5525, %v5510, %v5512
        %v5528 = vsel %vm5525, %v5512, %v5514
        %v5529 = vsel %vm5525, %v5514, %v5516
        %v5530 = vsel %vm5525, %v5516, %v5518
        %v5531 = vsel %vm5525, %v5518, %v5520
        %v5532 = vsel %vm5525, %v5520, %v5522
        %v5533 = vsel %vm5525, %v5522, %v5524
        %v5535 = vsel %vm207, %v5506, 0
        %v5538 = vsel %vm211, %v5526, 0
        %v5541 = vsel %vm211, %v5527, 0
        %v5544 = vsel %vm211, %v5528, 0
        %v5547 = vsel %vm211, %v5529, 0
        %v5550 = vsel %vm211, %v5530, 0
        %v5553 = vsel %vm211, %v5531, 0
        %v5556 = vsel %vm211, %v5532, 0
        %v5559 = vsel %vm211, %v5533, 0
        %5561 = vmatprep.subr.bf16.mxu0 0
        %5562 = vmatpush1.bf16.msra.mxu0 0
        %5563 = vmatprep.subr.bf16.mxu0 0
        %5564 = vmatpush1.bf16.msra.mxu0 0
        %5565 = vmatprep.subr.bf16.mxu0 0
        %5566 = vmatpush1.bf16.msra.mxu0 0
        %5567 = vmatprep.subr.bf16.mxu0 0
        %5568 = vmatpush1.bf16.msra.mxu0 0
        %5569 = vmatprep.subr.bf16.mxu0 0
        %5570 = vmatpush1.bf16.msra.mxu0 0
        %5571 = vmatprep.subr.bf16.mxu0 0
        %5572 = vmatpush1.bf16.msra.mxu0 0
        %5573 = vmatprep.subr.bf16.mxu0 0
        %5574 = vmatpush1.bf16.msra.mxu0 0
        %5575 = vmatprep.subr.bf16.mxu0 %v5541
        %5576 = vmatpush1.bf16.msra.mxu0 %v5538
        %5577 = vmatprep.subr.bf16.mxu0 0
        %5578 = vmatpush2.bf16.msra.mxu0 0
        %5579 = vmatprep.subr.bf16.mxu0 0
        %5580 = vmatpush2.bf16.msra.mxu0 0
        %5581 = vmatprep.subr.bf16.mxu0 0
        %5582 = vmatpush2.bf16.msra.mxu0 0
        %5583 = vmatprep.subr.bf16.mxu0 0
        %5584 = vmatpush2.bf16.msra.mxu0 0
        %5585 = vmatprep.subr.bf16.mxu0 0
        %5586 = vmatpush2.bf16.msra.mxu0 0
        %5587 = vmatprep.subr.bf16.mxu0 0
        %5588 = vmatpush2.bf16.msra.mxu0 0
        %5589 = vmatprep.subr.bf16.mxu0 0
        %5590 = vmatpush2.bf16.msra.mxu0 0
        %5591 = vmatprep.subr.bf16.mxu0 0
        %5592 = vmatpush2.bf16.msra.mxu0 0
        %5593 = vmatprep.mubr.bf16.mxu0 0
        %5594 = vmatmul.mubr.bf16.gmra.mxu0 %v5535
        %v5595 = vpop.f32.mrf.mxu0
        %v5596 = vadd.f32 0.0, %v5595
        %v5597 = vpop.f32.mrf.mxu0
        %v5598 = vadd.f32 0.0, %v5597
        %v5599 = vpop.f32.mrf.mxu0
        %v5600 = vpop.f32.mrf.mxu0
        %5601 = vdwg.mxu0
        %5602 = vmatprep.subr.bf16.mxu0 0
        %5603 = vmatpush1.bf16.msra.mxu0 0
        %5604 = vmatprep.subr.bf16.mxu0 0
        %5605 = vmatpush1.bf16.msra.mxu0 0
        %5606 = vmatprep.subr.bf16.mxu0 0
        %5607 = vmatpush1.bf16.msra.mxu0 0
        %5608 = vmatprep.subr.bf16.mxu0 0
        %5609 = vmatpush1.bf16.msra.mxu0 0
        %5610 = vmatprep.subr.bf16.mxu0 0
        %5611 = vmatpush1.bf16.msra.mxu0 0
        %5612 = vmatprep.subr.bf16.mxu0 0
        %5613 = vmatpush1.bf16.msra.mxu0 0
        %5614 = vmatprep.subr.bf16.mxu0 0
        %5615 = vmatpush1.bf16.msra.mxu0 0
        %5616 = vmatprep.subr.bf16.mxu0 %v5547
        %5617 = vmatpush1.bf16.msra.mxu0 %v5544
        %5618 = vmatprep.subr.bf16.mxu0 0
        %5619 = vmatpush2.bf16.msra.mxu0 0
        %5620 = vmatprep.subr.bf16.mxu0 0
        %5621 = vmatpush2.bf16.msra.mxu0 0
        %5622 = vmatprep.subr.bf16.mxu0 0
        %5623 = vmatpush2.bf16.msra.mxu0 0
        %5624 = vmatprep.subr.bf16.mxu0 0
        %5625 = vmatpush2.bf16.msra.mxu0 0
        %5626 = vmatprep.subr.bf16.mxu0 0
        %5627 = vmatpush2.bf16.msra.mxu0 0
        %5628 = vmatprep.subr.bf16.mxu0 0
        %5629 = vmatpush2.bf16.msra.mxu0 0
        %5630 = vmatprep.subr.bf16.mxu0 0
        %5631 = vmatpush2.bf16.msra.mxu0 0
        %5632 = vmatprep.subr.bf16.mxu0 0
        %5633 = vmatpush2.bf16.msra.mxu0 0
        %5634 = vmatprep.mubr.bf16.mxu0 0
        %5635 = vmatmul.mubr.bf16.gmra.mxu0 %v5535
        %v5636 = vpop.f32.mrf.mxu0
        %v5637 = vadd.f32 0.0, %v5636
        %v5638 = vpop.f32.mrf.mxu0
        %v5639 = vadd.f32 0.0, %v5638
        %v5640 = vpop.f32.mrf.mxu0
        %v5641 = vpop.f32.mrf.mxu0
        %5642 = vdwg.mxu0
        %5643 = vmatprep.subr.bf16.mxu0 0
        %5644 = vmatpush1.bf16.msra.mxu0 0
        %5645 = vmatprep.subr.bf16.mxu0 0
        %5646 = vmatpush1.bf16.msra.mxu0 0
        %5647 = vmatprep.subr.bf16.mxu0 0
        %5648 = vmatpush1.bf16.msra.mxu0 0
        %5649 = vmatprep.subr.bf16.mxu0 0
        %5650 = vmatpush1.bf16.msra.mxu0 0
        %5651 = vmatprep.subr.bf16.mxu0 0
        %5652 = vmatpush1.bf16.msra.mxu0 0
        %5653 = vmatprep.subr.bf16.mxu0 0
        %5654 = vmatpush1.bf16.msra.mxu0 0
        %5655 = vmatprep.subr.bf16.mxu0 0
        %5656 = vmatpush1.bf16.msra.mxu0 0
        %5657 = vmatprep.subr.bf16.mxu0 %v5553
        %5658 = vmatpush1.bf16.msra.mxu0 %v5550
        %5659 = vmatprep.subr.bf16.mxu0 0
        %5660 = vmatpush2.bf16.msra.mxu0 0
        %5661 = vmatprep.subr.bf16.mxu0 0
        %5662 = vmatpush2.bf16.msra.mxu0 0
        %5663 = vmatprep.subr.bf16.mxu0 0
        %5664 = vmatpush2.bf16.msra.mxu0 0
        %5665 = vmatprep.subr.bf16.mxu0 0
        %5666 = vmatpush2.bf16.msra.mxu0 0
        %5667 = vmatprep.subr.bf16.mxu0 0
        %5668 = vmatpush2.bf16.msra.mxu0 0
        %5669 = vmatprep.subr.bf16.mxu0 0
        %5670 = vmatpush2.bf16.msra.mxu0 0
        %5671 = vmatprep.subr.bf16.mxu0 0
        %5672 = vmatpush2.bf16.msra.mxu0 0
        %5673 = vmatprep.subr.bf16.mxu0 0
        %5674 = vmatpush2.bf16.msra.mxu0 0
        %5675 = vmatprep.mubr.bf16.mxu0 0
        %5676 = vmatmul.mubr.bf16.gmra.mxu0 %v5535
        %v5677 = vpop.f32.mrf.mxu0
        %v5678 = vadd.f32 0.0, %v5677
        %v5679 = vpop.f32.mrf.mxu0
        %v5680 = vadd.f32 0.0, %v5679
        %v5681 = vpop.f32.mrf.mxu0
        %v5682 = vpop.f32.mrf.mxu0
        %5683 = vdwg.mxu0
        %5684 = vmatprep.subr.bf16.mxu0 0
        %5685 = vmatpush1.bf16.msra.mxu0 0
        %5686 = vmatprep.subr.bf16.mxu0 0
        %5687 = vmatpush1.bf16.msra.mxu0 0
        %5688 = vmatprep.subr.bf16.mxu0 0
        %5689 = vmatpush1.bf16.msra.mxu0 0
        %5690 = vmatprep.subr.bf16.mxu0 0
        %5691 = vmatpush1.bf16.msra.mxu0 0
        %5692 = vmatprep.subr.bf16.mxu0 0
        %5693 = vmatpush1.bf16.msra.mxu0 0
        %5694 = vmatprep.subr.bf16.mxu0 0
        %5695 = vmatpush1.bf16.msra.mxu0 0
        %5696 = vmatprep.subr.bf16.mxu0 0
        %5697 = vmatpush1.bf16.msra.mxu0 0
        %5698 = vmatprep.subr.bf16.mxu0 %v5559
        %5699 = vmatpush1.bf16.msra.mxu0 %v5556
        %5700 = vmatprep.subr.bf16.mxu0 0
        %5701 = vmatpush2.bf16.msra.mxu0 0
        %5702 = vmatprep.subr.bf16.mxu0 0
        %5703 = vmatpush2.bf16.msra.mxu0 0
        %5704 = vmatprep.subr.bf16.mxu0 0
        %5705 = vmatpush2.bf16.msra.mxu0 0
        %5706 = vmatprep.subr.bf16.mxu0 0
        %5707 = vmatpush2.bf16.msra.mxu0 0
        %5708 = vmatprep.subr.bf16.mxu0 0
        %5709 = vmatpush2.bf16.msra.mxu0 0
        %5710 = vmatprep.subr.bf16.mxu0 0
        %5711 = vmatpush2.bf16.msra.mxu0 0
        %5712 = vmatprep.subr.bf16.mxu0 0
        %5713 = vmatpush2.bf16.msra.mxu0 0
        %5714 = vmatprep.subr.bf16.mxu0 0
        %5715 = vmatpush2.bf16.msra.mxu0 0
        %5716 = vmatprep.mubr.bf16.mxu0 0
        %5717 = vmatmul.mubr.bf16.gmra.mxu0 %v5535
        %v5718 = vpop.f32.mrf.mxu0
        %v5719 = vadd.f32 0.0, %v5718
        %v5720 = vpop.f32.mrf.mxu0
        %v5721 = vadd.f32 0.0, %v5720
        %v5722 = vpop.f32.mrf.mxu0
        %v5723 = vpop.f32.mrf.mxu0
        %5724 = vdwg.mxu0
        %v5725 = vadd.f32 %v5497, %v5596
        %v5726 = vadd.f32 %v5498, %v5598
        %v5727 = vadd.f32 %v5499, %v5637
        %v5728 = vadd.f32 %v5500, %v5639
        %v5729 = vadd.f32 %v5501, %v5678
        %v5730 = vadd.f32 %v5502, %v5680
        %v5731 = vadd.f32 %v5503, %v5719
        %v5732 = vadd.f32 %v5504, %v5721
        %s5733 = scalar_lea.vmem %s1, 96
        %v5734 = vld [vmem:[%s5733] sm:$0xf]
        %5735 = vrot.lane.b32.xlu0 %v4358, 43
        %v5736 = vpop.permute.xlu0 %5735
        %5737 = vrot.lane.b32.xlu0 %v4359, 43
        %v5738 = vpop.permute.xlu0 %5737
        %5739 = vrot.lane.b32.xlu0 %v4360, 43
        %v5740 = vpop.permute.xlu0 %5739
        %5741 = vrot.lane.b32.xlu0 %v4361, 43
        %v5742 = vpop.permute.xlu0 %5741
        %5743 = vrot.lane.b32.xlu0 %v4362, 43
        %v5744 = vpop.permute.xlu0 %5743
        %5745 = vrot.lane.b32.xlu0 %v4363, 43
        %v5746 = vpop.permute.xlu0 %5745
        %5747 = vrot.lane.b32.xlu0 %v4364, 43
        %v5748 = vpop.permute.xlu0 %5747
        %5749 = vrot.lane.b32.xlu0 %v4365, 43
        %v5750 = vpop.permute.xlu0 %5749
        %5751 = vrot.lane.b32.xlu0 %v4366, 43
        %v5752 = vpop.permute.xlu0 %5751
        %vm5753 = vcmask 351232
        %v5754 = vsel %vm5753, %v5736, %v5738
        %v5755 = vsel %vm5753, %v5738, %v5740
        %v5756 = vsel %vm5753, %v5740, %v5742
        %v5757 = vsel %vm5753, %v5742, %v5744
        %v5758 = vsel %vm5753, %v5744, %v5746
        %v5759 = vsel %vm5753, %v5746, %v5748
        %v5760 = vsel %vm5753, %v5748, %v5750
        %v5761 = vsel %vm5753, %v5750, %v5752
        %v5763 = vsel %vm207, %v5734, 0
        %v5766 = vsel %vm211, %v5754, 0
        %v5769 = vsel %vm211, %v5755, 0
        %v5772 = vsel %vm211, %v5756, 0
        %v5775 = vsel %vm211, %v5757, 0
        %v5778 = vsel %vm211, %v5758, 0
        %v5781 = vsel %vm211, %v5759, 0
        %v5784 = vsel %vm211, %v5760, 0
        %v5787 = vsel %vm211, %v5761, 0
        %5789 = vmatprep.subr.bf16.mxu0 0
        %5790 = vmatpush1.bf16.msra.mxu0 0
        %5791 = vmatprep.subr.bf16.mxu0 0
        %5792 = vmatpush1.bf16.msra.mxu0 0
        %5793 = vmatprep.subr.bf16.mxu0 0
        %5794 = vmatpush1.bf16.msra.mxu0 0
        %5795 = vmatprep.subr.bf16.mxu0 0
        %5796 = vmatpush1.bf16.msra.mxu0 0
        %5797 = vmatprep.subr.bf16.mxu0 0
        %5798 = vmatpush1.bf16.msra.mxu0 0
        %5799 = vmatprep.subr.bf16.mxu0 0
        %5800 = vmatpush1.bf16.msra.mxu0 0
        %5801 = vmatprep.subr.bf16.mxu0 0
        %5802 = vmatpush1.bf16.msra.mxu0 0
        %5803 = vmatprep.subr.bf16.mxu0 %v5769
        %5804 = vmatpush1.bf16.msra.mxu0 %v5766
        %5805 = vmatprep.subr.bf16.mxu0 0
        %5806 = vmatpush2.bf16.msra.mxu0 0
        %5807 = vmatprep.subr.bf16.mxu0 0
        %5808 = vmatpush2.bf16.msra.mxu0 0
        %5809 = vmatprep.subr.bf16.mxu0 0
        %5810 = vmatpush2.bf16.msra.mxu0 0
        %5811 = vmatprep.subr.bf16.mxu0 0
        %5812 = vmatpush2.bf16.msra.mxu0 0
        %5813 = vmatprep.subr.bf16.mxu0 0
        %5814 = vmatpush2.bf16.msra.mxu0 0
        %5815 = vmatprep.subr.bf16.mxu0 0
        %5816 = vmatpush2.bf16.msra.mxu0 0
        %5817 = vmatprep.subr.bf16.mxu0 0
        %5818 = vmatpush2.bf16.msra.mxu0 0
        %5819 = vmatprep.subr.bf16.mxu0 0
        %5820 = vmatpush2.bf16.msra.mxu0 0
        %5821 = vmatprep.mubr.bf16.mxu0 0
        %5822 = vmatmul.mubr.bf16.gmra.mxu0 %v5763
        %v5823 = vpop.f32.mrf.mxu0
        %v5824 = vadd.f32 0.0, %v5823
        %v5825 = vpop.f32.mrf.mxu0
        %v5826 = vadd.f32 0.0, %v5825
        %v5827 = vpop.f32.mrf.mxu0
        %v5828 = vpop.f32.mrf.mxu0
        %5829 = vdwg.mxu0
        %5830 = vmatprep.subr.bf16.mxu0 0
        %5831 = vmatpush1.bf16.msra.mxu0 0
        %5832 = vmatprep.subr.bf16.mxu0 0
        %5833 = vmatpush1.bf16.msra.mxu0 0
        %5834 = vmatprep.subr.bf16.mxu0 0
        %5835 = vmatpush1.bf16.msra.mxu0 0
        %5836 = vmatprep.subr.bf16.mxu0 0
        %5837 = vmatpush1.bf16.msra.mxu0 0
        %5838 = vmatprep.subr.bf16.mxu0 0
        %5839 = vmatpush1.bf16.msra.mxu0 0
        %5840 = vmatprep.subr.bf16.mxu0 0
        %5841 = vmatpush1.bf16.msra.mxu0 0
        %5842 = vmatprep.subr.bf16.mxu0 0
        %5843 = vmatpush1.bf16.msra.mxu0 0
        %5844 = vmatprep.subr.bf16.mxu0 %v5775
        %5845 = vmatpush1.bf16.msra.mxu0 %v5772
        %5846 = vmatprep.subr.bf16.mxu0 0
        %5847 = vmatpush2.bf16.msra.mxu0 0
        %5848 = vmatprep.subr.bf16.mxu0 0
        %5849 = vmatpush2.bf16.msra.mxu0 0
        %5850 = vmatprep.subr.bf16.mxu0 0
        %5851 = vmatpush2.bf16.msra.mxu0 0
        %5852 = vmatprep.subr.bf16.mxu0 0
        %5853 = vmatpush2.bf16.msra.mxu0 0
        %5854 = vmatprep.subr.bf16.mxu0 0
        %5855 = vmatpush2.bf16.msra.mxu0 0
        %5856 = vmatprep.subr.bf16.mxu0 0
        %5857 = vmatpush2.bf16.msra.mxu0 0
        %5858 = vmatprep.subr.bf16.mxu0 0
        %5859 = vmatpush2.bf16.msra.mxu0 0
        %5860 = vmatprep.subr.bf16.mxu0 0
        %5861 = vmatpush2.bf16.msra.mxu0 0
        %5862 = vmatprep.mubr.bf16.mxu0 0
        %5863 = vmatmul.mubr.bf16.gmra.mxu0 %v5763
        %v5864 = vpop.f32.mrf.mxu0
        %v5865 = vadd.f32 0.0, %v5864
        %v5866 = vpop.f32.mrf.mxu0
        %v5867 = vadd.f32 0.0, %v5866
        %v5868 = vpop.f32.mrf.mxu0
        %v5869 = vpop.f32.mrf.mxu0
        %5870 = vdwg.mxu0
        %5871 = vmatprep.subr.bf16.mxu0 0
        %5872 = vmatpush1.bf16.msra.mxu0 0
        %5873 = vmatprep.subr.bf16.mxu0 0
        %5874 = vmatpush1.bf16.msra.mxu0 0
        %5875 = vmatprep.subr.bf16.mxu0 0
        %5876 = vmatpush1.bf16.msra.mxu0 0
        %5877 = vmatprep.subr.bf16.mxu0 0
        %5878 = vmatpush1.bf16.msra.mxu0 0
        %5879 = vmatprep.subr.bf16.mxu0 0
        %5880 = vmatpush1.bf16.msra.mxu0 0
        %5881 = vmatprep.subr.bf16.mxu0 0
        %5882 = vmatpush1.bf16.msra.mxu0 0
        %5883 = vmatprep.subr.bf16.mxu0 0
        %5884 = vmatpush1.bf16.msra.mxu0 0
        %5885 = vmatprep.subr.bf16.mxu0 %v5781
        %5886 = vmatpush1.bf16.msra.mxu0 %v5778
        %5887 = vmatprep.subr.bf16.mxu0 0
        %5888 = vmatpush2.bf16.msra.mxu0 0
        %5889 = vmatprep.subr.bf16.mxu0 0
        %5890 = vmatpush2.bf16.msra.mxu0 0
        %5891 = vmatprep.subr.bf16.mxu0 0
        %5892 = vmatpush2.bf16.msra.mxu0 0
        %5893 = vmatprep.subr.bf16.mxu0 0
        %5894 = vmatpush2.bf16.msra.mxu0 0
        %5895 = vmatprep.subr.bf16.mxu0 0
        %5896 = vmatpush2.bf16.msra.mxu0 0
        %5897 = vmatprep.subr.bf16.mxu0 0
        %5898 = vmatpush2.bf16.msra.mxu0 0
        %5899 = vmatprep.subr.bf16.mxu0 0
        %5900 = vmatpush2.bf16.msra.mxu0 0
        %5901 = vmatprep.subr.bf16.mxu0 0
        %5902 = vmatpush2.bf16.msra.mxu0 0
        %5903 = vmatprep.mubr.bf16.mxu0 0
        %5904 = vmatmul.mubr.bf16.gmra.mxu0 %v5763
        %v5905 = vpop.f32.mrf.mxu0
        %v5906 = vadd.f32 0.0, %v5905
        %v5907 = vpop.f32.mrf.mxu0
        %v5908 = vadd.f32 0.0, %v5907
        %v5909 = vpop.f32.mrf.mxu0
        %v5910 = vpop.f32.mrf.mxu0
        %5911 = vdwg.mxu0
        %5912 = vmatprep.subr.bf16.mxu0 0
        %5913 = vmatpush1.bf16.msra.mxu0 0
        %5914 = vmatprep.subr.bf16.mxu0 0
        %5915 = vmatpush1.bf16.msra.mxu0 0
        %5916 = vmatprep.subr.bf16.mxu0 0
        %5917 = vmatpush1.bf16.msra.mxu0 0
        %5918 = vmatprep.subr.bf16.mxu0 0
        %5919 = vmatpush1.bf16.msra.mxu0 0
        %5920 = vmatprep.subr.bf16.mxu0 0
        %5921 = vmatpush1.bf16.msra.mxu0 0
        %5922 = vmatprep.subr.bf16.mxu0 0
        %5923 = vmatpush1.bf16.msra.mxu0 0
        %5924 = vmatprep.subr.bf16.mxu0 0
        %5925 = vmatpush1.bf16.msra.mxu0 0
        %5926 = vmatprep.subr.bf16.mxu0 %v5787
        %5927 = vmatpush1.bf16.msra.mxu0 %v5784
        %5928 = vmatprep.subr.bf16.mxu0 0
        %5929 = vmatpush2.bf16.msra.mxu0 0
        %5930 = vmatprep.subr.bf16.mxu0 0
        %5931 = vmatpush2.bf16.msra.mxu0 0
        %5932 = vmatprep.subr.bf16.mxu0 0
        %5933 = vmatpush2.bf16.msra.mxu0 0
        %5934 = vmatprep.subr.bf16.mxu0 0
        %5935 = vmatpush2.bf16.msra.mxu0 0
        %5936 = vmatprep.subr.bf16.mxu0 0
        %5937 = vmatpush2.bf16.msra.mxu0 0
        %5938 = vmatprep.subr.bf16.mxu0 0
        %5939 = vmatpush2.bf16.msra.mxu0 0
        %5940 = vmatprep.subr.bf16.mxu0 0
        %5941 = vmatpush2.bf16.msra.mxu0 0
        %5942 = vmatprep.subr.bf16.mxu0 0
        %5943 = vmatpush2.bf16.msra.mxu0 0
        %5944 = vmatprep.mubr.bf16.mxu0 0
        %5945 = vmatmul.mubr.bf16.gmra.mxu0 %v5763
        %v5946 = vpop.f32.mrf.mxu0
        %v5947 = vadd.f32 0.0, %v5946
        %v5948 = vpop.f32.mrf.mxu0
        %v5949 = vadd.f32 0.0, %v5948
        %v5950 = vpop.f32.mrf.mxu0
        %v5951 = vpop.f32.mrf.mxu0
        %5952 = vdwg.mxu0
        %v5953 = vadd.f32 %v5725, %v5824
        %v5954 = vadd.f32 %v5726, %v5826
        %v5955 = vadd.f32 %v5727, %v5865
        %v5956 = vadd.f32 %v5728, %v5867
        %v5957 = vadd.f32 %v5729, %v5906
        %v5958 = vadd.f32 %v5730, %v5908
        %v5959 = vadd.f32 %v5731, %v5947
        %v5960 = vadd.f32 %v5732, %v5949
        %s5961 = scalar_lea.vmem %s1, 100
        %v5962 = vld [vmem:[%s5961] sm:$0xf]
        %5963 = vrot.lane.b32.xlu0 %v4358, 42
        %v5964 = vpop.permute.xlu0 %5963
        %5965 = vrot.lane.b32.xlu0 %v4359, 42
        %v5966 = vpop.permute.xlu0 %5965
        %5967 = vrot.lane.b32.xlu0 %v4360, 42
        %v5968 = vpop.permute.xlu0 %5967
        %5969 = vrot.lane.b32.xlu0 %v4361, 42
        %v5970 = vpop.permute.xlu0 %5969
        %5971 = vrot.lane.b32.xlu0 %v4362, 42
        %v5972 = vpop.permute.xlu0 %5971
        %5973 = vrot.lane.b32.xlu0 %v4363, 42
        %v5974 = vpop.permute.xlu0 %5973
        %5975 = vrot.lane.b32.xlu0 %v4364, 42
        %v5976 = vpop.permute.xlu0 %5975
        %5977 = vrot.lane.b32.xlu0 %v4365, 42
        %v5978 = vpop.permute.xlu0 %5977
        %5979 = vrot.lane.b32.xlu0 %v4366, 42
        %v5980 = vpop.permute.xlu0 %5979
        %vm5981 = vcmask 343040
        %v5982 = vsel %vm5981, %v5964, %v5966
        %v5983 = vsel %vm5981, %v5966, %v5968
        %v5984 = vsel %vm5981, %v5968, %v5970
        %v5985 = vsel %vm5981, %v5970, %v5972
        %v5986 = vsel %vm5981, %v5972, %v5974
        %v5987 = vsel %vm5981, %v5974, %v5976
        %v5988 = vsel %vm5981, %v5976, %v5978
        %v5989 = vsel %vm5981, %v5978, %v5980
        %v5991 = vsel %vm207, %v5962, 0
        %v5994 = vsel %vm211, %v5982, 0
        %v5997 = vsel %vm211, %v5983, 0
        %v6000 = vsel %vm211, %v5984, 0
        %v6003 = vsel %vm211, %v5985, 0
        %v6006 = vsel %vm211, %v5986, 0
        %v6009 = vsel %vm211, %v5987, 0
        %v6012 = vsel %vm211, %v5988, 0
        %v6015 = vsel %vm211, %v5989, 0
        %6017 = vmatprep.subr.bf16.mxu0 0
        %6018 = vmatpush1.bf16.msra.mxu0 0
        %6019 = vmatprep.subr.bf16.mxu0 0
        %6020 = vmatpush1.bf16.msra.mxu0 0
        %6021 = vmatprep.subr.bf16.mxu0 0
        %6022 = vmatpush1.bf16.msra.mxu0 0
        %6023 = vmatprep.subr.bf16.mxu0 0
        %6024 = vmatpush1.bf16.msra.mxu0 0
        %6025 = vmatprep.subr.bf16.mxu0 0
        %6026 = vmatpush1.bf16.msra.mxu0 0
        %6027 = vmatprep.subr.bf16.mxu0 0
        %6028 = vmatpush1.bf16.msra.mxu0 0
        %6029 = vmatprep.subr.bf16.mxu0 0
        %6030 = vmatpush1.bf16.msra.mxu0 0
        %6031 = vmatprep.subr.bf16.mxu0 %v5997
        %6032 = vmatpush1.bf16.msra.mxu0 %v5994
        %6033 = vmatprep.subr.bf16.mxu0 0
        %6034 = vmatpush2.bf16.msra.mxu0 0
        %6035 = vmatprep.subr.bf16.mxu0 0
        %6036 = vmatpush2.bf16.msra.mxu0 0
        %6037 = vmatprep.subr.bf16.mxu0 0
        %6038 = vmatpush2.bf16.msra.mxu0 0
        %6039 = vmatprep.subr.bf16.mxu0 0
        %6040 = vmatpush2.bf16.msra.mxu0 0
        %6041 = vmatprep.subr.bf16.mxu0 0
        %6042 = vmatpush2.bf16.msra.mxu0 0
        %6043 = vmatprep.subr.bf16.mxu0 0
        %6044 = vmatpush2.bf16.msra.mxu0 0
        %6045 = vmatprep.subr.bf16.mxu0 0
        %6046 = vmatpush2.bf16.msra.mxu0 0
        %6047 = vmatprep.subr.bf16.mxu0 0
        %6048 = vmatpush2.bf16.msra.mxu0 0
        %6049 = vmatprep.mubr.bf16.mxu0 0
        %6050 = vmatmul.mubr.bf16.gmra.mxu0 %v5991
        %v6051 = vpop.f32.mrf.mxu0
        %v6052 = vadd.f32 0.0, %v6051
        %v6053 = vpop.f32.mrf.mxu0
        %v6054 = vadd.f32 0.0, %v6053
        %v6055 = vpop.f32.mrf.mxu0
        %v6056 = vpop.f32.mrf.mxu0
        %6057 = vdwg.mxu0
        %6058 = vmatprep.subr.bf16.mxu0 0
        %6059 = vmatpush1.bf16.msra.mxu0 0
        %6060 = vmatprep.subr.bf16.mxu0 0
        %6061 = vmatpush1.bf16.msra.mxu0 0
        %6062 = vmatprep.subr.bf16.mxu0 0
        %6063 = vmatpush1.bf16.msra.mxu0 0
        %6064 = vmatprep.subr.bf16.mxu0 0
        %6065 = vmatpush1.bf16.msra.mxu0 0
        %6066 = vmatprep.subr.bf16.mxu0 0
        %6067 = vmatpush1.bf16.msra.mxu0 0
        %6068 = vmatprep.subr.bf16.mxu0 0
        %6069 = vmatpush1.bf16.msra.mxu0 0
        %6070 = vmatprep.subr.bf16.mxu0 0
        %6071 = vmatpush1.bf16.msra.mxu0 0
        %6072 = vmatprep.subr.bf16.mxu0 %v6003
        %6073 = vmatpush1.bf16.msra.mxu0 %v6000
        %6074 = vmatprep.subr.bf16.mxu0 0
        %6075 = vmatpush2.bf16.msra.mxu0 0
        %6076 = vmatprep.subr.bf16.mxu0 0
        %6077 = vmatpush2.bf16.msra.mxu0 0
        %6078 = vmatprep.subr.bf16.mxu0 0
        %6079 = vmatpush2.bf16.msra.mxu0 0
        %6080 = vmatprep.subr.bf16.mxu0 0
        %6081 = vmatpush2.bf16.msra.mxu0 0
        %6082 = vmatprep.subr.bf16.mxu0 0
        %6083 = vmatpush2.bf16.msra.mxu0 0
        %6084 = vmatprep.subr.bf16.mxu0 0
        %6085 = vmatpush2.bf16.msra.mxu0 0
        %6086 = vmatprep.subr.bf16.mxu0 0
        %6087 = vmatpush2.bf16.msra.mxu0 0
        %6088 = vmatprep.subr.bf16.mxu0 0
        %6089 = vmatpush2.bf16.msra.mxu0 0
        %6090 = vmatprep.mubr.bf16.mxu0 0
        %6091 = vmatmul.mubr.bf16.gmra.mxu0 %v5991
        %v6092 = vpop.f32.mrf.mxu0
        %v6093 = vadd.f32 0.0, %v6092
        %v6094 = vpop.f32.mrf.mxu0
        %v6095 = vadd.f32 0.0, %v6094
        %v6096 = vpop.f32.mrf.mxu0
        %v6097 = vpop.f32.mrf.mxu0
        %6098 = vdwg.mxu0
        %6099 = vmatprep.subr.bf16.mxu0 0
        %6100 = vmatpush1.bf16.msra.mxu0 0
        %6101 = vmatprep.subr.bf16.mxu0 0
        %6102 = vmatpush1.bf16.msra.mxu0 0
        %6103 = vmatprep.subr.bf16.mxu0 0
        %6104 = vmatpush1.bf16.msra.mxu0 0
        %6105 = vmatprep.subr.bf16.mxu0 0
        %6106 = vmatpush1.bf16.msra.mxu0 0
        %6107 = vmatprep.subr.bf16.mxu0 0
        %6108 = vmatpush1.bf16.msra.mxu0 0
        %6109 = vmatprep.subr.bf16.mxu0 0
        %6110 = vmatpush1.bf16.msra.mxu0 0
        %6111 = vmatprep.subr.bf16.mxu0 0
        %6112 = vmatpush1.bf16.msra.mxu0 0
        %6113 = vmatprep.subr.bf16.mxu0 %v6009
        %6114 = vmatpush1.bf16.msra.mxu0 %v6006
        %6115 = vmatprep.subr.bf16.mxu0 0
        %6116 = vmatpush2.bf16.msra.mxu0 0
        %6117 = vmatprep.subr.bf16.mxu0 0
        %6118 = vmatpush2.bf16.msra.mxu0 0
        %6119 = vmatprep.subr.bf16.mxu0 0
        %6120 = vmatpush2.bf16.msra.mxu0 0
        %6121 = vmatprep.subr.bf16.mxu0 0
        %6122 = vmatpush2.bf16.msra.mxu0 0
        %6123 = vmatprep.subr.bf16.mxu0 0
        %6124 = vmatpush2.bf16.msra.mxu0 0
        %6125 = vmatprep.subr.bf16.mxu0 0
        %6126 = vmatpush2.bf16.msra.mxu0 0
        %6127 = vmatprep.subr.bf16.mxu0 0
        %6128 = vmatpush2.bf16.msra.mxu0 0
        %6129 = vmatprep.subr.bf16.mxu0 0
        %6130 = vmatpush2.bf16.msra.mxu0 0
        %6131 = vmatprep.mubr.bf16.mxu0 0
        %6132 = vmatmul.mubr.bf16.gmra.mxu0 %v5991
        %v6133 = vpop.f32.mrf.mxu0
        %v6134 = vadd.f32 0.0, %v6133
        %v6135 = vpop.f32.mrf.mxu0
        %v6136 = vadd.f32 0.0, %v6135
        %v6137 = vpop.f32.mrf.mxu0
        %v6138 = vpop.f32.mrf.mxu0
        %6139 = vdwg.mxu0
        %6140 = vmatprep.subr.bf16.mxu0 0
        %6141 = vmatpush1.bf16.msra.mxu0 0
        %6142 = vmatprep.subr.bf16.mxu0 0
        %6143 = vmatpush1.bf16.msra.mxu0 0
        %6144 = vmatprep.subr.bf16.mxu0 0
        %6145 = vmatpush1.bf16.msra.mxu0 0
        %6146 = vmatprep.subr.bf16.mxu0 0
        %6147 = vmatpush1.bf16.msra.mxu0 0
        %6148 = vmatprep.subr.bf16.mxu0 0
        %6149 = vmatpush1.bf16.msra.mxu0 0
        %6150 = vmatprep.subr.bf16.mxu0 0
        %6151 = vmatpush1.bf16.msra.mxu0 0
        %6152 = vmatprep.subr.bf16.mxu0 0
        %6153 = vmatpush1.bf16.msra.mxu0 0
        %6154 = vmatprep.subr.bf16.mxu0 %v6015
        %6155 = vmatpush1.bf16.msra.mxu0 %v6012
        %6156 = vmatprep.subr.bf16.mxu0 0
        %6157 = vmatpush2.bf16.msra.mxu0 0
        %6158 = vmatprep.subr.bf16.mxu0 0
        %6159 = vmatpush2.bf16.msra.mxu0 0
        %6160 = vmatprep.subr.bf16.mxu0 0
        %6161 = vmatpush2.bf16.msra.mxu0 0
        %6162 = vmatprep.subr.bf16.mxu0 0
        %6163 = vmatpush2.bf16.msra.mxu0 0
        %6164 = vmatprep.subr.bf16.mxu0 0
        %6165 = vmatpush2.bf16.msra.mxu0 0
        %6166 = vmatprep.subr.bf16.mxu0 0
        %6167 = vmatpush2.bf16.msra.mxu0 0
        %6168 = vmatprep.subr.bf16.mxu0 0
        %6169 = vmatpush2.bf16.msra.mxu0 0
        %6170 = vmatprep.subr.bf16.mxu0 0
        %6171 = vmatpush2.bf16.msra.mxu0 0
        %6172 = vmatprep.mubr.bf16.mxu0 0
        %6173 = vmatmul.mubr.bf16.gmra.mxu0 %v5991
        %v6174 = vpop.f32.mrf.mxu0
        %v6175 = vadd.f32 0.0, %v6174
        %v6176 = vpop.f32.mrf.mxu0
        %v6177 = vadd.f32 0.0, %v6176
        %v6178 = vpop.f32.mrf.mxu0
        %v6179 = vpop.f32.mrf.mxu0
        %6180 = vdwg.mxu0
        %v6181 = vadd.f32 %v5953, %v6052
        %v6182 = vadd.f32 %v5954, %v6054
        %v6183 = vadd.f32 %v5955, %v6093
        %v6184 = vadd.f32 %v5956, %v6095
        %v6185 = vadd.f32 %v5957, %v6134
        %v6186 = vadd.f32 %v5958, %v6136
        %v6187 = vadd.f32 %v5959, %v6175
        %v6188 = vadd.f32 %v5960, %v6177
        %s6189 = scalar_lea.vmem %s1, 104
        %v6190 = vld [vmem:[%s6189] sm:$0xf]
        %6191 = vrot.lane.b32.xlu0 %v4358, 41
        %v6192 = vpop.permute.xlu0 %6191
        %6193 = vrot.lane.b32.xlu0 %v4359, 41
        %v6194 = vpop.permute.xlu0 %6193
        %6195 = vrot.lane.b32.xlu0 %v4360, 41
        %v6196 = vpop.permute.xlu0 %6195
        %6197 = vrot.lane.b32.xlu0 %v4361, 41
        %v6198 = vpop.permute.xlu0 %6197
        %6199 = vrot.lane.b32.xlu0 %v4362, 41
        %v6200 = vpop.permute.xlu0 %6199
        %6201 = vrot.lane.b32.xlu0 %v4363, 41
        %v6202 = vpop.permute.xlu0 %6201
        %6203 = vrot.lane.b32.xlu0 %v4364, 41
        %v6204 = vpop.permute.xlu0 %6203
        %6205 = vrot.lane.b32.xlu0 %v4365, 41
        %v6206 = vpop.permute.xlu0 %6205
        %6207 = vrot.lane.b32.xlu0 %v4366, 41
        %v6208 = vpop.permute.xlu0 %6207
        %vm6209 = vcmask 334848
        %v6210 = vsel %vm6209, %v6192, %v6194
        %v6211 = vsel %vm6209, %v6194, %v6196
        %v6212 = vsel %vm6209, %v6196, %v6198
        %v6213 = vsel %vm6209, %v6198, %v6200
        %v6214 = vsel %vm6209, %v6200, %v6202
        %v6215 = vsel %vm6209, %v6202, %v6204
        %v6216 = vsel %vm6209, %v6204, %v6206
        %v6217 = vsel %vm6209, %v6206, %v6208
        %v6219 = vsel %vm207, %v6190, 0
        %v6222 = vsel %vm211, %v6210, 0
        %v6225 = vsel %vm211, %v6211, 0
        %v6228 = vsel %vm211, %v6212, 0
        %v6231 = vsel %vm211, %v6213, 0
        %v6234 = vsel %vm211, %v6214, 0
        %v6237 = vsel %vm211, %v6215, 0
        %v6240 = vsel %vm211, %v6216, 0
        %v6243 = vsel %vm211, %v6217, 0
        %6245 = vmatprep.subr.bf16.mxu0 0
        %6246 = vmatpush1.bf16.msra.mxu0 0
        %6247 = vmatprep.subr.bf16.mxu0 0
        %6248 = vmatpush1.bf16.msra.mxu0 0
        %6249 = vmatprep.subr.bf16.mxu0 0
        %6250 = vmatpush1.bf16.msra.mxu0 0
        %6251 = vmatprep.subr.bf16.mxu0 0
        %6252 = vmatpush1.bf16.msra.mxu0 0
        %6253 = vmatprep.subr.bf16.mxu0 0
        %6254 = vmatpush1.bf16.msra.mxu0 0
        %6255 = vmatprep.subr.bf16.mxu0 0
        %6256 = vmatpush1.bf16.msra.mxu0 0
        %6257 = vmatprep.subr.bf16.mxu0 0
        %6258 = vmatpush1.bf16.msra.mxu0 0
        %6259 = vmatprep.subr.bf16.mxu0 %v6225
        %6260 = vmatpush1.bf16.msra.mxu0 %v6222
        %6261 = vmatprep.subr.bf16.mxu0 0
        %6262 = vmatpush2.bf16.msra.mxu0 0
        %6263 = vmatprep.subr.bf16.mxu0 0
        %6264 = vmatpush2.bf16.msra.mxu0 0
        %6265 = vmatprep.subr.bf16.mxu0 0
        %6266 = vmatpush2.bf16.msra.mxu0 0
        %6267 = vmatprep.subr.bf16.mxu0 0
        %6268 = vmatpush2.bf16.msra.mxu0 0
        %6269 = vmatprep.subr.bf16.mxu0 0
        %6270 = vmatpush2.bf16.msra.mxu0 0
        %6271 = vmatprep.subr.bf16.mxu0 0
        %6272 = vmatpush2.bf16.msra.mxu0 0
        %6273 = vmatprep.subr.bf16.mxu0 0
        %6274 = vmatpush2.bf16.msra.mxu0 0
        %6275 = vmatprep.subr.bf16.mxu0 0
        %6276 = vmatpush2.bf16.msra.mxu0 0
        %6277 = vmatprep.mubr.bf16.mxu0 0
        %6278 = vmatmul.mubr.bf16.gmra.mxu0 %v6219
        %v6279 = vpop.f32.mrf.mxu0
        %v6280 = vadd.f32 0.0, %v6279
        %v6281 = vpop.f32.mrf.mxu0
        %v6282 = vadd.f32 0.0, %v6281
        %v6283 = vpop.f32.mrf.mxu0
        %v6284 = vpop.f32.mrf.mxu0
        %6285 = vdwg.mxu0
        %6286 = vmatprep.subr.bf16.mxu0 0
        %6287 = vmatpush1.bf16.msra.mxu0 0
        %6288 = vmatprep.subr.bf16.mxu0 0
        %6289 = vmatpush1.bf16.msra.mxu0 0
        %6290 = vmatprep.subr.bf16.mxu0 0
        %6291 = vmatpush1.bf16.msra.mxu0 0
        %6292 = vmatprep.subr.bf16.mxu0 0
        %6293 = vmatpush1.bf16.msra.mxu0 0
        %6294 = vmatprep.subr.bf16.mxu0 0
        %6295 = vmatpush1.bf16.msra.mxu0 0
        %6296 = vmatprep.subr.bf16.mxu0 0
        %6297 = vmatpush1.bf16.msra.mxu0 0
        %6298 = vmatprep.subr.bf16.mxu0 0
        %6299 = vmatpush1.bf16.msra.mxu0 0
        %6300 = vmatprep.subr.bf16.mxu0 %v6231
        %6301 = vmatpush1.bf16.msra.mxu0 %v6228
        %6302 = vmatprep.subr.bf16.mxu0 0
        %6303 = vmatpush2.bf16.msra.mxu0 0
        %6304 = vmatprep.subr.bf16.mxu0 0
        %6305 = vmatpush2.bf16.msra.mxu0 0
        %6306 = vmatprep.subr.bf16.mxu0 0
        %6307 = vmatpush2.bf16.msra.mxu0 0
        %6308 = vmatprep.subr.bf16.mxu0 0
        %6309 = vmatpush2.bf16.msra.mxu0 0
        %6310 = vmatprep.subr.bf16.mxu0 0
        %6311 = vmatpush2.bf16.msra.mxu0 0
        %6312 = vmatprep.subr.bf16.mxu0 0
        %6313 = vmatpush2.bf16.msra.mxu0 0
        %6314 = vmatprep.subr.bf16.mxu0 0
        %6315 = vmatpush2.bf16.msra.mxu0 0
        %6316 = vmatprep.subr.bf16.mxu0 0
        %6317 = vmatpush2.bf16.msra.mxu0 0
        %6318 = vmatprep.mubr.bf16.mxu0 0
        %6319 = vmatmul.mubr.bf16.gmra.mxu0 %v6219
        %v6320 = vpop.f32.mrf.mxu0
        %v6321 = vadd.f32 0.0, %v6320
        %v6322 = vpop.f32.mrf.mxu0
        %v6323 = vadd.f32 0.0, %v6322
        %v6324 = vpop.f32.mrf.mxu0
        %v6325 = vpop.f32.mrf.mxu0
        %6326 = vdwg.mxu0
        %6327 = vmatprep.subr.bf16.mxu0 0
        %6328 = vmatpush1.bf16.msra.mxu0 0
        %6329 = vmatprep.subr.bf16.mxu0 0
        %6330 = vmatpush1.bf16.msra.mxu0 0
        %6331 = vmatprep.subr.bf16.mxu0 0
        %6332 = vmatpush1.bf16.msra.mxu0 0
        %6333 = vmatprep.subr.bf16.mxu0 0
        %6334 = vmatpush1.bf16.msra.mxu0 0
        %6335 = vmatprep.subr.bf16.mxu0 0
        %6336 = vmatpush1.bf16.msra.mxu0 0
        %6337 = vmatprep.subr.bf16.mxu0 0
        %6338 = vmatpush1.bf16.msra.mxu0 0
        %6339 = vmatprep.subr.bf16.mxu0 0
        %6340 = vmatpush1.bf16.msra.mxu0 0
        %6341 = vmatprep.subr.bf16.mxu0 %v6237
        %6342 = vmatpush1.bf16.msra.mxu0 %v6234
        %6343 = vmatprep.subr.bf16.mxu0 0
        %6344 = vmatpush2.bf16.msra.mxu0 0
        %6345 = vmatprep.subr.bf16.mxu0 0
        %6346 = vmatpush2.bf16.msra.mxu0 0
        %6347 = vmatprep.subr.bf16.mxu0 0
        %6348 = vmatpush2.bf16.msra.mxu0 0
        %6349 = vmatprep.subr.bf16.mxu0 0
        %6350 = vmatpush2.bf16.msra.mxu0 0
        %6351 = vmatprep.subr.bf16.mxu0 0
        %6352 = vmatpush2.bf16.msra.mxu0 0
        %6353 = vmatprep.subr.bf16.mxu0 0
        %6354 = vmatpush2.bf16.msra.mxu0 0
        %6355 = vmatprep.subr.bf16.mxu0 0
        %6356 = vmatpush2.bf16.msra.mxu0 0
        %6357 = vmatprep.subr.bf16.mxu0 0
        %6358 = vmatpush2.bf16.msra.mxu0 0
        %6359 = vmatprep.mubr.bf16.mxu0 0
        %6360 = vmatmul.mubr.bf16.gmra.mxu0 %v6219
        %v6361 = vpop.f32.mrf.mxu0
        %v6362 = vadd.f32 0.0, %v6361
        %v6363 = vpop.f32.mrf.mxu0
        %v6364 = vadd.f32 0.0, %v6363
        %v6365 = vpop.f32.mrf.mxu0
        %v6366 = vpop.f32.mrf.mxu0
        %6367 = vdwg.mxu0
        %6368 = vmatprep.subr.bf16.mxu0 0
        %6369 = vmatpush1.bf16.msra.mxu0 0
        %6370 = vmatprep.subr.bf16.mxu0 0
        %6371 = vmatpush1.bf16.msra.mxu0 0
        %6372 = vmatprep.subr.bf16.mxu0 0
        %6373 = vmatpush1.bf16.msra.mxu0 0
        %6374 = vmatprep.subr.bf16.mxu0 0
        %6375 = vmatpush1.bf16.msra.mxu0 0
        %6376 = vmatprep.subr.bf16.mxu0 0
        %6377 = vmatpush1.bf16.msra.mxu0 0
        %6378 = vmatprep.subr.bf16.mxu0 0
        %6379 = vmatpush1.bf16.msra.mxu0 0
        %6380 = vmatprep.subr.bf16.mxu0 0
        %6381 = vmatpush1.bf16.msra.mxu0 0
        %6382 = vmatprep.subr.bf16.mxu0 %v6243
        %6383 = vmatpush1.bf16.msra.mxu0 %v6240
        %6384 = vmatprep.subr.bf16.mxu0 0
        %6385 = vmatpush2.bf16.msra.mxu0 0
        %6386 = vmatprep.subr.bf16.mxu0 0
        %6387 = vmatpush2.bf16.msra.mxu0 0
        %6388 = vmatprep.subr.bf16.mxu0 0
        %6389 = vmatpush2.bf16.msra.mxu0 0
        %6390 = vmatprep.subr.bf16.mxu0 0
        %6391 = vmatpush2.bf16.msra.mxu0 0
        %6392 = vmatprep.subr.bf16.mxu0 0
        %6393 = vmatpush2.bf16.msra.mxu0 0
        %6394 = vmatprep.subr.bf16.mxu0 0
        %6395 = vmatpush2.bf16.msra.mxu0 0
        %6396 = vmatprep.subr.bf16.mxu0 0
        %6397 = vmatpush2.bf16.msra.mxu0 0
        %6398 = vmatprep.subr.bf16.mxu0 0
        %6399 = vmatpush2.bf16.msra.mxu0 0
        %6400 = vmatprep.mubr.bf16.mxu0 0
        %6401 = vmatmul.mubr.bf16.gmra.mxu0 %v6219
        %v6402 = vpop.f32.mrf.mxu0
        %v6403 = vadd.f32 0.0, %v6402
        %v6404 = vpop.f32.mrf.mxu0
        %v6405 = vadd.f32 0.0, %v6404
        %v6406 = vpop.f32.mrf.mxu0
        %v6407 = vpop.f32.mrf.mxu0
        %6408 = vdwg.mxu0
        %v6409 = vadd.f32 %v6181, %v6280
        %v6410 = vadd.f32 %v6182, %v6282
        %v6411 = vadd.f32 %v6183, %v6321
        %v6412 = vadd.f32 %v6184, %v6323
        %v6413 = vadd.f32 %v6185, %v6362
        %v6414 = vadd.f32 %v6186, %v6364
        %v6415 = vadd.f32 %v6187, %v6403
        %v6416 = vadd.f32 %v6188, %v6405
        %6417 = vst [vmem:[%s122] sm:$0xff] %v6409
        %6418 = vst [vmem:[%s122 + $0x8] sm:$0xff] %v6410
        %6419 = vst [vmem:[%s122 + $0x10] sm:$0xff] %v6411
        %6420 = vst [vmem:[%s122 + $0x18] sm:$0xff] %v6412
        %6421 = vst [vmem:[%s122 + $0x20] sm:$0xff] %v6413
        %6422 = vst [vmem:[%s122 + $0x28] sm:$0xff] %v6414
        %6423 = vst [vmem:[%s122 + $0x30] sm:$0xff] %v6415
        %6424 = vst [vmem:[%s122 + $0x38] sm:$0xff] %v6416
        %s6425 = sand.u32 %s67, 1
        %s6426 = scalar_lea.sflag [#allocation5], %s6425
        %s6427 = sand.u32 %s67, 1
        %s6428 = smul.addr %s6427, 64
        %s6429 = scalar_lea.vmem [#allocation4], %s6428
        // Predicated region
        $region33: #{tpu_custom_call.1} parent=27 // pred_check
          %p6430 = pneg %p77
        $region34: #{tpu_custom_call.1} parent=27 // pred_check_branch
          %6432 = sbr.rel (%p6430) target = $region36
        $region35: #{tpu_custom_call.1} parent=27 // pred_region
          %s6433 = smul.u32 8, %s17
          %s6435 = ssub.s32 1024, 1024
          %6436 = vsyncadd %s6426, %s6435
          %s6437 = smul.addr %s6433, 128
          %s6438 = scalar_lea.hbm %s3, %s6437
          %s6440 = sshll.u32 %s6429, 4
          %s6441 = int_to_ptr.vmem [resolvable:$true] %s6440
          %6443 = dma.vmem_to_hbm [thread:$0]  %s6441, 1024, %s6438, %s6426
        $region36: #{tpu_custom_call.1} parent=27 // pred_fallthru
          _
      $region28: #{tpu_custom_call.1} parent=5 // pred_fallthru
        _
      %p6444 = scmp.le.s32.totalorder 2, %s12
      // Predicated region
      $region37: #{tpu_custom_call.1} parent=5 // pred_check
        %p6445 = pneg %p6444
      $region38: #{tpu_custom_call.1} parent=5 // pred_check_branch
        %6447 = sbr.rel (%p6445) target = $region40
      $region39: #{tpu_custom_call.1} parent=5 // pred_region
        %s6448 = ssub.s32 %s12, 2
        // Predicated region
        $region41: #{tpu_custom_call.1} parent=39 // pred_check
          %p6449 = pneg %p83
        $region42: #{tpu_custom_call.1} parent=39 // pred_check_branch
          %6451 = sbr.rel (%p6449) target = $region44
        $region43: #{tpu_custom_call.1} parent=39 // pred_region
          %s6452 = sand.u32 %s68, 1
          %s6453 = scalar_lea.sflag [#allocation5], %s6452
          %s6454 = sand.u32 %s68, 1
          %s6455 = smul.addr %s6454, 64
          %s6456 = scalar_lea.vmem [#allocation4], %s6455
          %6457 = dma.done %s6453, 1024
        $region44: #{tpu_custom_call.1} parent=39 // pred_fallthru
          _
      $region40: #{tpu_custom_call.1} parent=5 // pred_fallthru
        _
    $region6: #{tpu_custom_call.1} parent=1 // loop_footer
      %s16 = sadd.s32 1, %s12
    $region7: #{tpu_custom_call.1} parent=1 // loop_footer_branch
      %11 = sbr.rel target = $region3
    $region8: #{tpu_custom_call.1} parent=1 // loop_exit
      _
    %6458 = vsyncpa [#allocation5], 1
    %s6459 = scalar_lea.sflag [#allocation5], 1
    %6460 = vsyncpa %s6459, 1
  %6461 = vsyncmov [#allocation3]
  %s6462 = vpop.sfrf %6461
  %p6463 = scmp.eq.s32.totalorder %s6462, 0
  %p6464 = pneg %p6463
  %6466 = shalt.err (%p6464)

</llo_original>
